<compile_context>
chip_gen: v7x
topology: tpu7x:2x2x1
jax: 0.10.0
libtpu: 0.0.40
codegen_flags: <defaults>
</compile_context>

<pallas_src>
import functools
import math

import jax
import jax.numpy as jnp
from jax.experimental import pallas as pl
from jax.experimental.pallas import tpu as pltpu

# ---- model config (scaled down, structurally identical to the module) ------
BATCH        = 2                      # image batch per forward (== cls/pos param batch)
CHANNELS     = 3
IMG          = 32
PATCH        = 16
LATENT       = 128                    # latent_size
HEADS        = 4                      # num_heads
HEAD_DIM     = LATENT // HEADS
MLP_HIDDEN   = 4 * LATENT
NUM_ENCODERS = 2
NUM_CLASSES  = 4
N_PATCHES    = (IMG // PATCH) ** 2    # 4
SEQ          = N_PATCHES + 1          # +1 cls token
PATCH_DIM    = PATCH * PATCH * CHANNELS
EPS          = 1e-5
_INV_SQRT2   = 0.7071067811865476

# ---- batching / tiling for the fused kernel --------------------------------
NSUPER           = 2                                   # grid steps ("parallel")
GROUPS_PER_SUPER = 16                                  # independent forwards / step
NFWD             = NSUPER * GROUPS_PER_SUPER           # 32 forwards per call
ROWS_PER_SUPER   = BATCH * SEQ * GROUPS_PER_SUPER      # 160 token rows / step
HALF_ROWS        = ROWS_PER_SUPER // 2                 # 80
TOTAL_ROWS       = NSUPER * ROWS_PER_SUPER             # 320
IMAGES_PER_SUPER = BATCH * GROUPS_PER_SUPER            # 32
TOTAL_IMAGES     = NSUPER * IMAGES_PER_SUPER           # 64

# nn.MultiheadAttention(batch_first=False) on a (batch, tokens, E) input runs
# attention over the *image-batch* axis; with BATCH == 2 the softmax has
# exactly two entries, which the sigmoid-gate formulation below exploits.
assert BATCH == 2, "the 2-way attention sigmoid trick hard-codes image-batch == 2"
assert ROWS_PER_SUPER % 8 == 0 and GROUPS_PER_SUPER % 8 == 0


def _layernorm(x, g, b):
    mu = jnp.mean(x, axis=-1, keepdims=True)
    var = jnp.mean(jnp.square(x - mu), axis=-1, keepdims=True)
    return (x - mu) * jax.lax.rsqrt(var + EPS) * g + b


# ------------------------------ fused kernel --------------------------------
def vit_kernel(patches_ref, mask_ref,
               wp_ref, bp_ref, cls_ref, pos_ref,
               ln_g_ref, ln_b_ref, wqkv_ref, bqkv_ref, wo_ref, bo_ref,
               w1_ref, b1_ref, w2_ref, b2_ref,
               hg_ref, hb_ref, hw1_ref, hb1_ref, hw2_ref, hb2_ref,
               out_ref):
    f32 = jnp.float32
    bf16 = jnp.bfloat16
    R, half, G = ROWS_PER_SUPER, HALF_ROWS, GROUPS_PER_SUPER

    # ---- input embedding: ONE (R, PATCH_DIM) @ (PATCH_DIM, E) matmul -------
    # Patch rows were zero-padded host-side so row r of `proj` already sits at
    # token position r; cls rows (proj == bp there) get overwritten by the
    # jnp.where merge below — no masked single-row stores.
    proj = jnp.dot(patches_ref[...], wp_ref[...],
                   preferred_element_type=f32) + bp_ref[...]          # (R, E) f32

    row = jax.lax.broadcasted_iota(jnp.int32, (R, LATENT), 0)
    in_b1 = row >= half                                               # image 1 half
    pos_rows = jnp.where(in_b1, pos_ref[1:2, :], pos_ref[0:1, :])
    cls_rows = jnp.where(in_b1, cls_ref[1:2, :], cls_ref[0:1, :])
    is_cls = (row < G) | ((row >= half) & (row < half + G))           # s == 0 rows
    x = jnp.where(is_cls, cls_rows, proj) + pos_rows                  # (R, E) value

    # Pre-scaled block-diagonal head mask (host-built): mask[i,j] =
    # 1/sqrt(HEAD_DIM) if lanes i,j belong to the same head else 0.
    mask = mask_ref[...]

    # ---- encoder layers (unrolled; weights stacked on a leading layer axis) --
    for l in range(NUM_ENCODERS):
        gamma = ln_g_ref[l:l + 1, :]
        beta = ln_b_ref[l:l + 1, :]

        # LayerNorm (shared params, used twice — like self.norm in the module)
        n1 = _layernorm(x, gamma, beta)

        # Fused QKV projection for ALL rows (bf16 x bf16 -> f32 accumulate)
        qkv = (jnp.dot(n1.astype(bf16), wqkv_ref[l],
                       preferred_element_type=f32) + bqkv_ref[l:l + 1, :])
        q = qkv[:, :LATENT]
        k = qkv[:, LATENT:2 * LATENT]
        v = qkv[:, 2 * LATENT:]

        # 2-way attention over the image pair.  Row r of the first half pairs
        # with row half+r of the second half (same token, other image):
        #   d  = s_self - s_cross  (per head, broadcast over the head's lanes)
        #   softmax([s_self, s_cross]) -> attn = v + sigmoid(-d) * (v_other - v)
        dk = k[:half, :] - k[half:, :]                     # k0 - k1
        dv = v[half:, :] - v[:half, :]                     # v1 - v0 (= other - self for b=0)
        sdk = jnp.concatenate([dk, -dk], axis=0)           # signed (k_self - k_other)
        d = jnp.dot(q * sdk, mask, preferred_element_type=f32)   # one MXU push / layer
        gate = jax.nn.sigmoid(-d)                          # weight on the other image (EUP)
        attn = v + jnp.concatenate([gate[:half, :] * dv,
                                    gate[half:, :] * (-dv)], axis=0)

        attn = (jnp.dot(attn.astype(bf16), wo_ref[l],
                        preferred_element_type=f32) + bo_ref[l:l + 1, :])
        r1 = x + attn                                      # residual 1 (f32)

        # MLP block
        n2 = _layernorm(r1, gamma, beta)
        h1 = (jnp.dot(n2.astype(bf16), w1_ref[l],
                      preferred_element_type=f32) + b1_ref[l:l + 1, :])
        h1 = jax.nn.gelu(h1, approximate=True)             # tanh form -> EUP
        mlp = (jnp.dot(h1.astype(bf16), w2_ref[l],
                       preferred_element_type=f32) + b2_ref[l:l + 1, :])
        x = r1 + mlp                                       # residual 2 (stays in values)

    # ---- MLP head on the cls rows: two contiguous, 8-aligned slabs ---------
    cls_tok = jnp.concatenate([x[:G, :], x[half:half + G, :]], axis=0)   # (2G, E)
    n = _layernorm(cls_tok, hg_ref[...], hb_ref[...])
    z = (jnp.dot(n.astype(bf16), hw1_ref[...],
                 preferred_element_type=jnp.float32) + hb1_ref[...])
    out_ref[...] = (jnp.dot(z, hw2_ref[...],
                            preferred_element_type=jnp.float32) + hb2_ref[...])


# ----------------------------- host-side layout ------------------------------
def extract_patches(x):
    # einops: 'b c (h h1) (w w1) -> b (h w) (h1 w1 c)'
    B, C, H, W = x.shape
    hp, wp = H // PATCH, W // PATCH
    x = x.reshape(B, C, hp, PATCH, wp, PATCH)
    x = jnp.transpose(x, (0, 2, 4, 3, 5, 1))          # b h w h1 w1 c
    return x.reshape(B, hp * wp, PATCH * PATCH * C)


def _build_patch_rows(x):
    """(NFWD, B, C, IMG, IMG) -> zero-padded, row-ordered (TOTAL_ROWS, PATCH_DIM) bf16."""
    imgs = x.reshape(NFWD * BATCH, CHANNELS, IMG, IMG)
    patches = extract_patches(imgs)                                    # (NFWD*B, N, PD)
    p = patches.reshape(NSUPER, GROUPS_PER_SUPER, BATCH, N_PATCHES, PATCH_DIM)
    p = jnp.transpose(p, (0, 2, 3, 1, 4))                              # (S, B, N, G, PD)
    pad = jnp.zeros((NSUPER, BATCH, 1, GROUPS_PER_SUPER, PATCH_DIM), p.dtype)
    rows = jnp.concatenate([pad, p], axis=2)                           # (S, B, SEQ, G, PD)
    return rows.reshape(TOTAL_ROWS, PATCH_DIM).astype(jnp.bfloat16)


# ----------------------------- pallas wrapper --------------------------------
@jax.jit
def vit_forward(x, p):
    rows = _build_patch_rows(x)
    args = (rows, p["head_mask"], p["wp"], p["bp"], p["cls"], p["pos"],
            p["ln_g"], p["ln_b"], p["wqkv"], p["bqkv"], p["wo"], p["bo"],
            p["w1"], p["b1"], p["w2"], p["b2"],
            p["hg"], p["hb"], p["hw1"], p["hb1"], p["hw2"], p["hb2"])

    def resident(a):
        # Whole array as one block, same block index every grid step -> the
        # weight stays VMEM-resident (fetched once per core).
        zeros = (0,) * a.ndim
        return pl.BlockSpec(a.shape, lambda i, _z=zeros: _z)

    in_specs = [pl.BlockSpec((ROWS_PER_SUPER, PATCH_DIM), lambda i: (i, 0))]
    in_specs += [resident(a) for a in args[1:]]

    out = pl.pallas_call(
        vit_kernel,
        grid_spec=pltpu.PrefetchScalarGridSpec(
            num_scalar_prefetch=0,
            grid=(NSUPER,),
            in_specs=in_specs,
            out_specs=pl.BlockSpec((IMAGES_PER_SUPER, NUM_CLASSES),
                                   lambda i: (i, 0)),
        ),
        out_shape=jax.ShapeDtypeStruct((TOTAL_IMAGES, NUM_CLASSES), jnp.float32),
        compiler_params=pltpu.CompilerParams(
            dimension_semantics=("parallel",)),      # megacore on v7x
    )(*args)

    # kernel row order is (super, b, g) -> reorder to (forward, b, classes)
    out = out.reshape(NSUPER, BATCH, GROUPS_PER_SUPER, NUM_CLASSES)
    return jnp.transpose(out, (0, 2, 1, 3)).reshape(NFWD, BATCH, NUM_CLASSES)


# -------------------------- deterministic params ----------------------------
def init_params(key):
    keys = jax.random.split(key, 5 + NUM_ENCODERS)
    k_wp, k_cls, k_pos, k_h1, k_h2 = keys[:5]
    enc_keys = keys[5:]
    scale = 0.02
    bf16 = jnp.bfloat16

    def lin(k, in_dim, out_dim):
        kw, kb = jax.random.split(k)
        w = jax.random.normal(kw, (out_dim, in_dim), jnp.float32) * scale  # torch (out,in)
        b = jax.random.normal(kb, (out_dim,), jnp.float32) * scale
        return w.T, b                                                      # (in,out), (out,)

    wp, bp = lin(k_wp, PATCH_DIM, LATENT)
    cls = jax.random.normal(k_cls, (BATCH, LATENT), jnp.float32) * scale
    pos = jax.random.normal(k_pos, (BATCH, LATENT), jnp.float32) * scale

    wqkv, bqkv, wo, bo, w1, b1, w2, b2 = ([] for _ in range(8))
    for ek in enc_keys:
        k1, k2, k3, k4 = jax.random.split(ek, 4)
        a, ab = lin(k1, LATENT, 3 * LATENT); wqkv.append(a); bqkv.append(ab)
        c, cb = lin(k2, LATENT, LATENT);     wo.append(c);   bo.append(cb)
        d, db = lin(k3, LATENT, MLP_HIDDEN); w1.append(d);   b1.append(db)
        e, eb = lin(k4, MLP_HIDDEN, LATENT); w2.append(e);   b2.append(eb)

    hw1, hb1 = lin(k_h1, LATENT, LATENT)
    hw2, hb2 = lin(k_h2, LATENT, NUM_CLASSES)

    # block-diagonal per-head mask, pre-scaled by 1/sqrt(head_dim)
    hid = jnp.arange(LATENT) // HEAD_DIM
    head_mask = ((hid[:, None] == hid[None, :]).astype(jnp.float32)
                 / math.sqrt(HEAD_DIM))

    return {
        "head_mask": head_mask,
        # matmul weights stored bf16 (halves weight DMA, single-pass MXU);
        # biases / LN params / tiny head output weight stay f32.
        "wp": wp.astype(bf16), "bp": bp.reshape(1, LATENT),
        "cls": cls, "pos": pos,
        "ln_g": jnp.ones((NUM_ENCODERS, LATENT), jnp.float32),
        "ln_b": jnp.zeros((NUM_ENCODERS, LATENT), jnp.float32),
        "wqkv": jnp.stack(wqkv).astype(bf16), "bqkv": jnp.stack(bqkv),
        "wo": jnp.stack(wo).astype(bf16), "bo": jnp.stack(bo),
        "w1": jnp.stack(w1).astype(bf16), "b1": jnp.stack(b1),
        "w2": jnp.stack(w2).astype(bf16), "b2": jnp.stack(b2),
        "hg": jnp.ones((1, LATENT), jnp.float32),
        "hb": jnp.zeros((1, LATENT), jnp.float32),
        "hw1": hw1.astype(bf16), "hb1": hb1.reshape(1, LATENT),
        "hw2": hw2, "hb2": hb2.reshape(1, NUM_CLASSES),
    }


# ---------------------------- pure-JAX reference ----------------------------
def vit_reference(x, p):
    """Faithful f32 forward (erf GELU, exact softmax), vmapped over forwards."""
    f32 = jnp.float32
    mm = functools.partial(jnp.matmul, precision=jax.lax.Precision.HIGHEST)
    wp = p["wp"].astype(f32)
    wqkv = p["wqkv"].astype(f32)
    wo = p["wo"].astype(f32)
    w1 = p["w1"].astype(f32)
    w2 = p["w2"].astype(f32)
    hw1 = p["hw1"].astype(f32)
    hw2 = p["hw2"].astype(f32)
    scale = 1.0 / math.sqrt(HEAD_DIM)

    def single(img_pair):                               # (BATCH, C, IMG, IMG)
        patches = extract_patches(img_pair)             # (B, N, PD)
        proj = mm(patches, wp) + p["bp"]
        tokens = (jnp.concatenate([p["cls"][:, None, :], proj], axis=1)
                  + p["pos"][:, None, :])
        h = jnp.transpose(tokens, (1, 0, 2))            # (S, B, E)
        for l in range(NUM_ENCODERS):
            g, be = p["ln_g"][l], p["ln_b"][l]
            n1 = _layernorm(h, g, be)
            qkv = mm(n1, wqkv[l]) + p["bqkv"][l]
            q, k, v = jnp.split(qkv, 3, axis=-1)
            q = q.reshape(SEQ, BATCH, HEADS, HEAD_DIM)
            k = k.reshape(SEQ, BATCH, HEADS, HEAD_DIM)
            v = v.reshape(SEQ, BATCH, HEADS, HEAD_DIM)
            s = jnp.einsum("sihd,sjhd->shij", q * scale, k,
                           precision=jax.lax.Precision.HIGHEST)
            pw = jax.nn.softmax(s, axis=-1)
            o = jnp.einsum("shij,sjhd->sihd", pw, v,
                           precision=jax.lax.Precision.HIGHEST)
            o = o.reshape(SEQ, BATCH, LATENT)
            attn = mm(o, wo[l]) + p["bo"][l]
            r1 = h + attn
            n2 = _layernorm(r1, g, be)
            h1 = mm(n2, w1[l]) + p["b1"][l]
            h1 = 0.5 * h1 * (1.0 + jax.lax.erf(h1 * _INV_SQRT2))
            h = r1 + mm(h1, w2[l]) + p["b2"][l]
        cls_out = h[0]
        n = _layernorm(cls_out, p["hg"], p["hb"])
        z = mm(n, hw1) + p["hb1"]
        return mm(z, hw2) + p["hb2"]

    return jax.vmap(single)(x)


# --------------------------------- main --------------------------------------
if __name__ == "__main__":
    key = jax.random.PRNGKey(0)
    kx, kp = jax.random.split(key)
    # NFWD independent 2-image forwards batched into one kernel call.
    x = jax.random.normal(kx, (NFWD, BATCH, CHANNELS, IMG, IMG), jnp.float32)
    params = init_params(kp)

    out = jax.block_until_ready(vit_forward(x, params))
    ref = jax.block_until_ready(vit_reference(x, params))

    assert out.shape == (NFWD, BATCH, NUM_CLASSES), out.shape
    if not jnp.allclose(out, ref, atol=1e-2, rtol=1e-2):
        raise AssertionError(f"kernel mismatch: max err "
                             f"{jnp.max(jnp.abs(out - ref))}")
    print("KERNEL_OK")
</pallas_src>

<mosaic_0001>
module attributes {stable_mosaic.version = 11 : i64} {
  func.func @vit_kernel(%arg0: i32, %arg1: memref<160x768xbf16, #tpu.memory_space<vmem>>, %arg2: memref<128x128xf32, #tpu.memory_space<vmem>>, %arg3: memref<768x128xbf16, #tpu.memory_space<vmem>>, %arg4: memref<1x128xf32, #tpu.memory_space<vmem>>, %arg5: memref<2x128xf32, #tpu.memory_space<vmem>>, %arg6: memref<2x128xf32, #tpu.memory_space<vmem>>, %arg7: memref<2x128xf32, #tpu.memory_space<vmem>>, %arg8: memref<2x128xf32, #tpu.memory_space<vmem>>, %arg9: memref<2x128x384xbf16, #tpu.memory_space<vmem>>, %arg10: memref<2x384xf32, #tpu.memory_space<vmem>>, %arg11: memref<2x128x128xbf16, #tpu.memory_space<vmem>>, %arg12: memref<2x128xf32, #tpu.memory_space<vmem>>, %arg13: memref<2x128x512xbf16, #tpu.memory_space<vmem>>, %arg14: memref<2x512xf32, #tpu.memory_space<vmem>>, %arg15: memref<2x512x128xbf16, #tpu.memory_space<vmem>>, %arg16: memref<2x128xf32, #tpu.memory_space<vmem>>, %arg17: memref<1x128xf32, #tpu.memory_space<vmem>>, %arg18: memref<1x128xf32, #tpu.memory_space<vmem>>, %arg19: memref<128x128xbf16, #tpu.memory_space<vmem>>, %arg20: memref<1x128xf32, #tpu.memory_space<vmem>>, %arg21: memref<128x4xf32, #tpu.memory_space<vmem>>, %arg22: memref<1x4xf32, #tpu.memory_space<vmem>>, %arg23: memref<32x4xf32, #tpu.memory_space<vmem>>) attributes {dimension_semantics = [#tpu.dimension_semantics<parallel>], iteration_bounds = array<i64: 2>, scalar_prefetch = 0 : i64, scratch_operands = 0 : i64, tpu.core_type = #tpu.core_type<tc>, window_params = [{transform_indices = @transform_0, window_bounds = array<i64: 160, 768>}, {pipeline_mode = #tpu.pipeline_mode<synchronous>, transform_indices = @transform_1, window_bounds = array<i64: 128, 128>}, {pipeline_mode = #tpu.pipeline_mode<synchronous>, transform_indices = @transform_2, window_bounds = array<i64: 768, 128>}, {pipeline_mode = #tpu.pipeline_mode<synchronous>, transform_indices = @transform_3, window_bounds = array<i64: 1, 128>}, {pipeline_mode = #tpu.pipeline_mode<synchronous>, transform_indices = @transform_4, window_bounds = array<i64: 2, 128>}, {pipeline_mode = #tpu.pipeline_mode<synchronous>, transform_indices = @transform_5, window_bounds = array<i64: 2, 128>}, {pipeline_mode = #tpu.pipeline_mode<synchronous>, transform_indices = @transform_6, window_bounds = array<i64: 2, 128>}, {pipeline_mode = #tpu.pipeline_mode<synchronous>, transform_indices = @transform_7, window_bounds = array<i64: 2, 128>}, {pipeline_mode = #tpu.pipeline_mode<synchronous>, transform_indices = @transform_8, window_bounds = array<i64: 2, 128, 384>}, {pipeline_mode = #tpu.pipeline_mode<synchronous>, transform_indices = @transform_9, window_bounds = array<i64: 2, 384>}, {pipeline_mode = #tpu.pipeline_mode<synchronous>, transform_indices = @transform_10, window_bounds = array<i64: 2, 128, 128>}, {pipeline_mode = #tpu.pipeline_mode<synchronous>, transform_indices = @transform_11, window_bounds = array<i64: 2, 128>}, {pipeline_mode = #tpu.pipeline_mode<synchronous>, transform_indices = @transform_12, window_bounds = array<i64: 2, 128, 512>}, {pipeline_mode = #tpu.pipeline_mode<synchronous>, transform_indices = @transform_13, window_bounds = array<i64: 2, 512>}, {pipeline_mode = #tpu.pipeline_mode<synchronous>, transform_indices = @transform_14, window_bounds = array<i64: 2, 512, 128>}, {pipeline_mode = #tpu.pipeline_mode<synchronous>, transform_indices = @transform_15, window_bounds = array<i64: 2, 128>}, {pipeline_mode = #tpu.pipeline_mode<synchronous>, transform_indices = @transform_16, window_bounds = array<i64: 1, 128>}, {pipeline_mode = #tpu.pipeline_mode<synchronous>, transform_indices = @transform_17, window_bounds = array<i64: 1, 128>}, {pipeline_mode = #tpu.pipeline_mode<synchronous>, transform_indices = @transform_18, window_bounds = array<i64: 128, 128>}, {pipeline_mode = #tpu.pipeline_mode<synchronous>, transform_indices = @transform_19, window_bounds = array<i64: 1, 128>}, {pipeline_mode = #tpu.pipeline_mode<synchronous>, transform_indices = @transform_20, window_bounds = array<i64: 128, 4>}, {pipeline_mode = #tpu.pipeline_mode<synchronous>, transform_indices = @transform_21, window_bounds = array<i64: 1, 4>}, {transform_indices = @transform_22, window_bounds = array<i64: 32, 4>}]} {
    %c0 = arith.constant 0 : index
    %c0_0 = arith.constant 0 : index
    %0 = vector.load %arg1[%c0, %c0_0] : memref<160x768xbf16, #tpu.memory_space<vmem>>, vector<160x768xbf16>
    %c0_1 = arith.constant 0 : index
    %c0_2 = arith.constant 0 : index
    %1 = vector.load %arg3[%c0_1, %c0_2] : memref<768x128xbf16, #tpu.memory_space<vmem>>, vector<768x128xbf16>
    %cst = arith.constant dense<0.000000e+00> : vector<160x128xf32>
    %2 = tpu.matmul %0, %1, %cst {dimension_numbers = #tpu.dot_dimension_numbers<[1], [0], [0], [1], [0, 0, 1, 1], [], []>} : vector<160x768xbf16>, vector<768x128xbf16>, vector<160x128xf32> -> vector<160x128xf32>
    %c0_3 = arith.constant 0 : index
    %c0_4 = arith.constant 0 : index
    %3 = vector.load %arg4[%c0_3, %c0_4] : memref<1x128xf32, #tpu.memory_space<vmem>>, vector<1x128xf32>
    %4 = vector.broadcast %3 : vector<1x128xf32> to vector<160x128xf32>
    %5 = arith.addf %2, %4 : vector<160x128xf32>
    %6 = tpu.iota {dimensions = array<i32: 0>} : vector<160x128xi32>
    %c80_i32 = arith.constant 80 : i32
    %7 = vector.broadcast %c80_i32 : i32 to vector<160x128xi32>
    %8 = arith.cmpi sge, %6, %7 : vector<160x128xi32>
    %c1 = arith.constant 1 : index
    %c0_5 = arith.constant 0 : index
    %9 = vector.load %arg6[%c1, %c0_5] : memref<2x128xf32, #tpu.memory_space<vmem>>, vector<1x128xf32>
    %c0_6 = arith.constant 0 : index
    %c0_7 = arith.constant 0 : index
    %10 = vector.load %arg6[%c0_6, %c0_7] : memref<2x128xf32, #tpu.memory_space<vmem>>, vector<1x128xf32>
    %11 = vector.shape_cast %9 : vector<1x128xf32> to vector<1x128xf32>
    %12 = vector.broadcast %11 : vector<1x128xf32> to vector<160x128xf32>
    %13 = vector.shape_cast %10 : vector<1x128xf32> to vector<1x128xf32>
    %14 = vector.broadcast %13 : vector<1x128xf32> to vector<160x128xf32>
    %15 = arith.select %8, %12, %14 : vector<160x128xi1>, vector<160x128xf32>
    %c1_8 = arith.constant 1 : index
    %c0_9 = arith.constant 0 : index
    %16 = vector.load %arg5[%c1_8, %c0_9] : memref<2x128xf32, #tpu.memory_space<vmem>>, vector<1x128xf32>
    %c0_10 = arith.constant 0 : index
    %c0_11 = arith.constant 0 : index
    %17 = vector.load %arg5[%c0_10, %c0_11] : memref<2x128xf32, #tpu.memory_space<vmem>>, vector<1x128xf32>
    %18 = vector.shape_cast %16 : vector<1x128xf32> to vector<1x128xf32>
    %19 = vector.broadcast %18 : vector<1x128xf32> to vector<160x128xf32>
    %20 = vector.shape_cast %17 : vector<1x128xf32> to vector<1x128xf32>
    %21 = vector.broadcast %20 : vector<1x128xf32> to vector<160x128xf32>
    %22 = arith.select %8, %19, %21 : vector<160x128xi1>, vector<160x128xf32>
    %c16_i32 = arith.constant 16 : i32
    %23 = vector.broadcast %c16_i32 : i32 to vector<160x128xi32>
    %24 = arith.cmpi slt, %6, %23 : vector<160x128xi32>
    %c80_i32_12 = arith.constant 80 : i32
    %25 = vector.broadcast %c80_i32_12 : i32 to vector<160x128xi32>
    %26 = arith.cmpi sge, %6, %25 : vector<160x128xi32>
    %c96_i32 = arith.constant 96 : i32
    %27 = vector.broadcast %c96_i32 : i32 to vector<160x128xi32>
    %28 = arith.cmpi slt, %6, %27 : vector<160x128xi32>
    %29 = arith.andi %26, %28 : vector<160x128xi1>
    %30 = arith.ori %24, %29 : vector<160x128xi1>
    %31 = arith.select %30, %22, %5 : vector<160x128xi1>, vector<160x128xf32>
    %32 = arith.addf %31, %15 : vector<160x128xf32>
    %c0_13 = arith.constant 0 : index
    %c0_14 = arith.constant 0 : index
    %33 = vector.load %arg2[%c0_13, %c0_14] : memref<128x128xf32, #tpu.memory_space<vmem>>, vector<128x128xf32>
    %c0_15 = arith.constant 0 : index
    %c0_16 = arith.constant 0 : index
    %34 = vector.load %arg7[%c0_15, %c0_16] : memref<2x128xf32, #tpu.memory_space<vmem>>, vector<1x128xf32>
    %c0_17 = arith.constant 0 : index
    %c0_18 = arith.constant 0 : index
    %35 = vector.load %arg8[%c0_17, %c0_18] : memref<2x128xf32, #tpu.memory_space<vmem>>, vector<1x128xf32>
    %cst_19 = arith.constant dense<0.000000e+00> : vector<160xf32>
    %36 = vector.multi_reduction <add>, %32, %cst_19 [1] : vector<160x128xf32> to vector<160xf32>
    %37 = vector.shape_cast %36 : vector<160xf32> to vector<160x1xf32>
    %cst_20 = arith.constant 1.280000e+02 : f32
    %38 = vector.broadcast %cst_20 : f32 to vector<160x1xf32>
    %39 = arith.divf %37, %38 : vector<160x1xf32>
    %40 = vector.broadcast %39 : vector<160x1xf32> to vector<160x128xf32>
    %41 = arith.subf %32, %40 : vector<160x128xf32>
    %42 = arith.mulf %41, %41 : vector<160x128xf32>
    %cst_21 = arith.constant dense<0.000000e+00> : vector<160xf32>
    %43 = vector.multi_reduction <add>, %42, %cst_21 [1] : vector<160x128xf32> to vector<160xf32>
    %44 = vector.shape_cast %43 : vector<160xf32> to vector<160x1xf32>
    %cst_22 = arith.constant 1.280000e+02 : f32
    %45 = vector.broadcast %cst_22 : f32 to vector<160x1xf32>
    %46 = arith.divf %44, %45 : vector<160x1xf32>
    %47 = vector.broadcast %39 : vector<160x1xf32> to vector<160x128xf32>
    %48 = arith.subf %32, %47 : vector<160x128xf32>
    %cst_23 = arith.constant 9.99999974E-6 : f32
    %49 = vector.broadcast %cst_23 : f32 to vector<160x1xf32>
    %50 = arith.addf %46, %49 : vector<160x1xf32>
    %51 = math.rsqrt %50 : vector<160x1xf32>
    %52 = vector.broadcast %51 : vector<160x1xf32> to vector<160x128xf32>
    %53 = arith.mulf %48, %52 : vector<160x128xf32>
    %54 = vector.broadcast %34 : vector<1x128xf32> to vector<160x128xf32>
    %55 = arith.mulf %53, %54 : vector<160x128xf32>
    %56 = vector.broadcast %35 : vector<1x128xf32> to vector<160x128xf32>
    %57 = arith.addf %55, %56 : vector<160x128xf32>
    %58 = arith.truncf %57 : vector<160x128xf32> to vector<160x128xbf16>
    %c0_24 = arith.constant 0 : index
    %c0_25 = arith.constant 0 : index
    %c0_26 = arith.constant 0 : index
    %59 = vector.load %arg9[%c0_24, %c0_25, %c0_26] : memref<2x128x384xbf16, #tpu.memory_space<vmem>>, vector<1x128x384xbf16>
    %60 = vector.shape_cast %59 : vector<1x128x384xbf16> to vector<128x384xbf16>
    %cst_27 = arith.constant dense<0.000000e+00> : vector<160x384xf32>
    %61 = tpu.matmul %58, %60, %cst_27 {dimension_numbers = #tpu.dot_dimension_numbers<[1], [0], [0], [1], [0, 0, 1, 1], [], []>} : vector<160x128xbf16>, vector<128x384xbf16>, vector<160x384xf32> -> vector<160x384xf32>
    %c0_28 = arith.constant 0 : index
    %c0_29 = arith.constant 0 : index
    %62 = vector.load %arg10[%c0_28, %c0_29] : memref<2x384xf32, #tpu.memory_space<vmem>>, vector<1x384xf32>
    %63 = vector.broadcast %62 : vector<1x384xf32> to vector<160x384xf32>
    %64 = arith.addf %61, %63 : vector<160x384xf32>
    %65 = vector.extract_strided_slice %64 {offsets = [0, 0], sizes = [160, 128], strides = [1, 1]} : vector<160x384xf32> to vector<160x128xf32>
    %66 = vector.extract_strided_slice %64 {offsets = [0, 128], sizes = [160, 128], strides = [1, 1]} : vector<160x384xf32> to vector<160x128xf32>
    %67 = vector.extract_strided_slice %64 {offsets = [0, 256], sizes = [160, 128], strides = [1, 1]} : vector<160x384xf32> to vector<160x128xf32>
    %68 = vector.extract_strided_slice %66 {offsets = [0, 0], sizes = [80, 128], strides = [1, 1]} : vector<160x128xf32> to vector<80x128xf32>
    %69 = vector.extract_strided_slice %66 {offsets = [80, 0], sizes = [80, 128], strides = [1, 1]} : vector<160x128xf32> to vector<80x128xf32>
    %70 = arith.subf %68, %69 : vector<80x128xf32>
    %71 = vector.extract_strided_slice %67 {offsets = [80, 0], sizes = [80, 128], strides = [1, 1]} : vector<160x128xf32> to vector<80x128xf32>
    %72 = vector.extract_strided_slice %67 {offsets = [0, 0], sizes = [80, 128], strides = [1, 1]} : vector<160x128xf32> to vector<80x128xf32>
    %73 = arith.subf %71, %72 : vector<80x128xf32>
    %cst_30 = arith.constant 0.000000e+00 : f32
    %74 = vector.broadcast %cst_30 : f32 to vector<80x128xf32>
    %75 = arith.subf %74, %70 : vector<80x128xf32>
    %76 = tpu.concatenate %70, %75 in 0 : vector<80x128xf32>, vector<80x128xf32> -> vector<160x128xf32>
    %77 = arith.mulf %65, %76 : vector<160x128xf32>
    %cst_31 = arith.constant dense<0.000000e+00> : vector<160x128xf32>
    %78 = tpu.matmul %77, %33, %cst_31 {dimension_numbers = #tpu.dot_dimension_numbers<[1], [0], [0], [1], [0, 0, 1, 1], [], []>} : vector<160x128xf32>, vector<128x128xf32>, vector<160x128xf32> -> vector<160x128xf32>
    %cst_32 = arith.constant 0.000000e+00 : f32
    %79 = vector.broadcast %cst_32 : f32 to vector<160x128xf32>
    %80 = arith.subf %79, %78 : vector<160x128xf32>
    %81 = arith.negf %80 : vector<160x128xf32>
    %82 = math.exp %81 : vector<160x128xf32>
    %cst_33 = arith.constant 1.000000e+00 : f32
    %83 = vector.broadcast %cst_33 : f32 to vector<160x128xf32>
    %84 = arith.addf %83, %82 : vector<160x128xf32>
    %85 = arith.divf %83, %84 : vector<160x128xf32>
    %86 = vector.extract_strided_slice %85 {offsets = [0, 0], sizes = [80, 128], strides = [1, 1]} : vector<160x128xf32> to vector<80x128xf32>
    %87 = arith.mulf %86, %73 : vector<80x128xf32>
    %88 = vector.extract_strided_slice %85 {offsets = [80, 0], sizes = [80, 128], strides = [1, 1]} : vector<160x128xf32> to vector<80x128xf32>
    %cst_34 = arith.constant 0.000000e+00 : f32
    %89 = vector.broadcast %cst_34 : f32 to vector<80x128xf32>
    %90 = arith.subf %89, %73 : vector<80x128xf32>
    %91 = arith.mulf %88, %90 : vector<80x128xf32>
    %92 = tpu.concatenate %87, %91 in 0 : vector<80x128xf32>, vector<80x128xf32> -> vector<160x128xf32>
    %93 = arith.addf %67, %92 : vector<160x128xf32>
    %94 = arith.truncf %93 : vector<160x128xf32> to vector<160x128xbf16>
    %c0_35 = arith.constant 0 : index
    %c0_36 = arith.constant 0 : index
    %c0_37 = arith.constant 0 : index
    %95 = vector.load %arg11[%c0_35, %c0_36, %c0_37] : memref<2x128x128xbf16, #tpu.memory_space<vmem>>, vector<1x128x128xbf16>
    %96 = vector.shape_cast %95 : vector<1x128x128xbf16> to vector<128x128xbf16>
    %cst_38 = arith.constant dense<0.000000e+00> : vector<160x128xf32>
    %97 = tpu.matmul %94, %96, %cst_38 {dimension_numbers = #tpu.dot_dimension_numbers<[1], [0], [0], [1], [0, 0, 1, 1], [], []>} : vector<160x128xbf16>, vector<128x128xbf16>, vector<160x128xf32> -> vector<160x128xf32>
    %c0_39 = arith.constant 0 : index
    %c0_40 = arith.constant 0 : index
    %98 = vector.load %arg12[%c0_39, %c0_40] : memref<2x128xf32, #tpu.memory_space<vmem>>, vector<1x128xf32>
    %99 = vector.broadcast %98 : vector<1x128xf32> to vector<160x128xf32>
    %100 = arith.addf %97, %99 : vector<160x128xf32>
    %101 = arith.addf %32, %100 : vector<160x128xf32>
    %cst_41 = arith.constant dense<0.000000e+00> : vector<160xf32>
    %102 = vector.multi_reduction <add>, %101, %cst_41 [1] : vector<160x128xf32> to vector<160xf32>
    %103 = vector.shape_cast %102 : vector<160xf32> to vector<160x1xf32>
    %cst_42 = arith.constant 1.280000e+02 : f32
    %104 = vector.broadcast %cst_42 : f32 to vector<160x1xf32>
    %105 = arith.divf %103, %104 : vector<160x1xf32>
    %106 = vector.broadcast %105 : vector<160x1xf32> to vector<160x128xf32>
    %107 = arith.subf %101, %106 : vector<160x128xf32>
    %108 = arith.mulf %107, %107 : vector<160x128xf32>
    %cst_43 = arith.constant dense<0.000000e+00> : vector<160xf32>
    %109 = vector.multi_reduction <add>, %108, %cst_43 [1] : vector<160x128xf32> to vector<160xf32>
    %110 = vector.shape_cast %109 : vector<160xf32> to vector<160x1xf32>
    %cst_44 = arith.constant 1.280000e+02 : f32
    %111 = vector.broadcast %cst_44 : f32 to vector<160x1xf32>
    %112 = arith.divf %110, %111 : vector<160x1xf32>
    %113 = vector.broadcast %105 : vector<160x1xf32> to vector<160x128xf32>
    %114 = arith.subf %101, %113 : vector<160x128xf32>
    %cst_45 = arith.constant 9.99999974E-6 : f32
    %115 = vector.broadcast %cst_45 : f32 to vector<160x1xf32>
    %116 = arith.addf %112, %115 : vector<160x1xf32>
    %117 = math.rsqrt %116 : vector<160x1xf32>
    %118 = vector.broadcast %117 : vector<160x1xf32> to vector<160x128xf32>
    %119 = arith.mulf %114, %118 : vector<160x128xf32>
    %120 = vector.broadcast %34 : vector<1x128xf32> to vector<160x128xf32>
    %121 = arith.mulf %119, %120 : vector<160x128xf32>
    %122 = vector.broadcast %35 : vector<1x128xf32> to vector<160x128xf32>
    %123 = arith.addf %121, %122 : vector<160x128xf32>
    %124 = arith.truncf %123 : vector<160x128xf32> to vector<160x128xbf16>
    %c0_46 = arith.constant 0 : index
    %c0_47 = arith.constant 0 : index
    %c0_48 = arith.constant 0 : index
    %125 = vector.load %arg13[%c0_46, %c0_47, %c0_48] : memref<2x128x512xbf16, #tpu.memory_space<vmem>>, vector<1x128x512xbf16>
    %126 = vector.shape_cast %125 : vector<1x128x512xbf16> to vector<128x512xbf16>
    %cst_49 = arith.constant dense<0.000000e+00> : vector<160x512xf32>
    %127 = tpu.matmul %124, %126, %cst_49 {dimension_numbers = #tpu.dot_dimension_numbers<[1], [0], [0], [1], [0, 0, 1, 1], [], []>} : vector<160x128xbf16>, vector<128x512xbf16>, vector<160x512xf32> -> vector<160x512xf32>
    %c0_50 = arith.constant 0 : index
    %c0_51 = arith.constant 0 : index
    %128 = vector.load %arg14[%c0_50, %c0_51] : memref<2x512xf32, #tpu.memory_space<vmem>>, vector<1x512xf32>
    %129 = vector.broadcast %128 : vector<1x512xf32> to vector<160x512xf32>
    %130 = arith.addf %127, %129 : vector<160x512xf32>
    %131 = arith.mulf %130, %130 : vector<160x512xf32>
    %132 = arith.mulf %130, %131 : vector<160x512xf32>
    %cst_52 = arith.constant 4.471500e-02 : f32
    %133 = vector.broadcast %cst_52 : f32 to vector<160x512xf32>
    %134 = arith.mulf %133, %132 : vector<160x512xf32>
    %135 = arith.addf %130, %134 : vector<160x512xf32>
    %cst_53 = arith.constant 0.797884583 : f32
    %136 = vector.broadcast %cst_53 : f32 to vector<160x512xf32>
    %137 = arith.mulf %136, %135 : vector<160x512xf32>
    %138 = math.tanh %137 : vector<160x512xf32>
    %cst_54 = arith.constant 1.000000e+00 : f32
    %139 = vector.broadcast %cst_54 : f32 to vector<160x512xf32>
    %140 = arith.addf %139, %138 : vector<160x512xf32>
    %cst_55 = arith.constant 5.000000e-01 : f32
    %141 = vector.broadcast %cst_55 : f32 to vector<160x512xf32>
    %142 = arith.mulf %141, %140 : vector<160x512xf32>
    %143 = arith.mulf %130, %142 : vector<160x512xf32>
    %144 = arith.truncf %143 : vector<160x512xf32> to vector<160x512xbf16>
    %c0_56 = arith.constant 0 : index
    %c0_57 = arith.constant 0 : index
    %c0_58 = arith.constant 0 : index
    %145 = vector.load %arg15[%c0_56, %c0_57, %c0_58] : memref<2x512x128xbf16, #tpu.memory_space<vmem>>, vector<1x512x128xbf16>
    %146 = vector.shape_cast %145 : vector<1x512x128xbf16> to vector<512x128xbf16>
    %cst_59 = arith.constant dense<0.000000e+00> : vector<160x128xf32>
    %147 = tpu.matmul %144, %146, %cst_59 {dimension_numbers = #tpu.dot_dimension_numbers<[1], [0], [0], [1], [0, 0, 1, 1], [], []>} : vector<160x512xbf16>, vector<512x128xbf16>, vector<160x128xf32> -> vector<160x128xf32>
    %c0_60 = arith.constant 0 : index
    %c0_61 = arith.constant 0 : index
    %148 = vector.load %arg16[%c0_60, %c0_61] : memref<2x128xf32, #tpu.memory_space<vmem>>, vector<1x128xf32>
    %149 = vector.broadcast %148 : vector<1x128xf32> to vector<160x128xf32>
    %150 = arith.addf %147, %149 : vector<160x128xf32>
    %151 = arith.addf %101, %150 : vector<160x128xf32>
    %c1_62 = arith.constant 1 : index
    %c0_63 = arith.constant 0 : index
    %152 = vector.load %arg7[%c1_62, %c0_63] : memref<2x128xf32, #tpu.memory_space<vmem>>, vector<1x128xf32>
    %c1_64 = arith.constant 1 : index
    %c0_65 = arith.constant 0 : index
    %153 = vector.load %arg8[%c1_64, %c0_65] : memref<2x128xf32, #tpu.memory_space<vmem>>, vector<1x128xf32>
    %cst_66 = arith.constant dense<0.000000e+00> : vector<160xf32>
    %154 = vector.multi_reduction <add>, %151, %cst_66 [1] : vector<160x128xf32> to vector<160xf32>
    %155 = vector.shape_cast %154 : vector<160xf32> to vector<160x1xf32>
    %cst_67 = arith.constant 1.280000e+02 : f32
    %156 = vector.broadcast %cst_67 : f32 to vector<160x1xf32>
    %157 = arith.divf %155, %156 : vector<160x1xf32>
    %158 = vector.broadcast %157 : vector<160x1xf32> to vector<160x128xf32>
    %159 = arith.subf %151, %158 : vector<160x128xf32>
    %160 = arith.mulf %159, %159 : vector<160x128xf32>
    %cst_68 = arith.constant dense<0.000000e+00> : vector<160xf32>
    %161 = vector.multi_reduction <add>, %160, %cst_68 [1] : vector<160x128xf32> to vector<160xf32>
    %162 = vector.shape_cast %161 : vector<160xf32> to vector<160x1xf32>
    %cst_69 = arith.constant 1.280000e+02 : f32
    %163 = vector.broadcast %cst_69 : f32 to vector<160x1xf32>
    %164 = arith.divf %162, %163 : vector<160x1xf32>
    %165 = vector.broadcast %157 : vector<160x1xf32> to vector<160x128xf32>
    %166 = arith.subf %151, %165 : vector<160x128xf32>
    %cst_70 = arith.constant 9.99999974E-6 : f32
    %167 = vector.broadcast %cst_70 : f32 to vector<160x1xf32>
    %168 = arith.addf %164, %167 : vector<160x1xf32>
    %169 = math.rsqrt %168 : vector<160x1xf32>
    %170 = vector.broadcast %169 : vector<160x1xf32> to vector<160x128xf32>
    %171 = arith.mulf %166, %170 : vector<160x128xf32>
    %172 = vector.broadcast %152 : vector<1x128xf32> to vector<160x128xf32>
    %173 = arith.mulf %171, %172 : vector<160x128xf32>
    %174 = vector.broadcast %153 : vector<1x128xf32> to vector<160x128xf32>
    %175 = arith.addf %173, %174 : vector<160x128xf32>
    %176 = arith.truncf %175 : vector<160x128xf32> to vector<160x128xbf16>
    %c1_71 = arith.constant 1 : index
    %c0_72 = arith.constant 0 : index
    %c0_73 = arith.constant 0 : index
    %177 = vector.load %arg9[%c1_71, %c0_72, %c0_73] : memref<2x128x384xbf16, #tpu.memory_space<vmem>>, vector<1x128x384xbf16>
    %178 = vector.shape_cast %177 : vector<1x128x384xbf16> to vector<128x384xbf16>
    %cst_74 = arith.constant dense<0.000000e+00> : vector<160x384xf32>
    %179 = tpu.matmul %176, %178, %cst_74 {dimension_numbers = #tpu.dot_dimension_numbers<[1], [0], [0], [1], [0, 0, 1, 1], [], []>} : vector<160x128xbf16>, vector<128x384xbf16>, vector<160x384xf32> -> vector<160x384xf32>
    %c1_75 = arith.constant 1 : index
    %c0_76 = arith.constant 0 : index
    %180 = vector.load %arg10[%c1_75, %c0_76] : memref<2x384xf32, #tpu.memory_space<vmem>>, vector<1x384xf32>
    %181 = vector.broadcast %180 : vector<1x384xf32> to vector<160x384xf32>
    %182 = arith.addf %179, %181 : vector<160x384xf32>
    %183 = vector.extract_strided_slice %182 {offsets = [0, 0], sizes = [160, 128], strides = [1, 1]} : vector<160x384xf32> to vector<160x128xf32>
    %184 = vector.extract_strided_slice %182 {offsets = [0, 128], sizes = [160, 128], strides = [1, 1]} : vector<160x384xf32> to vector<160x128xf32>
    %185 = vector.extract_strided_slice %182 {offsets = [0, 256], sizes = [160, 128], strides = [1, 1]} : vector<160x384xf32> to vector<160x128xf32>
    %186 = vector.extract_strided_slice %184 {offsets = [0, 0], sizes = [80, 128], strides = [1, 1]} : vector<160x128xf32> to vector<80x128xf32>
    %187 = vector.extract_strided_slice %184 {offsets = [80, 0], sizes = [80, 128], strides = [1, 1]} : vector<160x128xf32> to vector<80x128xf32>
    %188 = arith.subf %186, %187 : vector<80x128xf32>
    %189 = vector.extract_strided_slice %185 {offsets = [80, 0], sizes = [80, 128], strides = [1, 1]} : vector<160x128xf32> to vector<80x128xf32>
    %190 = vector.extract_strided_slice %185 {offsets = [0, 0], sizes = [80, 128], strides = [1, 1]} : vector<160x128xf32> to vector<80x128xf32>
    %191 = arith.subf %189, %190 : vector<80x128xf32>
    %cst_77 = arith.constant 0.000000e+00 : f32
    %192 = vector.broadcast %cst_77 : f32 to vector<80x128xf32>
    %193 = arith.subf %192, %188 : vector<80x128xf32>
    %194 = tpu.concatenate %188, %193 in 0 : vector<80x128xf32>, vector<80x128xf32> -> vector<160x128xf32>
    %195 = arith.mulf %183, %194 : vector<160x128xf32>
    %cst_78 = arith.constant dense<0.000000e+00> : vector<160x128xf32>
    %196 = tpu.matmul %195, %33, %cst_78 {dimension_numbers = #tpu.dot_dimension_numbers<[1], [0], [0], [1], [0, 0, 1, 1], [], []>} : vector<160x128xf32>, vector<128x128xf32>, vector<160x128xf32> -> vector<160x128xf32>
    %cst_79 = arith.constant 0.000000e+00 : f32
    %197 = vector.broadcast %cst_79 : f32 to vector<160x128xf32>
    %198 = arith.subf %197, %196 : vector<160x128xf32>
    %199 = arith.negf %198 : vector<160x128xf32>
    %200 = math.exp %199 : vector<160x128xf32>
    %cst_80 = arith.constant 1.000000e+00 : f32
    %201 = vector.broadcast %cst_80 : f32 to vector<160x128xf32>
    %202 = arith.addf %201, %200 : vector<160x128xf32>
    %203 = arith.divf %201, %202 : vector<160x128xf32>
    %204 = vector.extract_strided_slice %203 {offsets = [0, 0], sizes = [80, 128], strides = [1, 1]} : vector<160x128xf32> to vector<80x128xf32>
    %205 = arith.mulf %204, %191 : vector<80x128xf32>
    %206 = vector.extract_strided_slice %203 {offsets = [80, 0], sizes = [80, 128], strides = [1, 1]} : vector<160x128xf32> to vector<80x128xf32>
    %cst_81 = arith.constant 0.000000e+00 : f32
    %207 = vector.broadcast %cst_81 : f32 to vector<80x128xf32>
    %208 = arith.subf %207, %191 : vector<80x128xf32>
    %209 = arith.mulf %206, %208 : vector<80x128xf32>
    %210 = tpu.concatenate %205, %209 in 0 : vector<80x128xf32>, vector<80x128xf32> -> vector<160x128xf32>
    %211 = arith.addf %185, %210 : vector<160x128xf32>
    %212 = arith.truncf %211 : vector<160x128xf32> to vector<160x128xbf16>
    %c1_82 = arith.constant 1 : index
    %c0_83 = arith.constant 0 : index
    %c0_84 = arith.constant 0 : index
    %213 = vector.load %arg11[%c1_82, %c0_83, %c0_84] : memref<2x128x128xbf16, #tpu.memory_space<vmem>>, vector<1x128x128xbf16>
    %214 = vector.shape_cast %213 : vector<1x128x128xbf16> to vector<128x128xbf16>
    %cst_85 = arith.constant dense<0.000000e+00> : vector<160x128xf32>
    %215 = tpu.matmul %212, %214, %cst_85 {dimension_numbers = #tpu.dot_dimension_numbers<[1], [0], [0], [1], [0, 0, 1, 1], [], []>} : vector<160x128xbf16>, vector<128x128xbf16>, vector<160x128xf32> -> vector<160x128xf32>
    %c1_86 = arith.constant 1 : index
    %c0_87 = arith.constant 0 : index
    %216 = vector.load %arg12[%c1_86, %c0_87] : memref<2x128xf32, #tpu.memory_space<vmem>>, vector<1x128xf32>
    %217 = vector.broadcast %216 : vector<1x128xf32> to vector<160x128xf32>
    %218 = arith.addf %215, %217 : vector<160x128xf32>
    %219 = arith.addf %151, %218 : vector<160x128xf32>
    %cst_88 = arith.constant dense<0.000000e+00> : vector<160xf32>
    %220 = vector.multi_reduction <add>, %219, %cst_88 [1] : vector<160x128xf32> to vector<160xf32>
    %221 = vector.shape_cast %220 : vector<160xf32> to vector<160x1xf32>
    %cst_89 = arith.constant 1.280000e+02 : f32
    %222 = vector.broadcast %cst_89 : f32 to vector<160x1xf32>
    %223 = arith.divf %221, %222 : vector<160x1xf32>
    %224 = vector.broadcast %223 : vector<160x1xf32> to vector<160x128xf32>
    %225 = arith.subf %219, %224 : vector<160x128xf32>
    %226 = arith.mulf %225, %225 : vector<160x128xf32>
    %cst_90 = arith.constant dense<0.000000e+00> : vector<160xf32>
    %227 = vector.multi_reduction <add>, %226, %cst_90 [1] : vector<160x128xf32> to vector<160xf32>
    %228 = vector.shape_cast %227 : vector<160xf32> to vector<160x1xf32>
    %cst_91 = arith.constant 1.280000e+02 : f32
    %229 = vector.broadcast %cst_91 : f32 to vector<160x1xf32>
    %230 = arith.divf %228, %229 : vector<160x1xf32>
    %231 = vector.broadcast %223 : vector<160x1xf32> to vector<160x128xf32>
    %232 = arith.subf %219, %231 : vector<160x128xf32>
    %cst_92 = arith.constant 9.99999974E-6 : f32
    %233 = vector.broadcast %cst_92 : f32 to vector<160x1xf32>
    %234 = arith.addf %230, %233 : vector<160x1xf32>
    %235 = math.rsqrt %234 : vector<160x1xf32>
    %236 = vector.broadcast %235 : vector<160x1xf32> to vector<160x128xf32>
    %237 = arith.mulf %232, %236 : vector<160x128xf32>
    %238 = vector.broadcast %152 : vector<1x128xf32> to vector<160x128xf32>
    %239 = arith.mulf %237, %238 : vector<160x128xf32>
    %240 = vector.broadcast %153 : vector<1x128xf32> to vector<160x128xf32>
    %241 = arith.addf %239, %240 : vector<160x128xf32>
    %242 = arith.truncf %241 : vector<160x128xf32> to vector<160x128xbf16>
    %c1_93 = arith.constant 1 : index
    %c0_94 = arith.constant 0 : index
    %c0_95 = arith.constant 0 : index
    %243 = vector.load %arg13[%c1_93, %c0_94, %c0_95] : memref<2x128x512xbf16, #tpu.memory_space<vmem>>, vector<1x128x512xbf16>
    %244 = vector.shape_cast %243 : vector<1x128x512xbf16> to vector<128x512xbf16>
    %cst_96 = arith.constant dense<0.000000e+00> : vector<160x512xf32>
    %245 = tpu.matmul %242, %244, %cst_96 {dimension_numbers = #tpu.dot_dimension_numbers<[1], [0], [0], [1], [0, 0, 1, 1], [], []>} : vector<160x128xbf16>, vector<128x512xbf16>, vector<160x512xf32> -> vector<160x512xf32>
    %c1_97 = arith.constant 1 : index
    %c0_98 = arith.constant 0 : index
    %246 = vector.load %arg14[%c1_97, %c0_98] : memref<2x512xf32, #tpu.memory_space<vmem>>, vector<1x512xf32>
    %247 = vector.broadcast %246 : vector<1x512xf32> to vector<160x512xf32>
    %248 = arith.addf %245, %247 : vector<160x512xf32>
    %249 = arith.mulf %248, %248 : vector<160x512xf32>
    %250 = arith.mulf %248, %249 : vector<160x512xf32>
    %cst_99 = arith.constant 4.471500e-02 : f32
    %251 = vector.broadcast %cst_99 : f32 to vector<160x512xf32>
    %252 = arith.mulf %251, %250 : vector<160x512xf32>
    %253 = arith.addf %248, %252 : vector<160x512xf32>
    %cst_100 = arith.constant 0.797884583 : f32
    %254 = vector.broadcast %cst_100 : f32 to vector<160x512xf32>
    %255 = arith.mulf %254, %253 : vector<160x512xf32>
    %256 = math.tanh %255 : vector<160x512xf32>
    %cst_101 = arith.constant 1.000000e+00 : f32
    %257 = vector.broadcast %cst_101 : f32 to vector<160x512xf32>
    %258 = arith.addf %257, %256 : vector<160x512xf32>
    %cst_102 = arith.constant 5.000000e-01 : f32
    %259 = vector.broadcast %cst_102 : f32 to vector<160x512xf32>
    %260 = arith.mulf %259, %258 : vector<160x512xf32>
    %261 = arith.mulf %248, %260 : vector<160x512xf32>
    %262 = arith.truncf %261 : vector<160x512xf32> to vector<160x512xbf16>
    %c1_103 = arith.constant 1 : index
    %c0_104 = arith.constant 0 : index
    %c0_105 = arith.constant 0 : index
    %263 = vector.load %arg15[%c1_103, %c0_104, %c0_105] : memref<2x512x128xbf16, #tpu.memory_space<vmem>>, vector<1x512x128xbf16>
    %264 = vector.shape_cast %263 : vector<1x512x128xbf16> to vector<512x128xbf16>
    %cst_106 = arith.constant dense<0.000000e+00> : vector<160x128xf32>
    %265 = tpu.matmul %262, %264, %cst_106 {dimension_numbers = #tpu.dot_dimension_numbers<[1], [0], [0], [1], [0, 0, 1, 1], [], []>} : vector<160x512xbf16>, vector<512x128xbf16>, vector<160x128xf32> -> vector<160x128xf32>
    %c1_107 = arith.constant 1 : index
    %c0_108 = arith.constant 0 : index
    %266 = vector.load %arg16[%c1_107, %c0_108] : memref<2x128xf32, #tpu.memory_space<vmem>>, vector<1x128xf32>
    %267 = vector.broadcast %266 : vector<1x128xf32> to vector<160x128xf32>
    %268 = arith.addf %265, %267 : vector<160x128xf32>
    %269 = arith.addf %219, %268 : vector<160x128xf32>
    %270 = vector.extract_strided_slice %269 {offsets = [0, 0], sizes = [16, 128], strides = [1, 1]} : vector<160x128xf32> to vector<16x128xf32>
    %271 = vector.extract_strided_slice %269 {offsets = [80, 0], sizes = [16, 128], strides = [1, 1]} : vector<160x128xf32> to vector<16x128xf32>
    %272 = tpu.concatenate %270, %271 in 0 : vector<16x128xf32>, vector<16x128xf32> -> vector<32x128xf32>
    %c0_109 = arith.constant 0 : index
    %c0_110 = arith.constant 0 : index
    %273 = vector.load %arg17[%c0_109, %c0_110] : memref<1x128xf32, #tpu.memory_space<vmem>>, vector<1x128xf32>
    %c0_111 = arith.constant 0 : index
    %c0_112 = arith.constant 0 : index
    %274 = vector.load %arg18[%c0_111, %c0_112] : memref<1x128xf32, #tpu.memory_space<vmem>>, vector<1x128xf32>
    %cst_113 = arith.constant dense<0.000000e+00> : vector<32xf32>
    %275 = vector.multi_reduction <add>, %272, %cst_113 [1] : vector<32x128xf32> to vector<32xf32>
    %276 = vector.shape_cast %275 : vector<32xf32> to vector<32x1xf32>
    %cst_114 = arith.constant 1.280000e+02 : f32
    %277 = vector.broadcast %cst_114 : f32 to vector<32x1xf32>
    %278 = arith.divf %276, %277 : vector<32x1xf32>
    %279 = vector.broadcast %278 : vector<32x1xf32> to vector<32x128xf32>
    %280 = arith.subf %272, %279 : vector<32x128xf32>
    %281 = arith.mulf %280, %280 : vector<32x128xf32>
    %cst_115 = arith.constant dense<0.000000e+00> : vector<32xf32>
    %282 = vector.multi_reduction <add>, %281, %cst_115 [1] : vector<32x128xf32> to vector<32xf32>
    %283 = vector.shape_cast %282 : vector<32xf32> to vector<32x1xf32>
    %cst_116 = arith.constant 1.280000e+02 : f32
    %284 = vector.broadcast %cst_116 : f32 to vector<32x1xf32>
    %285 = arith.divf %283, %284 : vector<32x1xf32>
    %286 = vector.broadcast %278 : vector<32x1xf32> to vector<32x128xf32>
    %287 = arith.subf %272, %286 : vector<32x128xf32>
    %cst_117 = arith.constant 9.99999974E-6 : f32
    %288 = vector.broadcast %cst_117 : f32 to vector<32x1xf32>
    %289 = arith.addf %285, %288 : vector<32x1xf32>
    %290 = math.rsqrt %289 : vector<32x1xf32>
    %291 = vector.broadcast %290 : vector<32x1xf32> to vector<32x128xf32>
    %292 = arith.mulf %287, %291 : vector<32x128xf32>
    %293 = vector.broadcast %273 : vector<1x128xf32> to vector<32x128xf32>
    %294 = arith.mulf %292, %293 : vector<32x128xf32>
    %295 = vector.broadcast %274 : vector<1x128xf32> to vector<32x128xf32>
    %296 = arith.addf %294, %295 : vector<32x128xf32>
    %297 = arith.truncf %296 : vector<32x128xf32> to vector<32x128xbf16>
    %c0_118 = arith.constant 0 : index
    %c0_119 = arith.constant 0 : index
    %298 = vector.load %arg19[%c0_118, %c0_119] : memref<128x128xbf16, #tpu.memory_space<vmem>>, vector<128x128xbf16>
    %cst_120 = arith.constant dense<0.000000e+00> : vector<32x128xf32>
    %299 = tpu.matmul %297, %298, %cst_120 {dimension_numbers = #tpu.dot_dimension_numbers<[1], [0], [0], [1], [0, 0, 1, 1], [], []>} : vector<32x128xbf16>, vector<128x128xbf16>, vector<32x128xf32> -> vector<32x128xf32>
    %c0_121 = arith.constant 0 : index
    %c0_122 = arith.constant 0 : index
    %300 = vector.load %arg20[%c0_121, %c0_122] : memref<1x128xf32, #tpu.memory_space<vmem>>, vector<1x128xf32>
    %301 = vector.broadcast %300 : vector<1x128xf32> to vector<32x128xf32>
    %302 = arith.addf %299, %301 : vector<32x128xf32>
    %c0_123 = arith.constant 0 : index
    %c0_124 = arith.constant 0 : index
    %303 = vector.load %arg21[%c0_123, %c0_124] : memref<128x4xf32, #tpu.memory_space<vmem>>, vector<128x4xf32>
    %cst_125 = arith.constant dense<0.000000e+00> : vector<32x4xf32>
    %304 = tpu.matmul %302, %303, %cst_125 {dimension_numbers = #tpu.dot_dimension_numbers<[1], [0], [0], [1], [0, 0, 1, 1], [], []>} : vector<32x128xf32>, vector<128x4xf32>, vector<32x4xf32> -> vector<32x4xf32>
    %c0_126 = arith.constant 0 : index
    %c0_127 = arith.constant 0 : index
    %305 = vector.load %arg22[%c0_126, %c0_127] : memref<1x4xf32, #tpu.memory_space<vmem>>, vector<1x4xf32>
    %306 = vector.broadcast %305 : vector<1x4xf32> to vector<32x4xf32>
    %307 = arith.addf %304, %306 : vector<32x4xf32>
    %c0_128 = arith.constant 0 : index
    %c0_129 = arith.constant 0 : index
    %308 = vector.load %arg23[%c0_128, %c0_129] : memref<32x4xf32, #tpu.memory_space<vmem>>, vector<32x4xf32>
    tpu.vector_store %arg23[%c0_128, %c0_129], %307 {strides = array<i32>} : memref<32x4xf32, #tpu.memory_space<vmem>>, vector<32x4xf32>,
    return
  }
  func.func @transform_0(%arg0: i32) -> (i32, i32) {
    %c0_i32 = arith.constant 0 : i32
    %c0_i32_0 = arith.constant 0 : i32
    return %arg0, %c0_i32 : i32, i32
  }
  func.func @transform_1(%arg0: i32) -> (i32, i32) {
    %c0_i32 = arith.constant 0 : i32
    %c0_i32_0 = arith.constant 0 : i32
    %c0_i32_1 = arith.constant 0 : i32
    return %c0_i32, %c0_i32_0 : i32, i32
  }
  func.func @transform_2(%arg0: i32) -> (i32, i32) {
    %c0_i32 = arith.constant 0 : i32
    %c0_i32_0 = arith.constant 0 : i32
    %c0_i32_1 = arith.constant 0 : i32
    return %c0_i32, %c0_i32_0 : i32, i32
  }
  func.func @transform_3(%arg0: i32) -> (i32, i32) {
    %c0_i32 = arith.constant 0 : i32
    %c0_i32_0 = arith.constant 0 : i32
    %c0_i32_1 = arith.constant 0 : i32
    return %c0_i32, %c0_i32_0 : i32, i32
  }
  func.func @transform_4(%arg0: i32) -> (i32, i32) {
    %c0_i32 = arith.constant 0 : i32
    %c0_i32_0 = arith.constant 0 : i32
    %c0_i32_1 = arith.constant 0 : i32
    return %c0_i32, %c0_i32_0 : i32, i32
  }
  func.func @transform_5(%arg0: i32) -> (i32, i32) {
    %c0_i32 = arith.constant 0 : i32
    %c0_i32_0 = arith.constant 0 : i32
    %c0_i32_1 = arith.constant 0 : i32
    return %c0_i32, %c0_i32_0 : i32, i32
  }
  func.func @transform_6(%arg0: i32) -> (i32, i32) {
    %c0_i32 = arith.constant 0 : i32
    %c0_i32_0 = arith.constant 0 : i32
    %c0_i32_1 = arith.constant 0 : i32
    return %c0_i32, %c0_i32_0 : i32, i32
  }
  func.func @transform_7(%arg0: i32) -> (i32, i32) {
    %c0_i32 = arith.constant 0 : i32
    %c0_i32_0 = arith.constant 0 : i32
    %c0_i32_1 = arith.constant 0 : i32
    return %c0_i32, %c0_i32_0 : i32, i32
  }
  func.func @transform_8(%arg0: i32) -> (i32, i32, i32) {
    %c0_i32 = arith.constant 0 : i32
    %c0_i32_0 = arith.constant 0 : i32
    %c0_i32_1 = arith.constant 0 : i32
    %c0_i32_2 = arith.constant 0 : i32
    return %c0_i32, %c0_i32_0, %c0_i32_1 : i32, i32, i32
  }
  func.func @transform_9(%arg0: i32) -> (i32, i32) {
    %c0_i32 = arith.constant 0 : i32
    %c0_i32_0 = arith.constant 0 : i32
    %c0_i32_1 = arith.constant 0 : i32
    return %c0_i32, %c0_i32_0 : i32, i32
  }
  func.func @transform_10(%arg0: i32) -> (i32, i32, i32) {
    %c0_i32 = arith.constant 0 : i32
    %c0_i32_0 = arith.constant 0 : i32
    %c0_i32_1 = arith.constant 0 : i32
    %c0_i32_2 = arith.constant 0 : i32
    return %c0_i32, %c0_i32_0, %c0_i32_1 : i32, i32, i32
  }
  func.func @transform_11(%arg0: i32) -> (i32, i32) {
    %c0_i32 = arith.constant 0 : i32
    %c0_i32_0 = arith.constant 0 : i32
    %c0_i32_1 = arith.constant 0 : i32
    return %c0_i32, %c0_i32_0 : i32, i32
  }
  func.func @transform_12(%arg0: i32) -> (i32, i32, i32) {
    %c0_i32 = arith.constant 0 : i32
    %c0_i32_0 = arith.constant 0 : i32
    %c0_i32_1 = arith.constant 0 : i32
    %c0_i32_2 = arith.constant 0 : i32
    return %c0_i32, %c0_i32_0, %c0_i32_1 : i32, i32, i32
  }
  func.func @transform_13(%arg0: i32) -> (i32, i32) {
    %c0_i32 = arith.constant 0 : i32
    %c0_i32_0 = arith.constant 0 : i32
    %c0_i32_1 = arith.constant 0 : i32
    return %c0_i32, %c0_i32_0 : i32, i32
  }
  func.func @transform_14(%arg0: i32) -> (i32, i32, i32) {
    %c0_i32 = arith.constant 0 : i32
    %c0_i32_0 = arith.constant 0 : i32
    %c0_i32_1 = arith.constant 0 : i32
    %c0_i32_2 = arith.constant 0 : i32
    return %c0_i32, %c0_i32_0, %c0_i32_1 : i32, i32, i32
  }
  func.func @transform_15(%arg0: i32) -> (i32, i32) {
    %c0_i32 = arith.constant 0 : i32
    %c0_i32_0 = arith.constant 0 : i32
    %c0_i32_1 = arith.constant 0 : i32
    return %c0_i32, %c0_i32_0 : i32, i32
  }
  func.func @transform_16(%arg0: i32) -> (i32, i32) {
    %c0_i32 = arith.constant 0 : i32
    %c0_i32_0 = arith.constant 0 : i32
    %c0_i32_1 = arith.constant 0 : i32
    return %c0_i32, %c0_i32_0 : i32, i32
  }
  func.func @transform_17(%arg0: i32) -> (i32, i32) {
    %c0_i32 = arith.constant 0 : i32
    %c0_i32_0 = arith.constant 0 : i32
    %c0_i32_1 = arith.constant 0 : i32
    return %c0_i32, %c0_i32_0 : i32, i32
  }
  func.func @transform_18(%arg0: i32) -> (i32, i32) {
    %c0_i32 = arith.constant 0 : i32
    %c0_i32_0 = arith.constant 0 : i32
    %c0_i32_1 = arith.constant 0 : i32
    return %c0_i32, %c0_i32_0 : i32, i32
  }
  func.func @transform_19(%arg0: i32) -> (i32, i32) {
    %c0_i32 = arith.constant 0 : i32
    %c0_i32_0 = arith.constant 0 : i32
    %c0_i32_1 = arith.constant 0 : i32
    return %c0_i32, %c0_i32_0 : i32, i32
  }
  func.func @transform_20(%arg0: i32) -> (i32, i32) {
    %c0_i32 = arith.constant 0 : i32
    %c0_i32_0 = arith.constant 0 : i32
    %c0_i32_1 = arith.constant 0 : i32
    return %c0_i32, %c0_i32_0 : i32, i32
  }
  func.func @transform_21(%arg0: i32) -> (i32, i32) {
    %c0_i32 = arith.constant 0 : i32
    %c0_i32_0 = arith.constant 0 : i32
    %c0_i32_1 = arith.constant 0 : i32
    return %c0_i32, %c0_i32_0 : i32, i32
  }
  func.func @transform_22(%arg0: i32) -> (i32, i32) {
    %c0_i32 = arith.constant 0 : i32
    %c0_i32_0 = arith.constant 0 : i32
    return %arg0, %c0_i32 : i32, i32
  }
}

</mosaic_0001>

<llo_original>
// kernel: vit_forward.1
$region0: #{vit_forward.1}
  #allocation0 [shape = 'u32[]', space=smem, size = 0x4, offset = 0x4, fixed_abs, tag = 'smem constant byte address 0x4 - core index']
  #allocation1 [shape = 'u32[144,128]{1,0:T(1,128)}', space=vmem, size = 0x12000, scoped, tag = 'internal scratch']
  %s0 = inlined_call_operand.vmem [shape: bf16[320,768], index: 0, kind: input, shape index: {}]
  %s1 = inlined_call_operand.vmem [shape: f32[128,128], index: 1, kind: input, shape index: {}]
  %s2 = inlined_call_operand.vmem [shape: bf16[768,128], index: 2, kind: input, shape index: {}]
  %s3 = inlined_call_operand.vmem [shape: f32[1,128], index: 3, kind: input, shape index: {}]
  %s4 = inlined_call_operand.vmem [shape: f32[2,128], index: 4, kind: input, shape index: {}]
  %s5 = inlined_call_operand.vmem [shape: f32[2,128], index: 5, kind: input, shape index: {}]
  %s6 = inlined_call_operand.vmem [shape: f32[2,128], index: 6, kind: input, shape index: {}]
  %s7 = inlined_call_operand.vmem [shape: f32[2,128], index: 7, kind: input, shape index: {}]
  %s8 = inlined_call_operand.vmem [shape: bf16[2,128,384], index: 8, kind: input, shape index: {}]
  %s9 = inlined_call_operand.vmem [shape: f32[2,384], index: 9, kind: input, shape index: {}]
  %s10 = inlined_call_operand.vmem [shape: bf16[2,128,128], index: 10, kind: input, shape index: {}]
  %s11 = inlined_call_operand.vmem [shape: f32[2,128], index: 11, kind: input, shape index: {}]
  %s12 = inlined_call_operand.vmem [shape: bf16[2,128,512], index: 12, kind: input, shape index: {}]
  %s13 = inlined_call_operand.vmem [shape: f32[2,512], index: 13, kind: input, shape index: {}]
  %s14 = inlined_call_operand.vmem [shape: bf16[2,512,128], index: 14, kind: input, shape index: {}]
  %s15 = inlined_call_operand.vmem [shape: f32[2,128], index: 15, kind: input, shape index: {}]
  %s16 = inlined_call_operand.vmem [shape: f32[1,128], index: 16, kind: input, shape index: {}]
  %s17 = inlined_call_operand.vmem [shape: f32[1,128], index: 17, kind: input, shape index: {}]
  %s18 = inlined_call_operand.vmem [shape: bf16[128,128], index: 18, kind: input, shape index: {}]
  %s19 = inlined_call_operand.vmem [shape: f32[1,128], index: 19, kind: input, shape index: {}]
  %s20 = inlined_call_operand.vmem [shape: f32[128,4], index: 20, kind: input, shape index: {}]
  %s21 = inlined_call_operand.vmem [shape: f32[1,4], index: 21, kind: input, shape index: {}]
  %s22 = inlined_call_operand.vmem [shape: f32[64,4], index: 22, kind: output, shape index: {}]
  %s23 = sld [smem:[#allocation0]]
  $region121: #{vit_forward.1} parent=0
    _
  %s25 = ssub.s32 1, %s23
  %s26 = scalar_select 0, %s25, %s23
  loop: start=0, step=1, limit=4
  $region2: #{vit_forward.1} parent=0 // loop_pre_header
    _
  $region3: #{vit_forward.1} parent=0 // loop_header
    %s28 = sphi 0, %s32
    %p29 = scmp.ge.s32.totalorder %s28, 4
    %s38 = sphi 0, %s40
    %s41 = sphi 0, %s38
    %s42 = sphi 0, %s41
    %s58 = sphi 0, %s42
    %s62 = sphi 0, %s62
    %s64 = sphi 0, %s62
    %s65 = sphi 0, %s64
    %s79 = sphi 0, %s65
    %s83 = sphi 0, %s83
    %s85 = sphi 0, %s83
    %s86 = sphi 0, %s85
    %s100 = sphi 0, %s86
    %s104 = sphi 0, %s104
    %s106 = sphi 0, %s104
    %s107 = sphi 0, %s106
    %s121 = sphi 0, %s107
    %s125 = sphi 0, %s125
    %s127 = sphi 0, %s125
    %s128 = sphi 0, %s127
    %s142 = sphi 0, %s128
    %s146 = sphi 0, %s146
    %s148 = sphi 0, %s146
    %s149 = sphi 0, %s148
    %s163 = sphi 0, %s149
    %s167 = sphi 0, %s167
    %s169 = sphi 0, %s167
    %s170 = sphi 0, %s169
    %s184 = sphi 0, %s170
    %s188 = sphi 0, %s188
    %s190 = sphi 0, %s188
    %s191 = sphi 0, %s190
    %s205 = sphi 0, %s191
    %s209 = sphi 0, %s209
    %s211 = sphi 0, %s209
    %s212 = sphi 0, %s211
    %s226 = sphi 0, %s212
    %s230 = sphi 0, %s230
    %s232 = sphi 0, %s230
    %s233 = sphi 0, %s232
    %s247 = sphi 0, %s233
    %s251 = sphi 0, %s251
    %s253 = sphi 0, %s251
    %s254 = sphi 0, %s253
    %s268 = sphi 0, %s254
    %s272 = sphi 0, %s272
    %s274 = sphi 0, %s272
    %s275 = sphi 0, %s274
    %s289 = sphi 0, %s275
    %s293 = sphi 0, %s293
    %s295 = sphi 0, %s293
    %s296 = sphi 0, %s295
    %s310 = sphi 0, %s296
    %s314 = sphi 0, %s314
    %s316 = sphi 0, %s314
    %s317 = sphi 0, %s316
    %s331 = sphi 0, %s317
    %s335 = sphi 0, %s335
    %s337 = sphi 0, %s335
    %s338 = sphi 0, %s337
    %s352 = sphi 0, %s338
    %s356 = sphi 0, %s356
    %s358 = sphi 0, %s356
    %s359 = sphi 0, %s358
    %s373 = sphi 0, %s359
    %s377 = sphi 0, %s377
    %s379 = sphi 0, %s377
    %s380 = sphi 0, %s379
    %s394 = sphi 0, %s380
    %s398 = sphi 0, %s398
    %s400 = sphi 0, %s398
    %s401 = sphi 0, %s400
    %s415 = sphi 0, %s401
    %s419 = sphi 0, %s419
    %s421 = sphi 0, %s419
    %s422 = sphi 0, %s421
    %s436 = sphi 0, %s422
    %s440 = sphi 0, %s440
    %s442 = sphi 0, %s440
    %s443 = sphi 0, %s442
    %s457 = sphi 0, %s443
    %s461 = sphi 0, %s461
    %s463 = sphi 0, %s461
    %s464 = sphi 0, %s463
    %s478 = sphi 0, %s464
    %s482 = sphi 0, %s482
    %s484 = sphi 0, %s482
    %s485 = sphi 0, %s484
    %s499 = sphi 0, %s485
    %s505 = sphi 0, %s507
    %s508 = sphi 0, %s505
    %s509 = sphi 0, %s508
    %s525 = sphi 0, %s509
  $region4: #{vit_forward.1} parent=0 // loop_header_branch
    %31 = sbr.rel (%p29) target = $region8
  $region5: #{vit_forward.1} parent=0 // loop_body
    %s33 = ssub.s32 %s28, 1
    %s34 = ssub.s32 %s28, 2
    %s35 = sadd.s32 %s28, 1
    %s36 = ssub.s32 %s28, %s35
    %p37 = scmp.eq.s32.totalorder %s36, 0
    %s39 = sadd.s32 %s38, 1
    %s40 = scalar_select %p37, %s38, %s39
    %p43 = pneg %p37
    %p44 = scmp.eq.s32.totalorder %s28, 1
    %p45 = por %p43, %p44
    %p46 = scmp.ne.s32.totalorder %s38, %s41
    %p47 = scmp.eq.s32.totalorder %s28, 0
    %p48 = por %p46, %p47
    %p49 = scmp.ne.s32.totalorder %s38, %s41
    %p50 = scmp.eq.s32.totalorder %s33, 1
    %p51 = por %p49, %p50
    %p52 = scmp.ne.s32.totalorder %s41, %s42
    %p53 = scmp.eq.s32.totalorder %s33, 0
    %p54 = por %p52, %p53
    %p55 = scmp.ne.s32.totalorder %s41, %s42
    %p56 = scmp.eq.s32.totalorder %s34, 1
    %p57 = por %p55, %p56
    %p59 = scmp.ne.s32.totalorder %s42, %s58
    %p60 = scmp.eq.s32.totalorder %s34, 0
    %p61 = por %p59, %p60
    %s63 = sadd.s32 %s62, 1
    %p66 = scmp.eq.s32.totalorder %s28, 1
    %p67 = scmp.ne.s32.totalorder %s62, %s64
    %p68 = scmp.eq.s32.totalorder %s28, 0
    %p69 = por %p67, %p68
    %p70 = scmp.ne.s32.totalorder %s62, %s64
    %p71 = scmp.eq.s32.totalorder %s33, 1
    %p72 = por %p70, %p71
    %p73 = scmp.ne.s32.totalorder %s64, %s65
    %p74 = scmp.eq.s32.totalorder %s33, 0
    %p75 = por %p73, %p74
    %p76 = scmp.ne.s32.totalorder %s64, %s65
    %p77 = scmp.eq.s32.totalorder %s34, 1
    %p78 = por %p76, %p77
    %p80 = scmp.ne.s32.totalorder %s65, %s79
    %p81 = scmp.eq.s32.totalorder %s34, 0
    %p82 = por %p80, %p81
    %s84 = sadd.s32 %s83, 1
    %p87 = scmp.eq.s32.totalorder %s28, 1
    %p88 = scmp.ne.s32.totalorder %s83, %s85
    %p89 = scmp.eq.s32.totalorder %s28, 0
    %p90 = por %p88, %p89
    %p91 = scmp.ne.s32.totalorder %s83, %s85
    %p92 = scmp.eq.s32.totalorder %s33, 1
    %p93 = por %p91, %p92
    %p94 = scmp.ne.s32.totalorder %s85, %s86
    %p95 = scmp.eq.s32.totalorder %s33, 0
    %p96 = por %p94, %p95
    %p97 = scmp.ne.s32.totalorder %s85, %s86
    %p98 = scmp.eq.s32.totalorder %s34, 1
    %p99 = por %p97, %p98
    %p101 = scmp.ne.s32.totalorder %s86, %s100
    %p102 = scmp.eq.s32.totalorder %s34, 0
    %p103 = por %p101, %p102
    %s105 = sadd.s32 %s104, 1
    %p108 = scmp.eq.s32.totalorder %s28, 1
    %p109 = scmp.ne.s32.totalorder %s104, %s106
    %p110 = scmp.eq.s32.totalorder %s28, 0
    %p111 = por %p109, %p110
    %p112 = scmp.ne.s32.totalorder %s104, %s106
    %p113 = scmp.eq.s32.totalorder %s33, 1
    %p114 = por %p112, %p113
    %p115 = scmp.ne.s32.totalorder %s106, %s107
    %p116 = scmp.eq.s32.totalorder %s33, 0
    %p117 = por %p115, %p116
    %p118 = scmp.ne.s32.totalorder %s106, %s107
    %p119 = scmp.eq.s32.totalorder %s34, 1
    %p120 = por %p118, %p119
    %p122 = scmp.ne.s32.totalorder %s107, %s121
    %p123 = scmp.eq.s32.totalorder %s34, 0
    %p124 = por %p122, %p123
    %s126 = sadd.s32 %s125, 1
    %p129 = scmp.eq.s32.totalorder %s28, 1
    %p130 = scmp.ne.s32.totalorder %s125, %s127
    %p131 = scmp.eq.s32.totalorder %s28, 0
    %p132 = por %p130, %p131
    %p133 = scmp.ne.s32.totalorder %s125, %s127
    %p134 = scmp.eq.s32.totalorder %s33, 1
    %p135 = por %p133, %p134
    %p136 = scmp.ne.s32.totalorder %s127, %s128
    %p137 = scmp.eq.s32.totalorder %s33, 0
    %p138 = por %p136, %p137
    %p139 = scmp.ne.s32.totalorder %s127, %s128
    %p140 = scmp.eq.s32.totalorder %s34, 1
    %p141 = por %p139, %p140
    %p143 = scmp.ne.s32.totalorder %s128, %s142
    %p144 = scmp.eq.s32.totalorder %s34, 0
    %p145 = por %p143, %p144
    %s147 = sadd.s32 %s146, 1
    %p150 = scmp.eq.s32.totalorder %s28, 1
    %p151 = scmp.ne.s32.totalorder %s146, %s148
    %p152 = scmp.eq.s32.totalorder %s28, 0
    %p153 = por %p151, %p152
    %p154 = scmp.ne.s32.totalorder %s146, %s148
    %p155 = scmp.eq.s32.totalorder %s33, 1
    %p156 = por %p154, %p155
    %p157 = scmp.ne.s32.totalorder %s148, %s149
    %p158 = scmp.eq.s32.totalorder %s33, 0
    %p159 = por %p157, %p158
    %p160 = scmp.ne.s32.totalorder %s148, %s149
    %p161 = scmp.eq.s32.totalorder %s34, 1
    %p162 = por %p160, %p161
    %p164 = scmp.ne.s32.totalorder %s149, %s163
    %p165 = scmp.eq.s32.totalorder %s34, 0
    %p166 = por %p164, %p165
    %s168 = sadd.s32 %s167, 1
    %p171 = scmp.eq.s32.totalorder %s28, 1
    %p172 = scmp.ne.s32.totalorder %s167, %s169
    %p173 = scmp.eq.s32.totalorder %s28, 0
    %p174 = por %p172, %p173
    %p175 = scmp.ne.s32.totalorder %s167, %s169
    %p176 = scmp.eq.s32.totalorder %s33, 1
    %p177 = por %p175, %p176
    %p178 = scmp.ne.s32.totalorder %s169, %s170
    %p179 = scmp.eq.s32.totalorder %s33, 0
    %p180 = por %p178, %p179
    %p181 = scmp.ne.s32.totalorder %s169, %s170
    %p182 = scmp.eq.s32.totalorder %s34, 1
    %p183 = por %p181, %p182
    %p185 = scmp.ne.s32.totalorder %s170, %s184
    %p186 = scmp.eq.s32.totalorder %s34, 0
    %p187 = por %p185, %p186
    %s189 = sadd.s32 %s188, 1
    %p192 = scmp.eq.s32.totalorder %s28, 1
    %p193 = scmp.ne.s32.totalorder %s188, %s190
    %p194 = scmp.eq.s32.totalorder %s28, 0
    %p195 = por %p193, %p194
    %p196 = scmp.ne.s32.totalorder %s188, %s190
    %p197 = scmp.eq.s32.totalorder %s33, 1
    %p198 = por %p196, %p197
    %p199 = scmp.ne.s32.totalorder %s190, %s191
    %p200 = scmp.eq.s32.totalorder %s33, 0
    %p201 = por %p199, %p200
    %p202 = scmp.ne.s32.totalorder %s190, %s191
    %p203 = scmp.eq.s32.totalorder %s34, 1
    %p204 = por %p202, %p203
    %p206 = scmp.ne.s32.totalorder %s191, %s205
    %p207 = scmp.eq.s32.totalorder %s34, 0
    %p208 = por %p206, %p207
    %s210 = sadd.s32 %s209, 1
    %p213 = scmp.eq.s32.totalorder %s28, 1
    %p214 = scmp.ne.s32.totalorder %s209, %s211
    %p215 = scmp.eq.s32.totalorder %s28, 0
    %p216 = por %p214, %p215
    %p217 = scmp.ne.s32.totalorder %s209, %s211
    %p218 = scmp.eq.s32.totalorder %s33, 1
    %p219 = por %p217, %p218
    %p220 = scmp.ne.s32.totalorder %s211, %s212
    %p221 = scmp.eq.s32.totalorder %s33, 0
    %p222 = por %p220, %p221
    %p223 = scmp.ne.s32.totalorder %s211, %s212
    %p224 = scmp.eq.s32.totalorder %s34, 1
    %p225 = por %p223, %p224
    %p227 = scmp.ne.s32.totalorder %s212, %s226
    %p228 = scmp.eq.s32.totalorder %s34, 0
    %p229 = por %p227, %p228
    %s231 = sadd.s32 %s230, 1
    %p234 = scmp.eq.s32.totalorder %s28, 1
    %p235 = scmp.ne.s32.totalorder %s230, %s232
    %p236 = scmp.eq.s32.totalorder %s28, 0
    %p237 = por %p235, %p236
    %p238 = scmp.ne.s32.totalorder %s230, %s232
    %p239 = scmp.eq.s32.totalorder %s33, 1
    %p240 = por %p238, %p239
    %p241 = scmp.ne.s32.totalorder %s232, %s233
    %p242 = scmp.eq.s32.totalorder %s33, 0
    %p243 = por %p241, %p242
    %p244 = scmp.ne.s32.totalorder %s232, %s233
    %p245 = scmp.eq.s32.totalorder %s34, 1
    %p246 = por %p244, %p245
    %p248 = scmp.ne.s32.totalorder %s233, %s247
    %p249 = scmp.eq.s32.totalorder %s34, 0
    %p250 = por %p248, %p249
    %s252 = sadd.s32 %s251, 1
    %p255 = scmp.eq.s32.totalorder %s28, 1
    %p256 = scmp.ne.s32.totalorder %s251, %s253
    %p257 = scmp.eq.s32.totalorder %s28, 0
    %p258 = por %p256, %p257
    %p259 = scmp.ne.s32.totalorder %s251, %s253
    %p260 = scmp.eq.s32.totalorder %s33, 1
    %p261 = por %p259, %p260
    %p262 = scmp.ne.s32.totalorder %s253, %s254
    %p263 = scmp.eq.s32.totalorder %s33, 0
    %p264 = por %p262, %p263
    %p265 = scmp.ne.s32.totalorder %s253, %s254
    %p266 = scmp.eq.s32.totalorder %s34, 1
    %p267 = por %p265, %p266
    %p269 = scmp.ne.s32.totalorder %s254, %s268
    %p270 = scmp.eq.s32.totalorder %s34, 0
    %p271 = por %p269, %p270
    %s273 = sadd.s32 %s272, 1
    %p276 = scmp.eq.s32.totalorder %s28, 1
    %p277 = scmp.ne.s32.totalorder %s272, %s274
    %p278 = scmp.eq.s32.totalorder %s28, 0
    %p279 = por %p277, %p278
    %p280 = scmp.ne.s32.totalorder %s272, %s274
    %p281 = scmp.eq.s32.totalorder %s33, 1
    %p282 = por %p280, %p281
    %p283 = scmp.ne.s32.totalorder %s274, %s275
    %p284 = scmp.eq.s32.totalorder %s33, 0
    %p285 = por %p283, %p284
    %p286 = scmp.ne.s32.totalorder %s274, %s275
    %p287 = scmp.eq.s32.totalorder %s34, 1
    %p288 = por %p286, %p287
    %p290 = scmp.ne.s32.totalorder %s275, %s289
    %p291 = scmp.eq.s32.totalorder %s34, 0
    %p292 = por %p290, %p291
    %s294 = sadd.s32 %s293, 1
    %p297 = scmp.eq.s32.totalorder %s28, 1
    %p298 = scmp.ne.s32.totalorder %s293, %s295
    %p299 = scmp.eq.s32.totalorder %s28, 0
    %p300 = por %p298, %p299
    %p301 = scmp.ne.s32.totalorder %s293, %s295
    %p302 = scmp.eq.s32.totalorder %s33, 1
    %p303 = por %p301, %p302
    %p304 = scmp.ne.s32.totalorder %s295, %s296
    %p305 = scmp.eq.s32.totalorder %s33, 0
    %p306 = por %p304, %p305
    %p307 = scmp.ne.s32.totalorder %s295, %s296
    %p308 = scmp.eq.s32.totalorder %s34, 1
    %p309 = por %p307, %p308
    %p311 = scmp.ne.s32.totalorder %s296, %s310
    %p312 = scmp.eq.s32.totalorder %s34, 0
    %p313 = por %p311, %p312
    %s315 = sadd.s32 %s314, 1
    %p318 = scmp.eq.s32.totalorder %s28, 1
    %p319 = scmp.ne.s32.totalorder %s314, %s316
    %p320 = scmp.eq.s32.totalorder %s28, 0
    %p321 = por %p319, %p320
    %p322 = scmp.ne.s32.totalorder %s314, %s316
    %p323 = scmp.eq.s32.totalorder %s33, 1
    %p324 = por %p322, %p323
    %p325 = scmp.ne.s32.totalorder %s316, %s317
    %p326 = scmp.eq.s32.totalorder %s33, 0
    %p327 = por %p325, %p326
    %p328 = scmp.ne.s32.totalorder %s316, %s317
    %p329 = scmp.eq.s32.totalorder %s34, 1
    %p330 = por %p328, %p329
    %p332 = scmp.ne.s32.totalorder %s317, %s331
    %p333 = scmp.eq.s32.totalorder %s34, 0
    %p334 = por %p332, %p333
    %s336 = sadd.s32 %s335, 1
    %p339 = scmp.eq.s32.totalorder %s28, 1
    %p340 = scmp.ne.s32.totalorder %s335, %s337
    %p341 = scmp.eq.s32.totalorder %s28, 0
    %p342 = por %p340, %p341
    %p343 = scmp.ne.s32.totalorder %s335, %s337
    %p344 = scmp.eq.s32.totalorder %s33, 1
    %p345 = por %p343, %p344
    %p346 = scmp.ne.s32.totalorder %s337, %s338
    %p347 = scmp.eq.s32.totalorder %s33, 0
    %p348 = por %p346, %p347
    %p349 = scmp.ne.s32.totalorder %s337, %s338
    %p350 = scmp.eq.s32.totalorder %s34, 1
    %p351 = por %p349, %p350
    %p353 = scmp.ne.s32.totalorder %s338, %s352
    %p354 = scmp.eq.s32.totalorder %s34, 0
    %p355 = por %p353, %p354
    %s357 = sadd.s32 %s356, 1
    %p360 = scmp.eq.s32.totalorder %s28, 1
    %p361 = scmp.ne.s32.totalorder %s356, %s358
    %p362 = scmp.eq.s32.totalorder %s28, 0
    %p363 = por %p361, %p362
    %p364 = scmp.ne.s32.totalorder %s356, %s358
    %p365 = scmp.eq.s32.totalorder %s33, 1
    %p366 = por %p364, %p365
    %p367 = scmp.ne.s32.totalorder %s358, %s359
    %p368 = scmp.eq.s32.totalorder %s33, 0
    %p369 = por %p367, %p368
    %p370 = scmp.ne.s32.totalorder %s358, %s359
    %p371 = scmp.eq.s32.totalorder %s34, 1
    %p372 = por %p370, %p371
    %p374 = scmp.ne.s32.totalorder %s359, %s373
    %p375 = scmp.eq.s32.totalorder %s34, 0
    %p376 = por %p374, %p375
    %s378 = sadd.s32 %s377, 1
    %p381 = scmp.eq.s32.totalorder %s28, 1
    %p382 = scmp.ne.s32.totalorder %s377, %s379
    %p383 = scmp.eq.s32.totalorder %s28, 0
    %p384 = por %p382, %p383
    %p385 = scmp.ne.s32.totalorder %s377, %s379
    %p386 = scmp.eq.s32.totalorder %s33, 1
    %p387 = por %p385, %p386
    %p388 = scmp.ne.s32.totalorder %s379, %s380
    %p389 = scmp.eq.s32.totalorder %s33, 0
    %p390 = por %p388, %p389
    %p391 = scmp.ne.s32.totalorder %s379, %s380
    %p392 = scmp.eq.s32.totalorder %s34, 1
    %p393 = por %p391, %p392
    %p395 = scmp.ne.s32.totalorder %s380, %s394
    %p396 = scmp.eq.s32.totalorder %s34, 0
    %p397 = por %p395, %p396
    %s399 = sadd.s32 %s398, 1
    %p402 = scmp.eq.s32.totalorder %s28, 1
    %p403 = scmp.ne.s32.totalorder %s398, %s400
    %p404 = scmp.eq.s32.totalorder %s28, 0
    %p405 = por %p403, %p404
    %p406 = scmp.ne.s32.totalorder %s398, %s400
    %p407 = scmp.eq.s32.totalorder %s33, 1
    %p408 = por %p406, %p407
    %p409 = scmp.ne.s32.totalorder %s400, %s401
    %p410 = scmp.eq.s32.totalorder %s33, 0
    %p411 = por %p409, %p410
    %p412 = scmp.ne.s32.totalorder %s400, %s401
    %p413 = scmp.eq.s32.totalorder %s34, 1
    %p414 = por %p412, %p413
    %p416 = scmp.ne.s32.totalorder %s401, %s415
    %p417 = scmp.eq.s32.totalorder %s34, 0
    %p418 = por %p416, %p417
    %s420 = sadd.s32 %s419, 1
    %p423 = scmp.eq.s32.totalorder %s28, 1
    %p424 = scmp.ne.s32.totalorder %s419, %s421
    %p425 = scmp.eq.s32.totalorder %s28, 0
    %p426 = por %p424, %p425
    %p427 = scmp.ne.s32.totalorder %s419, %s421
    %p428 = scmp.eq.s32.totalorder %s33, 1
    %p429 = por %p427, %p428
    %p430 = scmp.ne.s32.totalorder %s421, %s422
    %p431 = scmp.eq.s32.totalorder %s33, 0
    %p432 = por %p430, %p431
    %p433 = scmp.ne.s32.totalorder %s421, %s422
    %p434 = scmp.eq.s32.totalorder %s34, 1
    %p435 = por %p433, %p434
    %p437 = scmp.ne.s32.totalorder %s422, %s436
    %p438 = scmp.eq.s32.totalorder %s34, 0
    %p439 = por %p437, %p438
    %s441 = sadd.s32 %s440, 1
    %p444 = scmp.eq.s32.totalorder %s28, 1
    %p445 = scmp.ne.s32.totalorder %s440, %s442
    %p446 = scmp.eq.s32.totalorder %s28, 0
    %p447 = por %p445, %p446
    %p448 = scmp.ne.s32.totalorder %s440, %s442
    %p449 = scmp.eq.s32.totalorder %s33, 1
    %p450 = por %p448, %p449
    %p451 = scmp.ne.s32.totalorder %s442, %s443
    %p452 = scmp.eq.s32.totalorder %s33, 0
    %p453 = por %p451, %p452
    %p454 = scmp.ne.s32.totalorder %s442, %s443
    %p455 = scmp.eq.s32.totalorder %s34, 1
    %p456 = por %p454, %p455
    %p458 = scmp.ne.s32.totalorder %s443, %s457
    %p459 = scmp.eq.s32.totalorder %s34, 0
    %p460 = por %p458, %p459
    %s462 = sadd.s32 %s461, 1
    %p465 = scmp.eq.s32.totalorder %s28, 1
    %p466 = scmp.ne.s32.totalorder %s461, %s463
    %p467 = scmp.eq.s32.totalorder %s28, 0
    %p468 = por %p466, %p467
    %p469 = scmp.ne.s32.totalorder %s461, %s463
    %p470 = scmp.eq.s32.totalorder %s33, 1
    %p471 = por %p469, %p470
    %p472 = scmp.ne.s32.totalorder %s463, %s464
    %p473 = scmp.eq.s32.totalorder %s33, 0
    %p474 = por %p472, %p473
    %p475 = scmp.ne.s32.totalorder %s463, %s464
    %p476 = scmp.eq.s32.totalorder %s34, 1
    %p477 = por %p475, %p476
    %p479 = scmp.ne.s32.totalorder %s464, %s478
    %p480 = scmp.eq.s32.totalorder %s34, 0
    %p481 = por %p479, %p480
    %s483 = sadd.s32 %s482, 1
    %p486 = scmp.eq.s32.totalorder %s28, 1
    %p487 = scmp.ne.s32.totalorder %s482, %s484
    %p488 = scmp.eq.s32.totalorder %s28, 0
    %p489 = por %p487, %p488
    %p490 = scmp.ne.s32.totalorder %s482, %s484
    %p491 = scmp.eq.s32.totalorder %s33, 1
    %p492 = por %p490, %p491
    %p493 = scmp.ne.s32.totalorder %s484, %s485
    %p494 = scmp.eq.s32.totalorder %s33, 0
    %p495 = por %p493, %p494
    %p496 = scmp.ne.s32.totalorder %s484, %s485
    %p497 = scmp.eq.s32.totalorder %s34, 1
    %p498 = por %p496, %p497
    %p500 = scmp.ne.s32.totalorder %s485, %s499
    %p501 = scmp.eq.s32.totalorder %s34, 0
    %p502 = por %p500, %p501
    %s503 = ssub.s32 %s28, %s35
    %p504 = scmp.eq.s32.totalorder %s503, 0
    %s506 = sadd.s32 %s505, 1
    %s507 = scalar_select %p504, %s505, %s506
    %p510 = pneg %p504
    %p511 = scmp.eq.s32.totalorder %s28, 1
    %p512 = por %p510, %p511
    %p513 = scmp.ne.s32.totalorder %s505, %s508
    %p514 = scmp.eq.s32.totalorder %s28, 0
    %p515 = por %p513, %p514
    %p516 = scmp.ne.s32.totalorder %s505, %s508
    %p517 = scmp.eq.s32.totalorder %s33, 1
    %p518 = por %p516, %p517
    %p519 = scmp.ne.s32.totalorder %s508, %s509
    %p520 = scmp.eq.s32.totalorder %s33, 0
    %p521 = por %p519, %p520
    %p522 = scmp.ne.s32.totalorder %s508, %s509
    %p523 = scmp.eq.s32.totalorder %s34, 1
    %p524 = por %p522, %p523
    %p526 = scmp.ne.s32.totalorder %s509, %s525
    %p527 = scmp.eq.s32.totalorder %s34, 0
    %p528 = por %p526, %p527
    %p529 = scmp.le.s32.totalorder 1, %s28
    %p530 = scmp.lt.s32.totalorder %s28, 3
    %p531 = pnand %p529, %p530
    %p532 = pneg %p531
    // Predicated region
    $region9: #{vit_forward.1} parent=5 // pred_check
      _
    $region10: #{vit_forward.1} parent=5 // pred_check_branch
      %534 = sbr.rel (%p531) target = $region12
    $region11: #{vit_forward.1} parent=5 // pred_region
      %s535 = ssub.s32 %s28, 1
      // Predicated region
      $region13: #{vit_forward.1} parent=11 // pred_check
        %p536 = pneg %p75
      $region14: #{vit_forward.1} parent=11 // pred_check_branch
        %538 = sbr.rel (%p536) target = $region16
      $region15: #{vit_forward.1} parent=11 // pred_region
        _
      $region16: #{vit_forward.1} parent=11 // pred_fallthru
        _
      // Predicated region
      $region17: #{vit_forward.1} parent=11 // pred_check
        %p539 = pneg %p96
      $region18: #{vit_forward.1} parent=11 // pred_check_branch
        %541 = sbr.rel (%p539) target = $region20
      $region19: #{vit_forward.1} parent=11 // pred_region
        _
      $region20: #{vit_forward.1} parent=11 // pred_fallthru
        _
      // Predicated region
      $region21: #{vit_forward.1} parent=11 // pred_check
        %p542 = pneg %p117
      $region22: #{vit_forward.1} parent=11 // pred_check_branch
        %544 = sbr.rel (%p542) target = $region24
      $region23: #{vit_forward.1} parent=11 // pred_region
        _
      $region24: #{vit_forward.1} parent=11 // pred_fallthru
        _
      // Predicated region
      $region25: #{vit_forward.1} parent=11 // pred_check
        %p545 = pneg %p138
      $region26: #{vit_forward.1} parent=11 // pred_check_branch
        %547 = sbr.rel (%p545) target = $region28
      $region27: #{vit_forward.1} parent=11 // pred_region
        _
      $region28: #{vit_forward.1} parent=11 // pred_fallthru
        _
      // Predicated region
      $region29: #{vit_forward.1} parent=11 // pred_check
        %p548 = pneg %p159
      $region30: #{vit_forward.1} parent=11 // pred_check_branch
        %550 = sbr.rel (%p548) target = $region32
      $region31: #{vit_forward.1} parent=11 // pred_region
        _
      $region32: #{vit_forward.1} parent=11 // pred_fallthru
        _
      // Predicated region
      $region33: #{vit_forward.1} parent=11 // pred_check
        %p551 = pneg %p180
      $region34: #{vit_forward.1} parent=11 // pred_check_branch
        %553 = sbr.rel (%p551) target = $region36
      $region35: #{vit_forward.1} parent=11 // pred_region
        _
      $region36: #{vit_forward.1} parent=11 // pred_fallthru
        _
      // Predicated region
      $region37: #{vit_forward.1} parent=11 // pred_check
        %p554 = pneg %p201
      $region38: #{vit_forward.1} parent=11 // pred_check_branch
        %556 = sbr.rel (%p554) target = $region40
      $region39: #{vit_forward.1} parent=11 // pred_region
        _
      $region40: #{vit_forward.1} parent=11 // pred_fallthru
        _
      // Predicated region
      $region41: #{vit_forward.1} parent=11 // pred_check
        %p557 = pneg %p222
      $region42: #{vit_forward.1} parent=11 // pred_check_branch
        %559 = sbr.rel (%p557) target = $region44
      $region43: #{vit_forward.1} parent=11 // pred_region
        _
      $region44: #{vit_forward.1} parent=11 // pred_fallthru
        _
      // Predicated region
      $region45: #{vit_forward.1} parent=11 // pred_check
        %p560 = pneg %p243
      $region46: #{vit_forward.1} parent=11 // pred_check_branch
        %562 = sbr.rel (%p560) target = $region48
      $region47: #{vit_forward.1} parent=11 // pred_region
        _
      $region48: #{vit_forward.1} parent=11 // pred_fallthru
        _
      // Predicated region
      $region49: #{vit_forward.1} parent=11 // pred_check
        %p563 = pneg %p264
      $region50: #{vit_forward.1} parent=11 // pred_check_branch
        %565 = sbr.rel (%p563) target = $region52
      $region51: #{vit_forward.1} parent=11 // pred_region
        _
      $region52: #{vit_forward.1} parent=11 // pred_fallthru
        _
      // Predicated region
      $region53: #{vit_forward.1} parent=11 // pred_check
        %p566 = pneg %p285
      $region54: #{vit_forward.1} parent=11 // pred_check_branch
        %568 = sbr.rel (%p566) target = $region56
      $region55: #{vit_forward.1} parent=11 // pred_region
        _
      $region56: #{vit_forward.1} parent=11 // pred_fallthru
        _
      // Predicated region
      $region57: #{vit_forward.1} parent=11 // pred_check
        %p569 = pneg %p306
      $region58: #{vit_forward.1} parent=11 // pred_check_branch
        %571 = sbr.rel (%p569) target = $region60
      $region59: #{vit_forward.1} parent=11 // pred_region
        _
      $region60: #{vit_forward.1} parent=11 // pred_fallthru
        _
      // Predicated region
      $region61: #{vit_forward.1} parent=11 // pred_check
        %p572 = pneg %p327
      $region62: #{vit_forward.1} parent=11 // pred_check_branch
        %574 = sbr.rel (%p572) target = $region64
      $region63: #{vit_forward.1} parent=11 // pred_region
        _
      $region64: #{vit_forward.1} parent=11 // pred_fallthru
        _
      // Predicated region
      $region65: #{vit_forward.1} parent=11 // pred_check
        %p575 = pneg %p348
      $region66: #{vit_forward.1} parent=11 // pred_check_branch
        %577 = sbr.rel (%p575) target = $region68
      $region67: #{vit_forward.1} parent=11 // pred_region
        _
      $region68: #{vit_forward.1} parent=11 // pred_fallthru
        _
      // Predicated region
      $region69: #{vit_forward.1} parent=11 // pred_check
        %p578 = pneg %p369
      $region70: #{vit_forward.1} parent=11 // pred_check_branch
        %580 = sbr.rel (%p578) target = $region72
      $region71: #{vit_forward.1} parent=11 // pred_region
        _
      $region72: #{vit_forward.1} parent=11 // pred_fallthru
        _
      // Predicated region
      $region73: #{vit_forward.1} parent=11 // pred_check
        %p581 = pneg %p390
      $region74: #{vit_forward.1} parent=11 // pred_check_branch
        %583 = sbr.rel (%p581) target = $region76
      $region75: #{vit_forward.1} parent=11 // pred_region
        _
      $region76: #{vit_forward.1} parent=11 // pred_fallthru
        _
      // Predicated region
      $region77: #{vit_forward.1} parent=11 // pred_check
        %p584 = pneg %p411
      $region78: #{vit_forward.1} parent=11 // pred_check_branch
        %586 = sbr.rel (%p584) target = $region80
      $region79: #{vit_forward.1} parent=11 // pred_region
        _
      $region80: #{vit_forward.1} parent=11 // pred_fallthru
        _
      // Predicated region
      $region81: #{vit_forward.1} parent=11 // pred_check
        %p587 = pneg %p432
      $region82: #{vit_forward.1} parent=11 // pred_check_branch
        %589 = sbr.rel (%p587) target = $region84
      $region83: #{vit_forward.1} parent=11 // pred_region
        _
      $region84: #{vit_forward.1} parent=11 // pred_fallthru
        _
      // Predicated region
      $region85: #{vit_forward.1} parent=11 // pred_check
        %p590 = pneg %p453
      $region86: #{vit_forward.1} parent=11 // pred_check_branch
        %592 = sbr.rel (%p590) target = $region88
      $region87: #{vit_forward.1} parent=11 // pred_region
        _
      $region88: #{vit_forward.1} parent=11 // pred_fallthru
        _
      // Predicated region
      $region89: #{vit_forward.1} parent=11 // pred_check
        %p593 = pneg %p474
      $region90: #{vit_forward.1} parent=11 // pred_check_branch
        %595 = sbr.rel (%p593) target = $region92
      $region91: #{vit_forward.1} parent=11 // pred_region
        _
      $region92: #{vit_forward.1} parent=11 // pred_fallthru
        _
      // Predicated region
      $region93: #{vit_forward.1} parent=11 // pred_check
        %p596 = pneg %p495
      $region94: #{vit_forward.1} parent=11 // pred_check_branch
        %598 = sbr.rel (%p596) target = $region96
      $region95: #{vit_forward.1} parent=11 // pred_region
        _
      $region96: #{vit_forward.1} parent=11 // pred_fallthru
        _
    $region12: #{vit_forward.1} parent=5 // pred_fallthru
      _
    %p599 = scmp.lt.s32.totalorder %s28, 2
    // Predicated region
    $region97: #{vit_forward.1} parent=5 // pred_check
      %p600 = pneg %p599
    $region98: #{vit_forward.1} parent=5 // pred_check_branch
      %602 = sbr.rel (%p600) target = $region100
    $region99: #{vit_forward.1} parent=5 // pred_region
      // Predicated region
      $region101: #{vit_forward.1} parent=99 // pred_check
        %p603 = pneg %p48
      $region102: #{vit_forward.1} parent=99 // pred_check_branch
        %605 = sbr.rel (%p603) target = $region104
      $region103: #{vit_forward.1} parent=99 // pred_region
        %s606 = smul.u32 20, %s28
        %p607 = scmp.lt.s32.totalorder %s606, 39
        %s608 = scalar_select %p607, %s606, 39
        %s609 = smul.addr %s608, 6
        %s610 = smul.addr %s609, 4
        %s611 = scalar_lea.vmem %s0, %s610
        %s612 = smul.u32 20, %s28
      $region104: #{vit_forward.1} parent=99 // pred_fallthru
        _
    $region100: #{vit_forward.1} parent=5 // pred_fallthru
      _
    %p613 = scmp.le.s32.totalorder 1, %s28
    %p614 = scmp.lt.s32.totalorder %s28, 3
    %p615 = pnand %p613, %p614
    %p616 = pneg %p615
    // Predicated region
    $region105: #{vit_forward.1} parent=5 // pred_check
      _
    $region106: #{vit_forward.1} parent=5 // pred_check_branch
      %618 = sbr.rel (%p615) target = $region108
    $region107: #{vit_forward.1} parent=5 // pred_region
      %s619 = ssub.s32 %s28, 1
      %s620 = smul.u32 20, %s33
      %p621 = scmp.lt.s32.totalorder %s620, 39
      %s622 = scalar_select %p621, %s620, 39
      %s623 = smul.addr %s622, 6
      %s624 = smul.addr %s623, 4
      %s625 = scalar_lea.vmem %s0, %s624
      %p626 = pneg %p54
      %p627 = pneg %p51
      %p628 = pneg %p75
      %p629 = pneg %p72
      %p630 = pneg %p96
      %p631 = pneg %p93
      %p632 = pneg %p117
      %p633 = pneg %p114
      %p634 = pneg %p138
      %p635 = pneg %p135
      %p636 = pneg %p159
      %p637 = pneg %p156
      %p638 = pneg %p180
      %p639 = pneg %p177
      %p640 = pneg %p201
      %p641 = pneg %p198
      %p642 = pneg %p222
      %p643 = pneg %p219
      %p644 = pneg %p243
      %p645 = pneg %p240
      %p646 = pneg %p264
      %p647 = pneg %p261
      %p648 = pneg %p285
      %p649 = pneg %p282
      %p650 = pneg %p306
      %p651 = pneg %p303
      %p652 = pneg %p327
      %p653 = pneg %p324
      %p654 = pneg %p348
      %p655 = pneg %p345
      %p656 = pneg %p369
      %p657 = pneg %p366
      %p658 = pneg %p390
      %p659 = pneg %p387
      %p660 = pneg %p411
      %p661 = pneg %p408
      %p662 = pneg %p432
      %p663 = pneg %p429
      %p664 = pneg %p453
      %p665 = pneg %p450
      %p666 = pneg %p474
      %p667 = pneg %p471
      %p668 = pneg %p495
      %p669 = pneg %p492
      %p670 = pneg %p521
      %p671 = pneg %p518
      %s672 = smul.u32 4, %s33
      %p673 = scmp.lt.s32.totalorder %s672, 7
      %s674 = scalar_select %p673, %s672, 7
      %s675 = smul.addr %s674, 8
      %s676 = scalar_lea.vmem %s22, %s675
      %s677 = smul.u32 20, %s33
      %p678 = scmp.lt.s32.totalorder %s677, 39
      %s679 = scalar_select %p678, %s677, 39
      %s680 = smul.addr %s679, 6
      %s681 = smul.addr %s680, 4
      %s682 = scalar_lea.vmem %s0, %s681
      %s683 = smul.u32 20, %s33
      %s684 = smul.u32 4, %s33
      %p685 = scmp.lt.s32.totalorder %s684, 7
      %s686 = scalar_select %p685, %s684, 7
      %s687 = smul.addr %s686, 8
      %s688 = scalar_lea.vmem %s22, %s687
      %s689 = smul.u32 4, %s33
      %v691 = vld [vmem:[%s682] sm:$0xff]
      %v692 = vld [vmem:[%s682 + $0x8] sm:$0xff]
      %v693 = vld [vmem:[%s682 + $0x10] sm:$0xff]
      %v694 = vld [vmem:[%s682 + $0x18] sm:$0xff]
      %v695 = vld [vmem:[%s682 + $0x20] sm:$0xff]
      %v696 = vld [vmem:[%s682 + $0x28] sm:$0xff]
      %v697 = vld [vmem:[%s682 + $0x30] sm:$0xff]
      %v698 = vld [vmem:[%s682 + $0x38] sm:$0xff]
      %v699 = vld [vmem:[%s682 + $0x40] sm:$0xff]
      %v700 = vld [vmem:[%s682 + $0x48] sm:$0xff]
      %v701 = vld [vmem:[%s682 + $0x50] sm:$0xff]
      %v702 = vld [vmem:[%s682 + $0x58] sm:$0xff]
      %v703 = vld [vmem:[%s682 + $0x60] sm:$0xff]
      %v704 = vld [vmem:[%s682 + $0x68] sm:$0xff]
      %v705 = vld [vmem:[%s682 + $0x70] sm:$0xff]
      %v706 = vld [vmem:[%s682 + $0x78] sm:$0xff]
      %v707 = vld [vmem:[%s682 + $0x80] sm:$0xff]
      %v708 = vld [vmem:[%s682 + $0x88] sm:$0xff]
      %v709 = vld [vmem:[%s682 + $0x90] sm:$0xff]
      %v710 = vld [vmem:[%s682 + $0x98] sm:$0xff]
      %v711 = vld [vmem:[%s682 + $0xa0] sm:$0xff]
      %v712 = vld [vmem:[%s682 + $0xa8] sm:$0xff]
      %v713 = vld [vmem:[%s682 + $0xb0] sm:$0xff]
      %v714 = vld [vmem:[%s682 + $0xb8] sm:$0xff]
      %v715 = vld [vmem:[%s682 + $0xc0] sm:$0xff]
      %v716 = vld [vmem:[%s682 + $0xc8] sm:$0xff]
      %v717 = vld [vmem:[%s682 + $0xd0] sm:$0xff]
      %v718 = vld [vmem:[%s682 + $0xd8] sm:$0xff]
      %v719 = vld [vmem:[%s682 + $0xe0] sm:$0xff]
      %v720 = vld [vmem:[%s682 + $0xe8] sm:$0xff]
      %v721 = vld [vmem:[%s682 + $0xf0] sm:$0xff]
      %v722 = vld [vmem:[%s682 + $0xf8] sm:$0xff]
      %v723 = vld [vmem:[%s682 + $0x100] sm:$0xff]
      %v724 = vld [vmem:[%s682 + $0x108] sm:$0xff]
      %v725 = vld [vmem:[%s682 + $0x110] sm:$0xff]
      %v726 = vld [vmem:[%s682 + $0x118] sm:$0xff]
      %v727 = vld [vmem:[%s682 + $0x120] sm:$0xff]
      %v728 = vld [vmem:[%s682 + $0x128] sm:$0xff]
      %v729 = vld [vmem:[%s682 + $0x130] sm:$0xff]
      %v730 = vld [vmem:[%s682 + $0x138] sm:$0xff]
      %v731 = vld [vmem:[%s682 + $0x140] sm:$0xff]
      %v732 = vld [vmem:[%s682 + $0x148] sm:$0xff]
      %v733 = vld [vmem:[%s682 + $0x150] sm:$0xff]
      %v734 = vld [vmem:[%s682 + $0x158] sm:$0xff]
      %v735 = vld [vmem:[%s682 + $0x160] sm:$0xff]
      %v736 = vld [vmem:[%s682 + $0x168] sm:$0xff]
      %v737 = vld [vmem:[%s682 + $0x170] sm:$0xff]
      %v738 = vld [vmem:[%s682 + $0x178] sm:$0xff]
      %v739 = vld [vmem:[%s682 + $0x180] sm:$0xff]
      %v740 = vld [vmem:[%s682 + $0x188] sm:$0xff]
      %v741 = vld [vmem:[%s682 + $0x190] sm:$0xff]
      %v742 = vld [vmem:[%s682 + $0x198] sm:$0xff]
      %v743 = vld [vmem:[%s682 + $0x1a0] sm:$0xff]
      %v744 = vld [vmem:[%s682 + $0x1a8] sm:$0xff]
      %v745 = vld [vmem:[%s682 + $0x1b0] sm:$0xff]
      %v746 = vld [vmem:[%s682 + $0x1b8] sm:$0xff]
      %v747 = vld [vmem:[%s682 + $0x1c0] sm:$0xff]
      %v748 = vld [vmem:[%s682 + $0x1c8] sm:$0xff]
      %v749 = vld [vmem:[%s682 + $0x1d0] sm:$0xff]
      %v750 = vld [vmem:[%s682 + $0x1d8] sm:$0xff]
      %v751 = vld [vmem:[%s2] sm:$0xf]
      %v752 = vld [vmem:[%s2 + $0x4] sm:$0xf]
      %v753 = vld [vmem:[%s2 + $0x8] sm:$0xf]
      %v754 = vld [vmem:[%s2 + $0xc] sm:$0xf]
      %v755 = vld [vmem:[%s2 + $0x10] sm:$0xf]
      %v756 = vld [vmem:[%s2 + $0x14] sm:$0xf]
      %v757 = vld [vmem:[%s2 + $0x18] sm:$0xf]
      %v758 = vld [vmem:[%s2 + $0x1c] sm:$0xf]
      %v759 = vld [vmem:[%s2 + $0x20] sm:$0xf]
      %v760 = vld [vmem:[%s2 + $0x24] sm:$0xf]
      %v761 = vld [vmem:[%s2 + $0x28] sm:$0xf]
      %v762 = vld [vmem:[%s2 + $0x2c] sm:$0xf]
      %v763 = vld [vmem:[%s2 + $0x30] sm:$0xf]
      %v764 = vld [vmem:[%s2 + $0x34] sm:$0xf]
      %v765 = vld [vmem:[%s2 + $0x38] sm:$0xf]
      %v766 = vld [vmem:[%s2 + $0x3c] sm:$0xf]
      %v767 = vld [vmem:[%s2 + $0x40] sm:$0xf]
      %v768 = vld [vmem:[%s2 + $0x44] sm:$0xf]
      %v769 = vld [vmem:[%s2 + $0x48] sm:$0xf]
      %v770 = vld [vmem:[%s2 + $0x4c] sm:$0xf]
      %v771 = vld [vmem:[%s2 + $0x50] sm:$0xf]
      %v772 = vld [vmem:[%s2 + $0x54] sm:$0xf]
      %v773 = vld [vmem:[%s2 + $0x58] sm:$0xf]
      %v774 = vld [vmem:[%s2 + $0x5c] sm:$0xf]
      %v775 = vld [vmem:[%s2 + $0x60] sm:$0xf]
      %v776 = vld [vmem:[%s2 + $0x64] sm:$0xf]
      %v777 = vld [vmem:[%s2 + $0x68] sm:$0xf]
      %v778 = vld [vmem:[%s2 + $0x6c] sm:$0xf]
      %v779 = vld [vmem:[%s2 + $0x70] sm:$0xf]
      %v780 = vld [vmem:[%s2 + $0x74] sm:$0xf]
      %v781 = vld [vmem:[%s2 + $0x78] sm:$0xf]
      %v782 = vld [vmem:[%s2 + $0x7c] sm:$0xf]
      %v783 = vld [vmem:[%s2 + $0x80] sm:$0xf]
      %v784 = vld [vmem:[%s2 + $0x84] sm:$0xf]
      %v785 = vld [vmem:[%s2 + $0x88] sm:$0xf]
      %v786 = vld [vmem:[%s2 + $0x8c] sm:$0xf]
      %v787 = vld [vmem:[%s2 + $0x90] sm:$0xf]
      %v788 = vld [vmem:[%s2 + $0x94] sm:$0xf]
      %v789 = vld [vmem:[%s2 + $0x98] sm:$0xf]
      %v790 = vld [vmem:[%s2 + $0x9c] sm:$0xf]
      %v791 = vld [vmem:[%s2 + $0xa0] sm:$0xf]
      %v792 = vld [vmem:[%s2 + $0xa4] sm:$0xf]
      %v793 = vld [vmem:[%s2 + $0xa8] sm:$0xf]
      %v794 = vld [vmem:[%s2 + $0xac] sm:$0xf]
      %v795 = vld [vmem:[%s2 + $0xb0] sm:$0xf]
      %v796 = vld [vmem:[%s2 + $0xb4] sm:$0xf]
      %v797 = vld [vmem:[%s2 + $0xb8] sm:$0xf]
      %v798 = vld [vmem:[%s2 + $0xbc] sm:$0xf]
      %v799 = vld [vmem:[%s2 + $0xc0] sm:$0xf]
      %v800 = vld [vmem:[%s2 + $0xc4] sm:$0xf]
      %v801 = vld [vmem:[%s2 + $0xc8] sm:$0xf]
      %v802 = vld [vmem:[%s2 + $0xcc] sm:$0xf]
      %v803 = vld [vmem:[%s2 + $0xd0] sm:$0xf]
      %v804 = vld [vmem:[%s2 + $0xd4] sm:$0xf]
      %v805 = vld [vmem:[%s2 + $0xd8] sm:$0xf]
      %v806 = vld [vmem:[%s2 + $0xdc] sm:$0xf]
      %v807 = vld [vmem:[%s2 + $0xe0] sm:$0xf]
      %v808 = vld [vmem:[%s2 + $0xe4] sm:$0xf]
      %v809 = vld [vmem:[%s2 + $0xe8] sm:$0xf]
      %v810 = vld [vmem:[%s2 + $0xec] sm:$0xf]
      %v811 = vld [vmem:[%s2 + $0xf0] sm:$0xf]
      %v812 = vld [vmem:[%s2 + $0xf4] sm:$0xf]
      %v813 = vld [vmem:[%s2 + $0xf8] sm:$0xf]
      %v814 = vld [vmem:[%s2 + $0xfc] sm:$0xf]
      %v815 = vld [vmem:[%s2 + $0x100] sm:$0xf]
      %v816 = vld [vmem:[%s2 + $0x104] sm:$0xf]
      %v817 = vld [vmem:[%s2 + $0x108] sm:$0xf]
      %v818 = vld [vmem:[%s2 + $0x10c] sm:$0xf]
      %v819 = vld [vmem:[%s2 + $0x110] sm:$0xf]
      %v820 = vld [vmem:[%s2 + $0x114] sm:$0xf]
      %v821 = vld [vmem:[%s2 + $0x118] sm:$0xf]
      %v822 = vld [vmem:[%s2 + $0x11c] sm:$0xf]
      %v823 = vld [vmem:[%s2 + $0x120] sm:$0xf]
      %v824 = vld [vmem:[%s2 + $0x124] sm:$0xf]
      %v825 = vld [vmem:[%s2 + $0x128] sm:$0xf]
      %v826 = vld [vmem:[%s2 + $0x12c] sm:$0xf]
      %v827 = vld [vmem:[%s2 + $0x130] sm:$0xf]
      %v828 = vld [vmem:[%s2 + $0x134] sm:$0xf]
      %v829 = vld [vmem:[%s2 + $0x138] sm:$0xf]
      %v830 = vld [vmem:[%s2 + $0x13c] sm:$0xf]
      %v831 = vld [vmem:[%s2 + $0x140] sm:$0xf]
      %v832 = vld [vmem:[%s2 + $0x144] sm:$0xf]
      %v833 = vld [vmem:[%s2 + $0x148] sm:$0xf]
      %v834 = vld [vmem:[%s2 + $0x14c] sm:$0xf]
      %v835 = vld [vmem:[%s2 + $0x150] sm:$0xf]
      %v836 = vld [vmem:[%s2 + $0x154] sm:$0xf]
      %v837 = vld [vmem:[%s2 + $0x158] sm:$0xf]
      %v838 = vld [vmem:[%s2 + $0x15c] sm:$0xf]
      %v839 = vld [vmem:[%s2 + $0x160] sm:$0xf]
      %v840 = vld [vmem:[%s2 + $0x164] sm:$0xf]
      %v841 = vld [vmem:[%s2 + $0x168] sm:$0xf]
      %v842 = vld [vmem:[%s2 + $0x16c] sm:$0xf]
      %v843 = vld [vmem:[%s2 + $0x170] sm:$0xf]
      %v844 = vld [vmem:[%s2 + $0x174] sm:$0xf]
      %v845 = vld [vmem:[%s2 + $0x178] sm:$0xf]
      %v846 = vld [vmem:[%s2 + $0x17c] sm:$0xf]
      %v847 = vld [vmem:[%s3] sm:$0x1]
      %v849 = vlaneseq
      %v850 = vshrl.u32 %v849, 7
      %v851 = vsub.s32 0, %v850
      %v852 = vrot.slane %v847, %v851
      %v914 = vunpack.c.l.b16 %v691
      %v915 = vunpack.c.h.b16 %v691
      %v916 = vunpack.c.l.b16 %v692
      %v917 = vunpack.c.h.b16 %v692
      %v918 = vunpack.c.l.b16 %v693
      %v919 = vunpack.c.h.b16 %v693
      %v920 = vunpack.c.l.b16 %v694
      %v921 = vunpack.c.h.b16 %v694
      %v922 = vunpack.c.l.b16 %v695
      %v923 = vunpack.c.h.b16 %v695
      %v924 = vunpack.c.l.b16 %v696
      %v925 = vunpack.c.h.b16 %v696
      %v926 = vunpack.c.l.b16 %v697
      %v927 = vunpack.c.h.b16 %v697
      %v928 = vunpack.c.l.b16 %v698
      %v929 = vunpack.c.h.b16 %v698
      %v930 = vunpack.c.l.b16 %v699
      %v931 = vunpack.c.h.b16 %v699
      %v932 = vunpack.c.l.b16 %v700
      %v933 = vunpack.c.h.b16 %v700
      %v934 = vunpack.c.l.b16 %v701
      %v935 = vunpack.c.h.b16 %v701
      %v936 = vunpack.c.l.b16 %v702
      %v937 = vunpack.c.h.b16 %v702
      %v938 = vunpack.c.l.b16 %v703
      %v939 = vunpack.c.h.b16 %v703
      %v940 = vunpack.c.l.b16 %v704
      %v941 = vunpack.c.h.b16 %v704
      %v942 = vunpack.c.l.b16 %v705
      %v943 = vunpack.c.h.b16 %v705
      %v944 = vunpack.c.l.b16 %v706
      %v945 = vunpack.c.h.b16 %v706
      %v946 = vunpack.c.l.b16 %v707
      %v947 = vunpack.c.h.b16 %v707
      %v948 = vunpack.c.l.b16 %v708
      %v949 = vunpack.c.h.b16 %v708
      %v950 = vunpack.c.l.b16 %v709
      %v951 = vunpack.c.h.b16 %v709
      %v952 = vunpack.c.l.b16 %v710
      %v953 = vunpack.c.h.b16 %v710
      %v954 = vunpack.c.l.b16 %v711
      %v955 = vunpack.c.h.b16 %v711
      %v956 = vunpack.c.l.b16 %v712
      %v957 = vunpack.c.h.b16 %v712
      %v958 = vunpack.c.l.b16 %v713
      %v959 = vunpack.c.h.b16 %v713
      %v960 = vunpack.c.l.b16 %v714
      %v961 = vunpack.c.h.b16 %v714
      %v962 = vunpack.c.l.b16 %v715
      %v963 = vunpack.c.h.b16 %v715
      %v964 = vunpack.c.l.b16 %v716
      %v965 = vunpack.c.h.b16 %v716
      %v966 = vunpack.c.l.b16 %v717
      %v967 = vunpack.c.h.b16 %v717
      %v968 = vunpack.c.l.b16 %v718
      %v969 = vunpack.c.h.b16 %v718
      %v970 = vunpack.c.l.b16 %v719
      %v971 = vunpack.c.h.b16 %v719
      %v972 = vunpack.c.l.b16 %v720
      %v973 = vunpack.c.h.b16 %v720
      %v974 = vunpack.c.l.b16 %v721
      %v975 = vunpack.c.h.b16 %v721
      %v976 = vunpack.c.l.b16 %v722
      %v977 = vunpack.c.h.b16 %v722
      %v978 = vunpack.c.l.b16 %v723
      %v979 = vunpack.c.h.b16 %v723
      %v980 = vunpack.c.l.b16 %v724
      %v981 = vunpack.c.h.b16 %v724
      %v982 = vunpack.c.l.b16 %v725
      %v983 = vunpack.c.h.b16 %v725
      %v984 = vunpack.c.l.b16 %v726
      %v985 = vunpack.c.h.b16 %v726
      %v986 = vunpack.c.l.b16 %v727
      %v987 = vunpack.c.h.b16 %v727
      %v988 = vunpack.c.l.b16 %v728
      %v989 = vunpack.c.h.b16 %v728
      %v990 = vunpack.c.l.b16 %v729
      %v991 = vunpack.c.h.b16 %v729
      %v992 = vunpack.c.l.b16 %v730
      %v993 = vunpack.c.h.b16 %v730
      %v994 = vunpack.c.l.b16 %v731
      %v995 = vunpack.c.h.b16 %v731
      %v996 = vunpack.c.l.b16 %v732
      %v997 = vunpack.c.h.b16 %v732
      %v998 = vunpack.c.l.b16 %v733
      %v999 = vunpack.c.h.b16 %v733
      %v1000 = vunpack.c.l.b16 %v734
      %v1001 = vunpack.c.h.b16 %v734
      %v1002 = vunpack.c.l.b16 %v735
      %v1003 = vunpack.c.h.b16 %v735
      %v1004 = vunpack.c.l.b16 %v736
      %v1005 = vunpack.c.h.b16 %v736
      %v1006 = vunpack.c.l.b16 %v737
      %v1007 = vunpack.c.h.b16 %v737
      %v1008 = vunpack.c.l.b16 %v738
      %v1009 = vunpack.c.h.b16 %v738
      %v1010 = vunpack.c.l.b16 %v739
      %v1011 = vunpack.c.h.b16 %v739
      %v1012 = vunpack.c.l.b16 %v740
      %v1013 = vunpack.c.h.b16 %v740
      %v1014 = vunpack.c.l.b16 %v741
      %v1015 = vunpack.c.h.b16 %v741
      %v1016 = vunpack.c.l.b16 %v742
      %v1017 = vunpack.c.h.b16 %v742
      %v1018 = vunpack.c.l.b16 %v743
      %v1019 = vunpack.c.h.b16 %v743
      %v1020 = vunpack.c.l.b16 %v744
      %v1021 = vunpack.c.h.b16 %v744
      %v1022 = vunpack.c.l.b16 %v745
      %v1023 = vunpack.c.h.b16 %v745
      %v1024 = vunpack.c.l.b16 %v746
      %v1025 = vunpack.c.h.b16 %v746
      %v1026 = vunpack.c.l.b16 %v747
      %v1027 = vunpack.c.h.b16 %v747
      %v1028 = vunpack.c.l.b16 %v748
      %v1029 = vunpack.c.h.b16 %v748
      %v1030 = vunpack.c.l.b16 %v749
      %v1031 = vunpack.c.h.b16 %v749
      %v1032 = vunpack.c.l.b16 %v750
      %v1033 = vunpack.c.h.b16 %v750
      %v1034 = vpack.c.b16 %v920, %v914
      %v1035 = vpack.c.b16 %v921, %v915
      %v1036 = vpack.c.b16 %v922, %v916
      %v1037 = vpack.c.b16 %v923, %v917
      %v1038 = vpack.c.b16 %v924, %v918
      %v1039 = vpack.c.b16 %v925, %v919
      %v1040 = vpack.c.b16 %v932, %v926
      %v1041 = vpack.c.b16 %v933, %v927
      %v1042 = vpack.c.b16 %v934, %v928
      %v1043 = vpack.c.b16 %v935, %v929
      %v1044 = vpack.c.b16 %v936, %v930
      %v1045 = vpack.c.b16 %v937, %v931
      %v1046 = vpack.c.b16 %v944, %v938
      %v1047 = vpack.c.b16 %v945, %v939
      %v1048 = vpack.c.b16 %v946, %v940
      %v1049 = vpack.c.b16 %v947, %v941
      %v1050 = vpack.c.b16 %v948, %v942
      %v1051 = vpack.c.b16 %v949, %v943
      %v1052 = vpack.c.b16 %v956, %v950
      %v1053 = vpack.c.b16 %v957, %v951
      %v1054 = vpack.c.b16 %v958, %v952
      %v1055 = vpack.c.b16 %v959, %v953
      %v1056 = vpack.c.b16 %v960, %v954
      %v1057 = vpack.c.b16 %v961, %v955
      %v1058 = vpack.c.b16 %v968, %v962
      %v1059 = vpack.c.b16 %v969, %v963
      %v1060 = vpack.c.b16 %v970, %v964
      %v1061 = vpack.c.b16 %v971, %v965
      %v1062 = vpack.c.b16 %v972, %v966
      %v1063 = vpack.c.b16 %v973, %v967
      %v1064 = vpack.c.b16 %v980, %v974
      %v1065 = vpack.c.b16 %v981, %v975
      %v1066 = vpack.c.b16 %v982, %v976
      %v1067 = vpack.c.b16 %v983, %v977
      %v1068 = vpack.c.b16 %v984, %v978
      %v1069 = vpack.c.b16 %v985, %v979
      %v1070 = vpack.c.b16 %v992, %v986
      %v1071 = vpack.c.b16 %v993, %v987
      %v1072 = vpack.c.b16 %v994, %v988
      %v1073 = vpack.c.b16 %v995, %v989
      %v1074 = vpack.c.b16 %v996, %v990
      %v1075 = vpack.c.b16 %v997, %v991
      %v1076 = vpack.c.b16 %v1004, %v998
      %v1077 = vpack.c.b16 %v1005, %v999
      %v1078 = vpack.c.b16 %v1006, %v1000
      %v1079 = vpack.c.b16 %v1007, %v1001
      %v1080 = vpack.c.b16 %v1008, %v1002
      %v1081 = vpack.c.b16 %v1009, %v1003
      %v1082 = vpack.c.b16 %v1016, %v1010
      %v1083 = vpack.c.b16 %v1017, %v1011
      %v1084 = vpack.c.b16 %v1018, %v1012
      %v1085 = vpack.c.b16 %v1019, %v1013
      %v1086 = vpack.c.b16 %v1020, %v1014
      %v1087 = vpack.c.b16 %v1021, %v1015
      %v1088 = vpack.c.b16 %v1028, %v1022
      %v1089 = vpack.c.b16 %v1029, %v1023
      %v1090 = vpack.c.b16 %v1030, %v1024
      %v1091 = vpack.c.b16 %v1031, %v1025
      %v1092 = vpack.c.b16 %v1032, %v1026
      %v1093 = vpack.c.b16 %v1033, %v1027
      %v1250 = vunpack.c.l.b16 %v751
      %v1251 = vunpack.c.l.b16 %v752
      %v1252 = vunpack.c.l.b16 %v753
      %v1253 = vunpack.c.l.b16 %v754
      %v1254 = vunpack.c.l.b16 %v755
      %v1255 = vunpack.c.l.b16 %v756
      %v1256 = vunpack.c.l.b16 %v757
      %v1257 = vunpack.c.l.b16 %v758
      %v1258 = vunpack.c.l.b16 %v759
      %v1259 = vunpack.c.l.b16 %v760
      %v1260 = vunpack.c.l.b16 %v761
      %v1261 = vunpack.c.l.b16 %v762
      %v1262 = vunpack.c.l.b16 %v763
      %v1263 = vunpack.c.l.b16 %v764
      %v1264 = vunpack.c.l.b16 %v765
      %v1265 = vunpack.c.l.b16 %v766
      %v1266 = vunpack.c.l.b16 %v767
      %v1267 = vunpack.c.l.b16 %v768
      %v1268 = vunpack.c.l.b16 %v769
      %v1269 = vunpack.c.l.b16 %v770
      %v1270 = vunpack.c.l.b16 %v771
      %v1271 = vunpack.c.l.b16 %v772
      %v1272 = vunpack.c.l.b16 %v773
      %v1273 = vunpack.c.l.b16 %v774
      %v1274 = vunpack.c.l.b16 %v775
      %v1275 = vunpack.c.l.b16 %v776
      %v1276 = vunpack.c.l.b16 %v777
      %v1277 = vunpack.c.l.b16 %v778
      %v1278 = vunpack.c.l.b16 %v779
      %v1279 = vunpack.c.l.b16 %v780
      %v1280 = vunpack.c.l.b16 %v781
      %v1281 = vunpack.c.l.b16 %v782
      %v1282 = vunpack.c.l.b16 %v783
      %v1283 = vunpack.c.l.b16 %v784
      %v1284 = vunpack.c.l.b16 %v785
      %v1285 = vunpack.c.l.b16 %v786
      %v1286 = vunpack.c.l.b16 %v787
      %v1287 = vunpack.c.l.b16 %v788
      %v1288 = vunpack.c.l.b16 %v789
      %v1289 = vunpack.c.l.b16 %v790
      %v1290 = vunpack.c.l.b16 %v791
      %v1291 = vunpack.c.l.b16 %v792
      %v1292 = vunpack.c.l.b16 %v793
      %v1293 = vunpack.c.l.b16 %v794
      %v1294 = vunpack.c.l.b16 %v795
      %v1295 = vunpack.c.l.b16 %v796
      %v1296 = vunpack.c.l.b16 %v797
      %v1297 = vunpack.c.l.b16 %v798
      %v1298 = vunpack.c.l.b16 %v799
      %v1299 = vunpack.c.l.b16 %v800
      %v1300 = vunpack.c.l.b16 %v801
      %v1301 = vunpack.c.l.b16 %v802
      %v1302 = vunpack.c.l.b16 %v803
      %v1303 = vunpack.c.l.b16 %v804
      %v1304 = vunpack.c.l.b16 %v805
      %v1305 = vunpack.c.l.b16 %v806
      %v1306 = vunpack.c.l.b16 %v807
      %v1307 = vunpack.c.l.b16 %v808
      %v1308 = vunpack.c.l.b16 %v809
      %v1309 = vunpack.c.l.b16 %v810
      %v1310 = vunpack.c.l.b16 %v811
      %v1311 = vunpack.c.l.b16 %v812
      %v1312 = vunpack.c.l.b16 %v813
      %v1313 = vunpack.c.l.b16 %v814
      %v1314 = vunpack.c.l.b16 %v815
      %v1315 = vunpack.c.l.b16 %v816
      %v1316 = vunpack.c.l.b16 %v817
      %v1317 = vunpack.c.l.b16 %v818
      %v1318 = vunpack.c.l.b16 %v819
      %v1319 = vunpack.c.l.b16 %v820
      %v1320 = vunpack.c.l.b16 %v821
      %v1321 = vunpack.c.l.b16 %v822
      %v1322 = vunpack.c.l.b16 %v823
      %v1323 = vunpack.c.l.b16 %v824
      %v1324 = vunpack.c.l.b16 %v825
      %v1325 = vunpack.c.l.b16 %v826
      %v1326 = vunpack.c.l.b16 %v827
      %v1327 = vunpack.c.l.b16 %v828
      %v1328 = vunpack.c.l.b16 %v829
      %v1329 = vunpack.c.l.b16 %v830
      %v1330 = vunpack.c.l.b16 %v831
      %v1331 = vunpack.c.l.b16 %v832
      %v1332 = vunpack.c.l.b16 %v833
      %v1333 = vunpack.c.l.b16 %v834
      %v1334 = vunpack.c.l.b16 %v835
      %v1335 = vunpack.c.l.b16 %v836
      %v1336 = vunpack.c.l.b16 %v837
      %v1337 = vunpack.c.l.b16 %v838
      %v1338 = vunpack.c.l.b16 %v839
      %v1339 = vunpack.c.l.b16 %v840
      %v1340 = vunpack.c.l.b16 %v841
      %v1341 = vunpack.c.l.b16 %v842
      %v1342 = vunpack.c.l.b16 %v843
      %v1343 = vunpack.c.l.b16 %v844
      %v1344 = vunpack.c.l.b16 %v845
      %v1345 = vunpack.c.l.b16 %v846
      %v1346 = vpack.c.b16 %v1251, %v1250
      %v1347 = vpack.c.b16 %v1253, %v1252
      %v1348 = vpack.c.b16 %v1255, %v1254
      %v1349 = vpack.c.b16 %v1257, %v1256
      %v1350 = vpack.c.b16 %v1259, %v1258
      %v1351 = vpack.c.b16 %v1261, %v1260
      %v1352 = vpack.c.b16 %v1263, %v1262
      %v1353 = vpack.c.b16 %v1265, %v1264
      %v1354 = vpack.c.b16 %v1267, %v1266
      %v1355 = vpack.c.b16 %v1269, %v1268
      %v1356 = vpack.c.b16 %v1271, %v1270
      %v1357 = vpack.c.b16 %v1273, %v1272
      %v1358 = vpack.c.b16 %v1275, %v1274
      %v1359 = vpack.c.b16 %v1277, %v1276
      %v1360 = vpack.c.b16 %v1279, %v1278
      %v1361 = vpack.c.b16 %v1281, %v1280
      %v1362 = vpack.c.b16 %v1283, %v1282
      %v1363 = vpack.c.b16 %v1285, %v1284
      %v1364 = vpack.c.b16 %v1287, %v1286
      %v1365 = vpack.c.b16 %v1289, %v1288
      %v1366 = vpack.c.b16 %v1291, %v1290
      %v1367 = vpack.c.b16 %v1293, %v1292
      %v1368 = vpack.c.b16 %v1295, %v1294
      %v1369 = vpack.c.b16 %v1297, %v1296
      %v1370 = vpack.c.b16 %v1299, %v1298
      %v1371 = vpack.c.b16 %v1301, %v1300
      %v1372 = vpack.c.b16 %v1303, %v1302
      %v1373 = vpack.c.b16 %v1305, %v1304
      %v1374 = vpack.c.b16 %v1307, %v1306
      %v1375 = vpack.c.b16 %v1309, %v1308
      %v1376 = vpack.c.b16 %v1311, %v1310
      %v1377 = vpack.c.b16 %v1313, %v1312
      %v1378 = vpack.c.b16 %v1315, %v1314
      %v1379 = vpack.c.b16 %v1317, %v1316
      %v1380 = vpack.c.b16 %v1319, %v1318
      %v1381 = vpack.c.b16 %v1321, %v1320
      %v1382 = vpack.c.b16 %v1323, %v1322
      %v1383 = vpack.c.b16 %v1325, %v1324
      %v1384 = vpack.c.b16 %v1327, %v1326
      %v1385 = vpack.c.b16 %v1329, %v1328
      %v1386 = vpack.c.b16 %v1331, %v1330
      %v1387 = vpack.c.b16 %v1333, %v1332
      %v1388 = vpack.c.b16 %v1335, %v1334
      %v1389 = vpack.c.b16 %v1337, %v1336
      %v1390 = vpack.c.b16 %v1339, %v1338
      %v1391 = vpack.c.b16 %v1341, %v1340
      %v1392 = vpack.c.b16 %v1343, %v1342
      %v1393 = vpack.c.b16 %v1345, %v1344
      %1442 = vmatprep.subr.bf16.mxu0 0
      %1443 = vmatpush1.bf16.msra.mxu0 %v1346
      %1444 = vmatprep.subr.bf16.mxu0 0
      %1445 = vmatpush1.bf16.msra.mxu0 %v1347
      %1446 = vmatprep.subr.bf16.mxu0 0
      %1447 = vmatpush1.bf16.msra.mxu0 %v1348
      %1448 = vmatprep.subr.bf16.mxu0 0
      %1449 = vmatpush1.bf16.msra.mxu0 %v1349
      %1450 = vmatprep.subr.bf16.mxu0 0
      %1451 = vmatpush1.bf16.msra.mxu0 %v1350
      %1452 = vmatprep.subr.bf16.mxu0 0
      %1453 = vmatpush1.bf16.msra.mxu0 %v1351
      %1454 = vmatprep.subr.bf16.mxu0 0
      %1455 = vmatpush1.bf16.msra.mxu0 %v1352
      %1456 = vmatprep.subr.bf16.mxu0 0
      %1457 = vmatpush1.bf16.msra.mxu0 %v1353
      %1458 = vmatprep.subr.bf16.mxu0 0
      %1459 = vmatpush1.bf16.msra.mxu0 %v1354
      %1460 = vmatprep.subr.bf16.mxu0 0
      %1461 = vmatpush1.bf16.msra.mxu0 %v1355
      %1462 = vmatprep.subr.bf16.mxu0 0
      %1463 = vmatpush1.bf16.msra.mxu0 %v1356
      %1464 = vmatprep.subr.bf16.mxu0 0
      %1465 = vmatpush1.bf16.msra.mxu0 %v1357
      %1466 = vmatprep.subr.bf16.mxu0 0
      %1467 = vmatpush1.bf16.msra.mxu0 %v1358
      %1468 = vmatprep.subr.bf16.mxu0 0
      %1469 = vmatpush1.bf16.msra.mxu0 %v1359
      %1470 = vmatprep.subr.bf16.mxu0 0
      %1471 = vmatpush1.bf16.msra.mxu0 %v1360
      %1472 = vmatprep.subr.bf16.mxu0 0
      %1473 = vmatpush1.bf16.msra.mxu0 %v1361
      %1474 = vmatprep.mubr.bf16.mxu0 %v1035
      %1475 = vmatmul.mubr.bf16.gmra.mrb[0].mxu0 %v1034
      %v1476 = vpop.f32.mrb[0].mxu0
      %v1477 = vadd.f32 %v852, %v1476
      %v1478 = vpop.f32.mrb[0].mxu0
      %v1479 = vpop.f32.mrb[0].mxu0
      %v1480 = vadd.f32 %v852, %v1479
      %v1481 = vpop.f32.mrb[0].mxu0
      %1482 = vmatprep.mubr.bf16.mxu0 %v1041
      %1483 = vmatmul.mubr.bf16.gmra.mrb[0].mxu0 %v1040
      %v1484 = vpop.f32.mrb[0].mxu0
      %v1485 = vadd.f32 %v852, %v1484
      %v1486 = vpop.f32.mrb[0].mxu0
      %v1487 = vpop.f32.mrb[0].mxu0
      %v1488 = vadd.f32 %v852, %v1487
      %v1489 = vpop.f32.mrb[0].mxu0
      %1490 = vmatprep.mubr.bf16.mxu0 %v1047
      %1491 = vmatmul.mubr.bf16.gmra.mrb[0].mxu0 %v1046
      %v1492 = vpop.f32.mrb[0].mxu0
      %v1493 = vadd.f32 %v852, %v1492
      %v1494 = vpop.f32.mrb[0].mxu0
      %v1495 = vpop.f32.mrb[0].mxu0
      %v1496 = vadd.f32 %v852, %v1495
      %v1497 = vpop.f32.mrb[0].mxu0
      %1498 = vmatprep.mubr.bf16.mxu0 %v1053
      %1499 = vmatmul.mubr.bf16.gmra.mrb[0].mxu0 %v1052
      %v1500 = vpop.f32.mrb[0].mxu0
      %v1501 = vadd.f32 %v852, %v1500
      %v1502 = vpop.f32.mrb[0].mxu0
      %v1503 = vpop.f32.mrb[0].mxu0
      %v1504 = vadd.f32 %v852, %v1503
      %v1505 = vpop.f32.mrb[0].mxu0
      %1506 = vmatprep.mubr.bf16.mxu0 %v1059
      %1507 = vmatmul.mubr.bf16.gmra.mrb[0].mxu0 %v1058
      %v1508 = vpop.f32.mrb[0].mxu0
      %v1509 = vadd.f32 %v852, %v1508
      %v1510 = vpop.f32.mrb[0].mxu0
      %v1511 = vpop.f32.mrb[0].mxu0
      %v1512 = vadd.f32 %v852, %v1511
      %v1513 = vpop.f32.mrb[0].mxu0
      %1514 = vmatprep.mubr.bf16.mxu0 %v1065
      %1515 = vmatmul.mubr.bf16.gmra.mrb[0].mxu0 %v1064
      %v1516 = vpop.f32.mrb[0].mxu0
      %v1517 = vadd.f32 %v852, %v1516
      %v1518 = vpop.f32.mrb[0].mxu0
      %v1519 = vpop.f32.mrb[0].mxu0
      %v1520 = vadd.f32 %v852, %v1519
      %v1521 = vpop.f32.mrb[0].mxu0
      %1522 = vmatprep.mubr.bf16.mxu0 %v1071
      %1523 = vmatmul.mubr.bf16.gmra.mrb[0].mxu0 %v1070
      %v1524 = vpop.f32.mrb[0].mxu0
      %v1525 = vadd.f32 %v852, %v1524
      %v1526 = vpop.f32.mrb[0].mxu0
      %v1527 = vpop.f32.mrb[0].mxu0
      %v1528 = vadd.f32 %v852, %v1527
      %v1529 = vpop.f32.mrb[0].mxu0
      %1530 = vmatprep.mubr.bf16.mxu0 %v1077
      %1531 = vmatmul.mubr.bf16.gmra.mrb[0].mxu0 %v1076
      %v1532 = vpop.f32.mrb[0].mxu0
      %v1533 = vadd.f32 %v852, %v1532
      %v1534 = vpop.f32.mrb[0].mxu0
      %v1535 = vpop.f32.mrb[0].mxu0
      %v1536 = vadd.f32 %v852, %v1535
      %v1537 = vpop.f32.mrb[0].mxu0
      %1538 = vmatprep.mubr.bf16.mxu0 %v1083
      %1539 = vmatmul.mubr.bf16.gmra.mrb[0].mxu0 %v1082
      %v1540 = vpop.f32.mrb[0].mxu0
      %v1541 = vadd.f32 %v852, %v1540
      %v1542 = vpop.f32.mrb[0].mxu0
      %v1543 = vpop.f32.mrb[0].mxu0
      %v1544 = vadd.f32 %v852, %v1543
      %v1545 = vpop.f32.mrb[0].mxu0
      %1546 = vmatprep.mubr.bf16.mxu0 %v1089
      %1547 = vmatmul.mubr.bf16.gmra.mrb[0].mxu0 %v1088
      %v1548 = vpop.f32.mrb[0].mxu0
      %v1549 = vadd.f32 %v852, %v1548
      %v1550 = vpop.f32.mrb[0].mxu0
      %v1551 = vpop.f32.mrb[0].mxu0
      %v1552 = vadd.f32 %v852, %v1551
      %v1553 = vpop.f32.mrb[0].mxu0
      %1554 = vdwg.mxu0
      %1555 = vmatprep.subr.bf16.mxu0 0
      %1556 = vmatpush1.bf16.msra.mxu0 %v1362
      %1557 = vmatprep.subr.bf16.mxu0 0
      %1558 = vmatpush1.bf16.msra.mxu0 %v1363
      %1559 = vmatprep.subr.bf16.mxu0 0
      %1560 = vmatpush1.bf16.msra.mxu0 %v1364
      %1561 = vmatprep.subr.bf16.mxu0 0
      %1562 = vmatpush1.bf16.msra.mxu0 %v1365
      %1563 = vmatprep.subr.bf16.mxu0 0
      %1564 = vmatpush1.bf16.msra.mxu0 %v1366
      %1565 = vmatprep.subr.bf16.mxu0 0
      %1566 = vmatpush1.bf16.msra.mxu0 %v1367
      %1567 = vmatprep.subr.bf16.mxu0 0
      %1568 = vmatpush1.bf16.msra.mxu0 %v1368
      %1569 = vmatprep.subr.bf16.mxu0 0
      %1570 = vmatpush1.bf16.msra.mxu0 %v1369
      %1571 = vmatprep.subr.bf16.mxu0 0
      %1572 = vmatpush1.bf16.msra.mxu0 %v1370
      %1573 = vmatprep.subr.bf16.mxu0 0
      %1574 = vmatpush1.bf16.msra.mxu0 %v1371
      %1575 = vmatprep.subr.bf16.mxu0 0
      %1576 = vmatpush1.bf16.msra.mxu0 %v1372
      %1577 = vmatprep.subr.bf16.mxu0 0
      %1578 = vmatpush1.bf16.msra.mxu0 %v1373
      %1579 = vmatprep.subr.bf16.mxu0 0
      %1580 = vmatpush1.bf16.msra.mxu0 %v1374
      %1581 = vmatprep.subr.bf16.mxu0 0
      %1582 = vmatpush1.bf16.msra.mxu0 %v1375
      %1583 = vmatprep.subr.bf16.mxu0 0
      %1584 = vmatpush1.bf16.msra.mxu0 %v1376
      %1585 = vmatprep.subr.bf16.mxu0 0
      %1586 = vmatpush1.bf16.msra.mxu0 %v1377
      %1587 = vmatprep.mubr.bf16.mxu0 %v1037
      %1588 = vmatmul.mubr.bf16.gmra.mrb[0].mxu0 %v1036
      %v1589 = vpop.f32.mrb[0].mxu0
      %v1590 = vadd.f32 %v1477, %v1589
      %v1591 = vpop.f32.mrb[0].mxu0
      %v1592 = vpop.f32.mrb[0].mxu0
      %v1593 = vadd.f32 %v1480, %v1592
      %v1594 = vpop.f32.mrb[0].mxu0
      %1595 = vmatprep.mubr.bf16.mxu0 %v1043
      %1596 = vmatmul.mubr.bf16.gmra.mrb[0].mxu0 %v1042
      %v1597 = vpop.f32.mrb[0].mxu0
      %v1598 = vadd.f32 %v1485, %v1597
      %v1599 = vpop.f32.mrb[0].mxu0
      %v1600 = vpop.f32.mrb[0].mxu0
      %v1601 = vadd.f32 %v1488, %v1600
      %v1602 = vpop.f32.mrb[0].mxu0
      %1603 = vmatprep.mubr.bf16.mxu0 %v1049
      %1604 = vmatmul.mubr.bf16.gmra.mrb[0].mxu0 %v1048
      %v1605 = vpop.f32.mrb[0].mxu0
      %v1606 = vadd.f32 %v1493, %v1605
      %v1607 = vpop.f32.mrb[0].mxu0
      %v1608 = vpop.f32.mrb[0].mxu0
      %v1609 = vadd.f32 %v1496, %v1608
      %v1610 = vpop.f32.mrb[0].mxu0
      %1611 = vmatprep.mubr.bf16.mxu0 %v1055
      %1612 = vmatmul.mubr.bf16.gmra.mrb[0].mxu0 %v1054
      %v1613 = vpop.f32.mrb[0].mxu0
      %v1614 = vadd.f32 %v1501, %v1613
      %v1615 = vpop.f32.mrb[0].mxu0
      %v1616 = vpop.f32.mrb[0].mxu0
      %v1617 = vadd.f32 %v1504, %v1616
      %v1618 = vpop.f32.mrb[0].mxu0
      %1619 = vmatprep.mubr.bf16.mxu0 %v1061
      %1620 = vmatmul.mubr.bf16.gmra.mrb[0].mxu0 %v1060
      %v1621 = vpop.f32.mrb[0].mxu0
      %v1622 = vadd.f32 %v1509, %v1621
      %v1623 = vpop.f32.mrb[0].mxu0
      %v1624 = vpop.f32.mrb[0].mxu0
      %v1625 = vadd.f32 %v1512, %v1624
      %v1626 = vpop.f32.mrb[0].mxu0
      %1627 = vmatprep.mubr.bf16.mxu0 %v1067
      %1628 = vmatmul.mubr.bf16.gmra.mrb[0].mxu0 %v1066
      %v1629 = vpop.f32.mrb[0].mxu0
      %v1630 = vadd.f32 %v1517, %v1629
      %v1631 = vpop.f32.mrb[0].mxu0
      %v1632 = vpop.f32.mrb[0].mxu0
      %v1633 = vadd.f32 %v1520, %v1632
      %v1634 = vpop.f32.mrb[0].mxu0
      %1635 = vmatprep.mubr.bf16.mxu0 %v1073
      %1636 = vmatmul.mubr.bf16.gmra.mrb[0].mxu0 %v1072
      %v1637 = vpop.f32.mrb[0].mxu0
      %v1638 = vadd.f32 %v1525, %v1637
      %v1639 = vpop.f32.mrb[0].mxu0
      %v1640 = vpop.f32.mrb[0].mxu0
      %v1641 = vadd.f32 %v1528, %v1640
      %v1642 = vpop.f32.mrb[0].mxu0
      %1643 = vmatprep.mubr.bf16.mxu0 %v1079
      %1644 = vmatmul.mubr.bf16.gmra.mrb[0].mxu0 %v1078
      %v1645 = vpop.f32.mrb[0].mxu0
      %v1646 = vadd.f32 %v1533, %v1645
      %v1647 = vpop.f32.mrb[0].mxu0
      %v1648 = vpop.f32.mrb[0].mxu0
      %v1649 = vadd.f32 %v1536, %v1648
      %v1650 = vpop.f32.mrb[0].mxu0
      %1651 = vmatprep.mubr.bf16.mxu0 %v1085
      %1652 = vmatmul.mubr.bf16.gmra.mrb[0].mxu0 %v1084
      %v1653 = vpop.f32.mrb[0].mxu0
      %v1654 = vadd.f32 %v1541, %v1653
      %v1655 = vpop.f32.mrb[0].mxu0
      %v1656 = vpop.f32.mrb[0].mxu0
      %v1657 = vadd.f32 %v1544, %v1656
      %v1658 = vpop.f32.mrb[0].mxu0
      %1659 = vmatprep.mubr.bf16.mxu0 %v1091
      %1660 = vmatmul.mubr.bf16.gmra.mrb[0].mxu0 %v1090
      %v1661 = vpop.f32.mrb[0].mxu0
      %v1662 = vadd.f32 %v1549, %v1661
      %v1663 = vpop.f32.mrb[0].mxu0
      %v1664 = vpop.f32.mrb[0].mxu0
      %v1665 = vadd.f32 %v1552, %v1664
      %v1666 = vpop.f32.mrb[0].mxu0
      %1667 = vdwg.mxu0
      %1668 = vmatprep.subr.bf16.mxu0 0
      %1669 = vmatpush1.bf16.msra.mxu0 %v1378
      %1670 = vmatprep.subr.bf16.mxu0 0
      %1671 = vmatpush1.bf16.msra.mxu0 %v1379
      %1672 = vmatprep.subr.bf16.mxu0 0
      %1673 = vmatpush1.bf16.msra.mxu0 %v1380
      %1674 = vmatprep.subr.bf16.mxu0 0
      %1675 = vmatpush1.bf16.msra.mxu0 %v1381
      %1676 = vmatprep.subr.bf16.mxu0 0
      %1677 = vmatpush1.bf16.msra.mxu0 %v1382
      %1678 = vmatprep.subr.bf16.mxu0 0
      %1679 = vmatpush1.bf16.msra.mxu0 %v1383
      %1680 = vmatprep.subr.bf16.mxu0 0
      %1681 = vmatpush1.bf16.msra.mxu0 %v1384
      %1682 = vmatprep.subr.bf16.mxu0 0
      %1683 = vmatpush1.bf16.msra.mxu0 %v1385
      %1684 = vmatprep.subr.bf16.mxu0 0
      %1685 = vmatpush1.bf16.msra.mxu0 %v1386
      %1686 = vmatprep.subr.bf16.mxu0 0
      %1687 = vmatpush1.bf16.msra.mxu0 %v1387
      %1688 = vmatprep.subr.bf16.mxu0 0
      %1689 = vmatpush1.bf16.msra.mxu0 %v1388
      %1690 = vmatprep.subr.bf16.mxu0 0
      %1691 = vmatpush1.bf16.msra.mxu0 %v1389
      %1692 = vmatprep.subr.bf16.mxu0 0
      %1693 = vmatpush1.bf16.msra.mxu0 %v1390
      %1694 = vmatprep.subr.bf16.mxu0 0
      %1695 = vmatpush1.bf16.msra.mxu0 %v1391
      %1696 = vmatprep.subr.bf16.mxu0 0
      %1697 = vmatpush1.bf16.msra.mxu0 %v1392
      %1698 = vmatprep.subr.bf16.mxu0 0
      %1699 = vmatpush1.bf16.msra.mxu0 %v1393
      %1700 = vmatprep.mubr.bf16.mxu0 %v1039
      %1701 = vmatmul.mubr.bf16.gmra.mrb[0].mxu0 %v1038
      %v1702 = vpop.f32.mrb[0].mxu0
      %v1703 = vadd.f32 %v1590, %v1702
      %v1704 = vpop.f32.mrb[0].mxu0
      %v1705 = vpop.f32.mrb[0].mxu0
      %v1706 = vadd.f32 %v1593, %v1705
      %v1707 = vpop.f32.mrb[0].mxu0
      %1708 = vmatprep.mubr.bf16.mxu0 %v1045
      %1709 = vmatmul.mubr.bf16.gmra.mrb[0].mxu0 %v1044
      %v1710 = vpop.f32.mrb[0].mxu0
      %v1711 = vadd.f32 %v1598, %v1710
      %v1712 = vpop.f32.mrb[0].mxu0
      %v1713 = vpop.f32.mrb[0].mxu0
      %v1714 = vadd.f32 %v1601, %v1713
      %v1715 = vpop.f32.mrb[0].mxu0
      %1716 = vmatprep.mubr.bf16.mxu0 %v1051
      %1717 = vmatmul.mubr.bf16.gmra.mrb[0].mxu0 %v1050
      %v1718 = vpop.f32.mrb[0].mxu0
      %v1719 = vadd.f32 %v1606, %v1718
      %v1720 = vpop.f32.mrb[0].mxu0
      %v1721 = vpop.f32.mrb[0].mxu0
      %v1722 = vadd.f32 %v1609, %v1721
      %v1723 = vpop.f32.mrb[0].mxu0
      %1724 = vmatprep.mubr.bf16.mxu0 %v1057
      %1725 = vmatmul.mubr.bf16.gmra.mrb[0].mxu0 %v1056
      %v1726 = vpop.f32.mrb[0].mxu0
      %v1727 = vadd.f32 %v1614, %v1726
      %v1728 = vpop.f32.mrb[0].mxu0
      %v1729 = vpop.f32.mrb[0].mxu0
      %v1730 = vadd.f32 %v1617, %v1729
      %v1731 = vpop.f32.mrb[0].mxu0
      %1732 = vmatprep.mubr.bf16.mxu0 %v1063
      %1733 = vmatmul.mubr.bf16.gmra.mrb[0].mxu0 %v1062
      %v1734 = vpop.f32.mrb[0].mxu0
      %v1735 = vadd.f32 %v1622, %v1734
      %v1736 = vpop.f32.mrb[0].mxu0
      %v1737 = vpop.f32.mrb[0].mxu0
      %v1738 = vadd.f32 %v1625, %v1737
      %v1739 = vpop.f32.mrb[0].mxu0
      %1740 = vmatprep.mubr.bf16.mxu0 %v1069
      %1741 = vmatmul.mubr.bf16.gmra.mrb[0].mxu0 %v1068
      %v1742 = vpop.f32.mrb[0].mxu0
      %v1743 = vadd.f32 %v1630, %v1742
      %v1744 = vpop.f32.mrb[0].mxu0
      %v1745 = vpop.f32.mrb[0].mxu0
      %v1746 = vadd.f32 %v1633, %v1745
      %v1747 = vpop.f32.mrb[0].mxu0
      %1748 = vmatprep.mubr.bf16.mxu0 %v1075
      %1749 = vmatmul.mubr.bf16.gmra.mrb[0].mxu0 %v1074
      %v1750 = vpop.f32.mrb[0].mxu0
      %v1751 = vadd.f32 %v1638, %v1750
      %v1752 = vpop.f32.mrb[0].mxu0
      %v1753 = vpop.f32.mrb[0].mxu0
      %v1754 = vadd.f32 %v1641, %v1753
      %v1755 = vpop.f32.mrb[0].mxu0
      %1756 = vmatprep.mubr.bf16.mxu0 %v1081
      %1757 = vmatmul.mubr.bf16.gmra.mrb[0].mxu0 %v1080
      %v1758 = vpop.f32.mrb[0].mxu0
      %v1759 = vadd.f32 %v1646, %v1758
      %v1760 = vpop.f32.mrb[0].mxu0
      %v1761 = vpop.f32.mrb[0].mxu0
      %v1762 = vadd.f32 %v1649, %v1761
      %v1763 = vpop.f32.mrb[0].mxu0
      %1764 = vmatprep.mubr.bf16.mxu0 %v1087
      %1765 = vmatmul.mubr.bf16.gmra.mrb[0].mxu0 %v1086
      %v1766 = vpop.f32.mrb[0].mxu0
      %v1767 = vadd.f32 %v1654, %v1766
      %v1768 = vpop.f32.mrb[0].mxu0
      %v1769 = vpop.f32.mrb[0].mxu0
      %v1770 = vadd.f32 %v1657, %v1769
      %v1771 = vpop.f32.mrb[0].mxu0
      %1772 = vmatprep.mubr.bf16.mxu0 %v1093
      %1773 = vmatmul.mubr.bf16.gmra.mrb[0].mxu0 %v1092
      %v1774 = vpop.f32.mrb[0].mxu0
      %v1775 = vadd.f32 %v1662, %v1774
      %v1776 = vpop.f32.mrb[0].mxu0
      %v1777 = vpop.f32.mrb[0].mxu0
      %v1778 = vadd.f32 %v1665, %v1777
      %v1779 = vpop.f32.mrb[0].mxu0
      %1780 = vdwg.mxu0
      %v1781 = vlaneseq
      %v1782 = vshrl.u32 %v1781, 7
      %v1783 = vadd.s32 %v1782, 8
      %v1784 = vadd.s32 %v1782, 16
      %v1785 = vadd.s32 %v1782, 24
      %v1786 = vadd.s32 %v1782, 32
      %v1787 = vadd.s32 %v1782, 40
      %v1788 = vadd.s32 %v1782, 48
      %v1789 = vadd.s32 %v1782, 56
      %v1790 = vadd.s32 %v1782, 64
      %v1791 = vadd.s32 %v1782, 72
      %v1792 = vadd.s32 %v1782, 80
      %v1793 = vadd.s32 %v1782, 88
      %v1794 = vadd.s32 %v1782, 96
      %v1795 = vadd.s32 %v1782, 104
      %v1796 = vadd.s32 %v1782, 112
      %v1797 = vadd.s32 %v1782, 120
      %v1798 = vadd.s32 %v1782, 128
      %v1799 = vadd.s32 %v1782, 136
      %v1800 = vadd.s32 %v1782, 144
      %v1801 = vadd.s32 %v1782, 152
      %vm1802 = vcmp.ge.s32.totalorder %v1782, 80
      %vm1803 = vcmp.ge.s32.totalorder %v1783, 80
      %vm1804 = vcmp.ge.s32.totalorder %v1784, 80
      %vm1805 = vcmp.ge.s32.totalorder %v1785, 80
      %vm1806 = vcmp.ge.s32.totalorder %v1786, 80
      %vm1807 = vcmp.ge.s32.totalorder %v1787, 80
      %vm1808 = vcmp.ge.s32.totalorder %v1788, 80
      %vm1809 = vcmp.ge.s32.totalorder %v1789, 80
      %vm1810 = vcmp.ge.s32.totalorder %v1790, 80
      %vm1811 = vcmp.ge.s32.totalorder %v1791, 80
      %vm1812 = vcmp.ge.s32.totalorder %v1792, 80
      %vm1813 = vcmp.ge.s32.totalorder %v1793, 80
      %vm1814 = vcmp.ge.s32.totalorder %v1794, 80
      %vm1815 = vcmp.ge.s32.totalorder %v1795, 80
      %vm1816 = vcmp.ge.s32.totalorder %v1796, 80
      %vm1817 = vcmp.ge.s32.totalorder %v1797, 80
      %vm1818 = vcmp.ge.s32.totalorder %v1798, 80
      %vm1819 = vcmp.ge.s32.totalorder %v1799, 80
      %vm1820 = vcmp.ge.s32.totalorder %v1800, 80
      %vm1821 = vcmp.ge.s32.totalorder %v1801, 80
      %v1822 = vld [vmem:[%s5 + $0x1] sm:$0x1]
      %v1823 = vld [vmem:[%s5] sm:$0x1]
      %v1824 = vlaneseq
      %v1825 = vshrl.u32 %v1824, 7
      %v1826 = vsub.s32 0, %v1825
      %v1827 = vrot.slane %v1822, %v1826
      %v1828 = vlaneseq
      %v1829 = vshrl.u32 %v1828, 7
      %v1830 = vsub.s32 0, %v1829
      %v1831 = vrot.slane %v1823, %v1830
      %v1832 = vsel %vm1802, %v1827, %v1831
      %v1833 = vsel %vm1803, %v1827, %v1831
      %v1834 = vsel %vm1804, %v1827, %v1831
      %v1835 = vsel %vm1805, %v1827, %v1831
      %v1836 = vsel %vm1806, %v1827, %v1831
      %v1837 = vsel %vm1807, %v1827, %v1831
      %v1838 = vsel %vm1808, %v1827, %v1831
      %v1839 = vsel %vm1809, %v1827, %v1831
      %v1840 = vsel %vm1810, %v1827, %v1831
      %v1841 = vsel %vm1811, %v1827, %v1831
      %v1842 = vsel %vm1812, %v1827, %v1831
      %v1843 = vsel %vm1813, %v1827, %v1831
      %v1844 = vsel %vm1814, %v1827, %v1831
      %v1845 = vsel %vm1815, %v1827, %v1831
      %v1846 = vsel %vm1816, %v1827, %v1831
      %v1847 = vsel %vm1817, %v1827, %v1831
      %v1848 = vsel %vm1818, %v1827, %v1831
      %v1849 = vsel %vm1819, %v1827, %v1831
      %v1850 = vsel %vm1820, %v1827, %v1831
      %v1851 = vsel %vm1821, %v1827, %v1831
      %v1852 = vld [vmem:[%s4 + $0x1] sm:$0x1]
      %v1853 = vld [vmem:[%s4] sm:$0x1]
      %v1854 = vlaneseq
      %v1855 = vshrl.u32 %v1854, 7
      %v1856 = vsub.s32 0, %v1855
      %v1857 = vrot.slane %v1852, %v1856
      %v1858 = vlaneseq
      %v1859 = vshrl.u32 %v1858, 7
      %v1860 = vsub.s32 0, %v1859
      %v1861 = vrot.slane %v1853, %v1860
      %v1862 = vsel %vm1802, %v1857, %v1861
      %v1863 = vsel %vm1803, %v1857, %v1861
      %v1864 = vsel %vm1804, %v1857, %v1861
      %v1865 = vsel %vm1805, %v1857, %v1861
      %v1866 = vsel %vm1806, %v1857, %v1861
      %v1867 = vsel %vm1807, %v1857, %v1861
      %v1868 = vsel %vm1808, %v1857, %v1861
      %v1869 = vsel %vm1809, %v1857, %v1861
      %v1870 = vsel %vm1810, %v1857, %v1861
      %v1871 = vsel %vm1811, %v1857, %v1861
      %v1872 = vsel %vm1812, %v1857, %v1861
      %v1873 = vsel %vm1813, %v1857, %v1861
      %v1874 = vsel %vm1814, %v1857, %v1861
      %v1875 = vsel %vm1815, %v1857, %v1861
      %v1876 = vsel %vm1816, %v1857, %v1861
      %v1877 = vsel %vm1817, %v1857, %v1861
      %v1878 = vsel %vm1818, %v1857, %v1861
      %v1879 = vsel %vm1819, %v1857, %v1861
      %v1880 = vsel %vm1820, %v1857, %v1861
      %v1881 = vsel %vm1821, %v1857, %v1861
      %vm1882 = vcmp.lt.s32.totalorder %v1782, 16
      %vm1883 = vcmp.lt.s32.totalorder %v1783, 16
      %vm1884 = vcmp.lt.s32.totalorder %v1784, 16
      %vm1885 = vcmp.lt.s32.totalorder %v1785, 16
      %vm1886 = vcmp.lt.s32.totalorder %v1786, 16
      %vm1887 = vcmp.lt.s32.totalorder %v1787, 16
      %vm1888 = vcmp.lt.s32.totalorder %v1788, 16
      %vm1889 = vcmp.lt.s32.totalorder %v1789, 16
      %vm1890 = vcmp.lt.s32.totalorder %v1790, 16
      %vm1891 = vcmp.lt.s32.totalorder %v1791, 16
      %vm1892 = vcmp.lt.s32.totalorder %v1792, 16
      %vm1893 = vcmp.lt.s32.totalorder %v1793, 16
      %vm1894 = vcmp.lt.s32.totalorder %v1794, 16
      %vm1895 = vcmp.lt.s32.totalorder %v1795, 16
      %vm1896 = vcmp.lt.s32.totalorder %v1796, 16
      %vm1897 = vcmp.lt.s32.totalorder %v1797, 16
      %vm1898 = vcmp.lt.s32.totalorder %v1798, 16
      %vm1899 = vcmp.lt.s32.totalorder %v1799, 16
      %vm1900 = vcmp.lt.s32.totalorder %v1800, 16
      %vm1901 = vcmp.lt.s32.totalorder %v1801, 16
      %vm1902 = vcmp.lt.s32.totalorder %v1782, 96
      %vm1903 = vcmp.lt.s32.totalorder %v1783, 96
      %vm1904 = vcmp.lt.s32.totalorder %v1784, 96
      %vm1905 = vcmp.lt.s32.totalorder %v1785, 96
      %vm1906 = vcmp.lt.s32.totalorder %v1786, 96
      %vm1907 = vcmp.lt.s32.totalorder %v1787, 96
      %vm1908 = vcmp.lt.s32.totalorder %v1788, 96
      %vm1909 = vcmp.lt.s32.totalorder %v1789, 96
      %vm1910 = vcmp.lt.s32.totalorder %v1790, 96
      %vm1911 = vcmp.lt.s32.totalorder %v1791, 96
      %vm1912 = vcmp.lt.s32.totalorder %v1792, 96
      %vm1913 = vcmp.lt.s32.totalorder %v1793, 96
      %vm1914 = vcmp.lt.s32.totalorder %v1794, 96
      %vm1915 = vcmp.lt.s32.totalorder %v1795, 96
      %vm1916 = vcmp.lt.s32.totalorder %v1796, 96
      %vm1917 = vcmp.lt.s32.totalorder %v1797, 96
      %vm1918 = vcmp.lt.s32.totalorder %v1798, 96
      %vm1919 = vcmp.lt.s32.totalorder %v1799, 96
      %vm1920 = vcmp.lt.s32.totalorder %v1800, 96
      %vm1921 = vcmp.lt.s32.totalorder %v1801, 96
      %vm1922 = vmand %vm1802, %vm1902
      %vm1923 = vmand %vm1803, %vm1903
      %vm1924 = vmand %vm1804, %vm1904
      %vm1925 = vmand %vm1805, %vm1905
      %vm1926 = vmand %vm1806, %vm1906
      %vm1927 = vmand %vm1807, %vm1907
      %vm1928 = vmand %vm1808, %vm1908
      %vm1929 = vmand %vm1809, %vm1909
      %vm1930 = vmand %vm1810, %vm1910
      %vm1931 = vmand %vm1811, %vm1911
      %vm1932 = vmand %vm1812, %vm1912
      %vm1933 = vmand %vm1813, %vm1913
      %vm1934 = vmand %vm1814, %vm1914
      %vm1935 = vmand %vm1815, %vm1915
      %vm1936 = vmand %vm1816, %vm1916
      %vm1937 = vmand %vm1817, %vm1917
      %vm1938 = vmand %vm1818, %vm1918
      %vm1939 = vmand %vm1819, %vm1919
      %vm1940 = vmand %vm1820, %vm1920
      %vm1941 = vmand %vm1821, %vm1921
      %vm1942 = vmor %vm1882, %vm1922
      %vm1943 = vmor %vm1883, %vm1923
      %vm1944 = vmor %vm1884, %vm1924
      %vm1945 = vmor %vm1885, %vm1925
      %vm1946 = vmor %vm1886, %vm1926
      %vm1947 = vmor %vm1887, %vm1927
      %vm1948 = vmor %vm1888, %vm1928
      %vm1949 = vmor %vm1889, %vm1929
      %vm1950 = vmor %vm1890, %vm1930
      %vm1951 = vmor %vm1891, %vm1931
      %vm1952 = vmor %vm1892, %vm1932
      %vm1953 = vmor %vm1893, %vm1933
      %vm1954 = vmor %vm1894, %vm1934
      %vm1955 = vmor %vm1895, %vm1935
      %vm1956 = vmor %vm1896, %vm1936
      %vm1957 = vmor %vm1897, %vm1937
      %vm1958 = vmor %vm1898, %vm1938
      %vm1959 = vmor %vm1899, %vm1939
      %vm1960 = vmor %vm1900, %vm1940
      %vm1961 = vmor %vm1901, %vm1941
      %v1962 = vsel %vm1942, %v1862, %v1703
      %v1963 = vsel %vm1943, %v1863, %v1706
      %v1964 = vsel %vm1944, %v1864, %v1711
      %v1965 = vsel %vm1945, %v1865, %v1714
      %v1966 = vsel %vm1946, %v1866, %v1719
      %v1967 = vsel %vm1947, %v1867, %v1722
      %v1968 = vsel %vm1948, %v1868, %v1727
      %v1969 = vsel %vm1949, %v1869, %v1730
      %v1970 = vsel %vm1950, %v1870, %v1735
      %v1971 = vsel %vm1951, %v1871, %v1738
      %v1972 = vsel %vm1952, %v1872, %v1743
      %v1973 = vsel %vm1953, %v1873, %v1746
      %v1974 = vsel %vm1954, %v1874, %v1751
      %v1975 = vsel %vm1955, %v1875, %v1754
      %v1976 = vsel %vm1956, %v1876, %v1759
      %v1977 = vsel %vm1957, %v1877, %v1762
      %v1978 = vsel %vm1958, %v1878, %v1767
      %v1979 = vsel %vm1959, %v1879, %v1770
      %v1980 = vsel %vm1960, %v1880, %v1775
      %v1981 = vsel %vm1961, %v1881, %v1778
      %v1982 = vadd.f32 %v1962, %v1832
      %v1983 = vadd.f32 %v1963, %v1833
      %v1984 = vadd.f32 %v1964, %v1834
      %v1985 = vadd.f32 %v1965, %v1835
      %v1986 = vadd.f32 %v1966, %v1836
      %v1987 = vadd.f32 %v1967, %v1837
      %v1988 = vadd.f32 %v1968, %v1838
      %v1989 = vadd.f32 %v1969, %v1839
      %v1990 = vadd.f32 %v1970, %v1840
      %v1991 = vadd.f32 %v1971, %v1841
      %v1992 = vadd.f32 %v1972, %v1842
      %v1993 = vadd.f32 %v1973, %v1843
      %v1994 = vadd.f32 %v1974, %v1844
      %v1995 = vadd.f32 %v1975, %v1845
      %v1996 = vadd.f32 %v1976, %v1846
      %v1997 = vadd.f32 %v1977, %v1847
      %v1998 = vadd.f32 %v1978, %v1848
      %v1999 = vadd.f32 %v1979, %v1849
      %v2000 = vadd.f32 %v1980, %v1850
      %v2001 = vadd.f32 %v1981, %v1851
      %v2002 = vld [vmem:[%s1] sm:$0xff]
      %v2003 = vld [vmem:[%s1 + $0x8] sm:$0xff]
      %v2004 = vld [vmem:[%s1 + $0x10] sm:$0xff]
      %v2005 = vld [vmem:[%s1 + $0x18] sm:$0xff]
      %v2006 = vld [vmem:[%s1 + $0x20] sm:$0xff]
      %v2007 = vld [vmem:[%s1 + $0x28] sm:$0xff]
      %v2008 = vld [vmem:[%s1 + $0x30] sm:$0xff]
      %v2009 = vld [vmem:[%s1 + $0x38] sm:$0xff]
      %v2010 = vld [vmem:[%s1 + $0x40] sm:$0xff]
      %v2011 = vld [vmem:[%s1 + $0x48] sm:$0xff]
      %v2012 = vld [vmem:[%s1 + $0x50] sm:$0xff]
      %v2013 = vld [vmem:[%s1 + $0x58] sm:$0xff]
      %v2014 = vld [vmem:[%s1 + $0x60] sm:$0xff]
      %v2015 = vld [vmem:[%s1 + $0x68] sm:$0xff]
      %v2016 = vld [vmem:[%s1 + $0x70] sm:$0xff]
      %v2017 = vld [vmem:[%s1 + $0x78] sm:$0xff]
      %v2018 = vld [vmem:[%s6] sm:$0x1]
      %v2019 = vld [vmem:[%s7] sm:$0x1]
      %2020 = vadd.xlane.f32.xlu0 %v1982
      %v2021 = vpop.xlane.xlu0 %2020
      %2022 = vadd.xlane.f32.xlu0 %v1983
      %v2023 = vpop.xlane.xlu0 %2022
      %2024 = vadd.xlane.f32.xlu0 %v1984
      %v2025 = vpop.xlane.xlu0 %2024
      %2026 = vadd.xlane.f32.xlu0 %v1985
      %v2027 = vpop.xlane.xlu0 %2026
      %2028 = vadd.xlane.f32.xlu0 %v1986
      %v2029 = vpop.xlane.xlu0 %2028
      %2030 = vadd.xlane.f32.xlu0 %v1987
      %v2031 = vpop.xlane.xlu0 %2030
      %2032 = vadd.xlane.f32.xlu0 %v1988
      %v2033 = vpop.xlane.xlu0 %2032
      %2034 = vadd.xlane.f32.xlu0 %v1989
      %v2035 = vpop.xlane.xlu0 %2034
      %2036 = vadd.xlane.f32.xlu0 %v1990
      %v2037 = vpop.xlane.xlu0 %2036
      %2038 = vadd.xlane.f32.xlu0 %v1991
      %v2039 = vpop.xlane.xlu0 %2038
      %2040 = vadd.xlane.f32.xlu0 %v1992
      %v2041 = vpop.xlane.xlu0 %2040
      %2042 = vadd.xlane.f32.xlu0 %v1993
      %v2043 = vpop.xlane.xlu0 %2042
      %2044 = vadd.xlane.f32.xlu0 %v1994
      %v2045 = vpop.xlane.xlu0 %2044
      %2046 = vadd.xlane.f32.xlu0 %v1995
      %v2047 = vpop.xlane.xlu0 %2046
      %2048 = vadd.xlane.f32.xlu0 %v1996
      %v2049 = vpop.xlane.xlu0 %2048
      %2050 = vadd.xlane.f32.xlu0 %v1997
      %v2051 = vpop.xlane.xlu0 %2050
      %2052 = vadd.xlane.f32.xlu0 %v1998
      %v2053 = vpop.xlane.xlu0 %2052
      %2054 = vadd.xlane.f32.xlu0 %v1999
      %v2055 = vpop.xlane.xlu0 %2054
      %2056 = vadd.xlane.f32.xlu0 %v2000
      %v2057 = vpop.xlane.xlu0 %2056
      %2058 = vadd.xlane.f32.xlu0 %v2001
      %v2059 = vpop.xlane.xlu0 %2058
      %v2060 = vrcp.pop 128.0
      %v2061 = vmul.f32 %v2021, %v2060
      %v2062 = vmul.f32 %v2023, %v2060
      %v2063 = vmul.f32 %v2025, %v2060
      %v2064 = vmul.f32 %v2027, %v2060
      %v2065 = vmul.f32 %v2029, %v2060
      %v2066 = vmul.f32 %v2031, %v2060
      %v2067 = vmul.f32 %v2033, %v2060
      %v2068 = vmul.f32 %v2035, %v2060
      %v2069 = vmul.f32 %v2037, %v2060
      %v2070 = vmul.f32 %v2039, %v2060
      %v2071 = vmul.f32 %v2041, %v2060
      %v2072 = vmul.f32 %v2043, %v2060
      %v2073 = vmul.f32 %v2045, %v2060
      %v2074 = vmul.f32 %v2047, %v2060
      %v2075 = vmul.f32 %v2049, %v2060
      %v2076 = vmul.f32 %v2051, %v2060
      %v2077 = vmul.f32 %v2053, %v2060
      %v2078 = vmul.f32 %v2055, %v2060
      %v2079 = vmul.f32 %v2057, %v2060
      %v2080 = vmul.f32 %v2059, %v2060
      %v2081 = vsub.f32 %v1982, %v2061
      %v2082 = vsub.f32 %v1983, %v2062
      %v2083 = vsub.f32 %v1984, %v2063
      %v2084 = vsub.f32 %v1985, %v2064
      %v2085 = vsub.f32 %v1986, %v2065
      %v2086 = vsub.f32 %v1987, %v2066
      %v2087 = vsub.f32 %v1988, %v2067
      %v2088 = vsub.f32 %v1989, %v2068
      %v2089 = vsub.f32 %v1990, %v2069
      %v2090 = vsub.f32 %v1991, %v2070
      %v2091 = vsub.f32 %v1992, %v2071
      %v2092 = vsub.f32 %v1993, %v2072
      %v2093 = vsub.f32 %v1994, %v2073
      %v2094 = vsub.f32 %v1995, %v2074
      %v2095 = vsub.f32 %v1996, %v2075
      %v2096 = vsub.f32 %v1997, %v2076
      %v2097 = vsub.f32 %v1998, %v2077
      %v2098 = vsub.f32 %v1999, %v2078
      %v2099 = vsub.f32 %v2000, %v2079
      %v2100 = vsub.f32 %v2001, %v2080
      %v2101 = vmul.f32 %v2081, %v2081
      %v2102 = vmul.f32 %v2082, %v2082
      %v2103 = vmul.f32 %v2083, %v2083
      %v2104 = vmul.f32 %v2084, %v2084
      %v2105 = vmul.f32 %v2085, %v2085
      %v2106 = vmul.f32 %v2086, %v2086
      %v2107 = vmul.f32 %v2087, %v2087
      %v2108 = vmul.f32 %v2088, %v2088
      %v2109 = vmul.f32 %v2089, %v2089
      %v2110 = vmul.f32 %v2090, %v2090
      %v2111 = vmul.f32 %v2091, %v2091
      %v2112 = vmul.f32 %v2092, %v2092
      %v2113 = vmul.f32 %v2093, %v2093
      %v2114 = vmul.f32 %v2094, %v2094
      %v2115 = vmul.f32 %v2095, %v2095
      %v2116 = vmul.f32 %v2096, %v2096
      %v2117 = vmul.f32 %v2097, %v2097
      %v2118 = vmul.f32 %v2098, %v2098
      %v2119 = vmul.f32 %v2099, %v2099
      %v2120 = vmul.f32 %v2100, %v2100
      %2121 = vadd.xlane.f32.xlu0 %v2101
      %v2122 = vpop.xlane.xlu0 %2121
      %2123 = vadd.xlane.f32.xlu0 %v2102
      %v2124 = vpop.xlane.xlu0 %2123
      %2125 = vadd.xlane.f32.xlu0 %v2103
      %v2126 = vpop.xlane.xlu0 %2125
      %2127 = vadd.xlane.f32.xlu0 %v2104
      %v2128 = vpop.xlane.xlu0 %2127
      %2129 = vadd.xlane.f32.xlu0 %v2105
      %v2130 = vpop.xlane.xlu0 %2129
      %2131 = vadd.xlane.f32.xlu0 %v2106
      %v2132 = vpop.xlane.xlu0 %2131
      %2133 = vadd.xlane.f32.xlu0 %v2107
      %v2134 = vpop.xlane.xlu0 %2133
      %2135 = vadd.xlane.f32.xlu0 %v2108
      %v2136 = vpop.xlane.xlu0 %2135
      %2137 = vadd.xlane.f32.xlu0 %v2109
      %v2138 = vpop.xlane.xlu0 %2137
      %2139 = vadd.xlane.f32.xlu0 %v2110
      %v2140 = vpop.xlane.xlu0 %2139
      %2141 = vadd.xlane.f32.xlu0 %v2111
      %v2142 = vpop.xlane.xlu0 %2141
      %2143 = vadd.xlane.f32.xlu0 %v2112
      %v2144 = vpop.xlane.xlu0 %2143
      %2145 = vadd.xlane.f32.xlu0 %v2113
      %v2146 = vpop.xlane.xlu0 %2145
      %2147 = vadd.xlane.f32.xlu0 %v2114
      %v2148 = vpop.xlane.xlu0 %2147
      %2149 = vadd.xlane.f32.xlu0 %v2115
      %v2150 = vpop.xlane.xlu0 %2149
      %2151 = vadd.xlane.f32.xlu0 %v2116
      %v2152 = vpop.xlane.xlu0 %2151
      %2153 = vadd.xlane.f32.xlu0 %v2117
      %v2154 = vpop.xlane.xlu0 %2153
      %2155 = vadd.xlane.f32.xlu0 %v2118
      %v2156 = vpop.xlane.xlu0 %2155
      %2157 = vadd.xlane.f32.xlu0 %v2119
      %v2158 = vpop.xlane.xlu0 %2157
      %2159 = vadd.xlane.f32.xlu0 %v2120
      %v2160 = vpop.xlane.xlu0 %2159
      %v2161 = vmul.f32 %v2122, %v2060
      %v2162 = vmul.f32 %v2124, %v2060
      %v2163 = vmul.f32 %v2126, %v2060
      %v2164 = vmul.f32 %v2128, %v2060
      %v2165 = vmul.f32 %v2130, %v2060
      %v2166 = vmul.f32 %v2132, %v2060
      %v2167 = vmul.f32 %v2134, %v2060
      %v2168 = vmul.f32 %v2136, %v2060
      %v2169 = vmul.f32 %v2138, %v2060
      %v2170 = vmul.f32 %v2140, %v2060
      %v2171 = vmul.f32 %v2142, %v2060
      %v2172 = vmul.f32 %v2144, %v2060
      %v2173 = vmul.f32 %v2146, %v2060
      %v2174 = vmul.f32 %v2148, %v2060
      %v2175 = vmul.f32 %v2150, %v2060
      %v2176 = vmul.f32 %v2152, %v2060
      %v2177 = vmul.f32 %v2154, %v2060
      %v2178 = vmul.f32 %v2156, %v2060
      %v2179 = vmul.f32 %v2158, %v2060
      %v2180 = vmul.f32 %v2160, %v2060
      %v2181 = vadd.f32 %v2161, 1e-05
      %v2182 = vadd.f32 %v2162, 1e-05
      %v2183 = vadd.f32 %v2163, 1e-05
      %v2184 = vadd.f32 %v2164, 1e-05
      %v2185 = vadd.f32 %v2165, 1e-05
      %v2186 = vadd.f32 %v2166, 1e-05
      %v2187 = vadd.f32 %v2167, 1e-05
      %v2188 = vadd.f32 %v2168, 1e-05
      %v2189 = vadd.f32 %v2169, 1e-05
      %v2190 = vadd.f32 %v2170, 1e-05
      %v2191 = vadd.f32 %v2171, 1e-05
      %v2192 = vadd.f32 %v2172, 1e-05
      %v2193 = vadd.f32 %v2173, 1e-05
      %v2194 = vadd.f32 %v2174, 1e-05
      %v2195 = vadd.f32 %v2175, 1e-05
      %v2196 = vadd.f32 %v2176, 1e-05
      %v2197 = vadd.f32 %v2177, 1e-05
      %v2198 = vadd.f32 %v2178, 1e-05
      %v2199 = vadd.f32 %v2179, 1e-05
      %v2200 = vadd.f32 %v2180, 1e-05
      %v2201 = vrsqrt.pop %v2181
      %v2202 = vrsqrt.pop %v2182
      %v2203 = vrsqrt.pop %v2183
      %v2204 = vrsqrt.pop %v2184
      %v2205 = vrsqrt.pop %v2185
      %v2206 = vrsqrt.pop %v2186
      %v2207 = vrsqrt.pop %v2187
      %v2208 = vrsqrt.pop %v2188
      %v2209 = vrsqrt.pop %v2189
      %v2210 = vrsqrt.pop %v2190
      %v2211 = vrsqrt.pop %v2191
      %v2212 = vrsqrt.pop %v2192
      %v2213 = vrsqrt.pop %v2193
      %v2214 = vrsqrt.pop %v2194
      %v2215 = vrsqrt.pop %v2195
      %v2216 = vrsqrt.pop %v2196
      %v2217 = vrsqrt.pop %v2197
      %v2218 = vrsqrt.pop %v2198
      %v2219 = vrsqrt.pop %v2199
      %v2220 = vrsqrt.pop %v2200
      %v2221 = vmul.f32 %v2081, %v2201
      %v2222 = vmul.f32 %v2082, %v2202
      %v2223 = vmul.f32 %v2083, %v2203
      %v2224 = vmul.f32 %v2084, %v2204
      %v2225 = vmul.f32 %v2085, %v2205
      %v2226 = vmul.f32 %v2086, %v2206
      %v2227 = vmul.f32 %v2087, %v2207
      %v2228 = vmul.f32 %v2088, %v2208
      %v2229 = vmul.f32 %v2089, %v2209
      %v2230 = vmul.f32 %v2090, %v2210
      %v2231 = vmul.f32 %v2091, %v2211
      %v2232 = vmul.f32 %v2092, %v2212
      %v2233 = vmul.f32 %v2093, %v2213
      %v2234 = vmul.f32 %v2094, %v2214
      %v2235 = vmul.f32 %v2095, %v2215
      %v2236 = vmul.f32 %v2096, %v2216
      %v2237 = vmul.f32 %v2097, %v2217
      %v2238 = vmul.f32 %v2098, %v2218
      %v2239 = vmul.f32 %v2099, %v2219
      %v2240 = vmul.f32 %v2100, %v2220
      %v2241 = vlaneseq
      %v2242 = vshrl.u32 %v2241, 7
      %v2243 = vsub.s32 0, %v2242
      %v2244 = vrot.slane %v2018, %v2243
      %v2245 = vmul.f32 %v2221, %v2244
      %v2246 = vmul.f32 %v2222, %v2244
      %v2247 = vmul.f32 %v2223, %v2244
      %v2248 = vmul.f32 %v2224, %v2244
      %v2249 = vmul.f32 %v2225, %v2244
      %v2250 = vmul.f32 %v2226, %v2244
      %v2251 = vmul.f32 %v2227, %v2244
      %v2252 = vmul.f32 %v2228, %v2244
      %v2253 = vmul.f32 %v2229, %v2244
      %v2254 = vmul.f32 %v2230, %v2244
      %v2255 = vmul.f32 %v2231, %v2244
      %v2256 = vmul.f32 %v2232, %v2244
      %v2257 = vmul.f32 %v2233, %v2244
      %v2258 = vmul.f32 %v2234, %v2244
      %v2259 = vmul.f32 %v2235, %v2244
      %v2260 = vmul.f32 %v2236, %v2244
      %v2261 = vmul.f32 %v2237, %v2244
      %v2262 = vmul.f32 %v2238, %v2244
      %v2263 = vmul.f32 %v2239, %v2244
      %v2264 = vmul.f32 %v2240, %v2244
      %v2265 = vlaneseq
      %v2266 = vshrl.u32 %v2265, 7
      %v2267 = vsub.s32 0, %v2266
      %v2268 = vrot.slane %v2019, %v2267
      %v2269 = vadd.f32 %v2245, %v2268
      %v2270 = vadd.f32 %v2246, %v2268
      %v2271 = vadd.f32 %v2247, %v2268
      %v2272 = vadd.f32 %v2248, %v2268
      %v2273 = vadd.f32 %v2249, %v2268
      %v2274 = vadd.f32 %v2250, %v2268
      %v2275 = vadd.f32 %v2251, %v2268
      %v2276 = vadd.f32 %v2252, %v2268
      %v2277 = vadd.f32 %v2253, %v2268
      %v2278 = vadd.f32 %v2254, %v2268
      %v2279 = vadd.f32 %v2255, %v2268
      %v2280 = vadd.f32 %v2256, %v2268
      %v2281 = vadd.f32 %v2257, %v2268
      %v2282 = vadd.f32 %v2258, %v2268
      %v2283 = vadd.f32 %v2259, %v2268
      %v2284 = vadd.f32 %v2260, %v2268
      %v2285 = vadd.f32 %v2261, %v2268
      %v2286 = vadd.f32 %v2262, %v2268
      %v2287 = vadd.f32 %v2263, %v2268
      %v2288 = vadd.f32 %v2264, %v2268
      %v2289 = vpack.c.bf16 %v2270, %v2269
      %v2290 = vpack.c.bf16 %v2272, %v2271
      %v2291 = vpack.c.bf16 %v2274, %v2273
      %v2292 = vpack.c.bf16 %v2276, %v2275
      %v2293 = vpack.c.bf16 %v2278, %v2277
      %v2294 = vpack.c.bf16 %v2280, %v2279
      %v2295 = vpack.c.bf16 %v2282, %v2281
      %v2296 = vpack.c.bf16 %v2284, %v2283
      %v2297 = vpack.c.bf16 %v2286, %v2285
      %v2298 = vpack.c.bf16 %v2288, %v2287
      %v2299 = vld [vmem:[%s8] sm:$0xff]
      %v2300 = vld [vmem:[%s8 + $0x8] sm:$0xf]
      %v2301 = vld [vmem:[%s8 + $0xc] sm:$0xff]
      %v2302 = vld [vmem:[%s8 + $0x14] sm:$0xf]
      %v2303 = vld [vmem:[%s8 + $0x18] sm:$0xff]
      %v2304 = vld [vmem:[%s8 + $0x20] sm:$0xf]
      %v2305 = vld [vmem:[%s8 + $0x24] sm:$0xff]
      %v2306 = vld [vmem:[%s8 + $0x2c] sm:$0xf]
      %v2307 = vld [vmem:[%s8 + $0x30] sm:$0xff]
      %v2308 = vld [vmem:[%s8 + $0x38] sm:$0xf]
      %v2309 = vld [vmem:[%s8 + $0x3c] sm:$0xff]
      %v2310 = vld [vmem:[%s8 + $0x44] sm:$0xf]
      %v2311 = vld [vmem:[%s8 + $0x48] sm:$0xff]
      %v2312 = vld [vmem:[%s8 + $0x50] sm:$0xf]
      %v2313 = vld [vmem:[%s8 + $0x54] sm:$0xff]
      %v2314 = vld [vmem:[%s8 + $0x5c] sm:$0xf]
      %v2315 = vld [vmem:[%s8 + $0x60] sm:$0xff]
      %v2316 = vld [vmem:[%s8 + $0x68] sm:$0xf]
      %v2317 = vld [vmem:[%s8 + $0x6c] sm:$0xff]
      %v2318 = vld [vmem:[%s8 + $0x74] sm:$0xf]
      %v2319 = vld [vmem:[%s8 + $0x78] sm:$0xff]
      %v2320 = vld [vmem:[%s8 + $0x80] sm:$0xf]
      %v2321 = vld [vmem:[%s8 + $0x84] sm:$0xff]
      %v2322 = vld [vmem:[%s8 + $0x8c] sm:$0xf]
      %v2323 = vld [vmem:[%s8 + $0x90] sm:$0xff]
      %v2324 = vld [vmem:[%s8 + $0x98] sm:$0xf]
      %v2325 = vld [vmem:[%s8 + $0x9c] sm:$0xff]
      %v2326 = vld [vmem:[%s8 + $0xa4] sm:$0xf]
      %v2327 = vld [vmem:[%s8 + $0xa8] sm:$0xff]
      %v2328 = vld [vmem:[%s8 + $0xb0] sm:$0xf]
      %v2329 = vld [vmem:[%s8 + $0xb4] sm:$0xff]
      %v2330 = vld [vmem:[%s8 + $0xbc] sm:$0xf]
      %v2331 = vld [vmem:[%s9] ss:$2 sm:$0x7]
      %v2333 = vlaneseq
      %v2334 = vshrl.u32 %v2333, 7
      %v2335 = vsub.s32 0, %v2334
      %v2336 = vrot.slane %v2331, %v2335
      %v2337 = vlaneseq
      %v2338 = vshrl.u32 %v2337, 7
      %v2339 = vsub.s32 1, %v2338
      %v2340 = vrot.slane %v2331, %v2339
      %v2341 = vlaneseq
      %v2342 = vshrl.u32 %v2341, 7
      %v2343 = vsub.s32 2, %v2342
      %v2344 = vrot.slane %v2331, %v2343
      %v2380 = vunpack.c.l.b16 %v2299
      %v2381 = vunpack.c.h.b16 %v2299
      %v2382 = vunpack.c.l.b16 %v2300
      %v2383 = vunpack.c.l.b16 %v2301
      %v2384 = vunpack.c.h.b16 %v2301
      %v2385 = vunpack.c.l.b16 %v2302
      %v2386 = vunpack.c.l.b16 %v2303
      %v2387 = vunpack.c.h.b16 %v2303
      %v2388 = vunpack.c.l.b16 %v2304
      %v2389 = vunpack.c.l.b16 %v2305
      %v2390 = vunpack.c.h.b16 %v2305
      %v2391 = vunpack.c.l.b16 %v2306
      %v2392 = vunpack.c.l.b16 %v2307
      %v2393 = vunpack.c.h.b16 %v2307
      %v2394 = vunpack.c.l.b16 %v2308
      %v2395 = vunpack.c.l.b16 %v2309
      %v2396 = vunpack.c.h.b16 %v2309
      %v2397 = vunpack.c.l.b16 %v2310
      %v2398 = vunpack.c.l.b16 %v2311
      %v2399 = vunpack.c.h.b16 %v2311
      %v2400 = vunpack.c.l.b16 %v2312
      %v2401 = vunpack.c.l.b16 %v2313
      %v2402 = vunpack.c.h.b16 %v2313
      %v2403 = vunpack.c.l.b16 %v2314
      %v2404 = vunpack.c.l.b16 %v2315
      %v2405 = vunpack.c.h.b16 %v2315
      %v2406 = vunpack.c.l.b16 %v2316
      %v2407 = vunpack.c.l.b16 %v2317
      %v2408 = vunpack.c.h.b16 %v2317
      %v2409 = vunpack.c.l.b16 %v2318
      %v2410 = vunpack.c.l.b16 %v2319
      %v2411 = vunpack.c.h.b16 %v2319
      %v2412 = vunpack.c.l.b16 %v2320
      %v2413 = vunpack.c.l.b16 %v2321
      %v2414 = vunpack.c.h.b16 %v2321
      %v2415 = vunpack.c.l.b16 %v2322
      %v2416 = vunpack.c.l.b16 %v2323
      %v2417 = vunpack.c.h.b16 %v2323
      %v2418 = vunpack.c.l.b16 %v2324
      %v2419 = vunpack.c.l.b16 %v2325
      %v2420 = vunpack.c.h.b16 %v2325
      %v2421 = vunpack.c.l.b16 %v2326
      %v2422 = vunpack.c.l.b16 %v2327
      %v2423 = vunpack.c.h.b16 %v2327
      %v2424 = vunpack.c.l.b16 %v2328
      %v2425 = vunpack.c.l.b16 %v2329
      %v2426 = vunpack.c.h.b16 %v2329
      %v2427 = vunpack.c.l.b16 %v2330
      %v2428 = vpack.c.b16 %v2383, %v2380
      %v2429 = vpack.c.b16 %v2384, %v2381
      %v2430 = vpack.c.b16 %v2385, %v2382
      %v2431 = vpack.c.b16 %v2389, %v2386
      %v2432 = vpack.c.b16 %v2390, %v2387
      %v2433 = vpack.c.b16 %v2391, %v2388
      %v2434 = vpack.c.b16 %v2395, %v2392
      %v2435 = vpack.c.b16 %v2396, %v2393
      %v2436 = vpack.c.b16 %v2397, %v2394
      %v2437 = vpack.c.b16 %v2401, %v2398
      %v2438 = vpack.c.b16 %v2402, %v2399
      %v2439 = vpack.c.b16 %v2403, %v2400
      %v2440 = vpack.c.b16 %v2407, %v2404
      %v2441 = vpack.c.b16 %v2408, %v2405
      %v2442 = vpack.c.b16 %v2409, %v2406
      %v2443 = vpack.c.b16 %v2413, %v2410
      %v2444 = vpack.c.b16 %v2414, %v2411
      %v2445 = vpack.c.b16 %v2415, %v2412
      %v2446 = vpack.c.b16 %v2419, %v2416
      %v2447 = vpack.c.b16 %v2420, %v2417
      %v2448 = vpack.c.b16 %v2421, %v2418
      %v2449 = vpack.c.b16 %v2425, %v2422
      %v2450 = vpack.c.b16 %v2426, %v2423
      %v2451 = vpack.c.b16 %v2427, %v2424
      %2476 = vmatprep.subr.bf16.mxu0 %v2429
      %2477 = vmatpush1.bf16.msra.mxu0 %v2428
      %2478 = vmatprep.subr.bf16.mxu0 %v2432
      %2479 = vmatpush1.bf16.msra.mxu0 %v2431
      %2480 = vmatprep.subr.bf16.mxu0 %v2435
      %2481 = vmatpush1.bf16.msra.mxu0 %v2434
      %2482 = vmatprep.subr.bf16.mxu0 %v2438
      %2483 = vmatpush1.bf16.msra.mxu0 %v2437
      %2484 = vmatprep.subr.bf16.mxu0 %v2441
      %2485 = vmatpush1.bf16.msra.mxu0 %v2440
      %2486 = vmatprep.subr.bf16.mxu0 %v2444
      %2487 = vmatpush1.bf16.msra.mxu0 %v2443
      %2488 = vmatprep.subr.bf16.mxu0 %v2447
      %2489 = vmatpush1.bf16.msra.mxu0 %v2446
      %2490 = vmatprep.subr.bf16.mxu0 %v2450
      %2491 = vmatpush1.bf16.msra.mxu0 %v2449
      %2492 = vmatprep.subr.bf16.mxu0 0
      %2493 = vmatpush1.bf16.msra.mxu0 0
      %2494 = vmatprep.subr.bf16.mxu0 0
      %2495 = vmatpush1.bf16.msra.mxu0 0
      %2496 = vmatprep.subr.bf16.mxu0 0
      %2497 = vmatpush1.bf16.msra.mxu0 0
      %2498 = vmatprep.subr.bf16.mxu0 0
      %2499 = vmatpush1.bf16.msra.mxu0 0
      %2500 = vmatprep.subr.bf16.mxu0 0
      %2501 = vmatpush1.bf16.msra.mxu0 0
      %2502 = vmatprep.subr.bf16.mxu0 0
      %2503 = vmatpush1.bf16.msra.mxu0 0
      %2504 = vmatprep.subr.bf16.mxu0 0
      %2505 = vmatpush1.bf16.msra.mxu0 0
      %2506 = vmatprep.subr.bf16.mxu0 0
      %2507 = vmatpush1.bf16.msra.mxu0 0
      %2508 = vmatprep.mubr.bf16.mxu0 0
      %2509 = vmatmul.mubr.bf16.gmra.mrb[0].mxu0 %v2289
      %v2510 = vpop.f32.mrb[0].mxu0
      %v2511 = vadd.f32 %v2336, %v2510
      %v2512 = vpop.f32.mrb[0].mxu0
      %v2513 = vadd.f32 %v2340, %v2512
      %v2514 = vpop.f32.mrb[0].mxu0
      %v2515 = vadd.f32 %v2336, %v2514
      %v2516 = vpop.f32.mrb[0].mxu0
      %v2517 = vadd.f32 %v2340, %v2516
      %2518 = vmatprep.mubr.bf16.mxu0 0
      %2519 = vmatmul.mubr.bf16.gmra.mrb[0].mxu0 %v2290
      %v2520 = vpop.f32.mrb[0].mxu0
      %v2521 = vadd.f32 %v2336, %v2520
      %v2522 = vpop.f32.mrb[0].mxu0
      %v2523 = vadd.f32 %v2340, %v2522
      %v2524 = vpop.f32.mrb[0].mxu0
      %v2525 = vadd.f32 %v2336, %v2524
      %v2526 = vpop.f32.mrb[0].mxu0
      %v2527 = vadd.f32 %v2340, %v2526
      %2528 = vmatprep.mubr.bf16.mxu0 0
      %2529 = vmatmul.mubr.bf16.gmra.mrb[0].mxu0 %v2291
      %v2530 = vpop.f32.mrb[0].mxu0
      %v2531 = vadd.f32 %v2336, %v2530
      %v2532 = vpop.f32.mrb[0].mxu0
      %v2533 = vadd.f32 %v2340, %v2532
      %v2534 = vpop.f32.mrb[0].mxu0
      %v2535 = vadd.f32 %v2336, %v2534
      %v2536 = vpop.f32.mrb[0].mxu0
      %v2537 = vadd.f32 %v2340, %v2536
      %2538 = vmatprep.mubr.bf16.mxu0 0
      %2539 = vmatmul.mubr.bf16.gmra.mrb[0].mxu0 %v2292
      %v2540 = vpop.f32.mrb[0].mxu0
      %v2541 = vadd.f32 %v2336, %v2540
      %v2542 = vpop.f32.mrb[0].mxu0
      %v2543 = vadd.f32 %v2340, %v2542
      %v2544 = vpop.f32.mrb[0].mxu0
      %v2545 = vadd.f32 %v2336, %v2544
      %v2546 = vpop.f32.mrb[0].mxu0
      %v2547 = vadd.f32 %v2340, %v2546
      %2548 = vmatprep.mubr.bf16.mxu0 0
      %2549 = vmatmul.mubr.bf16.gmra.mrb[0].mxu0 %v2293
      %v2550 = vpop.f32.mrb[0].mxu0
      %v2551 = vadd.f32 %v2336, %v2550
      %v2552 = vpop.f32.mrb[0].mxu0
      %v2553 = vadd.f32 %v2340, %v2552
      %v2554 = vpop.f32.mrb[0].mxu0
      %v2555 = vadd.f32 %v2336, %v2554
      %v2556 = vpop.f32.mrb[0].mxu0
      %v2557 = vadd.f32 %v2340, %v2556
      %2558 = vmatprep.mubr.bf16.mxu0 0
      %2559 = vmatmul.mubr.bf16.gmra.mrb[0].mxu0 %v2294
      %v2560 = vpop.f32.mrb[0].mxu0
      %v2561 = vadd.f32 %v2336, %v2560
      %v2562 = vpop.f32.mrb[0].mxu0
      %v2563 = vadd.f32 %v2340, %v2562
      %v2564 = vpop.f32.mrb[0].mxu0
      %v2565 = vadd.f32 %v2336, %v2564
      %v2566 = vpop.f32.mrb[0].mxu0
      %v2567 = vadd.f32 %v2340, %v2566
      %2568 = vmatprep.mubr.bf16.mxu0 0
      %2569 = vmatmul.mubr.bf16.gmra.mrb[0].mxu0 %v2295
      %v2570 = vpop.f32.mrb[0].mxu0
      %v2571 = vadd.f32 %v2336, %v2570
      %v2572 = vpop.f32.mrb[0].mxu0
      %v2573 = vadd.f32 %v2340, %v2572
      %v2574 = vpop.f32.mrb[0].mxu0
      %v2575 = vadd.f32 %v2336, %v2574
      %v2576 = vpop.f32.mrb[0].mxu0
      %v2577 = vadd.f32 %v2340, %v2576
      %2578 = vmatprep.mubr.bf16.mxu0 0
      %2579 = vmatmul.mubr.bf16.gmra.mrb[0].mxu0 %v2296
      %v2580 = vpop.f32.mrb[0].mxu0
      %v2581 = vadd.f32 %v2336, %v2580
      %v2582 = vpop.f32.mrb[0].mxu0
      %v2583 = vadd.f32 %v2340, %v2582
      %v2584 = vpop.f32.mrb[0].mxu0
      %v2585 = vadd.f32 %v2336, %v2584
      %v2586 = vpop.f32.mrb[0].mxu0
      %v2587 = vadd.f32 %v2340, %v2586
      %2588 = vmatprep.mubr.bf16.mxu0 0
      %2589 = vmatmul.mubr.bf16.gmra.mrb[0].mxu0 %v2297
      %v2590 = vpop.f32.mrb[0].mxu0
      %v2591 = vadd.f32 %v2336, %v2590
      %v2592 = vpop.f32.mrb[0].mxu0
      %v2593 = vadd.f32 %v2340, %v2592
      %v2594 = vpop.f32.mrb[0].mxu0
      %v2595 = vadd.f32 %v2336, %v2594
      %v2596 = vpop.f32.mrb[0].mxu0
      %v2597 = vadd.f32 %v2340, %v2596
      %2598 = vmatprep.mubr.bf16.mxu0 0
      %2599 = vmatmul.mubr.bf16.gmra.mrb[0].mxu0 %v2298
      %v2600 = vpop.f32.mrb[0].mxu0
      %v2601 = vadd.f32 %v2336, %v2600
      %v2602 = vpop.f32.mrb[0].mxu0
      %v2603 = vadd.f32 %v2340, %v2602
      %v2604 = vpop.f32.mrb[0].mxu0
      %v2605 = vadd.f32 %v2336, %v2604
      %v2606 = vpop.f32.mrb[0].mxu0
      %v2607 = vadd.f32 %v2340, %v2606
      %2608 = vdwg.mxu0
      %2609 = vmatprep.subr.bf16.mxu0 0
      %2610 = vmatpush1.bf16.msra.mxu0 %v2430
      %2611 = vmatprep.subr.bf16.mxu0 0
      %2612 = vmatpush1.bf16.msra.mxu0 %v2433
      %2613 = vmatprep.subr.bf16.mxu0 0
      %2614 = vmatpush1.bf16.msra.mxu0 %v2436
      %2615 = vmatprep.subr.bf16.mxu0 0
      %2616 = vmatpush1.bf16.msra.mxu0 %v2439
      %2617 = vmatprep.subr.bf16.mxu0 0
      %2618 = vmatpush1.bf16.msra.mxu0 %v2442
      %2619 = vmatprep.subr.bf16.mxu0 0
      %2620 = vmatpush1.bf16.msra.mxu0 %v2445
      %2621 = vmatprep.subr.bf16.mxu0 0
      %2622 = vmatpush1.bf16.msra.mxu0 %v2448
      %2623 = vmatprep.subr.bf16.mxu0 0
      %2624 = vmatpush1.bf16.msra.mxu0 %v2451
      %2625 = vmatprep.subr.bf16.mxu0 0
      %2626 = vmatpush1.bf16.msra.mxu0 0
      %2627 = vmatprep.subr.bf16.mxu0 0
      %2628 = vmatpush1.bf16.msra.mxu0 0
      %2629 = vmatprep.subr.bf16.mxu0 0
      %2630 = vmatpush1.bf16.msra.mxu0 0
      %2631 = vmatprep.subr.bf16.mxu0 0
      %2632 = vmatpush1.bf16.msra.mxu0 0
      %2633 = vmatprep.subr.bf16.mxu0 0
      %2634 = vmatpush1.bf16.msra.mxu0 0
      %2635 = vmatprep.subr.bf16.mxu0 0
      %2636 = vmatpush1.bf16.msra.mxu0 0
      %2637 = vmatprep.subr.bf16.mxu0 0
      %2638 = vmatpush1.bf16.msra.mxu0 0
      %2639 = vmatprep.subr.bf16.mxu0 0
      %2640 = vmatpush1.bf16.msra.mxu0 0
      %2641 = vmatprep.mubr.bf16.mxu0 0
      %2642 = vmatmul.mubr.bf16.gmra.mrb[0].mxu0 %v2289
      %v2643 = vpop.f32.mrb[0].mxu0
      %v2644 = vadd.f32 %v2344, %v2643
      %v2645 = vpop.f32.mrb[0].mxu0
      %v2646 = vpop.f32.mrb[0].mxu0
      %v2647 = vadd.f32 %v2344, %v2646
      %v2648 = vpop.f32.mrb[0].mxu0
      %2649 = vmatprep.mubr.bf16.mxu0 0
      %2650 = vmatmul.mubr.bf16.gmra.mrb[0].mxu0 %v2290
      %v2651 = vpop.f32.mrb[0].mxu0
      %v2652 = vadd.f32 %v2344, %v2651
      %v2653 = vpop.f32.mrb[0].mxu0
      %v2654 = vpop.f32.mrb[0].mxu0
      %v2655 = vadd.f32 %v2344, %v2654
      %v2656 = vpop.f32.mrb[0].mxu0
      %2657 = vmatprep.mubr.bf16.mxu0 0
      %2658 = vmatmul.mubr.bf16.gmra.mrb[0].mxu0 %v2291
      %v2659 = vpop.f32.mrb[0].mxu0
      %v2660 = vadd.f32 %v2344, %v2659
      %v2661 = vpop.f32.mrb[0].mxu0
      %v2662 = vpop.f32.mrb[0].mxu0
      %v2663 = vadd.f32 %v2344, %v2662
      %v2664 = vpop.f32.mrb[0].mxu0
      %2665 = vmatprep.mubr.bf16.mxu0 0
      %2666 = vmatmul.mubr.bf16.gmra.mrb[0].mxu0 %v2292
      %v2667 = vpop.f32.mrb[0].mxu0
      %v2668 = vadd.f32 %v2344, %v2667
      %v2669 = vpop.f32.mrb[0].mxu0
      %v2670 = vpop.f32.mrb[0].mxu0
      %v2671 = vadd.f32 %v2344, %v2670
      %v2672 = vpop.f32.mrb[0].mxu0
      %2673 = vmatprep.mubr.bf16.mxu0 0
      %2674 = vmatmul.mubr.bf16.gmra.mrb[0].mxu0 %v2293
      %v2675 = vpop.f32.mrb[0].mxu0
      %v2676 = vadd.f32 %v2344, %v2675
      %v2677 = vpop.f32.mrb[0].mxu0
      %v2678 = vpop.f32.mrb[0].mxu0
      %v2679 = vadd.f32 %v2344, %v2678
      %v2680 = vpop.f32.mrb[0].mxu0
      %2681 = vmatprep.mubr.bf16.mxu0 0
      %2682 = vmatmul.mubr.bf16.gmra.mrb[0].mxu0 %v2294
      %v2683 = vpop.f32.mrb[0].mxu0
      %v2684 = vadd.f32 %v2344, %v2683
      %v2685 = vpop.f32.mrb[0].mxu0
      %v2686 = vpop.f32.mrb[0].mxu0
      %v2687 = vadd.f32 %v2344, %v2686
      %v2688 = vpop.f32.mrb[0].mxu0
      %2689 = vmatprep.mubr.bf16.mxu0 0
      %2690 = vmatmul.mubr.bf16.gmra.mrb[0].mxu0 %v2295
      %v2691 = vpop.f32.mrb[0].mxu0
      %v2692 = vadd.f32 %v2344, %v2691
      %v2693 = vpop.f32.mrb[0].mxu0
      %v2694 = vpop.f32.mrb[0].mxu0
      %v2695 = vadd.f32 %v2344, %v2694
      %v2696 = vpop.f32.mrb[0].mxu0
      %2697 = vmatprep.mubr.bf16.mxu0 0
      %2698 = vmatmul.mubr.bf16.gmra.mrb[0].mxu0 %v2296
      %v2699 = vpop.f32.mrb[0].mxu0
      %v2700 = vadd.f32 %v2344, %v2699
      %v2701 = vpop.f32.mrb[0].mxu0
      %v2702 = vpop.f32.mrb[0].mxu0
      %v2703 = vadd.f32 %v2344, %v2702
      %v2704 = vpop.f32.mrb[0].mxu0
      %2705 = vmatprep.mubr.bf16.mxu0 0
      %2706 = vmatmul.mubr.bf16.gmra.mrb[0].mxu0 %v2297
      %v2707 = vpop.f32.mrb[0].mxu0
      %v2708 = vadd.f32 %v2344, %v2707
      %v2709 = vpop.f32.mrb[0].mxu0
      %v2710 = vpop.f32.mrb[0].mxu0
      %v2711 = vadd.f32 %v2344, %v2710
      %v2712 = vpop.f32.mrb[0].mxu0
      %2713 = vmatprep.mubr.bf16.mxu0 0
      %2714 = vmatmul.mubr.bf16.gmra.mrb[0].mxu0 %v2298
      %v2715 = vpop.f32.mrb[0].mxu0
      %v2716 = vadd.f32 %v2344, %v2715
      %v2717 = vpop.f32.mrb[0].mxu0
      %v2718 = vpop.f32.mrb[0].mxu0
      %v2719 = vadd.f32 %v2344, %v2718
      %v2720 = vpop.f32.mrb[0].mxu0
      %2721 = vdwg.mxu0
      %v2722 = vsub.f32 %v2513, %v2563
      %v2723 = vsub.f32 %v2517, %v2567
      %v2724 = vsub.f32 %v2523, %v2573
      %v2725 = vsub.f32 %v2527, %v2577
      %v2726 = vsub.f32 %v2533, %v2583
      %v2727 = vsub.f32 %v2537, %v2587
      %v2728 = vsub.f32 %v2543, %v2593
      %v2729 = vsub.f32 %v2547, %v2597
      %v2730 = vsub.f32 %v2553, %v2603
      %v2731 = vsub.f32 %v2557, %v2607
      %v2732 = vsub.f32 %v2684, %v2644
      %v2733 = vsub.f32 %v2687, %v2647
      %v2734 = vsub.f32 %v2692, %v2652
      %v2735 = vsub.f32 %v2695, %v2655
      %v2736 = vsub.f32 %v2700, %v2660
      %v2737 = vsub.f32 %v2703, %v2663
      %v2738 = vsub.f32 %v2708, %v2668
      %v2739 = vsub.f32 %v2711, %v2671
      %v2740 = vsub.f32 %v2716, %v2676
      %v2741 = vsub.f32 %v2719, %v2679
      %v2742 = vsub.f32 0.0, %v2722
      %v2743 = vsub.f32 0.0, %v2723
      %v2744 = vsub.f32 0.0, %v2724
      %v2745 = vsub.f32 0.0, %v2725
      %v2746 = vsub.f32 0.0, %v2726
      %v2747 = vsub.f32 0.0, %v2727
      %v2748 = vsub.f32 0.0, %v2728
      %v2749 = vsub.f32 0.0, %v2729
      %v2750 = vsub.f32 0.0, %v2730
      %v2751 = vsub.f32 0.0, %v2731
      %v2752 = vmul.f32 %v2511, %v2722
      %v2753 = vmul.f32 %v2515, %v2723
      %v2754 = vmul.f32 %v2521, %v2724
      %v2755 = vmul.f32 %v2525, %v2725
      %v2756 = vmul.f32 %v2531, %v2726
      %v2757 = vmul.f32 %v2535, %v2727
      %v2758 = vmul.f32 %v2541, %v2728
      %v2759 = vmul.f32 %v2545, %v2729
      %v2760 = vmul.f32 %v2551, %v2730
      %v2761 = vmul.f32 %v2555, %v2731
      %v2762 = vmul.f32 %v2561, %v2742
      %v2763 = vmul.f32 %v2565, %v2743
      %v2764 = vmul.f32 %v2571, %v2744
      %v2765 = vmul.f32 %v2575, %v2745
      %v2766 = vmul.f32 %v2581, %v2746
      %v2767 = vmul.f32 %v2585, %v2747
      %v2768 = vmul.f32 %v2591, %v2748
      %v2769 = vmul.f32 %v2595, %v2749
      %v2770 = vmul.f32 %v2601, %v2750
      %v2771 = vmul.f32 %v2605, %v2751
      %2772 = vmatprep.subr.mxu0 0.0
      %2773 = vmatpush1.msra.mxu0 %v2002
      %2774 = vmatprep.subr.mxu0 0.0
      %2775 = vmatpush1.msra.mxu0 %v2003
      %2776 = vmatprep.subr.mxu0 0.0
      %2777 = vmatpush1.msra.mxu0 %v2004
      %2778 = vmatprep.subr.mxu0 0.0
      %2779 = vmatpush1.msra.mxu0 %v2005
      %2780 = vmatprep.subr.mxu0 0.0
      %2781 = vmatpush1.msra.mxu0 %v2006
      %2782 = vmatprep.subr.mxu0 0.0
      %2783 = vmatpush1.msra.mxu0 %v2007
      %2784 = vmatprep.subr.mxu0 0.0
      %2785 = vmatpush1.msra.mxu0 %v2008
      %2786 = vmatprep.subr.mxu0 0.0
      %2787 = vmatpush1.msra.mxu0 %v2009
      %2788 = vmatprep.subr.mxu0 0.0
      %2789 = vmatpush1.msra.mxu0 %v2010
      %2790 = vmatprep.subr.mxu0 0.0
      %2791 = vmatpush1.msra.mxu0 %v2011
      %2792 = vmatprep.subr.mxu0 0.0
      %2793 = vmatpush1.msra.mxu0 %v2012
      %2794 = vmatprep.subr.mxu0 0.0
      %2795 = vmatpush1.msra.mxu0 %v2013
      %2796 = vmatprep.subr.mxu0 0.0
      %2797 = vmatpush1.msra.mxu0 %v2014
      %2798 = vmatprep.subr.mxu0 0.0
      %2799 = vmatpush1.msra.mxu0 %v2015
      %2800 = vmatprep.subr.mxu0 0.0
      %2801 = vmatpush1.msra.mxu0 %v2016
      %2802 = vmatprep.subr.mxu0 0.0
      %2803 = vmatpush1.msra.mxu0 %v2017
      %2804 = vmatprep.subr.mxu0 0.0
      %2805 = vmatpush1.msra.mxu0 0.0
      %2806 = vmatprep.subr.mxu0 0.0
      %2807 = vmatpush1.msra.mxu0 0.0
      %2808 = vmatprep.subr.mxu0 0.0
      %2809 = vmatpush1.msra.mxu0 0.0
      %2810 = vmatprep.subr.mxu0 0.0
      %2811 = vmatpush1.msra.mxu0 0.0
      %2812 = vmatprep.subr.mxu0 0.0
      %2813 = vmatpush1.msra.mxu0 0.0
      %2814 = vmatprep.subr.mxu0 0.0
      %2815 = vmatpush1.msra.mxu0 0.0
      %2816 = vmatprep.subr.mxu0 0.0
      %2817 = vmatpush1.msra.mxu0 0.0
      %2818 = vmatprep.subr.mxu0 0.0
      %2819 = vmatpush1.msra.mxu0 0.0
      %2820 = vmatprep.subr.mxu0 0.0
      %2821 = vmatpush1.msra.mxu0 0.0
      %2822 = vmatprep.subr.mxu0 0.0
      %2823 = vmatpush1.msra.mxu0 0.0
      %2824 = vmatprep.subr.mxu0 0.0
      %2825 = vmatpush1.msra.mxu0 0.0
      %2826 = vmatprep.subr.mxu0 0.0
      %2827 = vmatpush1.msra.mxu0 0.0
      %2828 = vmatprep.subr.mxu0 0.0
      %2829 = vmatpush1.msra.mxu0 0.0
      %2830 = vmatprep.subr.mxu0 0.0
      %2831 = vmatpush1.msra.mxu0 0.0
      %2832 = vmatprep.subr.mxu0 0.0
      %2833 = vmatpush1.msra.mxu0 0.0
      %2834 = vmatprep.subr.mxu0 0.0
      %2835 = vmatpush1.msra.mxu0 0.0
      %2836 = vmatprep.mubr.f32.mxu0 0.0
      %2837 = vmatmul.mubr.f32.gmra.mrb[0].mxu0 %v2752
      %v2838 = vpop.f32.mrb[0].mxu0
      %v2839 = vadd.f32 0.0, %v2838
      %v2840 = vpop.f32.mrb[0].mxu0
      %2841 = vmatprep.mubr.f32.mxu0 0.0
      %2842 = vmatmul.mubr.f32.gmra.mrb[0].mxu0 %v2753
      %v2843 = vpop.f32.mrb[0].mxu0
      %v2844 = vadd.f32 0.0, %v2843
      %v2845 = vpop.f32.mrb[0].mxu0
      %2846 = vmatprep.mubr.f32.mxu0 0.0
      %2847 = vmatmul.mubr.f32.gmra.mrb[0].mxu0 %v2754
      %v2848 = vpop.f32.mrb[0].mxu0
      %v2849 = vadd.f32 0.0, %v2848
      %v2850 = vpop.f32.mrb[0].mxu0
      %2851 = vmatprep.mubr.f32.mxu0 0.0
      %2852 = vmatmul.mubr.f32.gmra.mrb[0].mxu0 %v2755
      %v2853 = vpop.f32.mrb[0].mxu0
      %v2854 = vadd.f32 0.0, %v2853
      %v2855 = vpop.f32.mrb[0].mxu0
      %2856 = vmatprep.mubr.f32.mxu0 0.0
      %2857 = vmatmul.mubr.f32.gmra.mrb[0].mxu0 %v2756
      %v2858 = vpop.f32.mrb[0].mxu0
      %v2859 = vadd.f32 0.0, %v2858
      %v2860 = vpop.f32.mrb[0].mxu0
      %2861 = vmatprep.mubr.f32.mxu0 0.0
      %2862 = vmatmul.mubr.f32.gmra.mrb[0].mxu0 %v2757
      %v2863 = vpop.f32.mrb[0].mxu0
      %v2864 = vadd.f32 0.0, %v2863
      %v2865 = vpop.f32.mrb[0].mxu0
      %2866 = vmatprep.mubr.f32.mxu0 0.0
      %2867 = vmatmul.mubr.f32.gmra.mrb[0].mxu0 %v2758
      %v2868 = vpop.f32.mrb[0].mxu0
      %v2869 = vadd.f32 0.0, %v2868
      %v2870 = vpop.f32.mrb[0].mxu0
      %2871 = vmatprep.mubr.f32.mxu0 0.0
      %2872 = vmatmul.mubr.f32.gmra.mrb[0].mxu0 %v2759
      %v2873 = vpop.f32.mrb[0].mxu0
      %v2874 = vadd.f32 0.0, %v2873
      %v2875 = vpop.f32.mrb[0].mxu0
      %2876 = vmatprep.mubr.f32.mxu0 0.0
      %2877 = vmatmul.mubr.f32.gmra.mrb[0].mxu0 %v2760
      %v2878 = vpop.f32.mrb[0].mxu0
      %v2879 = vadd.f32 0.0, %v2878
      %v2880 = vpop.f32.mrb[0].mxu0
      %2881 = vmatprep.mubr.f32.mxu0 0.0
      %2882 = vmatmul.mubr.f32.gmra.mrb[0].mxu0 %v2761
      %v2883 = vpop.f32.mrb[0].mxu0
      %v2884 = vadd.f32 0.0, %v2883
      %v2885 = vpop.f32.mrb[0].mxu0
      %2886 = vmatprep.mubr.f32.mxu0 0.0
      %2887 = vmatmul.mubr.f32.gmra.mrb[0].mxu0 %v2762
      %v2888 = vpop.f32.mrb[0].mxu0
      %v2889 = vadd.f32 0.0, %v2888
      %v2890 = vpop.f32.mrb[0].mxu0
      %2891 = vmatprep.mubr.f32.mxu0 0.0
      %2892 = vmatmul.mubr.f32.gmra.mrb[0].mxu0 %v2763
      %v2893 = vpop.f32.mrb[0].mxu0
      %v2894 = vadd.f32 0.0, %v2893
      %v2895 = vpop.f32.mrb[0].mxu0
      %2896 = vmatprep.mubr.f32.mxu0 0.0
      %2897 = vmatmul.mubr.f32.gmra.mrb[0].mxu0 %v2764
      %v2898 = vpop.f32.mrb[0].mxu0
      %v2899 = vadd.f32 0.0, %v2898
      %v2900 = vpop.f32.mrb[0].mxu0
      %2901 = vmatprep.mubr.f32.mxu0 0.0
      %2902 = vmatmul.mubr.f32.gmra.mrb[0].mxu0 %v2765
      %v2903 = vpop.f32.mrb[0].mxu0
      %v2904 = vadd.f32 0.0, %v2903
      %v2905 = vpop.f32.mrb[0].mxu0
      %2906 = vmatprep.mubr.f32.mxu0 0.0
      %2907 = vmatmul.mubr.f32.gmra.mrb[0].mxu0 %v2766
      %v2908 = vpop.f32.mrb[0].mxu0
      %v2909 = vadd.f32 0.0, %v2908
      %v2910 = vpop.f32.mrb[0].mxu0
      %2911 = vmatprep.mubr.f32.mxu0 0.0
      %2912 = vmatmul.mubr.f32.gmra.mrb[0].mxu0 %v2767
      %v2913 = vpop.f32.mrb[0].mxu0
      %v2914 = vadd.f32 0.0, %v2913
      %v2915 = vpop.f32.mrb[0].mxu0
      %2916 = vmatprep.mubr.f32.mxu0 0.0
      %2917 = vmatmul.mubr.f32.gmra.mrb[0].mxu0 %v2768
      %v2918 = vpop.f32.mrb[0].mxu0
      %v2919 = vadd.f32 0.0, %v2918
      %v2920 = vpop.f32.mrb[0].mxu0
      %2921 = vmatprep.mubr.f32.mxu0 0.0
      %2922 = vmatmul.mubr.f32.gmra.mrb[0].mxu0 %v2769
      %v2923 = vpop.f32.mrb[0].mxu0
      %v2924 = vadd.f32 0.0, %v2923
      %v2925 = vpop.f32.mrb[0].mxu0
      %2926 = vmatprep.mubr.f32.mxu0 0.0
      %2927 = vmatmul.mubr.f32.gmra.mrb[0].mxu0 %v2770
      %v2928 = vpop.f32.mrb[0].mxu0
      %v2929 = vadd.f32 0.0, %v2928
      %v2930 = vpop.f32.mrb[0].mxu0
      %2931 = vmatprep.mubr.f32.mxu0 0.0
      %2932 = vmatmul.mubr.f32.gmra.mrb[0].mxu0 %v2771
      %v2933 = vpop.f32.mrb[0].mxu0
      %v2934 = vadd.f32 0.0, %v2933
      %v2935 = vpop.f32.mrb[0].mxu0
      %2936 = vdwg.mxu0
      %v2937 = vsub.f32 0.0, %v2839
      %v2938 = vsub.f32 0.0, %v2844
      %v2939 = vsub.f32 0.0, %v2849
      %v2940 = vsub.f32 0.0, %v2854
      %v2941 = vsub.f32 0.0, %v2859
      %v2942 = vsub.f32 0.0, %v2864
      %v2943 = vsub.f32 0.0, %v2869
      %v2944 = vsub.f32 0.0, %v2874
      %v2945 = vsub.f32 0.0, %v2879
      %v2946 = vsub.f32 0.0, %v2884
      %v2947 = vsub.f32 0.0, %v2889
      %v2948 = vsub.f32 0.0, %v2894
      %v2949 = vsub.f32 0.0, %v2899
      %v2950 = vsub.f32 0.0, %v2904
      %v2951 = vsub.f32 0.0, %v2909
      %v2952 = vsub.f32 0.0, %v2914
      %v2953 = vsub.f32 0.0, %v2919
      %v2954 = vsub.f32 0.0, %v2924
      %v2955 = vsub.f32 0.0, %v2929
      %v2956 = vsub.f32 0.0, %v2934
      %v2957 = vxor.u32 %v2937, 2147483648
      %v2958 = vxor.u32 %v2938, 2147483648
      %v2959 = vxor.u32 %v2939, 2147483648
      %v2960 = vxor.u32 %v2940, 2147483648
      %v2961 = vxor.u32 %v2941, 2147483648
      %v2962 = vxor.u32 %v2942, 2147483648
      %v2963 = vxor.u32 %v2943, 2147483648
      %v2964 = vxor.u32 %v2944, 2147483648
      %v2965 = vxor.u32 %v2945, 2147483648
      %v2966 = vxor.u32 %v2946, 2147483648
      %v2967 = vxor.u32 %v2947, 2147483648
      %v2968 = vxor.u32 %v2948, 2147483648
      %v2969 = vxor.u32 %v2949, 2147483648
      %v2970 = vxor.u32 %v2950, 2147483648
      %v2971 = vxor.u32 %v2951, 2147483648
      %v2972 = vxor.u32 %v2952, 2147483648
      %v2973 = vxor.u32 %v2953, 2147483648
      %v2974 = vxor.u32 %v2954, 2147483648
      %v2975 = vxor.u32 %v2955, 2147483648
      %v2976 = vxor.u32 %v2956, 2147483648
      %v2977 = vmul.f32 %v2957, 1.442695
      %v2978 = vpow.pop %v2977
      %v2979 = vmul.f32 %v2958, 1.442695
      %v2980 = vpow.pop %v2979
      %v2981 = vmul.f32 %v2959, 1.442695
      %v2982 = vpow.pop %v2981
      %v2983 = vmul.f32 %v2960, 1.442695
      %v2984 = vpow.pop %v2983
      %v2985 = vmul.f32 %v2961, 1.442695
      %v2986 = vpow.pop %v2985
      %v2987 = vmul.f32 %v2962, 1.442695
      %v2988 = vpow.pop %v2987
      %v2989 = vmul.f32 %v2963, 1.442695
      %v2990 = vpow.pop %v2989
      %v2991 = vmul.f32 %v2964, 1.442695
      %v2992 = vpow.pop %v2991
      %v2993 = vmul.f32 %v2965, 1.442695
      %v2994 = vpow.pop %v2993
      %v2995 = vmul.f32 %v2966, 1.442695
      %v2996 = vpow.pop %v2995
      %v2997 = vmul.f32 %v2967, 1.442695
      %v2998 = vpow.pop %v2997
      %v2999 = vmul.f32 %v2968, 1.442695
      %v3000 = vpow.pop %v2999
      %v3001 = vmul.f32 %v2969, 1.442695
      %v3002 = vpow.pop %v3001
      %v3003 = vmul.f32 %v2970, 1.442695
      %v3004 = vpow.pop %v3003
      %v3005 = vmul.f32 %v2971, 1.442695
      %v3006 = vpow.pop %v3005
      %v3007 = vmul.f32 %v2972, 1.442695
      %v3008 = vpow.pop %v3007
      %v3009 = vmul.f32 %v2973, 1.442695
      %v3010 = vpow.pop %v3009
      %v3011 = vmul.f32 %v2974, 1.442695
      %v3012 = vpow.pop %v3011
      %v3013 = vmul.f32 %v2975, 1.442695
      %v3014 = vpow.pop %v3013
      %v3015 = vmul.f32 %v2976, 1.442695
      %v3016 = vpow.pop %v3015
      %v3017 = vadd.f32 %v2978, 1.0
      %v3018 = vadd.f32 %v2980, 1.0
      %v3019 = vadd.f32 %v2982, 1.0
      %v3020 = vadd.f32 %v2984, 1.0
      %v3021 = vadd.f32 %v2986, 1.0
      %v3022 = vadd.f32 %v2988, 1.0
      %v3023 = vadd.f32 %v2990, 1.0
      %v3024 = vadd.f32 %v2992, 1.0
      %v3025 = vadd.f32 %v2994, 1.0
      %v3026 = vadd.f32 %v2996, 1.0
      %v3027 = vadd.f32 %v2998, 1.0
      %v3028 = vadd.f32 %v3000, 1.0
      %v3029 = vadd.f32 %v3002, 1.0
      %v3030 = vadd.f32 %v3004, 1.0
      %v3031 = vadd.f32 %v3006, 1.0
      %v3032 = vadd.f32 %v3008, 1.0
      %v3033 = vadd.f32 %v3010, 1.0
      %v3034 = vadd.f32 %v3012, 1.0
      %v3035 = vadd.f32 %v3014, 1.0
      %v3036 = vadd.f32 %v3016, 1.0
      %v3037 = vrcp.pop %v3017
      %v3038 = vmul.f32 1.0, %v3037
      %v3039 = vrcp.pop %v3018
      %v3040 = vmul.f32 1.0, %v3039
      %v3041 = vrcp.pop %v3019
      %v3042 = vmul.f32 1.0, %v3041
      %v3043 = vrcp.pop %v3020
      %v3044 = vmul.f32 1.0, %v3043
      %v3045 = vrcp.pop %v3021
      %v3046 = vmul.f32 1.0, %v3045
      %v3047 = vrcp.pop %v3022
      %v3048 = vmul.f32 1.0, %v3047
      %v3049 = vrcp.pop %v3023
      %v3050 = vmul.f32 1.0, %v3049
      %v3051 = vrcp.pop %v3024
      %v3052 = vmul.f32 1.0, %v3051
      %v3053 = vrcp.pop %v3025
      %v3054 = vmul.f32 1.0, %v3053
      %v3055 = vrcp.pop %v3026
      %v3056 = vmul.f32 1.0, %v3055
      %v3057 = vrcp.pop %v3027
      %v3058 = vmul.f32 1.0, %v3057
      %v3059 = vrcp.pop %v3028
      %v3060 = vmul.f32 1.0, %v3059
      %v3061 = vrcp.pop %v3029
      %v3062 = vmul.f32 1.0, %v3061
      %v3063 = vrcp.pop %v3030
      %v3064 = vmul.f32 1.0, %v3063
      %v3065 = vrcp.pop %v3031
      %v3066 = vmul.f32 1.0, %v3065
      %v3067 = vrcp.pop %v3032
      %v3068 = vmul.f32 1.0, %v3067
      %v3069 = vrcp.pop %v3033
      %v3070 = vmul.f32 1.0, %v3069
      %v3071 = vrcp.pop %v3034
      %v3072 = vmul.f32 1.0, %v3071
      %v3073 = vrcp.pop %v3035
      %v3074 = vmul.f32 1.0, %v3073
      %v3075 = vrcp.pop %v3036
      %v3076 = vmul.f32 1.0, %v3075
      %v3077 = vmul.f32 %v3038, %v2732
      %v3078 = vmul.f32 %v3040, %v2733
      %v3079 = vmul.f32 %v3042, %v2734
      %v3080 = vmul.f32 %v3044, %v2735
      %v3081 = vmul.f32 %v3046, %v2736
      %v3082 = vmul.f32 %v3048, %v2737
      %v3083 = vmul.f32 %v3050, %v2738
      %v3084 = vmul.f32 %v3052, %v2739
      %v3085 = vmul.f32 %v3054, %v2740
      %v3086 = vmul.f32 %v3056, %v2741
      %v3087 = vsub.f32 0.0, %v2732
      %v3088 = vsub.f32 0.0, %v2733
      %v3089 = vsub.f32 0.0, %v2734
      %v3090 = vsub.f32 0.0, %v2735
      %v3091 = vsub.f32 0.0, %v2736
      %v3092 = vsub.f32 0.0, %v2737
      %v3093 = vsub.f32 0.0, %v2738
      %v3094 = vsub.f32 0.0, %v2739
      %v3095 = vsub.f32 0.0, %v2740
      %v3096 = vsub.f32 0.0, %v2741
      %v3097 = vmul.f32 %v3058, %v3087
      %v3098 = vmul.f32 %v3060, %v3088
      %v3099 = vmul.f32 %v3062, %v3089
      %v3100 = vmul.f32 %v3064, %v3090
      %v3101 = vmul.f32 %v3066, %v3091
      %v3102 = vmul.f32 %v3068, %v3092
      %v3103 = vmul.f32 %v3070, %v3093
      %v3104 = vmul.f32 %v3072, %v3094
      %v3105 = vmul.f32 %v3074, %v3095
      %v3106 = vmul.f32 %v3076, %v3096
      %v3107 = vadd.f32 %v2644, %v3077
      %v3108 = vadd.f32 %v2647, %v3078
      %v3109 = vadd.f32 %v2652, %v3079
      %v3110 = vadd.f32 %v2655, %v3080
      %v3111 = vadd.f32 %v2660, %v3081
      %v3112 = vadd.f32 %v2663, %v3082
      %v3113 = vadd.f32 %v2668, %v3083
      %v3114 = vadd.f32 %v2671, %v3084
      %v3115 = vadd.f32 %v2676, %v3085
      %v3116 = vadd.f32 %v2679, %v3086
      %v3117 = vadd.f32 %v2684, %v3097
      %v3118 = vadd.f32 %v2687, %v3098
      %v3119 = vadd.f32 %v2692, %v3099
      %v3120 = vadd.f32 %v2695, %v3100
      %v3121 = vadd.f32 %v2700, %v3101
      %v3122 = vadd.f32 %v2703, %v3102
      %v3123 = vadd.f32 %v2708, %v3103
      %v3124 = vadd.f32 %v2711, %v3104
      %v3125 = vadd.f32 %v2716, %v3105
      %v3126 = vadd.f32 %v2719, %v3106
      %v3127 = vpack.c.bf16 %v3108, %v3107
      %v3128 = vpack.c.bf16 %v3110, %v3109
      %v3129 = vpack.c.bf16 %v3112, %v3111
      %v3130 = vpack.c.bf16 %v3114, %v3113
      %v3131 = vpack.c.bf16 %v3116, %v3115
      %v3132 = vpack.c.bf16 %v3118, %v3117
      %v3133 = vpack.c.bf16 %v3120, %v3119
      %v3134 = vpack.c.bf16 %v3122, %v3121
      %v3135 = vpack.c.bf16 %v3124, %v3123
      %v3136 = vpack.c.bf16 %v3126, %v3125
      %v3137 = vld [vmem:[%s10] sm:$0xf]
      %v3138 = vld [vmem:[%s10 + $0x4] sm:$0xf]
      %v3139 = vld [vmem:[%s10 + $0x8] sm:$0xf]
      %v3140 = vld [vmem:[%s10 + $0xc] sm:$0xf]
      %v3141 = vld [vmem:[%s10 + $0x10] sm:$0xf]
      %v3142 = vld [vmem:[%s10 + $0x14] sm:$0xf]
      %v3143 = vld [vmem:[%s10 + $0x18] sm:$0xf]
      %v3144 = vld [vmem:[%s10 + $0x1c] sm:$0xf]
      %v3145 = vld [vmem:[%s10 + $0x20] sm:$0xf]
      %v3146 = vld [vmem:[%s10 + $0x24] sm:$0xf]
      %v3147 = vld [vmem:[%s10 + $0x28] sm:$0xf]
      %v3148 = vld [vmem:[%s10 + $0x2c] sm:$0xf]
      %v3149 = vld [vmem:[%s10 + $0x30] sm:$0xf]
      %v3150 = vld [vmem:[%s10 + $0x34] sm:$0xf]
      %v3151 = vld [vmem:[%s10 + $0x38] sm:$0xf]
      %v3152 = vld [vmem:[%s10 + $0x3c] sm:$0xf]
      %v3153 = vld [vmem:[%s11] sm:$0x1]
      %v3154 = vlaneseq
      %v3155 = vshrl.u32 %v3154, 7
      %v3156 = vsub.s32 0, %v3155
      %v3157 = vrot.slane %v3153, %v3156
      %v3174 = vunpack.c.l.b16 %v3137
      %v3175 = vunpack.c.l.b16 %v3138
      %v3176 = vunpack.c.l.b16 %v3139
      %v3177 = vunpack.c.l.b16 %v3140
      %v3178 = vunpack.c.l.b16 %v3141
      %v3179 = vunpack.c.l.b16 %v3142
      %v3180 = vunpack.c.l.b16 %v3143
      %v3181 = vunpack.c.l.b16 %v3144
      %v3182 = vunpack.c.l.b16 %v3145
      %v3183 = vunpack.c.l.b16 %v3146
      %v3184 = vunpack.c.l.b16 %v3147
      %v3185 = vunpack.c.l.b16 %v3148
      %v3186 = vunpack.c.l.b16 %v3149
      %v3187 = vunpack.c.l.b16 %v3150
      %v3188 = vunpack.c.l.b16 %v3151
      %v3189 = vunpack.c.l.b16 %v3152
      %v3190 = vpack.c.b16 %v3175, %v3174
      %v3191 = vpack.c.b16 %v3177, %v3176
      %v3192 = vpack.c.b16 %v3179, %v3178
      %v3193 = vpack.c.b16 %v3181, %v3180
      %v3194 = vpack.c.b16 %v3183, %v3182
      %v3195 = vpack.c.b16 %v3185, %v3184
      %v3196 = vpack.c.b16 %v3187, %v3186
      %v3197 = vpack.c.b16 %v3189, %v3188
      %3206 = vmatprep.subr.bf16.mxu0 0
      %3207 = vmatpush1.bf16.msra.mxu0 %v3190
      %3208 = vmatprep.subr.bf16.mxu0 0
      %3209 = vmatpush1.bf16.msra.mxu0 %v3191
      %3210 = vmatprep.subr.bf16.mxu0 0
      %3211 = vmatpush1.bf16.msra.mxu0 %v3192
      %3212 = vmatprep.subr.bf16.mxu0 0
      %3213 = vmatpush1.bf16.msra.mxu0 %v3193
      %3214 = vmatprep.subr.bf16.mxu0 0
      %3215 = vmatpush1.bf16.msra.mxu0 %v3194
      %3216 = vmatprep.subr.bf16.mxu0 0
      %3217 = vmatpush1.bf16.msra.mxu0 %v3195
      %3218 = vmatprep.subr.bf16.mxu0 0
      %3219 = vmatpush1.bf16.msra.mxu0 %v3196
      %3220 = vmatprep.subr.bf16.mxu0 0
      %3221 = vmatpush1.bf16.msra.mxu0 %v3197
      %3222 = vmatprep.subr.bf16.mxu0 0
      %3223 = vmatpush1.bf16.msra.mxu0 0
      %3224 = vmatprep.subr.bf16.mxu0 0
      %3225 = vmatpush1.bf16.msra.mxu0 0
      %3226 = vmatprep.subr.bf16.mxu0 0
      %3227 = vmatpush1.bf16.msra.mxu0 0
      %3228 = vmatprep.subr.bf16.mxu0 0
      %3229 = vmatpush1.bf16.msra.mxu0 0
      %3230 = vmatprep.subr.bf16.mxu0 0
      %3231 = vmatpush1.bf16.msra.mxu0 0
      %3232 = vmatprep.subr.bf16.mxu0 0
      %3233 = vmatpush1.bf16.msra.mxu0 0
      %3234 = vmatprep.subr.bf16.mxu0 0
      %3235 = vmatpush1.bf16.msra.mxu0 0
      %3236 = vmatprep.subr.bf16.mxu0 0
      %3237 = vmatpush1.bf16.msra.mxu0 0
      %3238 = vmatprep.mubr.bf16.mxu0 0
      %3239 = vmatmul.mubr.bf16.gmra.mrb[0].mxu0 %v3127
      %v3240 = vpop.f32.mrb[0].mxu0
      %v3241 = vadd.f32 %v3157, %v3240
      %v3242 = vpop.f32.mrb[0].mxu0
      %v3243 = vpop.f32.mrb[0].mxu0
      %v3244 = vadd.f32 %v3157, %v3243
      %v3245 = vpop.f32.mrb[0].mxu0
      %3246 = vmatprep.mubr.bf16.mxu0 0
      %3247 = vmatmul.mubr.bf16.gmra.mrb[0].mxu0 %v3128
      %v3248 = vpop.f32.mrb[0].mxu0
      %v3249 = vadd.f32 %v3157, %v3248
      %v3250 = vpop.f32.mrb[0].mxu0
      %v3251 = vpop.f32.mrb[0].mxu0
      %v3252 = vadd.f32 %v3157, %v3251
      %v3253 = vpop.f32.mrb[0].mxu0
      %3254 = vmatprep.mubr.bf16.mxu0 0
      %3255 = vmatmul.mubr.bf16.gmra.mrb[0].mxu0 %v3129
      %v3256 = vpop.f32.mrb[0].mxu0
      %v3257 = vadd.f32 %v3157, %v3256
      %v3258 = vpop.f32.mrb[0].mxu0
      %v3259 = vpop.f32.mrb[0].mxu0
      %v3260 = vadd.f32 %v3157, %v3259
      %v3261 = vpop.f32.mrb[0].mxu0
      %3262 = vmatprep.mubr.bf16.mxu0 0
      %3263 = vmatmul.mubr.bf16.gmra.mrb[0].mxu0 %v3130
      %v3264 = vpop.f32.mrb[0].mxu0
      %v3265 = vadd.f32 %v3157, %v3264
      %v3266 = vpop.f32.mrb[0].mxu0
      %v3267 = vpop.f32.mrb[0].mxu0
      %v3268 = vadd.f32 %v3157, %v3267
      %v3269 = vpop.f32.mrb[0].mxu0
      %3270 = vmatprep.mubr.bf16.mxu0 0
      %3271 = vmatmul.mubr.bf16.gmra.mrb[0].mxu0 %v3131
      %v3272 = vpop.f32.mrb[0].mxu0
      %v3273 = vadd.f32 %v3157, %v3272
      %v3274 = vpop.f32.mrb[0].mxu0
      %v3275 = vpop.f32.mrb[0].mxu0
      %v3276 = vadd.f32 %v3157, %v3275
      %v3277 = vpop.f32.mrb[0].mxu0
      %3278 = vmatprep.mubr.bf16.mxu0 0
      %3279 = vmatmul.mubr.bf16.gmra.mrb[0].mxu0 %v3132
      %v3280 = vpop.f32.mrb[0].mxu0
      %v3281 = vadd.f32 %v3157, %v3280
      %v3282 = vpop.f32.mrb[0].mxu0
      %v3283 = vpop.f32.mrb[0].mxu0
      %v3284 = vadd.f32 %v3157, %v3283
      %v3285 = vpop.f32.mrb[0].mxu0
      %3286 = vmatprep.mubr.bf16.mxu0 0
      %3287 = vmatmul.mubr.bf16.gmra.mrb[0].mxu0 %v3133
      %v3288 = vpop.f32.mrb[0].mxu0
      %v3289 = vadd.f32 %v3157, %v3288
      %v3290 = vpop.f32.mrb[0].mxu0
      %v3291 = vpop.f32.mrb[0].mxu0
      %v3292 = vadd.f32 %v3157, %v3291
      %v3293 = vpop.f32.mrb[0].mxu0
      %3294 = vmatprep.mubr.bf16.mxu0 0
      %3295 = vmatmul.mubr.bf16.gmra.mrb[0].mxu0 %v3134
      %v3296 = vpop.f32.mrb[0].mxu0
      %v3297 = vadd.f32 %v3157, %v3296
      %v3298 = vpop.f32.mrb[0].mxu0
      %v3299 = vpop.f32.mrb[0].mxu0
      %v3300 = vadd.f32 %v3157, %v3299
      %v3301 = vpop.f32.mrb[0].mxu0
      %3302 = vmatprep.mubr.bf16.mxu0 0
      %3303 = vmatmul.mubr.bf16.gmra.mrb[0].mxu0 %v3135
      %v3304 = vpop.f32.mrb[0].mxu0
      %v3305 = vadd.f32 %v3157, %v3304
      %v3306 = vpop.f32.mrb[0].mxu0
      %v3307 = vpop.f32.mrb[0].mxu0
      %v3308 = vadd.f32 %v3157, %v3307
      %v3309 = vpop.f32.mrb[0].mxu0
      %3310 = vmatprep.mubr.bf16.mxu0 0
      %3311 = vmatmul.mubr.bf16.gmra.mrb[0].mxu0 %v3136
      %v3312 = vpop.f32.mrb[0].mxu0
      %v3313 = vadd.f32 %v3157, %v3312
      %v3314 = vpop.f32.mrb[0].mxu0
      %v3315 = vpop.f32.mrb[0].mxu0
      %v3316 = vadd.f32 %v3157, %v3315
      %v3317 = vpop.f32.mrb[0].mxu0
      %3318 = vdwg.mxu0
      %v3319 = vadd.f32 %v1982, %v3241
      %v3320 = vadd.f32 %v1983, %v3244
      %v3321 = vadd.f32 %v1984, %v3249
      %v3322 = vadd.f32 %v1985, %v3252
      %v3323 = vadd.f32 %v1986, %v3257
      %v3324 = vadd.f32 %v1987, %v3260
      %v3325 = vadd.f32 %v1988, %v3265
      %v3326 = vadd.f32 %v1989, %v3268
      %v3327 = vadd.f32 %v1990, %v3273
      %v3328 = vadd.f32 %v1991, %v3276
      %v3329 = vadd.f32 %v1992, %v3281
      %v3330 = vadd.f32 %v1993, %v3284
      %v3331 = vadd.f32 %v1994, %v3289
      %v3332 = vadd.f32 %v1995, %v3292
      %v3333 = vadd.f32 %v1996, %v3297
      %v3334 = vadd.f32 %v1997, %v3300
      %v3335 = vadd.f32 %v1998, %v3305
      %v3336 = vadd.f32 %v1999, %v3308
      %v3337 = vadd.f32 %v2000, %v3313
      %v3338 = vadd.f32 %v2001, %v3316
      %3339 = vadd.xlane.f32.xlu0 %v3319
      %v3340 = vpop.xlane.xlu0 %3339
      %3341 = vadd.xlane.f32.xlu0 %v3320
      %v3342 = vpop.xlane.xlu0 %3341
      %3343 = vadd.xlane.f32.xlu0 %v3321
      %v3344 = vpop.xlane.xlu0 %3343
      %3345 = vadd.xlane.f32.xlu0 %v3322
      %v3346 = vpop.xlane.xlu0 %3345
      %3347 = vadd.xlane.f32.xlu0 %v3323
      %v3348 = vpop.xlane.xlu0 %3347
      %3349 = vadd.xlane.f32.xlu0 %v3324
      %v3350 = vpop.xlane.xlu0 %3349
      %3351 = vadd.xlane.f32.xlu0 %v3325
      %v3352 = vpop.xlane.xlu0 %3351
      %3353 = vadd.xlane.f32.xlu0 %v3326
      %v3354 = vpop.xlane.xlu0 %3353
      %3355 = vadd.xlane.f32.xlu0 %v3327
      %v3356 = vpop.xlane.xlu0 %3355
      %3357 = vadd.xlane.f32.xlu0 %v3328
      %v3358 = vpop.xlane.xlu0 %3357
      %3359 = vadd.xlane.f32.xlu0 %v3329
      %v3360 = vpop.xlane.xlu0 %3359
      %3361 = vadd.xlane.f32.xlu0 %v3330
      %v3362 = vpop.xlane.xlu0 %3361
      %3363 = vadd.xlane.f32.xlu0 %v3331
      %v3364 = vpop.xlane.xlu0 %3363
      %3365 = vadd.xlane.f32.xlu0 %v3332
      %v3366 = vpop.xlane.xlu0 %3365
      %3367 = vadd.xlane.f32.xlu0 %v3333
      %v3368 = vpop.xlane.xlu0 %3367
      %3369 = vadd.xlane.f32.xlu0 %v3334
      %v3370 = vpop.xlane.xlu0 %3369
      %3371 = vadd.xlane.f32.xlu0 %v3335
      %v3372 = vpop.xlane.xlu0 %3371
      %3373 = vadd.xlane.f32.xlu0 %v3336
      %v3374 = vpop.xlane.xlu0 %3373
      %3375 = vadd.xlane.f32.xlu0 %v3337
      %v3376 = vpop.xlane.xlu0 %3375
      %3377 = vadd.xlane.f32.xlu0 %v3338
      %v3378 = vpop.xlane.xlu0 %3377
      %v3379 = vmul.f32 %v3340, %v2060
      %v3380 = vmul.f32 %v3342, %v2060
      %v3381 = vmul.f32 %v3344, %v2060
      %v3382 = vmul.f32 %v3346, %v2060
      %v3383 = vmul.f32 %v3348, %v2060
      %v3384 = vmul.f32 %v3350, %v2060
      %v3385 = vmul.f32 %v3352, %v2060
      %v3386 = vmul.f32 %v3354, %v2060
      %v3387 = vmul.f32 %v3356, %v2060
      %v3388 = vmul.f32 %v3358, %v2060
      %v3389 = vmul.f32 %v3360, %v2060
      %v3390 = vmul.f32 %v3362, %v2060
      %v3391 = vmul.f32 %v3364, %v2060
      %v3392 = vmul.f32 %v3366, %v2060
      %v3393 = vmul.f32 %v3368, %v2060
      %v3394 = vmul.f32 %v3370, %v2060
      %v3395 = vmul.f32 %v3372, %v2060
      %v3396 = vmul.f32 %v3374, %v2060
      %v3397 = vmul.f32 %v3376, %v2060
      %v3398 = vmul.f32 %v3378, %v2060
      %v3399 = vsub.f32 %v3319, %v3379
      %v3400 = vsub.f32 %v3320, %v3380
      %v3401 = vsub.f32 %v3321, %v3381
      %v3402 = vsub.f32 %v3322, %v3382
      %v3403 = vsub.f32 %v3323, %v3383
      %v3404 = vsub.f32 %v3324, %v3384
      %v3405 = vsub.f32 %v3325, %v3385
      %v3406 = vsub.f32 %v3326, %v3386
      %v3407 = vsub.f32 %v3327, %v3387
      %v3408 = vsub.f32 %v3328, %v3388
      %v3409 = vsub.f32 %v3329, %v3389
      %v3410 = vsub.f32 %v3330, %v3390
      %v3411 = vsub.f32 %v3331, %v3391
      %v3412 = vsub.f32 %v3332, %v3392
      %v3413 = vsub.f32 %v3333, %v3393
      %v3414 = vsub.f32 %v3334, %v3394
      %v3415 = vsub.f32 %v3335, %v3395
      %v3416 = vsub.f32 %v3336, %v3396
      %v3417 = vsub.f32 %v3337, %v3397
      %v3418 = vsub.f32 %v3338, %v3398
      %v3419 = vmul.f32 %v3399, %v3399
      %v3420 = vmul.f32 %v3400, %v3400
      %v3421 = vmul.f32 %v3401, %v3401
      %v3422 = vmul.f32 %v3402, %v3402
      %v3423 = vmul.f32 %v3403, %v3403
      %v3424 = vmul.f32 %v3404, %v3404
      %v3425 = vmul.f32 %v3405, %v3405
      %v3426 = vmul.f32 %v3406, %v3406
      %v3427 = vmul.f32 %v3407, %v3407
      %v3428 = vmul.f32 %v3408, %v3408
      %v3429 = vmul.f32 %v3409, %v3409
      %v3430 = vmul.f32 %v3410, %v3410
      %v3431 = vmul.f32 %v3411, %v3411
      %v3432 = vmul.f32 %v3412, %v3412
      %v3433 = vmul.f32 %v3413, %v3413
      %v3434 = vmul.f32 %v3414, %v3414
      %v3435 = vmul.f32 %v3415, %v3415
      %v3436 = vmul.f32 %v3416, %v3416
      %v3437 = vmul.f32 %v3417, %v3417
      %v3438 = vmul.f32 %v3418, %v3418
      %3439 = vadd.xlane.f32.xlu0 %v3419
      %v3440 = vpop.xlane.xlu0 %3439
      %3441 = vadd.xlane.f32.xlu0 %v3420
      %v3442 = vpop.xlane.xlu0 %3441
      %3443 = vadd.xlane.f32.xlu0 %v3421
      %v3444 = vpop.xlane.xlu0 %3443
      %3445 = vadd.xlane.f32.xlu0 %v3422
      %v3446 = vpop.xlane.xlu0 %3445
      %3447 = vadd.xlane.f32.xlu0 %v3423
      %v3448 = vpop.xlane.xlu0 %3447
      %3449 = vadd.xlane.f32.xlu0 %v3424
      %v3450 = vpop.xlane.xlu0 %3449
      %3451 = vadd.xlane.f32.xlu0 %v3425
      %v3452 = vpop.xlane.xlu0 %3451
      %3453 = vadd.xlane.f32.xlu0 %v3426
      %v3454 = vpop.xlane.xlu0 %3453
      %3455 = vadd.xlane.f32.xlu0 %v3427
      %v3456 = vpop.xlane.xlu0 %3455
      %3457 = vadd.xlane.f32.xlu0 %v3428
      %v3458 = vpop.xlane.xlu0 %3457
      %3459 = vadd.xlane.f32.xlu0 %v3429
      %v3460 = vpop.xlane.xlu0 %3459
      %3461 = vadd.xlane.f32.xlu0 %v3430
      %v3462 = vpop.xlane.xlu0 %3461
      %3463 = vadd.xlane.f32.xlu0 %v3431
      %v3464 = vpop.xlane.xlu0 %3463
      %3465 = vadd.xlane.f32.xlu0 %v3432
      %v3466 = vpop.xlane.xlu0 %3465
      %3467 = vadd.xlane.f32.xlu0 %v3433
      %v3468 = vpop.xlane.xlu0 %3467
      %3469 = vadd.xlane.f32.xlu0 %v3434
      %v3470 = vpop.xlane.xlu0 %3469
      %3471 = vadd.xlane.f32.xlu0 %v3435
      %v3472 = vpop.xlane.xlu0 %3471
      %3473 = vadd.xlane.f32.xlu0 %v3436
      %v3474 = vpop.xlane.xlu0 %3473
      %3475 = vadd.xlane.f32.xlu0 %v3437
      %v3476 = vpop.xlane.xlu0 %3475
      %3477 = vadd.xlane.f32.xlu0 %v3438
      %v3478 = vpop.xlane.xlu0 %3477
      %v3479 = vmul.f32 %v3440, %v2060
      %v3480 = vmul.f32 %v3442, %v2060
      %v3481 = vmul.f32 %v3444, %v2060
      %v3482 = vmul.f32 %v3446, %v2060
      %v3483 = vmul.f32 %v3448, %v2060
      %v3484 = vmul.f32 %v3450, %v2060
      %v3485 = vmul.f32 %v3452, %v2060
      %v3486 = vmul.f32 %v3454, %v2060
      %v3487 = vmul.f32 %v3456, %v2060
      %v3488 = vmul.f32 %v3458, %v2060
      %v3489 = vmul.f32 %v3460, %v2060
      %v3490 = vmul.f32 %v3462, %v2060
      %v3491 = vmul.f32 %v3464, %v2060
      %v3492 = vmul.f32 %v3466, %v2060
      %v3493 = vmul.f32 %v3468, %v2060
      %v3494 = vmul.f32 %v3470, %v2060
      %v3495 = vmul.f32 %v3472, %v2060
      %v3496 = vmul.f32 %v3474, %v2060
      %v3497 = vmul.f32 %v3476, %v2060
      %v3498 = vmul.f32 %v3478, %v2060
      %v3499 = vadd.f32 %v3479, 1e-05
      %v3500 = vadd.f32 %v3480, 1e-05
      %v3501 = vadd.f32 %v3481, 1e-05
      %v3502 = vadd.f32 %v3482, 1e-05
      %v3503 = vadd.f32 %v3483, 1e-05
      %v3504 = vadd.f32 %v3484, 1e-05
      %v3505 = vadd.f32 %v3485, 1e-05
      %v3506 = vadd.f32 %v3486, 1e-05
      %v3507 = vadd.f32 %v3487, 1e-05
      %v3508 = vadd.f32 %v3488, 1e-05
      %v3509 = vadd.f32 %v3489, 1e-05
      %v3510 = vadd.f32 %v3490, 1e-05
      %v3511 = vadd.f32 %v3491, 1e-05
      %v3512 = vadd.f32 %v3492, 1e-05
      %v3513 = vadd.f32 %v3493, 1e-05
      %v3514 = vadd.f32 %v3494, 1e-05
      %v3515 = vadd.f32 %v3495, 1e-05
      %v3516 = vadd.f32 %v3496, 1e-05
      %v3517 = vadd.f32 %v3497, 1e-05
      %v3518 = vadd.f32 %v3498, 1e-05
      %v3519 = vrsqrt.pop %v3499
      %v3520 = vrsqrt.pop %v3500
      %v3521 = vrsqrt.pop %v3501
      %v3522 = vrsqrt.pop %v3502
      %v3523 = vrsqrt.pop %v3503
      %v3524 = vrsqrt.pop %v3504
      %v3525 = vrsqrt.pop %v3505
      %v3526 = vrsqrt.pop %v3506
      %v3527 = vrsqrt.pop %v3507
      %v3528 = vrsqrt.pop %v3508
      %v3529 = vrsqrt.pop %v3509
      %v3530 = vrsqrt.pop %v3510
      %v3531 = vrsqrt.pop %v3511
      %v3532 = vrsqrt.pop %v3512
      %v3533 = vrsqrt.pop %v3513
      %v3534 = vrsqrt.pop %v3514
      %v3535 = vrsqrt.pop %v3515
      %v3536 = vrsqrt.pop %v3516
      %v3537 = vrsqrt.pop %v3517
      %v3538 = vrsqrt.pop %v3518
      %v3539 = vmul.f32 %v3399, %v3519
      %v3540 = vmul.f32 %v3400, %v3520
      %v3541 = vmul.f32 %v3401, %v3521
      %v3542 = vmul.f32 %v3402, %v3522
      %v3543 = vmul.f32 %v3403, %v3523
      %v3544 = vmul.f32 %v3404, %v3524
      %v3545 = vmul.f32 %v3405, %v3525
      %v3546 = vmul.f32 %v3406, %v3526
      %v3547 = vmul.f32 %v3407, %v3527
      %v3548 = vmul.f32 %v3408, %v3528
      %v3549 = vmul.f32 %v3409, %v3529
      %v3550 = vmul.f32 %v3410, %v3530
      %v3551 = vmul.f32 %v3411, %v3531
      %v3552 = vmul.f32 %v3412, %v3532
      %v3553 = vmul.f32 %v3413, %v3533
      %v3554 = vmul.f32 %v3414, %v3534
      %v3555 = vmul.f32 %v3415, %v3535
      %v3556 = vmul.f32 %v3416, %v3536
      %v3557 = vmul.f32 %v3417, %v3537
      %v3558 = vmul.f32 %v3418, %v3538
      %v3559 = vmul.f32 %v3539, %v2244
      %v3560 = vmul.f32 %v3540, %v2244
      %v3561 = vmul.f32 %v3541, %v2244
      %v3562 = vmul.f32 %v3542, %v2244
      %v3563 = vmul.f32 %v3543, %v2244
      %v3564 = vmul.f32 %v3544, %v2244
      %v3565 = vmul.f32 %v3545, %v2244
      %v3566 = vmul.f32 %v3546, %v2244
      %v3567 = vmul.f32 %v3547, %v2244
      %v3568 = vmul.f32 %v3548, %v2244
      %v3569 = vmul.f32 %v3549, %v2244
      %v3570 = vmul.f32 %v3550, %v2244
      %v3571 = vmul.f32 %v3551, %v2244
      %v3572 = vmul.f32 %v3552, %v2244
      %v3573 = vmul.f32 %v3553, %v2244
      %v3574 = vmul.f32 %v3554, %v2244
      %v3575 = vmul.f32 %v3555, %v2244
      %v3576 = vmul.f32 %v3556, %v2244
      %v3577 = vmul.f32 %v3557, %v2244
      %v3578 = vmul.f32 %v3558, %v2244
      %v3579 = vadd.f32 %v3559, %v2268
      %v3580 = vadd.f32 %v3560, %v2268
      %v3581 = vadd.f32 %v3561, %v2268
      %v3582 = vadd.f32 %v3562, %v2268
      %v3583 = vadd.f32 %v3563, %v2268
      %v3584 = vadd.f32 %v3564, %v2268
      %v3585 = vadd.f32 %v3565, %v2268
      %v3586 = vadd.f32 %v3566, %v2268
      %v3587 = vadd.f32 %v3567, %v2268
      %v3588 = vadd.f32 %v3568, %v2268
      %v3589 = vadd.f32 %v3569, %v2268
      %v3590 = vadd.f32 %v3570, %v2268
      %v3591 = vadd.f32 %v3571, %v2268
      %v3592 = vadd.f32 %v3572, %v2268
      %v3593 = vadd.f32 %v3573, %v2268
      %v3594 = vadd.f32 %v3574, %v2268
      %v3595 = vadd.f32 %v3575, %v2268
      %v3596 = vadd.f32 %v3576, %v2268
      %v3597 = vadd.f32 %v3577, %v2268
      %v3598 = vadd.f32 %v3578, %v2268
      %v3599 = vpack.c.bf16 %v3580, %v3579
      %v3600 = vpack.c.bf16 %v3582, %v3581
      %v3601 = vpack.c.bf16 %v3584, %v3583
      %v3602 = vpack.c.bf16 %v3586, %v3585
      %v3603 = vpack.c.bf16 %v3588, %v3587
      %v3604 = vpack.c.bf16 %v3590, %v3589
      %v3605 = vpack.c.bf16 %v3592, %v3591
      %v3606 = vpack.c.bf16 %v3594, %v3593
      %v3607 = vpack.c.bf16 %v3596, %v3595
      %v3608 = vpack.c.bf16 %v3598, %v3597
      %v3609 = vld [vmem:[%s12] sm:$0xff]
      %v3610 = vld [vmem:[%s12 + $0x8] sm:$0xff]
      %v3611 = vld [vmem:[%s12 + $0x10] sm:$0xff]
      %v3612 = vld [vmem:[%s12 + $0x18] sm:$0xff]
      %v3613 = vld [vmem:[%s12 + $0x20] sm:$0xff]
      %v3614 = vld [vmem:[%s12 + $0x28] sm:$0xff]
      %v3615 = vld [vmem:[%s12 + $0x30] sm:$0xff]
      %v3616 = vld [vmem:[%s12 + $0x38] sm:$0xff]
      %v3617 = vld [vmem:[%s12 + $0x40] sm:$0xff]
      %v3618 = vld [vmem:[%s12 + $0x48] sm:$0xff]
      %v3619 = vld [vmem:[%s12 + $0x50] sm:$0xff]
      %v3620 = vld [vmem:[%s12 + $0x58] sm:$0xff]
      %v3621 = vld [vmem:[%s12 + $0x60] sm:$0xff]
      %v3622 = vld [vmem:[%s12 + $0x68] sm:$0xff]
      %v3623 = vld [vmem:[%s12 + $0x70] sm:$0xff]
      %v3624 = vld [vmem:[%s12 + $0x78] sm:$0xff]
      %v3625 = vld [vmem:[%s12 + $0x80] sm:$0xff]
      %v3626 = vld [vmem:[%s12 + $0x88] sm:$0xff]
      %v3627 = vld [vmem:[%s12 + $0x90] sm:$0xff]
      %v3628 = vld [vmem:[%s12 + $0x98] sm:$0xff]
      %v3629 = vld [vmem:[%s12 + $0xa0] sm:$0xff]
      %v3630 = vld [vmem:[%s12 + $0xa8] sm:$0xff]
      %v3631 = vld [vmem:[%s12 + $0xb0] sm:$0xff]
      %v3632 = vld [vmem:[%s12 + $0xb8] sm:$0xff]
      %v3633 = vld [vmem:[%s12 + $0xc0] sm:$0xff]
      %v3634 = vld [vmem:[%s12 + $0xc8] sm:$0xff]
      %v3635 = vld [vmem:[%s12 + $0xd0] sm:$0xff]
      %v3636 = vld [vmem:[%s12 + $0xd8] sm:$0xff]
      %v3637 = vld [vmem:[%s12 + $0xe0] sm:$0xff]
      %v3638 = vld [vmem:[%s12 + $0xe8] sm:$0xff]
      %v3639 = vld [vmem:[%s12 + $0xf0] sm:$0xff]
      %v3640 = vld [vmem:[%s12 + $0xf8] sm:$0xff]
      %v3641 = vld [vmem:[%s13] ss:$2 sm:$0xf]
      %v3643 = vlaneseq
      %v3644 = vshrl.u32 %v3643, 7
      %v3645 = vsub.s32 0, %v3644
      %v3646 = vrot.slane %v3641, %v3645
      %v3647 = vlaneseq
      %v3648 = vshrl.u32 %v3647, 7
      %v3649 = vsub.s32 1, %v3648
      %v3650 = vrot.slane %v3641, %v3649
      %v3651 = vlaneseq
      %v3652 = vshrl.u32 %v3651, 7
      %v3653 = vsub.s32 2, %v3652
      %v3654 = vrot.slane %v3641, %v3653
      %v3655 = vlaneseq
      %v3656 = vshrl.u32 %v3655, 7
      %v3657 = vsub.s32 3, %v3656
      %v3658 = vrot.slane %v3641, %v3657
      %v3695 = vunpack.c.l.b16 %v3609
      %v3696 = vunpack.c.h.b16 %v3609
      %v3697 = vunpack.c.l.b16 %v3610
      %v3698 = vunpack.c.h.b16 %v3610
      %v3699 = vunpack.c.l.b16 %v3611
      %v3700 = vunpack.c.h.b16 %v3611
      %v3701 = vunpack.c.l.b16 %v3612
      %v3702 = vunpack.c.h.b16 %v3612
      %v3703 = vunpack.c.l.b16 %v3613
      %v3704 = vunpack.c.h.b16 %v3613
      %v3705 = vunpack.c.l.b16 %v3614
      %v3706 = vunpack.c.h.b16 %v3614
      %v3707 = vunpack.c.l.b16 %v3615
      %v3708 = vunpack.c.h.b16 %v3615
      %v3709 = vunpack.c.l.b16 %v3616
      %v3710 = vunpack.c.h.b16 %v3616
      %v3711 = vunpack.c.l.b16 %v3617
      %v3712 = vunpack.c.h.b16 %v3617
      %v3713 = vunpack.c.l.b16 %v3618
      %v3714 = vunpack.c.h.b16 %v3618
      %v3715 = vunpack.c.l.b16 %v3619
      %v3716 = vunpack.c.h.b16 %v3619
      %v3717 = vunpack.c.l.b16 %v3620
      %v3718 = vunpack.c.h.b16 %v3620
      %v3719 = vunpack.c.l.b16 %v3621
      %v3720 = vunpack.c.h.b16 %v3621
      %v3721 = vunpack.c.l.b16 %v3622
      %v3722 = vunpack.c.h.b16 %v3622
      %v3723 = vunpack.c.l.b16 %v3623
      %v3724 = vunpack.c.h.b16 %v3623
      %v3725 = vunpack.c.l.b16 %v3624
      %v3726 = vunpack.c.h.b16 %v3624
      %v3727 = vunpack.c.l.b16 %v3625
      %v3728 = vunpack.c.h.b16 %v3625
      %v3729 = vunpack.c.l.b16 %v3626
      %v3730 = vunpack.c.h.b16 %v3626
      %v3731 = vunpack.c.l.b16 %v3627
      %v3732 = vunpack.c.h.b16 %v3627
      %v3733 = vunpack.c.l.b16 %v3628
      %v3734 = vunpack.c.h.b16 %v3628
      %v3735 = vunpack.c.l.b16 %v3629
      %v3736 = vunpack.c.h.b16 %v3629
      %v3737 = vunpack.c.l.b16 %v3630
      %v3738 = vunpack.c.h.b16 %v3630
      %v3739 = vunpack.c.l.b16 %v3631
      %v3740 = vunpack.c.h.b16 %v3631
      %v3741 = vunpack.c.l.b16 %v3632
      %v3742 = vunpack.c.h.b16 %v3632
      %v3743 = vunpack.c.l.b16 %v3633
      %v3744 = vunpack.c.h.b16 %v3633
      %v3745 = vunpack.c.l.b16 %v3634
      %v3746 = vunpack.c.h.b16 %v3634
      %v3747 = vunpack.c.l.b16 %v3635
      %v3748 = vunpack.c.h.b16 %v3635
      %v3749 = vunpack.c.l.b16 %v3636
      %v3750 = vunpack.c.h.b16 %v3636
      %v3751 = vunpack.c.l.b16 %v3637
      %v3752 = vunpack.c.h.b16 %v3637
      %v3753 = vunpack.c.l.b16 %v3638
      %v3754 = vunpack.c.h.b16 %v3638
      %v3755 = vunpack.c.l.b16 %v3639
      %v3756 = vunpack.c.h.b16 %v3639
      %v3757 = vunpack.c.l.b16 %v3640
      %v3758 = vunpack.c.h.b16 %v3640
      %v3759 = vpack.c.b16 %v3699, %v3695
      %v3760 = vpack.c.b16 %v3700, %v3696
      %v3761 = vpack.c.b16 %v3701, %v3697
      %v3762 = vpack.c.b16 %v3702, %v3698
      %v3763 = vpack.c.b16 %v3707, %v3703
      %v3764 = vpack.c.b16 %v3708, %v3704
      %v3765 = vpack.c.b16 %v3709, %v3705
      %v3766 = vpack.c.b16 %v3710, %v3706
      %v3767 = vpack.c.b16 %v3715, %v3711
      %v3768 = vpack.c.b16 %v3716, %v3712
      %v3769 = vpack.c.b16 %v3717, %v3713
      %v3770 = vpack.c.b16 %v3718, %v3714
      %v3771 = vpack.c.b16 %v3723, %v3719
      %v3772 = vpack.c.b16 %v3724, %v3720
      %v3773 = vpack.c.b16 %v3725, %v3721
      %v3774 = vpack.c.b16 %v3726, %v3722
      %v3775 = vpack.c.b16 %v3731, %v3727
      %v3776 = vpack.c.b16 %v3732, %v3728
      %v3777 = vpack.c.b16 %v3733, %v3729
      %v3778 = vpack.c.b16 %v3734, %v3730
      %v3779 = vpack.c.b16 %v3739, %v3735
      %v3780 = vpack.c.b16 %v3740, %v3736
      %v3781 = vpack.c.b16 %v3741, %v3737
      %v3782 = vpack.c.b16 %v3742, %v3738
      %v3783 = vpack.c.b16 %v3747, %v3743
      %v3784 = vpack.c.b16 %v3748, %v3744
      %v3785 = vpack.c.b16 %v3749, %v3745
      %v3786 = vpack.c.b16 %v3750, %v3746
      %v3787 = vpack.c.b16 %v3755, %v3751
      %v3788 = vpack.c.b16 %v3756, %v3752
      %v3789 = vpack.c.b16 %v3757, %v3753
      %v3790 = vpack.c.b16 %v3758, %v3754
      %3823 = vmatprep.subr.bf16.mxu0 %v3760
      %3824 = vmatpush1.bf16.msra.mxu0 %v3759
      %3825 = vmatprep.subr.bf16.mxu0 %v3764
      %3826 = vmatpush1.bf16.msra.mxu0 %v3763
      %3827 = vmatprep.subr.bf16.mxu0 %v3768
      %3828 = vmatpush1.bf16.msra.mxu0 %v3767
      %3829 = vmatprep.subr.bf16.mxu0 %v3772
      %3830 = vmatpush1.bf16.msra.mxu0 %v3771
      %3831 = vmatprep.subr.bf16.mxu0 %v3776
      %3832 = vmatpush1.bf16.msra.mxu0 %v3775
      %3833 = vmatprep.subr.bf16.mxu0 %v3780
      %3834 = vmatpush1.bf16.msra.mxu0 %v3779
      %3835 = vmatprep.subr.bf16.mxu0 %v3784
      %3836 = vmatpush1.bf16.msra.mxu0 %v3783
      %3837 = vmatprep.subr.bf16.mxu0 %v3788
      %3838 = vmatpush1.bf16.msra.mxu0 %v3787
      %3839 = vmatprep.subr.bf16.mxu0 0
      %3840 = vmatpush1.bf16.msra.mxu0 0
      %3841 = vmatprep.subr.bf16.mxu0 0
      %3842 = vmatpush1.bf16.msra.mxu0 0
      %3843 = vmatprep.subr.bf16.mxu0 0
      %3844 = vmatpush1.bf16.msra.mxu0 0
      %3845 = vmatprep.subr.bf16.mxu0 0
      %3846 = vmatpush1.bf16.msra.mxu0 0
      %3847 = vmatprep.subr.bf16.mxu0 0
      %3848 = vmatpush1.bf16.msra.mxu0 0
      %3849 = vmatprep.subr.bf16.mxu0 0
      %3850 = vmatpush1.bf16.msra.mxu0 0
      %3851 = vmatprep.subr.bf16.mxu0 0
      %3852 = vmatpush1.bf16.msra.mxu0 0
      %3853 = vmatprep.subr.bf16.mxu0 0
      %3854 = vmatpush1.bf16.msra.mxu0 0
      %3855 = vmatprep.mubr.bf16.mxu0 0
      %3856 = vmatmul.mubr.bf16.gmra.mrb[0].mxu0 %v3599
      %v3857 = vpop.f32.mrb[0].mxu0
      %v3858 = vadd.f32 %v3646, %v3857
      %v3859 = vpop.f32.mrb[0].mxu0
      %v3860 = vadd.f32 %v3650, %v3859
      %v3861 = vpop.f32.mrb[0].mxu0
      %v3862 = vadd.f32 %v3646, %v3861
      %v3863 = vpop.f32.mrb[0].mxu0
      %v3864 = vadd.f32 %v3650, %v3863
      %3865 = vmatprep.mubr.bf16.mxu0 0
      %3866 = vmatmul.mubr.bf16.gmra.mrb[0].mxu0 %v3600
      %v3867 = vpop.f32.mrb[0].mxu0
      %v3868 = vadd.f32 %v3646, %v3867
      %v3869 = vpop.f32.mrb[0].mxu0
      %v3870 = vadd.f32 %v3650, %v3869
      %v3871 = vpop.f32.mrb[0].mxu0
      %v3872 = vadd.f32 %v3646, %v3871
      %v3873 = vpop.f32.mrb[0].mxu0
      %v3874 = vadd.f32 %v3650, %v3873
      %3875 = vmatprep.mubr.bf16.mxu0 0
      %3876 = vmatmul.mubr.bf16.gmra.mrb[0].mxu0 %v3601
      %v3877 = vpop.f32.mrb[0].mxu0
      %v3878 = vadd.f32 %v3646, %v3877
      %v3879 = vpop.f32.mrb[0].mxu0
      %v3880 = vadd.f32 %v3650, %v3879
      %v3881 = vpop.f32.mrb[0].mxu0
      %v3882 = vadd.f32 %v3646, %v3881
      %v3883 = vpop.f32.mrb[0].mxu0
      %v3884 = vadd.f32 %v3650, %v3883
      %3885 = vmatprep.mubr.bf16.mxu0 0
      %3886 = vmatmul.mubr.bf16.gmra.mrb[0].mxu0 %v3602
      %v3887 = vpop.f32.mrb[0].mxu0
      %v3888 = vadd.f32 %v3646, %v3887
      %v3889 = vpop.f32.mrb[0].mxu0
      %v3890 = vadd.f32 %v3650, %v3889
      %v3891 = vpop.f32.mrb[0].mxu0
      %v3892 = vadd.f32 %v3646, %v3891
      %v3893 = vpop.f32.mrb[0].mxu0
      %v3894 = vadd.f32 %v3650, %v3893
      %3895 = vmatprep.mubr.bf16.mxu0 0
      %3896 = vmatmul.mubr.bf16.gmra.mrb[0].mxu0 %v3603
      %v3897 = vpop.f32.mrb[0].mxu0
      %v3898 = vadd.f32 %v3646, %v3897
      %v3899 = vpop.f32.mrb[0].mxu0
      %v3900 = vadd.f32 %v3650, %v3899
      %v3901 = vpop.f32.mrb[0].mxu0
      %v3902 = vadd.f32 %v3646, %v3901
      %v3903 = vpop.f32.mrb[0].mxu0
      %v3904 = vadd.f32 %v3650, %v3903
      %3905 = vmatprep.mubr.bf16.mxu0 0
      %3906 = vmatmul.mubr.bf16.gmra.mrb[0].mxu0 %v3604
      %v3907 = vpop.f32.mrb[0].mxu0
      %v3908 = vadd.f32 %v3646, %v3907
      %v3909 = vpop.f32.mrb[0].mxu0
      %v3910 = vadd.f32 %v3650, %v3909
      %v3911 = vpop.f32.mrb[0].mxu0
      %v3912 = vadd.f32 %v3646, %v3911
      %v3913 = vpop.f32.mrb[0].mxu0
      %v3914 = vadd.f32 %v3650, %v3913
      %3915 = vmatprep.mubr.bf16.mxu0 0
      %3916 = vmatmul.mubr.bf16.gmra.mrb[0].mxu0 %v3605
      %v3917 = vpop.f32.mrb[0].mxu0
      %v3918 = vadd.f32 %v3646, %v3917
      %v3919 = vpop.f32.mrb[0].mxu0
      %v3920 = vadd.f32 %v3650, %v3919
      %v3921 = vpop.f32.mrb[0].mxu0
      %v3922 = vadd.f32 %v3646, %v3921
      %v3923 = vpop.f32.mrb[0].mxu0
      %v3924 = vadd.f32 %v3650, %v3923
      %3925 = vmatprep.mubr.bf16.mxu0 0
      %3926 = vmatmul.mubr.bf16.gmra.mrb[0].mxu0 %v3606
      %v3927 = vpop.f32.mrb[0].mxu0
      %v3928 = vadd.f32 %v3646, %v3927
      %v3929 = vpop.f32.mrb[0].mxu0
      %v3930 = vadd.f32 %v3650, %v3929
      %v3931 = vpop.f32.mrb[0].mxu0
      %v3932 = vadd.f32 %v3646, %v3931
      %v3933 = vpop.f32.mrb[0].mxu0
      %v3934 = vadd.f32 %v3650, %v3933
      %3935 = vmatprep.mubr.bf16.mxu0 0
      %3936 = vmatmul.mubr.bf16.gmra.mrb[0].mxu0 %v3607
      %v3937 = vpop.f32.mrb[0].mxu0
      %v3938 = vadd.f32 %v3646, %v3937
      %v3939 = vpop.f32.mrb[0].mxu0
      %v3940 = vadd.f32 %v3650, %v3939
      %v3941 = vpop.f32.mrb[0].mxu0
      %v3942 = vadd.f32 %v3646, %v3941
      %v3943 = vpop.f32.mrb[0].mxu0
      %v3944 = vadd.f32 %v3650, %v3943
      %3945 = vmatprep.mubr.bf16.mxu0 0
      %3946 = vmatmul.mubr.bf16.gmra.mrb[0].mxu0 %v3608
      %v3947 = vpop.f32.mrb[0].mxu0
      %v3948 = vadd.f32 %v3646, %v3947
      %v3949 = vpop.f32.mrb[0].mxu0
      %v3950 = vadd.f32 %v3650, %v3949
      %v3951 = vpop.f32.mrb[0].mxu0
      %v3952 = vadd.f32 %v3646, %v3951
      %v3953 = vpop.f32.mrb[0].mxu0
      %v3954 = vadd.f32 %v3650, %v3953
      %3955 = vdwg.mxu0
      %3956 = vmatprep.subr.bf16.mxu0 %v3762
      %3957 = vmatpush1.bf16.msra.mxu0 %v3761
      %3958 = vmatprep.subr.bf16.mxu0 %v3766
      %3959 = vmatpush1.bf16.msra.mxu0 %v3765
      %3960 = vmatprep.subr.bf16.mxu0 %v3770
      %3961 = vmatpush1.bf16.msra.mxu0 %v3769
      %3962 = vmatprep.subr.bf16.mxu0 %v3774
      %3963 = vmatpush1.bf16.msra.mxu0 %v3773
      %3964 = vmatprep.subr.bf16.mxu0 %v3778
      %3965 = vmatpush1.bf16.msra.mxu0 %v3777
      %3966 = vmatprep.subr.bf16.mxu0 %v3782
      %3967 = vmatpush1.bf16.msra.mxu0 %v3781
      %3968 = vmatprep.subr.bf16.mxu0 %v3786
      %3969 = vmatpush1.bf16.msra.mxu0 %v3785
      %3970 = vmatprep.subr.bf16.mxu0 %v3790
      %3971 = vmatpush1.bf16.msra.mxu0 %v3789
      %3972 = vmatprep.subr.bf16.mxu0 0
      %3973 = vmatpush1.bf16.msra.mxu0 0
      %3974 = vmatprep.subr.bf16.mxu0 0
      %3975 = vmatpush1.bf16.msra.mxu0 0
      %3976 = vmatprep.subr.bf16.mxu0 0
      %3977 = vmatpush1.bf16.msra.mxu0 0
      %3978 = vmatprep.subr.bf16.mxu0 0
      %3979 = vmatpush1.bf16.msra.mxu0 0
      %3980 = vmatprep.subr.bf16.mxu0 0
      %3981 = vmatpush1.bf16.msra.mxu0 0
      %3982 = vmatprep.subr.bf16.mxu0 0
      %3983 = vmatpush1.bf16.msra.mxu0 0
      %3984 = vmatprep.subr.bf16.mxu0 0
      %3985 = vmatpush1.bf16.msra.mxu0 0
      %3986 = vmatprep.subr.bf16.mxu0 0
      %3987 = vmatpush1.bf16.msra.mxu0 0
      %3988 = vmatprep.mubr.bf16.mxu0 0
      %3989 = vmatmul.mubr.bf16.gmra.mrb[0].mxu0 %v3599
      %v3990 = vpop.f32.mrb[0].mxu0
      %v3991 = vadd.f32 %v3654, %v3990
      %v3992 = vpop.f32.mrb[0].mxu0
      %v3993 = vadd.f32 %v3658, %v3992
      %v3994 = vpop.f32.mrb[0].mxu0
      %v3995 = vadd.f32 %v3654, %v3994
      %v3996 = vpop.f32.mrb[0].mxu0
      %v3997 = vadd.f32 %v3658, %v3996
      %3998 = vmatprep.mubr.bf16.mxu0 0
      %3999 = vmatmul.mubr.bf16.gmra.mrb[0].mxu0 %v3600
      %v4000 = vpop.f32.mrb[0].mxu0
      %v4001 = vadd.f32 %v3654, %v4000
      %v4002 = vpop.f32.mrb[0].mxu0
      %v4003 = vadd.f32 %v3658, %v4002
      %v4004 = vpop.f32.mrb[0].mxu0
      %v4005 = vadd.f32 %v3654, %v4004
      %v4006 = vpop.f32.mrb[0].mxu0
      %v4007 = vadd.f32 %v3658, %v4006
      %4008 = vmatprep.mubr.bf16.mxu0 0
      %4009 = vmatmul.mubr.bf16.gmra.mrb[0].mxu0 %v3601
      %v4010 = vpop.f32.mrb[0].mxu0
      %v4011 = vadd.f32 %v3654, %v4010
      %v4012 = vpop.f32.mrb[0].mxu0
      %v4013 = vadd.f32 %v3658, %v4012
      %v4014 = vpop.f32.mrb[0].mxu0
      %v4015 = vadd.f32 %v3654, %v4014
      %v4016 = vpop.f32.mrb[0].mxu0
      %v4017 = vadd.f32 %v3658, %v4016
      %4018 = vmatprep.mubr.bf16.mxu0 0
      %4019 = vmatmul.mubr.bf16.gmra.mrb[0].mxu0 %v3602
      %v4020 = vpop.f32.mrb[0].mxu0
      %v4021 = vadd.f32 %v3654, %v4020
      %v4022 = vpop.f32.mrb[0].mxu0
      %v4023 = vadd.f32 %v3658, %v4022
      %v4024 = vpop.f32.mrb[0].mxu0
      %v4025 = vadd.f32 %v3654, %v4024
      %v4026 = vpop.f32.mrb[0].mxu0
      %v4027 = vadd.f32 %v3658, %v4026
      %4028 = vmatprep.mubr.bf16.mxu0 0
      %4029 = vmatmul.mubr.bf16.gmra.mrb[0].mxu0 %v3603
      %v4030 = vpop.f32.mrb[0].mxu0
      %v4031 = vadd.f32 %v3654, %v4030
      %v4032 = vpop.f32.mrb[0].mxu0
      %v4033 = vadd.f32 %v3658, %v4032
      %v4034 = vpop.f32.mrb[0].mxu0
      %v4035 = vadd.f32 %v3654, %v4034
      %v4036 = vpop.f32.mrb[0].mxu0
      %v4037 = vadd.f32 %v3658, %v4036
      %4038 = vmatprep.mubr.bf16.mxu0 0
      %4039 = vmatmul.mubr.bf16.gmra.mrb[0].mxu0 %v3604
      %v4040 = vpop.f32.mrb[0].mxu0
      %v4041 = vadd.f32 %v3654, %v4040
      %v4042 = vpop.f32.mrb[0].mxu0
      %v4043 = vadd.f32 %v3658, %v4042
      %v4044 = vpop.f32.mrb[0].mxu0
      %v4045 = vadd.f32 %v3654, %v4044
      %v4046 = vpop.f32.mrb[0].mxu0
      %v4047 = vadd.f32 %v3658, %v4046
      %4048 = vmatprep.mubr.bf16.mxu0 0
      %4049 = vmatmul.mubr.bf16.gmra.mrb[0].mxu0 %v3605
      %v4050 = vpop.f32.mrb[0].mxu0
      %v4051 = vadd.f32 %v3654, %v4050
      %v4052 = vpop.f32.mrb[0].mxu0
      %v4053 = vadd.f32 %v3658, %v4052
      %v4054 = vpop.f32.mrb[0].mxu0
      %v4055 = vadd.f32 %v3654, %v4054
      %v4056 = vpop.f32.mrb[0].mxu0
      %v4057 = vadd.f32 %v3658, %v4056
      %4058 = vmatprep.mubr.bf16.mxu0 0
      %4059 = vmatmul.mubr.bf16.gmra.mrb[0].mxu0 %v3606
      %v4060 = vpop.f32.mrb[0].mxu0
      %v4061 = vadd.f32 %v3654, %v4060
      %v4062 = vpop.f32.mrb[0].mxu0
      %v4063 = vadd.f32 %v3658, %v4062
      %v4064 = vpop.f32.mrb[0].mxu0
      %v4065 = vadd.f32 %v3654, %v4064
      %v4066 = vpop.f32.mrb[0].mxu0
      %v4067 = vadd.f32 %v3658, %v4066
      %4068 = vmatprep.mubr.bf16.mxu0 0
      %4069 = vmatmul.mubr.bf16.gmra.mrb[0].mxu0 %v3607
      %v4070 = vpop.f32.mrb[0].mxu0
      %v4071 = vadd.f32 %v3654, %v4070
      %v4072 = vpop.f32.mrb[0].mxu0
      %v4073 = vadd.f32 %v3658, %v4072
      %v4074 = vpop.f32.mrb[0].mxu0
      %v4075 = vadd.f32 %v3654, %v4074
      %v4076 = vpop.f32.mrb[0].mxu0
      %v4077 = vadd.f32 %v3658, %v4076
      %4078 = vmatprep.mubr.bf16.mxu0 0
      %4079 = vmatmul.mubr.bf16.gmra.mrb[0].mxu0 %v3608
      %v4080 = vpop.f32.mrb[0].mxu0
      %v4081 = vadd.f32 %v3654, %v4080
      %v4082 = vpop.f32.mrb[0].mxu0
      %v4083 = vadd.f32 %v3658, %v4082
      %v4084 = vpop.f32.mrb[0].mxu0
      %v4085 = vadd.f32 %v3654, %v4084
      %v4086 = vpop.f32.mrb[0].mxu0
      %v4087 = vadd.f32 %v3658, %v4086
      %4088 = vdwg.mxu0
      %v4089 = vmul.f32 %v3858, %v3858
      %v4090 = vmul.f32 %v3860, %v3860
      %v4091 = vmul.f32 %v3991, %v3991
      %v4092 = vmul.f32 %v3993, %v3993
      %v4093 = vmul.f32 %v3862, %v3862
      %v4094 = vmul.f32 %v3864, %v3864
      %v4095 = vmul.f32 %v3995, %v3995
      %v4096 = vmul.f32 %v3997, %v3997
      %v4097 = vmul.f32 %v3868, %v3868
      %v4098 = vmul.f32 %v3870, %v3870
      %v4099 = vmul.f32 %v4001, %v4001
      %v4100 = vmul.f32 %v4003, %v4003
      %v4101 = vmul.f32 %v3872, %v3872
      %v4102 = vmul.f32 %v3874, %v3874
      %v4103 = vmul.f32 %v4005, %v4005
      %v4104 = vmul.f32 %v4007, %v4007
      %v4105 = vmul.f32 %v3878, %v3878
      %v4106 = vmul.f32 %v3880, %v3880
      %v4107 = vmul.f32 %v4011, %v4011
      %v4108 = vmul.f32 %v4013, %v4013
      %v4109 = vmul.f32 %v3882, %v3882
      %v4110 = vmul.f32 %v3884, %v3884
      %v4111 = vmul.f32 %v4015, %v4015
      %v4112 = vmul.f32 %v4017, %v4017
      %v4113 = vmul.f32 %v3888, %v3888
      %v4114 = vmul.f32 %v3890, %v3890
      %v4115 = vmul.f32 %v4021, %v4021
      %v4116 = vmul.f32 %v4023, %v4023
      %v4117 = vmul.f32 %v3892, %v3892
      %v4118 = vmul.f32 %v3894, %v3894
      %v4119 = vmul.f32 %v4025, %v4025
      %v4120 = vmul.f32 %v4027, %v4027
      %v4121 = vmul.f32 %v3898, %v3898
      %v4122 = vmul.f32 %v3900, %v3900
      %v4123 = vmul.f32 %v4031, %v4031
      %v4124 = vmul.f32 %v4033, %v4033
      %v4125 = vmul.f32 %v3902, %v3902
      %v4126 = vmul.f32 %v3904, %v3904
      %v4127 = vmul.f32 %v4035, %v4035
      %v4128 = vmul.f32 %v4037, %v4037
      %v4129 = vmul.f32 %v3908, %v3908
      %v4130 = vmul.f32 %v3910, %v3910
      %v4131 = vmul.f32 %v4041, %v4041
      %v4132 = vmul.f32 %v4043, %v4043
      %v4133 = vmul.f32 %v3912, %v3912
      %v4134 = vmul.f32 %v3914, %v3914
      %v4135 = vmul.f32 %v4045, %v4045
      %v4136 = vmul.f32 %v4047, %v4047
      %v4137 = vmul.f32 %v3918, %v3918
      %v4138 = vmul.f32 %v3920, %v3920
      %v4139 = vmul.f32 %v4051, %v4051
      %v4140 = vmul.f32 %v4053, %v4053
      %v4141 = vmul.f32 %v3922, %v3922
      %v4142 = vmul.f32 %v3924, %v3924
      %v4143 = vmul.f32 %v4055, %v4055
      %v4144 = vmul.f32 %v4057, %v4057
      %v4145 = vmul.f32 %v3928, %v3928
      %v4146 = vmul.f32 %v3930, %v3930
      %v4147 = vmul.f32 %v4061, %v4061
      %v4148 = vmul.f32 %v4063, %v4063
      %v4149 = vmul.f32 %v3932, %v3932
      %v4150 = vmul.f32 %v3934, %v3934
      %v4151 = vmul.f32 %v4065, %v4065
      %v4152 = vmul.f32 %v4067, %v4067
      %v4153 = vmul.f32 %v3938, %v3938
      %v4154 = vmul.f32 %v3940, %v3940
      %v4155 = vmul.f32 %v4071, %v4071
      %v4156 = vmul.f32 %v4073, %v4073
      %v4157 = vmul.f32 %v3942, %v3942
      %v4158 = vmul.f32 %v3944, %v3944
      %v4159 = vmul.f32 %v4075, %v4075
      %v4160 = vmul.f32 %v4077, %v4077
      %v4161 = vmul.f32 %v3948, %v3948
      %v4162 = vmul.f32 %v3950, %v3950
      %v4163 = vmul.f32 %v4081, %v4081
      %v4164 = vmul.f32 %v4083, %v4083
      %v4165 = vmul.f32 %v3952, %v3952
      %v4166 = vmul.f32 %v3954, %v3954
      %v4167 = vmul.f32 %v4085, %v4085
      %v4168 = vmul.f32 %v4087, %v4087
      %v4169 = vmul.f32 %v3858, %v4089
      %v4170 = vmul.f32 %v3860, %v4090
      %v4171 = vmul.f32 %v3991, %v4091
      %v4172 = vmul.f32 %v3993, %v4092
      %v4173 = vmul.f32 %v3862, %v4093
      %v4174 = vmul.f32 %v3864, %v4094
      %v4175 = vmul.f32 %v3995, %v4095
      %v4176 = vmul.f32 %v3997, %v4096
      %v4177 = vmul.f32 %v3868, %v4097
      %v4178 = vmul.f32 %v3870, %v4098
      %v4179 = vmul.f32 %v4001, %v4099
      %v4180 = vmul.f32 %v4003, %v4100
      %v4181 = vmul.f32 %v3872, %v4101
      %v4182 = vmul.f32 %v3874, %v4102
      %v4183 = vmul.f32 %v4005, %v4103
      %v4184 = vmul.f32 %v4007, %v4104
      %v4185 = vmul.f32 %v3878, %v4105
      %v4186 = vmul.f32 %v3880, %v4106
      %v4187 = vmul.f32 %v4011, %v4107
      %v4188 = vmul.f32 %v4013, %v4108
      %v4189 = vmul.f32 %v3882, %v4109
      %v4190 = vmul.f32 %v3884, %v4110
      %v4191 = vmul.f32 %v4015, %v4111
      %v4192 = vmul.f32 %v4017, %v4112
      %v4193 = vmul.f32 %v3888, %v4113
      %v4194 = vmul.f32 %v3890, %v4114
      %v4195 = vmul.f32 %v4021, %v4115
      %v4196 = vmul.f32 %v4023, %v4116
      %v4197 = vmul.f32 %v3892, %v4117
      %v4198 = vmul.f32 %v3894, %v4118
      %v4199 = vmul.f32 %v4025, %v4119
      %v4200 = vmul.f32 %v4027, %v4120
      %v4201 = vmul.f32 %v3898, %v4121
      %v4202 = vmul.f32 %v3900, %v4122
      %v4203 = vmul.f32 %v4031, %v4123
      %v4204 = vmul.f32 %v4033, %v4124
      %v4205 = vmul.f32 %v3902, %v4125
      %v4206 = vmul.f32 %v3904, %v4126
      %v4207 = vmul.f32 %v4035, %v4127
      %v4208 = vmul.f32 %v4037, %v4128
      %v4209 = vmul.f32 %v3908, %v4129
      %v4210 = vmul.f32 %v3910, %v4130
      %v4211 = vmul.f32 %v4041, %v4131
      %v4212 = vmul.f32 %v4043, %v4132
      %v4213 = vmul.f32 %v3912, %v4133
      %v4214 = vmul.f32 %v3914, %v4134
      %v4215 = vmul.f32 %v4045, %v4135
      %v4216 = vmul.f32 %v4047, %v4136
      %v4217 = vmul.f32 %v3918, %v4137
      %v4218 = vmul.f32 %v3920, %v4138
      %v4219 = vmul.f32 %v4051, %v4139
      %v4220 = vmul.f32 %v4053, %v4140
      %v4221 = vmul.f32 %v3922, %v4141
      %v4222 = vmul.f32 %v3924, %v4142
      %v4223 = vmul.f32 %v4055, %v4143
      %v4224 = vmul.f32 %v4057, %v4144
      %v4225 = vmul.f32 %v3928, %v4145
      %v4226 = vmul.f32 %v3930, %v4146
      %v4227 = vmul.f32 %v4061, %v4147
      %v4228 = vmul.f32 %v4063, %v4148
      %v4229 = vmul.f32 %v3932, %v4149
      %v4230 = vmul.f32 %v3934, %v4150
      %v4231 = vmul.f32 %v4065, %v4151
      %v4232 = vmul.f32 %v4067, %v4152
      %v4233 = vmul.f32 %v3938, %v4153
      %v4234 = vmul.f32 %v3940, %v4154
      %v4235 = vmul.f32 %v4071, %v4155
      %v4236 = vmul.f32 %v4073, %v4156
      %v4237 = vmul.f32 %v3942, %v4157
      %v4238 = vmul.f32 %v3944, %v4158
      %v4239 = vmul.f32 %v4075, %v4159
      %v4240 = vmul.f32 %v4077, %v4160
      %v4241 = vmul.f32 %v3948, %v4161
      %v4242 = vmul.f32 %v3950, %v4162
      %v4243 = vmul.f32 %v4081, %v4163
      %v4244 = vmul.f32 %v4083, %v4164
      %v4245 = vmul.f32 %v3952, %v4165
      %v4246 = vmul.f32 %v3954, %v4166
      %v4247 = vmul.f32 %v4085, %v4167
      %v4248 = vmul.f32 %v4087, %v4168
      %v4249 = vmul.f32 %v4169, 0.044715
      %v4250 = vmul.f32 %v4170, 0.044715
      %v4251 = vmul.f32 %v4171, 0.044715
      %v4252 = vmul.f32 %v4172, 0.044715
      %v4253 = vmul.f32 %v4173, 0.044715
      %v4254 = vmul.f32 %v4174, 0.044715
      %v4255 = vmul.f32 %v4175, 0.044715
      %v4256 = vmul.f32 %v4176, 0.044715
      %v4257 = vmul.f32 %v4177, 0.044715
      %v4258 = vmul.f32 %v4178, 0.044715
      %v4259 = vmul.f32 %v4179, 0.044715
      %v4260 = vmul.f32 %v4180, 0.044715
      %v4261 = vmul.f32 %v4181, 0.044715
      %v4262 = vmul.f32 %v4182, 0.044715
      %v4263 = vmul.f32 %v4183, 0.044715
      %v4264 = vmul.f32 %v4184, 0.044715
      %v4265 = vmul.f32 %v4185, 0.044715
      %v4266 = vmul.f32 %v4186, 0.044715
      %v4267 = vmul.f32 %v4187, 0.044715
      %v4268 = vmul.f32 %v4188, 0.044715
      %v4269 = vmul.f32 %v4189, 0.044715
      %v4270 = vmul.f32 %v4190, 0.044715
      %v4271 = vmul.f32 %v4191, 0.044715
      %v4272 = vmul.f32 %v4192, 0.044715
      %v4273 = vmul.f32 %v4193, 0.044715
      %v4274 = vmul.f32 %v4194, 0.044715
      %v4275 = vmul.f32 %v4195, 0.044715
      %v4276 = vmul.f32 %v4196, 0.044715
      %v4277 = vmul.f32 %v4197, 0.044715
      %v4278 = vmul.f32 %v4198, 0.044715
      %v4279 = vmul.f32 %v4199, 0.044715
      %v4280 = vmul.f32 %v4200, 0.044715
      %v4281 = vmul.f32 %v4201, 0.044715
      %v4282 = vmul.f32 %v4202, 0.044715
      %v4283 = vmul.f32 %v4203, 0.044715
      %v4284 = vmul.f32 %v4204, 0.044715
      %v4285 = vmul.f32 %v4205, 0.044715
      %v4286 = vmul.f32 %v4206, 0.044715
      %v4287 = vmul.f32 %v4207, 0.044715
      %v4288 = vmul.f32 %v4208, 0.044715
      %v4289 = vmul.f32 %v4209, 0.044715
      %v4290 = vmul.f32 %v4210, 0.044715
      %v4291 = vmul.f32 %v4211, 0.044715
      %v4292 = vmul.f32 %v4212, 0.044715
      %v4293 = vmul.f32 %v4213, 0.044715
      %v4294 = vmul.f32 %v4214, 0.044715
      %v4295 = vmul.f32 %v4215, 0.044715
      %v4296 = vmul.f32 %v4216, 0.044715
      %v4297 = vmul.f32 %v4217, 0.044715
      %v4298 = vmul.f32 %v4218, 0.044715
      %v4299 = vmul.f32 %v4219, 0.044715
      %v4300 = vmul.f32 %v4220, 0.044715
      %v4301 = vmul.f32 %v4221, 0.044715
      %v4302 = vmul.f32 %v4222, 0.044715
      %v4303 = vmul.f32 %v4223, 0.044715
      %v4304 = vmul.f32 %v4224, 0.044715
      %v4305 = vmul.f32 %v4225, 0.044715
      %v4306 = vmul.f32 %v4226, 0.044715
      %v4307 = vmul.f32 %v4227, 0.044715
      %v4308 = vmul.f32 %v4228, 0.044715
      %v4309 = vmul.f32 %v4229, 0.044715
      %v4310 = vmul.f32 %v4230, 0.044715
      %v4311 = vmul.f32 %v4231, 0.044715
      %v4312 = vmul.f32 %v4232, 0.044715
      %v4313 = vmul.f32 %v4233, 0.044715
      %v4314 = vmul.f32 %v4234, 0.044715
      %v4315 = vmul.f32 %v4235, 0.044715
      %v4316 = vmul.f32 %v4236, 0.044715
      %v4317 = vmul.f32 %v4237, 0.044715
      %v4318 = vmul.f32 %v4238, 0.044715
      %v4319 = vmul.f32 %v4239, 0.044715
      %v4320 = vmul.f32 %v4240, 0.044715
      %v4321 = vmul.f32 %v4241, 0.044715
      %v4322 = vmul.f32 %v4242, 0.044715
      %v4323 = vmul.f32 %v4243, 0.044715
      %v4324 = vmul.f32 %v4244, 0.044715
      %v4325 = vmul.f32 %v4245, 0.044715
      %v4326 = vmul.f32 %v4246, 0.044715
      %v4327 = vmul.f32 %v4247, 0.044715
      %v4328 = vmul.f32 %v4248, 0.044715
      %v4329 = vadd.f32 %v3858, %v4249
      %v4330 = vadd.f32 %v3860, %v4250
      %v4331 = vadd.f32 %v3991, %v4251
      %v4332 = vadd.f32 %v3993, %v4252
      %v4333 = vadd.f32 %v3862, %v4253
      %v4334 = vadd.f32 %v3864, %v4254
      %v4335 = vadd.f32 %v3995, %v4255
      %v4336 = vadd.f32 %v3997, %v4256
      %v4337 = vadd.f32 %v3868, %v4257
      %v4338 = vadd.f32 %v3870, %v4258
      %v4339 = vadd.f32 %v4001, %v4259
      %v4340 = vadd.f32 %v4003, %v4260
      %v4341 = vadd.f32 %v3872, %v4261
      %v4342 = vadd.f32 %v3874, %v4262
      %v4343 = vadd.f32 %v4005, %v4263
      %v4344 = vadd.f32 %v4007, %v4264
      %v4345 = vadd.f32 %v3878, %v4265
      %v4346 = vadd.f32 %v3880, %v4266
      %v4347 = vadd.f32 %v4011, %v4267
      %v4348 = vadd.f32 %v4013, %v4268
      %v4349 = vadd.f32 %v3882, %v4269
      %v4350 = vadd.f32 %v3884, %v4270
      %v4351 = vadd.f32 %v4015, %v4271
      %v4352 = vadd.f32 %v4017, %v4272
      %v4353 = vadd.f32 %v3888, %v4273
      %v4354 = vadd.f32 %v3890, %v4274
      %v4355 = vadd.f32 %v4021, %v4275
      %v4356 = vadd.f32 %v4023, %v4276
      %v4357 = vadd.f32 %v3892, %v4277
      %v4358 = vadd.f32 %v3894, %v4278
      %v4359 = vadd.f32 %v4025, %v4279
      %v4360 = vadd.f32 %v4027, %v4280
      %v4361 = vadd.f32 %v3898, %v4281
      %v4362 = vadd.f32 %v3900, %v4282
      %v4363 = vadd.f32 %v4031, %v4283
      %v4364 = vadd.f32 %v4033, %v4284
      %v4365 = vadd.f32 %v3902, %v4285
      %v4366 = vadd.f32 %v3904, %v4286
      %v4367 = vadd.f32 %v4035, %v4287
      %v4368 = vadd.f32 %v4037, %v4288
      %v4369 = vadd.f32 %v3908, %v4289
      %v4370 = vadd.f32 %v3910, %v4290
      %v4371 = vadd.f32 %v4041, %v4291
      %v4372 = vadd.f32 %v4043, %v4292
      %v4373 = vadd.f32 %v3912, %v4293
      %v4374 = vadd.f32 %v3914, %v4294
      %v4375 = vadd.f32 %v4045, %v4295
      %v4376 = vadd.f32 %v4047, %v4296
      %v4377 = vadd.f32 %v3918, %v4297
      %v4378 = vadd.f32 %v3920, %v4298
      %v4379 = vadd.f32 %v4051, %v4299
      %v4380 = vadd.f32 %v4053, %v4300
      %v4381 = vadd.f32 %v3922, %v4301
      %v4382 = vadd.f32 %v3924, %v4302
      %v4383 = vadd.f32 %v4055, %v4303
      %v4384 = vadd.f32 %v4057, %v4304
      %v4385 = vadd.f32 %v3928, %v4305
      %v4386 = vadd.f32 %v3930, %v4306
      %v4387 = vadd.f32 %v4061, %v4307
      %v4388 = vadd.f32 %v4063, %v4308
      %v4389 = vadd.f32 %v3932, %v4309
      %v4390 = vadd.f32 %v3934, %v4310
      %v4391 = vadd.f32 %v4065, %v4311
      %v4392 = vadd.f32 %v4067, %v4312
      %v4393 = vadd.f32 %v3938, %v4313
      %v4394 = vadd.f32 %v3940, %v4314
      %v4395 = vadd.f32 %v4071, %v4315
      %v4396 = vadd.f32 %v4073, %v4316
      %v4397 = vadd.f32 %v3942, %v4317
      %v4398 = vadd.f32 %v3944, %v4318
      %v4399 = vadd.f32 %v4075, %v4319
      %v4400 = vadd.f32 %v4077, %v4320
      %v4401 = vadd.f32 %v3948, %v4321
      %v4402 = vadd.f32 %v3950, %v4322
      %v4403 = vadd.f32 %v4081, %v4323
      %v4404 = vadd.f32 %v4083, %v4324
      %v4405 = vadd.f32 %v3952, %v4325
      %v4406 = vadd.f32 %v3954, %v4326
      %v4407 = vadd.f32 %v4085, %v4327
      %v4408 = vadd.f32 %v4087, %v4328
      %v4409 = vmul.f32 %v4329, 0.7978846
      %v4410 = vmul.f32 %v4330, 0.7978846
      %v4411 = vmul.f32 %v4331, 0.7978846
      %v4412 = vmul.f32 %v4332, 0.7978846
      %v4413 = vmul.f32 %v4333, 0.7978846
      %v4414 = vmul.f32 %v4334, 0.7978846
      %v4415 = vmul.f32 %v4335, 0.7978846
      %v4416 = vmul.f32 %v4336, 0.7978846
      %v4417 = vmul.f32 %v4337, 0.7978846
      %v4418 = vmul.f32 %v4338, 0.7978846
      %v4419 = vmul.f32 %v4339, 0.7978846
      %v4420 = vmul.f32 %v4340, 0.7978846
      %v4421 = vmul.f32 %v4341, 0.7978846
      %v4422 = vmul.f32 %v4342, 0.7978846
      %v4423 = vmul.f32 %v4343, 0.7978846
      %v4424 = vmul.f32 %v4344, 0.7978846
      %v4425 = vmul.f32 %v4345, 0.7978846
      %v4426 = vmul.f32 %v4346, 0.7978846
      %v4427 = vmul.f32 %v4347, 0.7978846
      %v4428 = vmul.f32 %v4348, 0.7978846
      %v4429 = vmul.f32 %v4349, 0.7978846
      %v4430 = vmul.f32 %v4350, 0.7978846
      %v4431 = vmul.f32 %v4351, 0.7978846
      %v4432 = vmul.f32 %v4352, 0.7978846
      %v4433 = vmul.f32 %v4353, 0.7978846
      %v4434 = vmul.f32 %v4354, 0.7978846
      %v4435 = vmul.f32 %v4355, 0.7978846
      %v4436 = vmul.f32 %v4356, 0.7978846
      %v4437 = vmul.f32 %v4357, 0.7978846
      %v4438 = vmul.f32 %v4358, 0.7978846
      %v4439 = vmul.f32 %v4359, 0.7978846
      %v4440 = vmul.f32 %v4360, 0.7978846
      %v4441 = vmul.f32 %v4361, 0.7978846
      %v4442 = vmul.f32 %v4362, 0.7978846
      %v4443 = vmul.f32 %v4363, 0.7978846
      %v4444 = vmul.f32 %v4364, 0.7978846
      %v4445 = vmul.f32 %v4365, 0.7978846
      %v4446 = vmul.f32 %v4366, 0.7978846
      %v4447 = vmul.f32 %v4367, 0.7978846
      %v4448 = vmul.f32 %v4368, 0.7978846
      %v4449 = vmul.f32 %v4369, 0.7978846
      %v4450 = vmul.f32 %v4370, 0.7978846
      %v4451 = vmul.f32 %v4371, 0.7978846
      %v4452 = vmul.f32 %v4372, 0.7978846
      %v4453 = vmul.f32 %v4373, 0.7978846
      %v4454 = vmul.f32 %v4374, 0.7978846
      %v4455 = vmul.f32 %v4375, 0.7978846
      %v4456 = vmul.f32 %v4376, 0.7978846
      %v4457 = vmul.f32 %v4377, 0.7978846
      %v4458 = vmul.f32 %v4378, 0.7978846
      %v4459 = vmul.f32 %v4379, 0.7978846
      %v4460 = vmul.f32 %v4380, 0.7978846
      %v4461 = vmul.f32 %v4381, 0.7978846
      %v4462 = vmul.f32 %v4382, 0.7978846
      %v4463 = vmul.f32 %v4383, 0.7978846
      %v4464 = vmul.f32 %v4384, 0.7978846
      %v4465 = vmul.f32 %v4385, 0.7978846
      %v4466 = vmul.f32 %v4386, 0.7978846
      %v4467 = vmul.f32 %v4387, 0.7978846
      %v4468 = vmul.f32 %v4388, 0.7978846
      %v4469 = vmul.f32 %v4389, 0.7978846
      %v4470 = vmul.f32 %v4390, 0.7978846
      %v4471 = vmul.f32 %v4391, 0.7978846
      %v4472 = vmul.f32 %v4392, 0.7978846
      %v4473 = vmul.f32 %v4393, 0.7978846
      %v4474 = vmul.f32 %v4394, 0.7978846
      %v4475 = vmul.f32 %v4395, 0.7978846
      %v4476 = vmul.f32 %v4396, 0.7978846
      %v4477 = vmul.f32 %v4397, 0.7978846
      %v4478 = vmul.f32 %v4398, 0.7978846
      %v4479 = vmul.f32 %v4399, 0.7978846
      %v4480 = vmul.f32 %v4400, 0.7978846
      %v4481 = vmul.f32 %v4401, 0.7978846
      %v4482 = vmul.f32 %v4402, 0.7978846
      %v4483 = vmul.f32 %v4403, 0.7978846
      %v4484 = vmul.f32 %v4404, 0.7978846
      %v4485 = vmul.f32 %v4405, 0.7978846
      %v4486 = vmul.f32 %v4406, 0.7978846
      %v4487 = vmul.f32 %v4407, 0.7978846
      %v4488 = vmul.f32 %v4408, 0.7978846
      %v4489 = vtanh.pop %v4409
      %v4490 = vtanh.pop %v4410
      %v4491 = vtanh.pop %v4411
      %v4492 = vtanh.pop %v4412
      %v4493 = vtanh.pop %v4413
      %v4494 = vtanh.pop %v4414
      %v4495 = vtanh.pop %v4415
      %v4496 = vtanh.pop %v4416
      %v4497 = vtanh.pop %v4417
      %v4498 = vtanh.pop %v4418
      %v4499 = vtanh.pop %v4419
      %v4500 = vtanh.pop %v4420
      %v4501 = vtanh.pop %v4421
      %v4502 = vtanh.pop %v4422
      %v4503 = vtanh.pop %v4423
      %v4504 = vtanh.pop %v4424
      %v4505 = vtanh.pop %v4425
      %v4506 = vtanh.pop %v4426
      %v4507 = vtanh.pop %v4427
      %v4508 = vtanh.pop %v4428
      %v4509 = vtanh.pop %v4429
      %v4510 = vtanh.pop %v4430
      %v4511 = vtanh.pop %v4431
      %v4512 = vtanh.pop %v4432
      %v4513 = vtanh.pop %v4433
      %v4514 = vtanh.pop %v4434
      %v4515 = vtanh.pop %v4435
      %v4516 = vtanh.pop %v4436
      %v4517 = vtanh.pop %v4437
      %v4518 = vtanh.pop %v4438
      %v4519 = vtanh.pop %v4439
      %v4520 = vtanh.pop %v4440
      %v4521 = vtanh.pop %v4441
      %v4522 = vtanh.pop %v4442
      %v4523 = vtanh.pop %v4443
      %v4524 = vtanh.pop %v4444
      %v4525 = vtanh.pop %v4445
      %v4526 = vtanh.pop %v4446
      %v4527 = vtanh.pop %v4447
      %v4528 = vtanh.pop %v4448
      %v4529 = vtanh.pop %v4449
      %v4530 = vtanh.pop %v4450
      %v4531 = vtanh.pop %v4451
      %v4532 = vtanh.pop %v4452
      %v4533 = vtanh.pop %v4453
      %v4534 = vtanh.pop %v4454
      %v4535 = vtanh.pop %v4455
      %v4536 = vtanh.pop %v4456
      %v4537 = vtanh.pop %v4457
      %v4538 = vtanh.pop %v4458
      %v4539 = vtanh.pop %v4459
      %v4540 = vtanh.pop %v4460
      %v4541 = vtanh.pop %v4461
      %v4542 = vtanh.pop %v4462
      %v4543 = vtanh.pop %v4463
      %v4544 = vtanh.pop %v4464
      %v4545 = vtanh.pop %v4465
      %v4546 = vtanh.pop %v4466
      %v4547 = vtanh.pop %v4467
      %v4548 = vtanh.pop %v4468
      %v4549 = vtanh.pop %v4469
      %v4550 = vtanh.pop %v4470
      %v4551 = vtanh.pop %v4471
      %v4552 = vtanh.pop %v4472
      %v4553 = vtanh.pop %v4473
      %v4554 = vtanh.pop %v4474
      %v4555 = vtanh.pop %v4475
      %v4556 = vtanh.pop %v4476
      %v4557 = vtanh.pop %v4477
      %v4558 = vtanh.pop %v4478
      %v4559 = vtanh.pop %v4479
      %v4560 = vtanh.pop %v4480
      %v4561 = vtanh.pop %v4481
      %v4562 = vtanh.pop %v4482
      %v4563 = vtanh.pop %v4483
      %v4564 = vtanh.pop %v4484
      %v4565 = vtanh.pop %v4485
      %v4566 = vtanh.pop %v4486
      %v4567 = vtanh.pop %v4487
      %v4568 = vtanh.pop %v4488
      %v4569 = vadd.f32 %v4489, 1.0
      %v4570 = vadd.f32 %v4490, 1.0
      %v4571 = vadd.f32 %v4491, 1.0
      %v4572 = vadd.f32 %v4492, 1.0
      %v4573 = vadd.f32 %v4493, 1.0
      %v4574 = vadd.f32 %v4494, 1.0
      %v4575 = vadd.f32 %v4495, 1.0
      %v4576 = vadd.f32 %v4496, 1.0
      %v4577 = vadd.f32 %v4497, 1.0
      %v4578 = vadd.f32 %v4498, 1.0
      %v4579 = vadd.f32 %v4499, 1.0
      %v4580 = vadd.f32 %v4500, 1.0
      %v4581 = vadd.f32 %v4501, 1.0
      %v4582 = vadd.f32 %v4502, 1.0
      %v4583 = vadd.f32 %v4503, 1.0
      %v4584 = vadd.f32 %v4504, 1.0
      %v4585 = vadd.f32 %v4505, 1.0
      %v4586 = vadd.f32 %v4506, 1.0
      %v4587 = vadd.f32 %v4507, 1.0
      %v4588 = vadd.f32 %v4508, 1.0
      %v4589 = vadd.f32 %v4509, 1.0
      %v4590 = vadd.f32 %v4510, 1.0
      %v4591 = vadd.f32 %v4511, 1.0
      %v4592 = vadd.f32 %v4512, 1.0
      %v4593 = vadd.f32 %v4513, 1.0
      %v4594 = vadd.f32 %v4514, 1.0
      %v4595 = vadd.f32 %v4515, 1.0
      %v4596 = vadd.f32 %v4516, 1.0
      %v4597 = vadd.f32 %v4517, 1.0
      %v4598 = vadd.f32 %v4518, 1.0
      %v4599 = vadd.f32 %v4519, 1.0
      %v4600 = vadd.f32 %v4520, 1.0
      %v4601 = vadd.f32 %v4521, 1.0
      %v4602 = vadd.f32 %v4522, 1.0
      %v4603 = vadd.f32 %v4523, 1.0
      %v4604 = vadd.f32 %v4524, 1.0
      %v4605 = vadd.f32 %v4525, 1.0
      %v4606 = vadd.f32 %v4526, 1.0
      %v4607 = vadd.f32 %v4527, 1.0
      %v4608 = vadd.f32 %v4528, 1.0
      %v4609 = vadd.f32 %v4529, 1.0
      %v4610 = vadd.f32 %v4530, 1.0
      %v4611 = vadd.f32 %v4531, 1.0
      %v4612 = vadd.f32 %v4532, 1.0
      %v4613 = vadd.f32 %v4533, 1.0
      %v4614 = vadd.f32 %v4534, 1.0
      %v4615 = vadd.f32 %v4535, 1.0
      %v4616 = vadd.f32 %v4536, 1.0
      %v4617 = vadd.f32 %v4537, 1.0
      %v4618 = vadd.f32 %v4538, 1.0
      %v4619 = vadd.f32 %v4539, 1.0
      %v4620 = vadd.f32 %v4540, 1.0
      %v4621 = vadd.f32 %v4541, 1.0
      %v4622 = vadd.f32 %v4542, 1.0
      %v4623 = vadd.f32 %v4543, 1.0
      %v4624 = vadd.f32 %v4544, 1.0
      %v4625 = vadd.f32 %v4545, 1.0
      %v4626 = vadd.f32 %v4546, 1.0
      %v4627 = vadd.f32 %v4547, 1.0
      %v4628 = vadd.f32 %v4548, 1.0
      %v4629 = vadd.f32 %v4549, 1.0
      %v4630 = vadd.f32 %v4550, 1.0
      %v4631 = vadd.f32 %v4551, 1.0
      %v4632 = vadd.f32 %v4552, 1.0
      %v4633 = vadd.f32 %v4553, 1.0
      %v4634 = vadd.f32 %v4554, 1.0
      %v4635 = vadd.f32 %v4555, 1.0
      %v4636 = vadd.f32 %v4556, 1.0
      %v4637 = vadd.f32 %v4557, 1.0
      %v4638 = vadd.f32 %v4558, 1.0
      %v4639 = vadd.f32 %v4559, 1.0
      %v4640 = vadd.f32 %v4560, 1.0
      %v4641 = vadd.f32 %v4561, 1.0
      %v4642 = vadd.f32 %v4562, 1.0
      %v4643 = vadd.f32 %v4563, 1.0
      %v4644 = vadd.f32 %v4564, 1.0
      %v4645 = vadd.f32 %v4565, 1.0
      %v4646 = vadd.f32 %v4566, 1.0
      %v4647 = vadd.f32 %v4567, 1.0
      %v4648 = vadd.f32 %v4568, 1.0
      %v4649 = vmul.f32 %v4569, 0.5
      %v4650 = vmul.f32 %v4570, 0.5
      %v4651 = vmul.f32 %v4571, 0.5
      %v4652 = vmul.f32 %v4572, 0.5
      %v4653 = vmul.f32 %v4573, 0.5
      %v4654 = vmul.f32 %v4574, 0.5
      %v4655 = vmul.f32 %v4575, 0.5
      %v4656 = vmul.f32 %v4576, 0.5
      %v4657 = vmul.f32 %v4577, 0.5
      %v4658 = vmul.f32 %v4578, 0.5
      %v4659 = vmul.f32 %v4579, 0.5
      %v4660 = vmul.f32 %v4580, 0.5
      %v4661 = vmul.f32 %v4581, 0.5
      %v4662 = vmul.f32 %v4582, 0.5
      %v4663 = vmul.f32 %v4583, 0.5
      %v4664 = vmul.f32 %v4584, 0.5
      %v4665 = vmul.f32 %v4585, 0.5
      %v4666 = vmul.f32 %v4586, 0.5
      %v4667 = vmul.f32 %v4587, 0.5
      %v4668 = vmul.f32 %v4588, 0.5
      %v4669 = vmul.f32 %v4589, 0.5
      %v4670 = vmul.f32 %v4590, 0.5
      %v4671 = vmul.f32 %v4591, 0.5
      %v4672 = vmul.f32 %v4592, 0.5
      %v4673 = vmul.f32 %v4593, 0.5
      %v4674 = vmul.f32 %v4594, 0.5
      %v4675 = vmul.f32 %v4595, 0.5
      %v4676 = vmul.f32 %v4596, 0.5
      %v4677 = vmul.f32 %v4597, 0.5
      %v4678 = vmul.f32 %v4598, 0.5
      %v4679 = vmul.f32 %v4599, 0.5
      %v4680 = vmul.f32 %v4600, 0.5
      %v4681 = vmul.f32 %v4601, 0.5
      %v4682 = vmul.f32 %v4602, 0.5
      %v4683 = vmul.f32 %v4603, 0.5
      %v4684 = vmul.f32 %v4604, 0.5
      %v4685 = vmul.f32 %v4605, 0.5
      %v4686 = vmul.f32 %v4606, 0.5
      %v4687 = vmul.f32 %v4607, 0.5
      %v4688 = vmul.f32 %v4608, 0.5
      %v4689 = vmul.f32 %v4609, 0.5
      %v4690 = vmul.f32 %v4610, 0.5
      %v4691 = vmul.f32 %v4611, 0.5
      %v4692 = vmul.f32 %v4612, 0.5
      %v4693 = vmul.f32 %v4613, 0.5
      %v4694 = vmul.f32 %v4614, 0.5
      %v4695 = vmul.f32 %v4615, 0.5
      %v4696 = vmul.f32 %v4616, 0.5
      %v4697 = vmul.f32 %v4617, 0.5
      %v4698 = vmul.f32 %v4618, 0.5
      %v4699 = vmul.f32 %v4619, 0.5
      %v4700 = vmul.f32 %v4620, 0.5
      %v4701 = vmul.f32 %v4621, 0.5
      %v4702 = vmul.f32 %v4622, 0.5
      %v4703 = vmul.f32 %v4623, 0.5
      %v4704 = vmul.f32 %v4624, 0.5
      %v4705 = vmul.f32 %v4625, 0.5
      %v4706 = vmul.f32 %v4626, 0.5
      %v4707 = vmul.f32 %v4627, 0.5
      %v4708 = vmul.f32 %v4628, 0.5
      %v4709 = vmul.f32 %v4629, 0.5
      %v4710 = vmul.f32 %v4630, 0.5
      %v4711 = vmul.f32 %v4631, 0.5
      %v4712 = vmul.f32 %v4632, 0.5
      %v4713 = vmul.f32 %v4633, 0.5
      %v4714 = vmul.f32 %v4634, 0.5
      %v4715 = vmul.f32 %v4635, 0.5
      %v4716 = vmul.f32 %v4636, 0.5
      %v4717 = vmul.f32 %v4637, 0.5
      %v4718 = vmul.f32 %v4638, 0.5
      %v4719 = vmul.f32 %v4639, 0.5
      %v4720 = vmul.f32 %v4640, 0.5
      %v4721 = vmul.f32 %v4641, 0.5
      %v4722 = vmul.f32 %v4642, 0.5
      %v4723 = vmul.f32 %v4643, 0.5
      %v4724 = vmul.f32 %v4644, 0.5
      %v4725 = vmul.f32 %v4645, 0.5
      %v4726 = vmul.f32 %v4646, 0.5
      %v4727 = vmul.f32 %v4647, 0.5
      %v4728 = vmul.f32 %v4648, 0.5
      %v4729 = vmul.f32 %v3858, %v4649
      %v4730 = vmul.f32 %v3860, %v4650
      %v4731 = vmul.f32 %v3991, %v4651
      %v4732 = vmul.f32 %v3993, %v4652
      %v4733 = vmul.f32 %v3862, %v4653
      %v4734 = vmul.f32 %v3864, %v4654
      %v4735 = vmul.f32 %v3995, %v4655
      %v4736 = vmul.f32 %v3997, %v4656
      %v4737 = vmul.f32 %v3868, %v4657
      %v4738 = vmul.f32 %v3870, %v4658
      %v4739 = vmul.f32 %v4001, %v4659
      %v4740 = vmul.f32 %v4003, %v4660
      %v4741 = vmul.f32 %v3872, %v4661
      %v4742 = vmul.f32 %v3874, %v4662
      %v4743 = vmul.f32 %v4005, %v4663
      %v4744 = vmul.f32 %v4007, %v4664
      %v4745 = vmul.f32 %v3878, %v4665
      %v4746 = vmul.f32 %v3880, %v4666
      %v4747 = vmul.f32 %v4011, %v4667
      %v4748 = vmul.f32 %v4013, %v4668
      %v4749 = vmul.f32 %v3882, %v4669
      %v4750 = vmul.f32 %v3884, %v4670
      %v4751 = vmul.f32 %v4015, %v4671
      %v4752 = vmul.f32 %v4017, %v4672
      %v4753 = vmul.f32 %v3888, %v4673
      %v4754 = vmul.f32 %v3890, %v4674
      %v4755 = vmul.f32 %v4021, %v4675
      %v4756 = vmul.f32 %v4023, %v4676
      %v4757 = vmul.f32 %v3892, %v4677
      %v4758 = vmul.f32 %v3894, %v4678
      %v4759 = vmul.f32 %v4025, %v4679
      %v4760 = vmul.f32 %v4027, %v4680
      %v4761 = vmul.f32 %v3898, %v4681
      %v4762 = vmul.f32 %v3900, %v4682
      %v4763 = vmul.f32 %v4031, %v4683
      %v4764 = vmul.f32 %v4033, %v4684
      %v4765 = vmul.f32 %v3902, %v4685
      %v4766 = vmul.f32 %v3904, %v4686
      %v4767 = vmul.f32 %v4035, %v4687
      %v4768 = vmul.f32 %v4037, %v4688
      %v4769 = vmul.f32 %v3908, %v4689
      %v4770 = vmul.f32 %v3910, %v4690
      %v4771 = vmul.f32 %v4041, %v4691
      %v4772 = vmul.f32 %v4043, %v4692
      %v4773 = vmul.f32 %v3912, %v4693
      %v4774 = vmul.f32 %v3914, %v4694
      %v4775 = vmul.f32 %v4045, %v4695
      %v4776 = vmul.f32 %v4047, %v4696
      %v4777 = vmul.f32 %v3918, %v4697
      %v4778 = vmul.f32 %v3920, %v4698
      %v4779 = vmul.f32 %v4051, %v4699
      %v4780 = vmul.f32 %v4053, %v4700
      %v4781 = vmul.f32 %v3922, %v4701
      %v4782 = vmul.f32 %v3924, %v4702
      %v4783 = vmul.f32 %v4055, %v4703
      %v4784 = vmul.f32 %v4057, %v4704
      %v4785 = vmul.f32 %v3928, %v4705
      %v4786 = vmul.f32 %v3930, %v4706
      %v4787 = vmul.f32 %v4061, %v4707
      %v4788 = vmul.f32 %v4063, %v4708
      %v4789 = vmul.f32 %v3932, %v4709
      %v4790 = vmul.f32 %v3934, %v4710
      %v4791 = vmul.f32 %v4065, %v4711
      %v4792 = vmul.f32 %v4067, %v4712
      %v4793 = vmul.f32 %v3938, %v4713
      %v4794 = vmul.f32 %v3940, %v4714
      %v4795 = vmul.f32 %v4071, %v4715
      %v4796 = vmul.f32 %v4073, %v4716
      %v4797 = vmul.f32 %v3942, %v4717
      %v4798 = vmul.f32 %v3944, %v4718
      %v4799 = vmul.f32 %v4075, %v4719
      %v4800 = vmul.f32 %v4077, %v4720
      %v4801 = vmul.f32 %v3948, %v4721
      %v4802 = vmul.f32 %v3950, %v4722
      %v4803 = vmul.f32 %v4081, %v4723
      %v4804 = vmul.f32 %v4083, %v4724
      %v4805 = vmul.f32 %v3952, %v4725
      %v4806 = vmul.f32 %v3954, %v4726
      %v4807 = vmul.f32 %v4085, %v4727
      %v4808 = vmul.f32 %v4087, %v4728
      %v4809 = vpack.c.bf16 %v4733, %v4729
      %v4810 = vpack.c.bf16 %v4734, %v4730
      %v4811 = vpack.c.bf16 %v4735, %v4731
      %v4812 = vpack.c.bf16 %v4736, %v4732
      %v4813 = vpack.c.bf16 %v4741, %v4737
      %v4814 = vpack.c.bf16 %v4742, %v4738
      %v4815 = vpack.c.bf16 %v4743, %v4739
      %v4816 = vpack.c.bf16 %v4744, %v4740
      %v4817 = vpack.c.bf16 %v4749, %v4745
      %v4818 = vpack.c.bf16 %v4750, %v4746
      %v4819 = vpack.c.bf16 %v4751, %v4747
      %v4820 = vpack.c.bf16 %v4752, %v4748
      %v4821 = vpack.c.bf16 %v4757, %v4753
      %v4822 = vpack.c.bf16 %v4758, %v4754
      %v4823 = vpack.c.bf16 %v4759, %v4755
      %v4824 = vpack.c.bf16 %v4760, %v4756
      %v4825 = vpack.c.bf16 %v4765, %v4761
      %v4826 = vpack.c.bf16 %v4766, %v4762
      %v4827 = vpack.c.bf16 %v4767, %v4763
      %v4828 = vpack.c.bf16 %v4768, %v4764
      %v4829 = vpack.c.bf16 %v4773, %v4769
      %v4830 = vpack.c.bf16 %v4774, %v4770
      %v4831 = vpack.c.bf16 %v4775, %v4771
      %v4832 = vpack.c.bf16 %v4776, %v4772
      %v4833 = vpack.c.bf16 %v4781, %v4777
      %v4834 = vpack.c.bf16 %v4782, %v4778
      %v4835 = vpack.c.bf16 %v4783, %v4779
      %v4836 = vpack.c.bf16 %v4784, %v4780
      %v4837 = vpack.c.bf16 %v4789, %v4785
      %v4838 = vpack.c.bf16 %v4790, %v4786
      %v4839 = vpack.c.bf16 %v4791, %v4787
      %v4840 = vpack.c.bf16 %v4792, %v4788
      %v4841 = vpack.c.bf16 %v4797, %v4793
      %v4842 = vpack.c.bf16 %v4798, %v4794
      %v4843 = vpack.c.bf16 %v4799, %v4795
      %v4844 = vpack.c.bf16 %v4800, %v4796
      %v4845 = vpack.c.bf16 %v4805, %v4801
      %v4846 = vpack.c.bf16 %v4806, %v4802
      %v4847 = vpack.c.bf16 %v4807, %v4803
      %v4848 = vpack.c.bf16 %v4808, %v4804
      %v4849 = vld [vmem:[%s14] sm:$0xf]
      %v4850 = vld [vmem:[%s14 + $0x4] sm:$0xf]
      %v4851 = vld [vmem:[%s14 + $0x8] sm:$0xf]
      %v4852 = vld [vmem:[%s14 + $0xc] sm:$0xf]
      %v4853 = vld [vmem:[%s14 + $0x10] sm:$0xf]
      %v4854 = vld [vmem:[%s14 + $0x14] sm:$0xf]
      %v4855 = vld [vmem:[%s14 + $0x18] sm:$0xf]
      %v4856 = vld [vmem:[%s14 + $0x1c] sm:$0xf]
      %v4857 = vld [vmem:[%s14 + $0x20] sm:$0xf]
      %v4858 = vld [vmem:[%s14 + $0x24] sm:$0xf]
      %v4859 = vld [vmem:[%s14 + $0x28] sm:$0xf]
      %v4860 = vld [vmem:[%s14 + $0x2c] sm:$0xf]
      %v4861 = vld [vmem:[%s14 + $0x30] sm:$0xf]
      %v4862 = vld [vmem:[%s14 + $0x34] sm:$0xf]
      %v4863 = vld [vmem:[%s14 + $0x38] sm:$0xf]
      %v4864 = vld [vmem:[%s14 + $0x3c] sm:$0xf]
      %v4865 = vld [vmem:[%s14 + $0x40] sm:$0xf]
      %v4866 = vld [vmem:[%s14 + $0x44] sm:$0xf]
      %v4867 = vld [vmem:[%s14 + $0x48] sm:$0xf]
      %v4868 = vld [vmem:[%s14 + $0x4c] sm:$0xf]
      %v4869 = vld [vmem:[%s14 + $0x50] sm:$0xf]
      %v4870 = vld [vmem:[%s14 + $0x54] sm:$0xf]
      %v4871 = vld [vmem:[%s14 + $0x58] sm:$0xf]
      %v4872 = vld [vmem:[%s14 + $0x5c] sm:$0xf]
      %v4873 = vld [vmem:[%s14 + $0x60] sm:$0xf]
      %v4874 = vld [vmem:[%s14 + $0x64] sm:$0xf]
      %v4875 = vld [vmem:[%s14 + $0x68] sm:$0xf]
      %v4876 = vld [vmem:[%s14 + $0x6c] sm:$0xf]
      %v4877 = vld [vmem:[%s14 + $0x70] sm:$0xf]
      %v4878 = vld [vmem:[%s14 + $0x74] sm:$0xf]
      %v4879 = vld [vmem:[%s14 + $0x78] sm:$0xf]
      %v4880 = vld [vmem:[%s14 + $0x7c] sm:$0xf]
      %v4881 = vld [vmem:[%s14 + $0x80] sm:$0xf]
      %v4882 = vld [vmem:[%s14 + $0x84] sm:$0xf]
      %v4883 = vld [vmem:[%s14 + $0x88] sm:$0xf]
      %v4884 = vld [vmem:[%s14 + $0x8c] sm:$0xf]
      %v4885 = vld [vmem:[%s14 + $0x90] sm:$0xf]
      %v4886 = vld [vmem:[%s14 + $0x94] sm:$0xf]
      %v4887 = vld [vmem:[%s14 + $0x98] sm:$0xf]
      %v4888 = vld [vmem:[%s14 + $0x9c] sm:$0xf]
      %v4889 = vld [vmem:[%s14 + $0xa0] sm:$0xf]
      %v4890 = vld [vmem:[%s14 + $0xa4] sm:$0xf]
      %v4891 = vld [vmem:[%s14 + $0xa8] sm:$0xf]
      %v4892 = vld [vmem:[%s14 + $0xac] sm:$0xf]
      %v4893 = vld [vmem:[%s14 + $0xb0] sm:$0xf]
      %v4894 = vld [vmem:[%s14 + $0xb4] sm:$0xf]
      %v4895 = vld [vmem:[%s14 + $0xb8] sm:$0xf]
      %v4896 = vld [vmem:[%s14 + $0xbc] sm:$0xf]
      %v4897 = vld [vmem:[%s14 + $0xc0] sm:$0xf]
      %v4898 = vld [vmem:[%s14 + $0xc4] sm:$0xf]
      %v4899 = vld [vmem:[%s14 + $0xc8] sm:$0xf]
      %v4900 = vld [vmem:[%s14 + $0xcc] sm:$0xf]
      %v4901 = vld [vmem:[%s14 + $0xd0] sm:$0xf]
      %v4902 = vld [vmem:[%s14 + $0xd4] sm:$0xf]
      %v4903 = vld [vmem:[%s14 + $0xd8] sm:$0xf]
      %v4904 = vld [vmem:[%s14 + $0xdc] sm:$0xf]
      %v4905 = vld [vmem:[%s14 + $0xe0] sm:$0xf]
      %v4906 = vld [vmem:[%s14 + $0xe4] sm:$0xf]
      %v4907 = vld [vmem:[%s14 + $0xe8] sm:$0xf]
      %v4908 = vld [vmem:[%s14 + $0xec] sm:$0xf]
      %v4909 = vld [vmem:[%s14 + $0xf0] sm:$0xf]
      %v4910 = vld [vmem:[%s14 + $0xf4] sm:$0xf]
      %v4911 = vld [vmem:[%s14 + $0xf8] sm:$0xf]
      %v4912 = vld [vmem:[%s14 + $0xfc] sm:$0xf]
      %v4913 = vld [vmem:[%s15] sm:$0x1]
      %v4914 = vlaneseq
      %v4915 = vshrl.u32 %v4914, 7
      %v4916 = vsub.s32 0, %v4915
      %v4917 = vrot.slane %v4913, %v4916
      %v4982 = vunpack.c.l.b16 %v4849
      %v4983 = vunpack.c.l.b16 %v4850
      %v4984 = vunpack.c.l.b16 %v4851
      %v4985 = vunpack.c.l.b16 %v4852
      %v4986 = vunpack.c.l.b16 %v4853
      %v4987 = vunpack.c.l.b16 %v4854
      %v4988 = vunpack.c.l.b16 %v4855
      %v4989 = vunpack.c.l.b16 %v4856
      %v4990 = vunpack.c.l.b16 %v4857
      %v4991 = vunpack.c.l.b16 %v4858
      %v4992 = vunpack.c.l.b16 %v4859
      %v4993 = vunpack.c.l.b16 %v4860
      %v4994 = vunpack.c.l.b16 %v4861
      %v4995 = vunpack.c.l.b16 %v4862
      %v4996 = vunpack.c.l.b16 %v4863
      %v4997 = vunpack.c.l.b16 %v4864
      %v4998 = vunpack.c.l.b16 %v4865
      %v4999 = vunpack.c.l.b16 %v4866
      %v5000 = vunpack.c.l.b16 %v4867
      %v5001 = vunpack.c.l.b16 %v4868
      %v5002 = vunpack.c.l.b16 %v4869
      %v5003 = vunpack.c.l.b16 %v4870
      %v5004 = vunpack.c.l.b16 %v4871
      %v5005 = vunpack.c.l.b16 %v4872
      %v5006 = vunpack.c.l.b16 %v4873
      %v5007 = vunpack.c.l.b16 %v4874
      %v5008 = vunpack.c.l.b16 %v4875
      %v5009 = vunpack.c.l.b16 %v4876
      %v5010 = vunpack.c.l.b16 %v4877
      %v5011 = vunpack.c.l.b16 %v4878
      %v5012 = vunpack.c.l.b16 %v4879
      %v5013 = vunpack.c.l.b16 %v4880
      %v5014 = vunpack.c.l.b16 %v4881
      %v5015 = vunpack.c.l.b16 %v4882
      %v5016 = vunpack.c.l.b16 %v4883
      %v5017 = vunpack.c.l.b16 %v4884
      %v5018 = vunpack.c.l.b16 %v4885
      %v5019 = vunpack.c.l.b16 %v4886
      %v5020 = vunpack.c.l.b16 %v4887
      %v5021 = vunpack.c.l.b16 %v4888
      %v5022 = vunpack.c.l.b16 %v4889
      %v5023 = vunpack.c.l.b16 %v4890
      %v5024 = vunpack.c.l.b16 %v4891
      %v5025 = vunpack.c.l.b16 %v4892
      %v5026 = vunpack.c.l.b16 %v4893
      %v5027 = vunpack.c.l.b16 %v4894
      %v5028 = vunpack.c.l.b16 %v4895
      %v5029 = vunpack.c.l.b16 %v4896
      %v5030 = vunpack.c.l.b16 %v4897
      %v5031 = vunpack.c.l.b16 %v4898
      %v5032 = vunpack.c.l.b16 %v4899
      %v5033 = vunpack.c.l.b16 %v4900
      %v5034 = vunpack.c.l.b16 %v4901
      %v5035 = vunpack.c.l.b16 %v4902
      %v5036 = vunpack.c.l.b16 %v4903
      %v5037 = vunpack.c.l.b16 %v4904
      %v5038 = vunpack.c.l.b16 %v4905
      %v5039 = vunpack.c.l.b16 %v4906
      %v5040 = vunpack.c.l.b16 %v4907
      %v5041 = vunpack.c.l.b16 %v4908
      %v5042 = vunpack.c.l.b16 %v4909
      %v5043 = vunpack.c.l.b16 %v4910
      %v5044 = vunpack.c.l.b16 %v4911
      %v5045 = vunpack.c.l.b16 %v4912
      %v5046 = vpack.c.b16 %v4983, %v4982
      %v5047 = vpack.c.b16 %v4985, %v4984
      %v5048 = vpack.c.b16 %v4987, %v4986
      %v5049 = vpack.c.b16 %v4989, %v4988
      %v5050 = vpack.c.b16 %v4991, %v4990
      %v5051 = vpack.c.b16 %v4993, %v4992
      %v5052 = vpack.c.b16 %v4995, %v4994
      %v5053 = vpack.c.b16 %v4997, %v4996
      %v5054 = vpack.c.b16 %v4999, %v4998
      %v5055 = vpack.c.b16 %v5001, %v5000
      %v5056 = vpack.c.b16 %v5003, %v5002
      %v5057 = vpack.c.b16 %v5005, %v5004
      %v5058 = vpack.c.b16 %v5007, %v5006
      %v5059 = vpack.c.b16 %v5009, %v5008
      %v5060 = vpack.c.b16 %v5011, %v5010
      %v5061 = vpack.c.b16 %v5013, %v5012
      %v5062 = vpack.c.b16 %v5015, %v5014
      %v5063 = vpack.c.b16 %v5017, %v5016
      %v5064 = vpack.c.b16 %v5019, %v5018
      %v5065 = vpack.c.b16 %v5021, %v5020
      %v5066 = vpack.c.b16 %v5023, %v5022
      %v5067 = vpack.c.b16 %v5025, %v5024
      %v5068 = vpack.c.b16 %v5027, %v5026
      %v5069 = vpack.c.b16 %v5029, %v5028
      %v5070 = vpack.c.b16 %v5031, %v5030
      %v5071 = vpack.c.b16 %v5033, %v5032
      %v5072 = vpack.c.b16 %v5035, %v5034
      %v5073 = vpack.c.b16 %v5037, %v5036
      %v5074 = vpack.c.b16 %v5039, %v5038
      %v5075 = vpack.c.b16 %v5041, %v5040
      %v5076 = vpack.c.b16 %v5043, %v5042
      %v5077 = vpack.c.b16 %v5045, %v5044
      %5110 = vmatprep.subr.bf16.mxu0 0
      %5111 = vmatpush1.bf16.msra.mxu0 %v5046
      %5112 = vmatprep.subr.bf16.mxu0 0
      %5113 = vmatpush1.bf16.msra.mxu0 %v5047
      %5114 = vmatprep.subr.bf16.mxu0 0
      %5115 = vmatpush1.bf16.msra.mxu0 %v5048
      %5116 = vmatprep.subr.bf16.mxu0 0
      %5117 = vmatpush1.bf16.msra.mxu0 %v5049
      %5118 = vmatprep.subr.bf16.mxu0 0
      %5119 = vmatpush1.bf16.msra.mxu0 %v5050
      %5120 = vmatprep.subr.bf16.mxu0 0
      %5121 = vmatpush1.bf16.msra.mxu0 %v5051
      %5122 = vmatprep.subr.bf16.mxu0 0
      %5123 = vmatpush1.bf16.msra.mxu0 %v5052
      %5124 = vmatprep.subr.bf16.mxu0 0
      %5125 = vmatpush1.bf16.msra.mxu0 %v5053
      %5126 = vmatprep.subr.bf16.mxu0 0
      %5127 = vmatpush1.bf16.msra.mxu0 %v5054
      %5128 = vmatprep.subr.bf16.mxu0 0
      %5129 = vmatpush1.bf16.msra.mxu0 %v5055
      %5130 = vmatprep.subr.bf16.mxu0 0
      %5131 = vmatpush1.bf16.msra.mxu0 %v5056
      %5132 = vmatprep.subr.bf16.mxu0 0
      %5133 = vmatpush1.bf16.msra.mxu0 %v5057
      %5134 = vmatprep.subr.bf16.mxu0 0
      %5135 = vmatpush1.bf16.msra.mxu0 %v5058
      %5136 = vmatprep.subr.bf16.mxu0 0
      %5137 = vmatpush1.bf16.msra.mxu0 %v5059
      %5138 = vmatprep.subr.bf16.mxu0 0
      %5139 = vmatpush1.bf16.msra.mxu0 %v5060
      %5140 = vmatprep.subr.bf16.mxu0 0
      %5141 = vmatpush1.bf16.msra.mxu0 %v5061
      %5142 = vmatprep.mubr.bf16.mxu0 %v4810
      %5143 = vmatmul.mubr.bf16.gmra.mrb[0].mxu0 %v4809
      %v5144 = vpop.f32.mrb[0].mxu0
      %v5145 = vadd.f32 %v4917, %v5144
      %v5146 = vpop.f32.mrb[0].mxu0
      %v5147 = vpop.f32.mrb[0].mxu0
      %v5148 = vadd.f32 %v4917, %v5147
      %v5149 = vpop.f32.mrb[0].mxu0
      %5150 = vmatprep.mubr.bf16.mxu0 %v4814
      %5151 = vmatmul.mubr.bf16.gmra.mrb[0].mxu0 %v4813
      %v5152 = vpop.f32.mrb[0].mxu0
      %v5153 = vadd.f32 %v4917, %v5152
      %v5154 = vpop.f32.mrb[0].mxu0
      %v5155 = vpop.f32.mrb[0].mxu0
      %v5156 = vadd.f32 %v4917, %v5155
      %v5157 = vpop.f32.mrb[0].mxu0
      %5158 = vmatprep.mubr.bf16.mxu0 %v4818
      %5159 = vmatmul.mubr.bf16.gmra.mrb[0].mxu0 %v4817
      %v5160 = vpop.f32.mrb[0].mxu0
      %v5161 = vadd.f32 %v4917, %v5160
      %v5162 = vpop.f32.mrb[0].mxu0
      %v5163 = vpop.f32.mrb[0].mxu0
      %v5164 = vadd.f32 %v4917, %v5163
      %v5165 = vpop.f32.mrb[0].mxu0
      %5166 = vmatprep.mubr.bf16.mxu0 %v4822
      %5167 = vmatmul.mubr.bf16.gmra.mrb[0].mxu0 %v4821
      %v5168 = vpop.f32.mrb[0].mxu0
      %v5169 = vadd.f32 %v4917, %v5168
      %v5170 = vpop.f32.mrb[0].mxu0
      %v5171 = vpop.f32.mrb[0].mxu0
      %v5172 = vadd.f32 %v4917, %v5171
      %v5173 = vpop.f32.mrb[0].mxu0
      %5174 = vmatprep.mubr.bf16.mxu0 %v4826
      %5175 = vmatmul.mubr.bf16.gmra.mrb[0].mxu0 %v4825
      %v5176 = vpop.f32.mrb[0].mxu0
      %v5177 = vadd.f32 %v4917, %v5176
      %v5178 = vpop.f32.mrb[0].mxu0
      %v5179 = vpop.f32.mrb[0].mxu0
      %v5180 = vadd.f32 %v4917, %v5179
      %v5181 = vpop.f32.mrb[0].mxu0
      %5182 = vmatprep.mubr.bf16.mxu0 %v4830
      %5183 = vmatmul.mubr.bf16.gmra.mrb[0].mxu0 %v4829
      %v5184 = vpop.f32.mrb[0].mxu0
      %v5185 = vadd.f32 %v4917, %v5184
      %v5186 = vpop.f32.mrb[0].mxu0
      %v5187 = vpop.f32.mrb[0].mxu0
      %v5188 = vadd.f32 %v4917, %v5187
      %v5189 = vpop.f32.mrb[0].mxu0
      %5190 = vmatprep.mubr.bf16.mxu0 %v4834
      %5191 = vmatmul.mubr.bf16.gmra.mrb[0].mxu0 %v4833
      %v5192 = vpop.f32.mrb[0].mxu0
      %v5193 = vadd.f32 %v4917, %v5192
      %v5194 = vpop.f32.mrb[0].mxu0
      %v5195 = vpop.f32.mrb[0].mxu0
      %v5196 = vadd.f32 %v4917, %v5195
      %v5197 = vpop.f32.mrb[0].mxu0
      %5198 = vmatprep.mubr.bf16.mxu0 %v4838
      %5199 = vmatmul.mubr.bf16.gmra.mrb[0].mxu0 %v4837
      %v5200 = vpop.f32.mrb[0].mxu0
      %v5201 = vadd.f32 %v4917, %v5200
      %v5202 = vpop.f32.mrb[0].mxu0
      %v5203 = vpop.f32.mrb[0].mxu0
      %v5204 = vadd.f32 %v4917, %v5203
      %v5205 = vpop.f32.mrb[0].mxu0
      %5206 = vmatprep.mubr.bf16.mxu0 %v4842
      %5207 = vmatmul.mubr.bf16.gmra.mrb[0].mxu0 %v4841
      %v5208 = vpop.f32.mrb[0].mxu0
      %v5209 = vadd.f32 %v4917, %v5208
      %v5210 = vpop.f32.mrb[0].mxu0
      %v5211 = vpop.f32.mrb[0].mxu0
      %v5212 = vadd.f32 %v4917, %v5211
      %v5213 = vpop.f32.mrb[0].mxu0
      %5214 = vmatprep.mubr.bf16.mxu0 %v4846
      %5215 = vmatmul.mubr.bf16.gmra.mrb[0].mxu0 %v4845
      %v5216 = vpop.f32.mrb[0].mxu0
      %v5217 = vadd.f32 %v4917, %v5216
      %v5218 = vpop.f32.mrb[0].mxu0
      %v5219 = vpop.f32.mrb[0].mxu0
      %v5220 = vadd.f32 %v4917, %v5219
      %v5221 = vpop.f32.mrb[0].mxu0
      %5222 = vdwg.mxu0
      %5223 = vmatprep.subr.bf16.mxu0 0
      %5224 = vmatpush1.bf16.msra.mxu0 %v5062
      %5225 = vmatprep.subr.bf16.mxu0 0
      %5226 = vmatpush1.bf16.msra.mxu0 %v5063
      %5227 = vmatprep.subr.bf16.mxu0 0
      %5228 = vmatpush1.bf16.msra.mxu0 %v5064
      %5229 = vmatprep.subr.bf16.mxu0 0
      %5230 = vmatpush1.bf16.msra.mxu0 %v5065
      %5231 = vmatprep.subr.bf16.mxu0 0
      %5232 = vmatpush1.bf16.msra.mxu0 %v5066
      %5233 = vmatprep.subr.bf16.mxu0 0
      %5234 = vmatpush1.bf16.msra.mxu0 %v5067
      %5235 = vmatprep.subr.bf16.mxu0 0
      %5236 = vmatpush1.bf16.msra.mxu0 %v5068
      %5237 = vmatprep.subr.bf16.mxu0 0
      %5238 = vmatpush1.bf16.msra.mxu0 %v5069
      %5239 = vmatprep.subr.bf16.mxu0 0
      %5240 = vmatpush1.bf16.msra.mxu0 %v5070
      %5241 = vmatprep.subr.bf16.mxu0 0
      %5242 = vmatpush1.bf16.msra.mxu0 %v5071
      %5243 = vmatprep.subr.bf16.mxu0 0
      %5244 = vmatpush1.bf16.msra.mxu0 %v5072
      %5245 = vmatprep.subr.bf16.mxu0 0
      %5246 = vmatpush1.bf16.msra.mxu0 %v5073
      %5247 = vmatprep.subr.bf16.mxu0 0
      %5248 = vmatpush1.bf16.msra.mxu0 %v5074
      %5249 = vmatprep.subr.bf16.mxu0 0
      %5250 = vmatpush1.bf16.msra.mxu0 %v5075
      %5251 = vmatprep.subr.bf16.mxu0 0
      %5252 = vmatpush1.bf16.msra.mxu0 %v5076
      %5253 = vmatprep.subr.bf16.mxu0 0
      %5254 = vmatpush1.bf16.msra.mxu0 %v5077
      %5255 = vmatprep.mubr.bf16.mxu0 %v4812
      %5256 = vmatmul.mubr.bf16.gmra.mrb[0].mxu0 %v4811
      %v5257 = vpop.f32.mrb[0].mxu0
      %v5258 = vadd.f32 %v5145, %v5257
      %v5259 = vpop.f32.mrb[0].mxu0
      %v5260 = vpop.f32.mrb[0].mxu0
      %v5261 = vadd.f32 %v5148, %v5260
      %v5262 = vpop.f32.mrb[0].mxu0
      %5263 = vmatprep.mubr.bf16.mxu0 %v4816
      %5264 = vmatmul.mubr.bf16.gmra.mrb[0].mxu0 %v4815
      %v5265 = vpop.f32.mrb[0].mxu0
      %v5266 = vadd.f32 %v5153, %v5265
      %v5267 = vpop.f32.mrb[0].mxu0
      %v5268 = vpop.f32.mrb[0].mxu0
      %v5269 = vadd.f32 %v5156, %v5268
      %v5270 = vpop.f32.mrb[0].mxu0
      %5271 = vmatprep.mubr.bf16.mxu0 %v4820
      %5272 = vmatmul.mubr.bf16.gmra.mrb[0].mxu0 %v4819
      %v5273 = vpop.f32.mrb[0].mxu0
      %v5274 = vadd.f32 %v5161, %v5273
      %v5275 = vpop.f32.mrb[0].mxu0
      %v5276 = vpop.f32.mrb[0].mxu0
      %v5277 = vadd.f32 %v5164, %v5276
      %v5278 = vpop.f32.mrb[0].mxu0
      %5279 = vmatprep.mubr.bf16.mxu0 %v4824
      %5280 = vmatmul.mubr.bf16.gmra.mrb[0].mxu0 %v4823
      %v5281 = vpop.f32.mrb[0].mxu0
      %v5282 = vadd.f32 %v5169, %v5281
      %v5283 = vpop.f32.mrb[0].mxu0
      %v5284 = vpop.f32.mrb[0].mxu0
      %v5285 = vadd.f32 %v5172, %v5284
      %v5286 = vpop.f32.mrb[0].mxu0
      %5287 = vmatprep.mubr.bf16.mxu0 %v4828
      %5288 = vmatmul.mubr.bf16.gmra.mrb[0].mxu0 %v4827
      %v5289 = vpop.f32.mrb[0].mxu0
      %v5290 = vadd.f32 %v5177, %v5289
      %v5291 = vpop.f32.mrb[0].mxu0
      %v5292 = vpop.f32.mrb[0].mxu0
      %v5293 = vadd.f32 %v5180, %v5292
      %v5294 = vpop.f32.mrb[0].mxu0
      %5295 = vmatprep.mubr.bf16.mxu0 %v4832
      %5296 = vmatmul.mubr.bf16.gmra.mrb[0].mxu0 %v4831
      %v5297 = vpop.f32.mrb[0].mxu0
      %v5298 = vadd.f32 %v5185, %v5297
      %v5299 = vpop.f32.mrb[0].mxu0
      %v5300 = vpop.f32.mrb[0].mxu0
      %v5301 = vadd.f32 %v5188, %v5300
      %v5302 = vpop.f32.mrb[0].mxu0
      %5303 = vmatprep.mubr.bf16.mxu0 %v4836
      %5304 = vmatmul.mubr.bf16.gmra.mrb[0].mxu0 %v4835
      %v5305 = vpop.f32.mrb[0].mxu0
      %v5306 = vadd.f32 %v5193, %v5305
      %v5307 = vpop.f32.mrb[0].mxu0
      %v5308 = vpop.f32.mrb[0].mxu0
      %v5309 = vadd.f32 %v5196, %v5308
      %v5310 = vpop.f32.mrb[0].mxu0
      %5311 = vmatprep.mubr.bf16.mxu0 %v4840
      %5312 = vmatmul.mubr.bf16.gmra.mrb[0].mxu0 %v4839
      %v5313 = vpop.f32.mrb[0].mxu0
      %v5314 = vadd.f32 %v5201, %v5313
      %v5315 = vpop.f32.mrb[0].mxu0
      %v5316 = vpop.f32.mrb[0].mxu0
      %v5317 = vadd.f32 %v5204, %v5316
      %v5318 = vpop.f32.mrb[0].mxu0
      %5319 = vmatprep.mubr.bf16.mxu0 %v4844
      %5320 = vmatmul.mubr.bf16.gmra.mrb[0].mxu0 %v4843
      %v5321 = vpop.f32.mrb[0].mxu0
      %v5322 = vadd.f32 %v5209, %v5321
      %v5323 = vpop.f32.mrb[0].mxu0
      %v5324 = vpop.f32.mrb[0].mxu0
      %v5325 = vadd.f32 %v5212, %v5324
      %v5326 = vpop.f32.mrb[0].mxu0
      %5327 = vmatprep.mubr.bf16.mxu0 %v4848
      %5328 = vmatmul.mubr.bf16.gmra.mrb[0].mxu0 %v4847
      %v5329 = vpop.f32.mrb[0].mxu0
      %v5330 = vadd.f32 %v5217, %v5329
      %v5331 = vpop.f32.mrb[0].mxu0
      %v5332 = vpop.f32.mrb[0].mxu0
      %v5333 = vadd.f32 %v5220, %v5332
      %v5334 = vpop.f32.mrb[0].mxu0
      %5335 = vdwg.mxu0
      %v5336 = vadd.f32 %v3319, %v5258
      %v5337 = vadd.f32 %v3320, %v5261
      %v5338 = vadd.f32 %v3321, %v5266
      %v5339 = vadd.f32 %v3322, %v5269
      %v5340 = vadd.f32 %v3323, %v5274
      %v5341 = vadd.f32 %v3324, %v5277
      %v5342 = vadd.f32 %v3325, %v5282
      %v5343 = vadd.f32 %v3326, %v5285
      %v5344 = vadd.f32 %v3327, %v5290
      %v5345 = vadd.f32 %v3328, %v5293
      %v5346 = vadd.f32 %v3329, %v5298
      %v5347 = vadd.f32 %v3330, %v5301
      %v5348 = vadd.f32 %v3331, %v5306
      %v5349 = vadd.f32 %v3332, %v5309
      %v5350 = vadd.f32 %v3333, %v5314
      %v5351 = vadd.f32 %v3334, %v5317
      %v5352 = vadd.f32 %v3335, %v5322
      %v5353 = vadd.f32 %v3336, %v5325
      %v5354 = vadd.f32 %v3337, %v5330
      %v5355 = vadd.f32 %v3338, %v5333
      %v5356 = vld [vmem:[%s6 + $0x1] sm:$0x1]
      %v5357 = vld [vmem:[%s7 + $0x1] sm:$0x1]
      %5358 = vadd.xlane.f32.xlu0 %v5336
      %v5359 = vpop.xlane.xlu0 %5358
      %5360 = vadd.xlane.f32.xlu0 %v5337
      %v5361 = vpop.xlane.xlu0 %5360
      %5362 = vadd.xlane.f32.xlu0 %v5338
      %v5363 = vpop.xlane.xlu0 %5362
      %5364 = vadd.xlane.f32.xlu0 %v5339
      %v5365 = vpop.xlane.xlu0 %5364
      %5366 = vadd.xlane.f32.xlu0 %v5340
      %v5367 = vpop.xlane.xlu0 %5366
      %5368 = vadd.xlane.f32.xlu0 %v5341
      %v5369 = vpop.xlane.xlu0 %5368
      %5370 = vadd.xlane.f32.xlu0 %v5342
      %v5371 = vpop.xlane.xlu0 %5370
      %5372 = vadd.xlane.f32.xlu0 %v5343
      %v5373 = vpop.xlane.xlu0 %5372
      %5374 = vadd.xlane.f32.xlu0 %v5344
      %v5375 = vpop.xlane.xlu0 %5374
      %5376 = vadd.xlane.f32.xlu0 %v5345
      %v5377 = vpop.xlane.xlu0 %5376
      %5378 = vadd.xlane.f32.xlu0 %v5346
      %v5379 = vpop.xlane.xlu0 %5378
      %5380 = vadd.xlane.f32.xlu0 %v5347
      %v5381 = vpop.xlane.xlu0 %5380
      %5382 = vadd.xlane.f32.xlu0 %v5348
      %v5383 = vpop.xlane.xlu0 %5382
      %5384 = vadd.xlane.f32.xlu0 %v5349
      %v5385 = vpop.xlane.xlu0 %5384
      %5386 = vadd.xlane.f32.xlu0 %v5350
      %v5387 = vpop.xlane.xlu0 %5386
      %5388 = vadd.xlane.f32.xlu0 %v5351
      %v5389 = vpop.xlane.xlu0 %5388
      %5390 = vadd.xlane.f32.xlu0 %v5352
      %v5391 = vpop.xlane.xlu0 %5390
      %5392 = vadd.xlane.f32.xlu0 %v5353
      %v5393 = vpop.xlane.xlu0 %5392
      %5394 = vadd.xlane.f32.xlu0 %v5354
      %v5395 = vpop.xlane.xlu0 %5394
      %5396 = vadd.xlane.f32.xlu0 %v5355
      %v5397 = vpop.xlane.xlu0 %5396
      %v5398 = vmul.f32 %v5359, %v2060
      %v5399 = vmul.f32 %v5361, %v2060
      %v5400 = vmul.f32 %v5363, %v2060
      %v5401 = vmul.f32 %v5365, %v2060
      %v5402 = vmul.f32 %v5367, %v2060
      %v5403 = vmul.f32 %v5369, %v2060
      %v5404 = vmul.f32 %v5371, %v2060
      %v5405 = vmul.f32 %v5373, %v2060
      %v5406 = vmul.f32 %v5375, %v2060
      %v5407 = vmul.f32 %v5377, %v2060
      %v5408 = vmul.f32 %v5379, %v2060
      %v5409 = vmul.f32 %v5381, %v2060
      %v5410 = vmul.f32 %v5383, %v2060
      %v5411 = vmul.f32 %v5385, %v2060
      %v5412 = vmul.f32 %v5387, %v2060
      %v5413 = vmul.f32 %v5389, %v2060
      %v5414 = vmul.f32 %v5391, %v2060
      %v5415 = vmul.f32 %v5393, %v2060
      %v5416 = vmul.f32 %v5395, %v2060
      %v5417 = vmul.f32 %v5397, %v2060
      %v5418 = vsub.f32 %v5336, %v5398
      %v5419 = vsub.f32 %v5337, %v5399
      %v5420 = vsub.f32 %v5338, %v5400
      %v5421 = vsub.f32 %v5339, %v5401
      %v5422 = vsub.f32 %v5340, %v5402
      %v5423 = vsub.f32 %v5341, %v5403
      %v5424 = vsub.f32 %v5342, %v5404
      %v5425 = vsub.f32 %v5343, %v5405
      %v5426 = vsub.f32 %v5344, %v5406
      %v5427 = vsub.f32 %v5345, %v5407
      %v5428 = vsub.f32 %v5346, %v5408
      %v5429 = vsub.f32 %v5347, %v5409
      %v5430 = vsub.f32 %v5348, %v5410
      %v5431 = vsub.f32 %v5349, %v5411
      %v5432 = vsub.f32 %v5350, %v5412
      %v5433 = vsub.f32 %v5351, %v5413
      %v5434 = vsub.f32 %v5352, %v5414
      %v5435 = vsub.f32 %v5353, %v5415
      %v5436 = vsub.f32 %v5354, %v5416
      %v5437 = vsub.f32 %v5355, %v5417
      %v5438 = vmul.f32 %v5418, %v5418
      %v5439 = vmul.f32 %v5419, %v5419
      %v5440 = vmul.f32 %v5420, %v5420
      %v5441 = vmul.f32 %v5421, %v5421
      %v5442 = vmul.f32 %v5422, %v5422
      %v5443 = vmul.f32 %v5423, %v5423
      %v5444 = vmul.f32 %v5424, %v5424
      %v5445 = vmul.f32 %v5425, %v5425
      %v5446 = vmul.f32 %v5426, %v5426
      %v5447 = vmul.f32 %v5427, %v5427
      %v5448 = vmul.f32 %v5428, %v5428
      %v5449 = vmul.f32 %v5429, %v5429
      %v5450 = vmul.f32 %v5430, %v5430
      %v5451 = vmul.f32 %v5431, %v5431
      %v5452 = vmul.f32 %v5432, %v5432
      %v5453 = vmul.f32 %v5433, %v5433
      %v5454 = vmul.f32 %v5434, %v5434
      %v5455 = vmul.f32 %v5435, %v5435
      %v5456 = vmul.f32 %v5436, %v5436
      %v5457 = vmul.f32 %v5437, %v5437
      %5458 = vadd.xlane.f32.xlu0 %v5438
      %v5459 = vpop.xlane.xlu0 %5458
      %5460 = vadd.xlane.f32.xlu0 %v5439
      %v5461 = vpop.xlane.xlu0 %5460
      %5462 = vadd.xlane.f32.xlu0 %v5440
      %v5463 = vpop.xlane.xlu0 %5462
      %5464 = vadd.xlane.f32.xlu0 %v5441
      %v5465 = vpop.xlane.xlu0 %5464
      %5466 = vadd.xlane.f32.xlu0 %v5442
      %v5467 = vpop.xlane.xlu0 %5466
      %5468 = vadd.xlane.f32.xlu0 %v5443
      %v5469 = vpop.xlane.xlu0 %5468
      %5470 = vadd.xlane.f32.xlu0 %v5444
      %v5471 = vpop.xlane.xlu0 %5470
      %5472 = vadd.xlane.f32.xlu0 %v5445
      %v5473 = vpop.xlane.xlu0 %5472
      %5474 = vadd.xlane.f32.xlu0 %v5446
      %v5475 = vpop.xlane.xlu0 %5474
      %5476 = vadd.xlane.f32.xlu0 %v5447
      %v5477 = vpop.xlane.xlu0 %5476
      %5478 = vadd.xlane.f32.xlu0 %v5448
      %v5479 = vpop.xlane.xlu0 %5478
      %5480 = vadd.xlane.f32.xlu0 %v5449
      %v5481 = vpop.xlane.xlu0 %5480
      %5482 = vadd.xlane.f32.xlu0 %v5450
      %v5483 = vpop.xlane.xlu0 %5482
      %5484 = vadd.xlane.f32.xlu0 %v5451
      %v5485 = vpop.xlane.xlu0 %5484
      %5486 = vadd.xlane.f32.xlu0 %v5452
      %v5487 = vpop.xlane.xlu0 %5486
      %5488 = vadd.xlane.f32.xlu0 %v5453
      %v5489 = vpop.xlane.xlu0 %5488
      %5490 = vadd.xlane.f32.xlu0 %v5454
      %v5491 = vpop.xlane.xlu0 %5490
      %5492 = vadd.xlane.f32.xlu0 %v5455
      %v5493 = vpop.xlane.xlu0 %5492
      %5494 = vadd.xlane.f32.xlu0 %v5456
      %v5495 = vpop.xlane.xlu0 %5494
      %5496 = vadd.xlane.f32.xlu0 %v5457
      %v5497 = vpop.xlane.xlu0 %5496
      %v5498 = vmul.f32 %v5459, %v2060
      %v5499 = vmul.f32 %v5461, %v2060
      %v5500 = vmul.f32 %v5463, %v2060
      %v5501 = vmul.f32 %v5465, %v2060
      %v5502 = vmul.f32 %v5467, %v2060
      %v5503 = vmul.f32 %v5469, %v2060
      %v5504 = vmul.f32 %v5471, %v2060
      %v5505 = vmul.f32 %v5473, %v2060
      %v5506 = vmul.f32 %v5475, %v2060
      %v5507 = vmul.f32 %v5477, %v2060
      %v5508 = vmul.f32 %v5479, %v2060
      %v5509 = vmul.f32 %v5481, %v2060
      %v5510 = vmul.f32 %v5483, %v2060
      %v5511 = vmul.f32 %v5485, %v2060
      %v5512 = vmul.f32 %v5487, %v2060
      %v5513 = vmul.f32 %v5489, %v2060
      %v5514 = vmul.f32 %v5491, %v2060
      %v5515 = vmul.f32 %v5493, %v2060
      %v5516 = vmul.f32 %v5495, %v2060
      %v5517 = vmul.f32 %v5497, %v2060
      %v5518 = vadd.f32 %v5498, 1e-05
      %v5519 = vadd.f32 %v5499, 1e-05
      %v5520 = vadd.f32 %v5500, 1e-05
      %v5521 = vadd.f32 %v5501, 1e-05
      %v5522 = vadd.f32 %v5502, 1e-05
      %v5523 = vadd.f32 %v5503, 1e-05
      %v5524 = vadd.f32 %v5504, 1e-05
      %v5525 = vadd.f32 %v5505, 1e-05
      %v5526 = vadd.f32 %v5506, 1e-05
      %v5527 = vadd.f32 %v5507, 1e-05
      %v5528 = vadd.f32 %v5508, 1e-05
      %v5529 = vadd.f32 %v5509, 1e-05
      %v5530 = vadd.f32 %v5510, 1e-05
      %v5531 = vadd.f32 %v5511, 1e-05
      %v5532 = vadd.f32 %v5512, 1e-05
      %v5533 = vadd.f32 %v5513, 1e-05
      %v5534 = vadd.f32 %v5514, 1e-05
      %v5535 = vadd.f32 %v5515, 1e-05
      %v5536 = vadd.f32 %v5516, 1e-05
      %v5537 = vadd.f32 %v5517, 1e-05
      %v5538 = vrsqrt.pop %v5518
      %v5539 = vrsqrt.pop %v5519
      %v5540 = vrsqrt.pop %v5520
      %v5541 = vrsqrt.pop %v5521
      %v5542 = vrsqrt.pop %v5522
      %v5543 = vrsqrt.pop %v5523
      %v5544 = vrsqrt.pop %v5524
      %v5545 = vrsqrt.pop %v5525
      %v5546 = vrsqrt.pop %v5526
      %v5547 = vrsqrt.pop %v5527
      %v5548 = vrsqrt.pop %v5528
      %v5549 = vrsqrt.pop %v5529
      %v5550 = vrsqrt.pop %v5530
      %v5551 = vrsqrt.pop %v5531
      %v5552 = vrsqrt.pop %v5532
      %v5553 = vrsqrt.pop %v5533
      %v5554 = vrsqrt.pop %v5534
      %v5555 = vrsqrt.pop %v5535
      %v5556 = vrsqrt.pop %v5536
      %v5557 = vrsqrt.pop %v5537
      %v5558 = vmul.f32 %v5418, %v5538
      %v5559 = vmul.f32 %v5419, %v5539
      %v5560 = vmul.f32 %v5420, %v5540
      %v5561 = vmul.f32 %v5421, %v5541
      %v5562 = vmul.f32 %v5422, %v5542
      %v5563 = vmul.f32 %v5423, %v5543
      %v5564 = vmul.f32 %v5424, %v5544
      %v5565 = vmul.f32 %v5425, %v5545
      %v5566 = vmul.f32 %v5426, %v5546
      %v5567 = vmul.f32 %v5427, %v5547
      %v5568 = vmul.f32 %v5428, %v5548
      %v5569 = vmul.f32 %v5429, %v5549
      %v5570 = vmul.f32 %v5430, %v5550
      %v5571 = vmul.f32 %v5431, %v5551
      %v5572 = vmul.f32 %v5432, %v5552
      %v5573 = vmul.f32 %v5433, %v5553
      %v5574 = vmul.f32 %v5434, %v5554
      %v5575 = vmul.f32 %v5435, %v5555
      %v5576 = vmul.f32 %v5436, %v5556
      %v5577 = vmul.f32 %v5437, %v5557
      %v5578 = vlaneseq
      %v5579 = vshrl.u32 %v5578, 7
      %v5580 = vsub.s32 0, %v5579
      %v5581 = vrot.slane %v5356, %v5580
      %v5582 = vmul.f32 %v5558, %v5581
      %v5583 = vmul.f32 %v5559, %v5581
      %v5584 = vmul.f32 %v5560, %v5581
      %v5585 = vmul.f32 %v5561, %v5581
      %v5586 = vmul.f32 %v5562, %v5581
      %v5587 = vmul.f32 %v5563, %v5581
      %v5588 = vmul.f32 %v5564, %v5581
      %v5589 = vmul.f32 %v5565, %v5581
      %v5590 = vmul.f32 %v5566, %v5581
      %v5591 = vmul.f32 %v5567, %v5581
      %v5592 = vmul.f32 %v5568, %v5581
      %v5593 = vmul.f32 %v5569, %v5581
      %v5594 = vmul.f32 %v5570, %v5581
      %v5595 = vmul.f32 %v5571, %v5581
      %v5596 = vmul.f32 %v5572, %v5581
      %v5597 = vmul.f32 %v5573, %v5581
      %v5598 = vmul.f32 %v5574, %v5581
      %v5599 = vmul.f32 %v5575, %v5581
      %v5600 = vmul.f32 %v5576, %v5581
      %v5601 = vmul.f32 %v5577, %v5581
      %v5602 = vlaneseq
      %v5603 = vshrl.u32 %v5602, 7
      %v5604 = vsub.s32 0, %v5603
      %v5605 = vrot.slane %v5357, %v5604
      %v5606 = vadd.f32 %v5582, %v5605
      %v5607 = vadd.f32 %v5583, %v5605
      %v5608 = vadd.f32 %v5584, %v5605
      %v5609 = vadd.f32 %v5585, %v5605
      %v5610 = vadd.f32 %v5586, %v5605
      %v5611 = vadd.f32 %v5587, %v5605
      %v5612 = vadd.f32 %v5588, %v5605
      %v5613 = vadd.f32 %v5589, %v5605
      %v5614 = vadd.f32 %v5590, %v5605
      %v5615 = vadd.f32 %v5591, %v5605
      %v5616 = vadd.f32 %v5592, %v5605
      %v5617 = vadd.f32 %v5593, %v5605
      %v5618 = vadd.f32 %v5594, %v5605
      %v5619 = vadd.f32 %v5595, %v5605
      %v5620 = vadd.f32 %v5596, %v5605
      %v5621 = vadd.f32 %v5597, %v5605
      %v5622 = vadd.f32 %v5598, %v5605
      %v5623 = vadd.f32 %v5599, %v5605
      %v5624 = vadd.f32 %v5600, %v5605
      %v5625 = vadd.f32 %v5601, %v5605
      %v5626 = vpack.c.bf16 %v5607, %v5606
      %v5627 = vpack.c.bf16 %v5609, %v5608
      %v5628 = vpack.c.bf16 %v5611, %v5610
      %v5629 = vpack.c.bf16 %v5613, %v5612
      %v5630 = vpack.c.bf16 %v5615, %v5614
      %v5631 = vpack.c.bf16 %v5617, %v5616
      %v5632 = vpack.c.bf16 %v5619, %v5618
      %v5633 = vpack.c.bf16 %v5621, %v5620
      %v5634 = vpack.c.bf16 %v5623, %v5622
      %v5635 = vpack.c.bf16 %v5625, %v5624
      %s5636 = scalar_lea.vmem %s8, 192
      %v5637 = vld [vmem:[%s5636] sm:$0xff]
      %v5638 = vld [vmem:[%s5636 + $0x8] sm:$0xf]
      %v5639 = vld [vmem:[%s5636 + $0xc] sm:$0xff]
      %v5640 = vld [vmem:[%s5636 + $0x14] sm:$0xf]
      %v5641 = vld [vmem:[%s5636 + $0x18] sm:$0xff]
      %v5642 = vld [vmem:[%s5636 + $0x20] sm:$0xf]
      %v5643 = vld [vmem:[%s5636 + $0x24] sm:$0xff]
      %v5644 = vld [vmem:[%s5636 + $0x2c] sm:$0xf]
      %v5645 = vld [vmem:[%s5636 + $0x30] sm:$0xff]
      %v5646 = vld [vmem:[%s5636 + $0x38] sm:$0xf]
      %v5647 = vld [vmem:[%s5636 + $0x3c] sm:$0xff]
      %v5648 = vld [vmem:[%s5636 + $0x44] sm:$0xf]
      %v5649 = vld [vmem:[%s5636 + $0x48] sm:$0xff]
      %v5650 = vld [vmem:[%s5636 + $0x50] sm:$0xf]
      %v5651 = vld [vmem:[%s5636 + $0x54] sm:$0xff]
      %v5652 = vld [vmem:[%s5636 + $0x5c] sm:$0xf]
      %v5653 = vld [vmem:[%s5636 + $0x60] sm:$0xff]
      %v5654 = vld [vmem:[%s5636 + $0x68] sm:$0xf]
      %v5655 = vld [vmem:[%s5636 + $0x6c] sm:$0xff]
      %v5656 = vld [vmem:[%s5636 + $0x74] sm:$0xf]
      %v5657 = vld [vmem:[%s5636 + $0x78] sm:$0xff]
      %v5658 = vld [vmem:[%s5636 + $0x80] sm:$0xf]
      %v5659 = vld [vmem:[%s5636 + $0x84] sm:$0xff]
      %v5660 = vld [vmem:[%s5636 + $0x8c] sm:$0xf]
      %v5661 = vld [vmem:[%s5636 + $0x90] sm:$0xff]
      %v5662 = vld [vmem:[%s5636 + $0x98] sm:$0xf]
      %v5663 = vld [vmem:[%s5636 + $0x9c] sm:$0xff]
      %v5664 = vld [vmem:[%s5636 + $0xa4] sm:$0xf]
      %v5665 = vld [vmem:[%s5636 + $0xa8] sm:$0xff]
      %v5666 = vld [vmem:[%s5636 + $0xb0] sm:$0xf]
      %v5667 = vld [vmem:[%s5636 + $0xb4] sm:$0xff]
      %v5668 = vld [vmem:[%s5636 + $0xbc] sm:$0xf]
      %s5669 = scalar_lea.vmem %s9, 1
      %v5670 = vld [vmem:[%s5669] ss:$2 sm:$0x7]
      %v5672 = vlaneseq
      %v5673 = vshrl.u32 %v5672, 7
      %v5674 = vsub.s32 0, %v5673
      %v5675 = vrot.slane %v5670, %v5674
      %v5676 = vlaneseq
      %v5677 = vshrl.u32 %v5676, 7
      %v5678 = vsub.s32 1, %v5677
      %v5679 = vrot.slane %v5670, %v5678
      %v5680 = vlaneseq
      %v5681 = vshrl.u32 %v5680, 7
      %v5682 = vsub.s32 2, %v5681
      %v5683 = vrot.slane %v5670, %v5682
      %v5719 = vunpack.c.l.b16 %v5637
      %v5720 = vunpack.c.h.b16 %v5637
      %v5721 = vunpack.c.l.b16 %v5638
      %v5722 = vunpack.c.l.b16 %v5639
      %v5723 = vunpack.c.h.b16 %v5639
      %v5724 = vunpack.c.l.b16 %v5640
      %v5725 = vunpack.c.l.b16 %v5641
      %v5726 = vunpack.c.h.b16 %v5641
      %v5727 = vunpack.c.l.b16 %v5642
      %v5728 = vunpack.c.l.b16 %v5643
      %v5729 = vunpack.c.h.b16 %v5643
      %v5730 = vunpack.c.l.b16 %v5644
      %v5731 = vunpack.c.l.b16 %v5645
      %v5732 = vunpack.c.h.b16 %v5645
      %v5733 = vunpack.c.l.b16 %v5646
      %v5734 = vunpack.c.l.b16 %v5647
      %v5735 = vunpack.c.h.b16 %v5647
      %v5736 = vunpack.c.l.b16 %v5648
      %v5737 = vunpack.c.l.b16 %v5649
      %v5738 = vunpack.c.h.b16 %v5649
      %v5739 = vunpack.c.l.b16 %v5650
      %v5740 = vunpack.c.l.b16 %v5651
      %v5741 = vunpack.c.h.b16 %v5651
      %v5742 = vunpack.c.l.b16 %v5652
      %v5743 = vunpack.c.l.b16 %v5653
      %v5744 = vunpack.c.h.b16 %v5653
      %v5745 = vunpack.c.l.b16 %v5654
      %v5746 = vunpack.c.l.b16 %v5655
      %v5747 = vunpack.c.h.b16 %v5655
      %v5748 = vunpack.c.l.b16 %v5656
      %v5749 = vunpack.c.l.b16 %v5657
      %v5750 = vunpack.c.h.b16 %v5657
      %v5751 = vunpack.c.l.b16 %v5658
      %v5752 = vunpack.c.l.b16 %v5659
      %v5753 = vunpack.c.h.b16 %v5659
      %v5754 = vunpack.c.l.b16 %v5660
      %v5755 = vunpack.c.l.b16 %v5661
      %v5756 = vunpack.c.h.b16 %v5661
      %v5757 = vunpack.c.l.b16 %v5662
      %v5758 = vunpack.c.l.b16 %v5663
      %v5759 = vunpack.c.h.b16 %v5663
      %v5760 = vunpack.c.l.b16 %v5664
      %v5761 = vunpack.c.l.b16 %v5665
      %v5762 = vunpack.c.h.b16 %v5665
      %v5763 = vunpack.c.l.b16 %v5666
      %v5764 = vunpack.c.l.b16 %v5667
      %v5765 = vunpack.c.h.b16 %v5667
      %v5766 = vunpack.c.l.b16 %v5668
      %v5767 = vpack.c.b16 %v5722, %v5719
      %v5768 = vpack.c.b16 %v5723, %v5720
      %v5769 = vpack.c.b16 %v5724, %v5721
      %v5770 = vpack.c.b16 %v5728, %v5725
      %v5771 = vpack.c.b16 %v5729, %v5726
      %v5772 = vpack.c.b16 %v5730, %v5727
      %v5773 = vpack.c.b16 %v5734, %v5731
      %v5774 = vpack.c.b16 %v5735, %v5732
      %v5775 = vpack.c.b16 %v5736, %v5733
      %v5776 = vpack.c.b16 %v5740, %v5737
      %v5777 = vpack.c.b16 %v5741, %v5738
      %v5778 = vpack.c.b16 %v5742, %v5739
      %v5779 = vpack.c.b16 %v5746, %v5743
      %v5780 = vpack.c.b16 %v5747, %v5744
      %v5781 = vpack.c.b16 %v5748, %v5745
      %v5782 = vpack.c.b16 %v5752, %v5749
      %v5783 = vpack.c.b16 %v5753, %v5750
      %v5784 = vpack.c.b16 %v5754, %v5751
      %v5785 = vpack.c.b16 %v5758, %v5755
      %v5786 = vpack.c.b16 %v5759, %v5756
      %v5787 = vpack.c.b16 %v5760, %v5757
      %v5788 = vpack.c.b16 %v5764, %v5761
      %v5789 = vpack.c.b16 %v5765, %v5762
      %v5790 = vpack.c.b16 %v5766, %v5763
      %5815 = vmatprep.subr.bf16.mxu0 %v5768
      %5816 = vmatpush1.bf16.msra.mxu0 %v5767
      %5817 = vmatprep.subr.bf16.mxu0 %v5771
      %5818 = vmatpush1.bf16.msra.mxu0 %v5770
      %5819 = vmatprep.subr.bf16.mxu0 %v5774
      %5820 = vmatpush1.bf16.msra.mxu0 %v5773
      %5821 = vmatprep.subr.bf16.mxu0 %v5777
      %5822 = vmatpush1.bf16.msra.mxu0 %v5776
      %5823 = vmatprep.subr.bf16.mxu0 %v5780
      %5824 = vmatpush1.bf16.msra.mxu0 %v5779
      %5825 = vmatprep.subr.bf16.mxu0 %v5783
      %5826 = vmatpush1.bf16.msra.mxu0 %v5782
      %5827 = vmatprep.subr.bf16.mxu0 %v5786
      %5828 = vmatpush1.bf16.msra.mxu0 %v5785
      %5829 = vmatprep.subr.bf16.mxu0 %v5789
      %5830 = vmatpush1.bf16.msra.mxu0 %v5788
      %5831 = vmatprep.subr.bf16.mxu0 0
      %5832 = vmatpush1.bf16.msra.mxu0 0
      %5833 = vmatprep.subr.bf16.mxu0 0
      %5834 = vmatpush1.bf16.msra.mxu0 0
      %5835 = vmatprep.subr.bf16.mxu0 0
      %5836 = vmatpush1.bf16.msra.mxu0 0
      %5837 = vmatprep.subr.bf16.mxu0 0
      %5838 = vmatpush1.bf16.msra.mxu0 0
      %5839 = vmatprep.subr.bf16.mxu0 0
      %5840 = vmatpush1.bf16.msra.mxu0 0
      %5841 = vmatprep.subr.bf16.mxu0 0
      %5842 = vmatpush1.bf16.msra.mxu0 0
      %5843 = vmatprep.subr.bf16.mxu0 0
      %5844 = vmatpush1.bf16.msra.mxu0 0
      %5845 = vmatprep.subr.bf16.mxu0 0
      %5846 = vmatpush1.bf16.msra.mxu0 0
      %5847 = vmatprep.mubr.bf16.mxu0 0
      %5848 = vmatmul.mubr.bf16.gmra.mrb[0].mxu0 %v5626
      %v5849 = vpop.f32.mrb[0].mxu0
      %v5850 = vadd.f32 %v5675, %v5849
      %v5851 = vpop.f32.mrb[0].mxu0
      %v5852 = vadd.f32 %v5679, %v5851
      %v5853 = vpop.f32.mrb[0].mxu0
      %v5854 = vadd.f32 %v5675, %v5853
      %v5855 = vpop.f32.mrb[0].mxu0
      %v5856 = vadd.f32 %v5679, %v5855
      %5857 = vmatprep.mubr.bf16.mxu0 0
      %5858 = vmatmul.mubr.bf16.gmra.mrb[0].mxu0 %v5627
      %v5859 = vpop.f32.mrb[0].mxu0
      %v5860 = vadd.f32 %v5675, %v5859
      %v5861 = vpop.f32.mrb[0].mxu0
      %v5862 = vadd.f32 %v5679, %v5861
      %v5863 = vpop.f32.mrb[0].mxu0
      %v5864 = vadd.f32 %v5675, %v5863
      %v5865 = vpop.f32.mrb[0].mxu0
      %v5866 = vadd.f32 %v5679, %v5865
      %5867 = vmatprep.mubr.bf16.mxu0 0
      %5868 = vmatmul.mubr.bf16.gmra.mrb[0].mxu0 %v5628
      %v5869 = vpop.f32.mrb[0].mxu0
      %v5870 = vadd.f32 %v5675, %v5869
      %v5871 = vpop.f32.mrb[0].mxu0
      %v5872 = vadd.f32 %v5679, %v5871
      %v5873 = vpop.f32.mrb[0].mxu0
      %v5874 = vadd.f32 %v5675, %v5873
      %v5875 = vpop.f32.mrb[0].mxu0
      %v5876 = vadd.f32 %v5679, %v5875
      %5877 = vmatprep.mubr.bf16.mxu0 0
      %5878 = vmatmul.mubr.bf16.gmra.mrb[0].mxu0 %v5629
      %v5879 = vpop.f32.mrb[0].mxu0
      %v5880 = vadd.f32 %v5675, %v5879
      %v5881 = vpop.f32.mrb[0].mxu0
      %v5882 = vadd.f32 %v5679, %v5881
      %v5883 = vpop.f32.mrb[0].mxu0
      %v5884 = vadd.f32 %v5675, %v5883
      %v5885 = vpop.f32.mrb[0].mxu0
      %v5886 = vadd.f32 %v5679, %v5885
      %5887 = vmatprep.mubr.bf16.mxu0 0
      %5888 = vmatmul.mubr.bf16.gmra.mrb[0].mxu0 %v5630
      %v5889 = vpop.f32.mrb[0].mxu0
      %v5890 = vadd.f32 %v5675, %v5889
      %v5891 = vpop.f32.mrb[0].mxu0
      %v5892 = vadd.f32 %v5679, %v5891
      %v5893 = vpop.f32.mrb[0].mxu0
      %v5894 = vadd.f32 %v5675, %v5893
      %v5895 = vpop.f32.mrb[0].mxu0
      %v5896 = vadd.f32 %v5679, %v5895
      %5897 = vmatprep.mubr.bf16.mxu0 0
      %5898 = vmatmul.mubr.bf16.gmra.mrb[0].mxu0 %v5631
      %v5899 = vpop.f32.mrb[0].mxu0
      %v5900 = vadd.f32 %v5675, %v5899
      %v5901 = vpop.f32.mrb[0].mxu0
      %v5902 = vadd.f32 %v5679, %v5901
      %v5903 = vpop.f32.mrb[0].mxu0
      %v5904 = vadd.f32 %v5675, %v5903
      %v5905 = vpop.f32.mrb[0].mxu0
      %v5906 = vadd.f32 %v5679, %v5905
      %5907 = vmatprep.mubr.bf16.mxu0 0
      %5908 = vmatmul.mubr.bf16.gmra.mrb[0].mxu0 %v5632
      %v5909 = vpop.f32.mrb[0].mxu0
      %v5910 = vadd.f32 %v5675, %v5909
      %v5911 = vpop.f32.mrb[0].mxu0
      %v5912 = vadd.f32 %v5679, %v5911
      %v5913 = vpop.f32.mrb[0].mxu0
      %v5914 = vadd.f32 %v5675, %v5913
      %v5915 = vpop.f32.mrb[0].mxu0
      %v5916 = vadd.f32 %v5679, %v5915
      %5917 = vmatprep.mubr.bf16.mxu0 0
      %5918 = vmatmul.mubr.bf16.gmra.mrb[0].mxu0 %v5633
      %v5919 = vpop.f32.mrb[0].mxu0
      %v5920 = vadd.f32 %v5675, %v5919
      %v5921 = vpop.f32.mrb[0].mxu0
      %v5922 = vadd.f32 %v5679, %v5921
      %v5923 = vpop.f32.mrb[0].mxu0
      %v5924 = vadd.f32 %v5675, %v5923
      %v5925 = vpop.f32.mrb[0].mxu0
      %v5926 = vadd.f32 %v5679, %v5925
      %5927 = vmatprep.mubr.bf16.mxu0 0
      %5928 = vmatmul.mubr.bf16.gmra.mrb[0].mxu0 %v5634
      %v5929 = vpop.f32.mrb[0].mxu0
      %v5930 = vadd.f32 %v5675, %v5929
      %v5931 = vpop.f32.mrb[0].mxu0
      %v5932 = vadd.f32 %v5679, %v5931
      %v5933 = vpop.f32.mrb[0].mxu0
      %v5934 = vadd.f32 %v5675, %v5933
      %v5935 = vpop.f32.mrb[0].mxu0
      %v5936 = vadd.f32 %v5679, %v5935
      %5937 = vmatprep.mubr.bf16.mxu0 0
      %5938 = vmatmul.mubr.bf16.gmra.mrb[0].mxu0 %v5635
      %v5939 = vpop.f32.mrb[0].mxu0
      %v5940 = vadd.f32 %v5675, %v5939
      %v5941 = vpop.f32.mrb[0].mxu0
      %v5942 = vadd.f32 %v5679, %v5941
      %v5943 = vpop.f32.mrb[0].mxu0
      %v5944 = vadd.f32 %v5675, %v5943
      %v5945 = vpop.f32.mrb[0].mxu0
      %v5946 = vadd.f32 %v5679, %v5945
      %5947 = vdwg.mxu0
      %5948 = vmatprep.subr.bf16.mxu0 0
      %5949 = vmatpush1.bf16.msra.mxu0 %v5769
      %5950 = vmatprep.subr.bf16.mxu0 0
      %5951 = vmatpush1.bf16.msra.mxu0 %v5772
      %5952 = vmatprep.subr.bf16.mxu0 0
      %5953 = vmatpush1.bf16.msra.mxu0 %v5775
      %5954 = vmatprep.subr.bf16.mxu0 0
      %5955 = vmatpush1.bf16.msra.mxu0 %v5778
      %5956 = vmatprep.subr.bf16.mxu0 0
      %5957 = vmatpush1.bf16.msra.mxu0 %v5781
      %5958 = vmatprep.subr.bf16.mxu0 0
      %5959 = vmatpush1.bf16.msra.mxu0 %v5784
      %5960 = vmatprep.subr.bf16.mxu0 0
      %5961 = vmatpush1.bf16.msra.mxu0 %v5787
      %5962 = vmatprep.subr.bf16.mxu0 0
      %5963 = vmatpush1.bf16.msra.mxu0 %v5790
      %5964 = vmatprep.subr.bf16.mxu0 0
      %5965 = vmatpush1.bf16.msra.mxu0 0
      %5966 = vmatprep.subr.bf16.mxu0 0
      %5967 = vmatpush1.bf16.msra.mxu0 0
      %5968 = vmatprep.subr.bf16.mxu0 0
      %5969 = vmatpush1.bf16.msra.mxu0 0
      %5970 = vmatprep.subr.bf16.mxu0 0
      %5971 = vmatpush1.bf16.msra.mxu0 0
      %5972 = vmatprep.subr.bf16.mxu0 0
      %5973 = vmatpush1.bf16.msra.mxu0 0
      %5974 = vmatprep.subr.bf16.mxu0 0
      %5975 = vmatpush1.bf16.msra.mxu0 0
      %5976 = vmatprep.subr.bf16.mxu0 0
      %5977 = vmatpush1.bf16.msra.mxu0 0
      %5978 = vmatprep.subr.bf16.mxu0 0
      %5979 = vmatpush1.bf16.msra.mxu0 0
      %5980 = vmatprep.mubr.bf16.mxu0 0
      %5981 = vmatmul.mubr.bf16.gmra.mrb[0].mxu0 %v5626
      %v5982 = vpop.f32.mrb[0].mxu0
      %v5983 = vadd.f32 %v5683, %v5982
      %v5984 = vpop.f32.mrb[0].mxu0
      %v5985 = vpop.f32.mrb[0].mxu0
      %v5986 = vadd.f32 %v5683, %v5985
      %v5987 = vpop.f32.mrb[0].mxu0
      %5988 = vmatprep.mubr.bf16.mxu0 0
      %5989 = vmatmul.mubr.bf16.gmra.mrb[0].mxu0 %v5627
      %v5990 = vpop.f32.mrb[0].mxu0
      %v5991 = vadd.f32 %v5683, %v5990
      %v5992 = vpop.f32.mrb[0].mxu0
      %v5993 = vpop.f32.mrb[0].mxu0
      %v5994 = vadd.f32 %v5683, %v5993
      %v5995 = vpop.f32.mrb[0].mxu0
      %5996 = vmatprep.mubr.bf16.mxu0 0
      %5997 = vmatmul.mubr.bf16.gmra.mrb[0].mxu0 %v5628
      %v5998 = vpop.f32.mrb[0].mxu0
      %v5999 = vadd.f32 %v5683, %v5998
      %v6000 = vpop.f32.mrb[0].mxu0
      %v6001 = vpop.f32.mrb[0].mxu0
      %v6002 = vadd.f32 %v5683, %v6001
      %v6003 = vpop.f32.mrb[0].mxu0
      %6004 = vmatprep.mubr.bf16.mxu0 0
      %6005 = vmatmul.mubr.bf16.gmra.mrb[0].mxu0 %v5629
      %v6006 = vpop.f32.mrb[0].mxu0
      %v6007 = vadd.f32 %v5683, %v6006
      %v6008 = vpop.f32.mrb[0].mxu0
      %v6009 = vpop.f32.mrb[0].mxu0
      %v6010 = vadd.f32 %v5683, %v6009
      %v6011 = vpop.f32.mrb[0].mxu0
      %6012 = vmatprep.mubr.bf16.mxu0 0
      %6013 = vmatmul.mubr.bf16.gmra.mrb[0].mxu0 %v5630
      %v6014 = vpop.f32.mrb[0].mxu0
      %v6015 = vadd.f32 %v5683, %v6014
      %v6016 = vpop.f32.mrb[0].mxu0
      %v6017 = vpop.f32.mrb[0].mxu0
      %v6018 = vadd.f32 %v5683, %v6017
      %v6019 = vpop.f32.mrb[0].mxu0
      %6020 = vmatprep.mubr.bf16.mxu0 0
      %6021 = vmatmul.mubr.bf16.gmra.mrb[0].mxu0 %v5631
      %v6022 = vpop.f32.mrb[0].mxu0
      %v6023 = vadd.f32 %v5683, %v6022
      %v6024 = vpop.f32.mrb[0].mxu0
      %v6025 = vpop.f32.mrb[0].mxu0
      %v6026 = vadd.f32 %v5683, %v6025
      %v6027 = vpop.f32.mrb[0].mxu0
      %6028 = vmatprep.mubr.bf16.mxu0 0
      %6029 = vmatmul.mubr.bf16.gmra.mrb[0].mxu0 %v5632
      %v6030 = vpop.f32.mrb[0].mxu0
      %v6031 = vadd.f32 %v5683, %v6030
      %v6032 = vpop.f32.mrb[0].mxu0
      %v6033 = vpop.f32.mrb[0].mxu0
      %v6034 = vadd.f32 %v5683, %v6033
      %v6035 = vpop.f32.mrb[0].mxu0
      %6036 = vmatprep.mubr.bf16.mxu0 0
      %6037 = vmatmul.mubr.bf16.gmra.mrb[0].mxu0 %v5633
      %v6038 = vpop.f32.mrb[0].mxu0
      %v6039 = vadd.f32 %v5683, %v6038
      %v6040 = vpop.f32.mrb[0].mxu0
      %v6041 = vpop.f32.mrb[0].mxu0
      %v6042 = vadd.f32 %v5683, %v6041
      %v6043 = vpop.f32.mrb[0].mxu0
      %6044 = vmatprep.mubr.bf16.mxu0 0
      %6045 = vmatmul.mubr.bf16.gmra.mrb[0].mxu0 %v5634
      %v6046 = vpop.f32.mrb[0].mxu0
      %v6047 = vadd.f32 %v5683, %v6046
      %v6048 = vpop.f32.mrb[0].mxu0
      %v6049 = vpop.f32.mrb[0].mxu0
      %v6050 = vadd.f32 %v5683, %v6049
      %v6051 = vpop.f32.mrb[0].mxu0
      %6052 = vmatprep.mubr.bf16.mxu0 0
      %6053 = vmatmul.mubr.bf16.gmra.mrb[0].mxu0 %v5635
      %v6054 = vpop.f32.mrb[0].mxu0
      %v6055 = vadd.f32 %v5683, %v6054
      %v6056 = vpop.f32.mrb[0].mxu0
      %v6057 = vpop.f32.mrb[0].mxu0
      %v6058 = vadd.f32 %v5683, %v6057
      %v6059 = vpop.f32.mrb[0].mxu0
      %6060 = vdwg.mxu0
      %v6061 = vsub.f32 %v5852, %v5902
      %v6062 = vsub.f32 %v5856, %v5906
      %v6063 = vsub.f32 %v5862, %v5912
      %v6064 = vsub.f32 %v5866, %v5916
      %v6065 = vsub.f32 %v5872, %v5922
      %v6066 = vsub.f32 %v5876, %v5926
      %v6067 = vsub.f32 %v5882, %v5932
      %v6068 = vsub.f32 %v5886, %v5936
      %v6069 = vsub.f32 %v5892, %v5942
      %v6070 = vsub.f32 %v5896, %v5946
      %v6071 = vsub.f32 %v6023, %v5983
      %v6072 = vsub.f32 %v6026, %v5986
      %v6073 = vsub.f32 %v6031, %v5991
      %v6074 = vsub.f32 %v6034, %v5994
      %v6075 = vsub.f32 %v6039, %v5999
      %v6076 = vsub.f32 %v6042, %v6002
      %v6077 = vsub.f32 %v6047, %v6007
      %v6078 = vsub.f32 %v6050, %v6010
      %v6079 = vsub.f32 %v6055, %v6015
      %v6080 = vsub.f32 %v6058, %v6018
      %v6081 = vsub.f32 0.0, %v6061
      %v6082 = vsub.f32 0.0, %v6062
      %v6083 = vsub.f32 0.0, %v6063
      %v6084 = vsub.f32 0.0, %v6064
      %v6085 = vsub.f32 0.0, %v6065
      %v6086 = vsub.f32 0.0, %v6066
      %v6087 = vsub.f32 0.0, %v6067
      %v6088 = vsub.f32 0.0, %v6068
      %v6089 = vsub.f32 0.0, %v6069
      %v6090 = vsub.f32 0.0, %v6070
      %v6091 = vmul.f32 %v5850, %v6061
      %v6092 = vmul.f32 %v5854, %v6062
      %v6093 = vmul.f32 %v5860, %v6063
      %v6094 = vmul.f32 %v5864, %v6064
      %v6095 = vmul.f32 %v5870, %v6065
      %v6096 = vmul.f32 %v5874, %v6066
      %v6097 = vmul.f32 %v5880, %v6067
      %v6098 = vmul.f32 %v5884, %v6068
      %v6099 = vmul.f32 %v5890, %v6069
      %v6100 = vmul.f32 %v5894, %v6070
      %v6101 = vmul.f32 %v5900, %v6081
      %v6102 = vmul.f32 %v5904, %v6082
      %v6103 = vmul.f32 %v5910, %v6083
      %v6104 = vmul.f32 %v5914, %v6084
      %v6105 = vmul.f32 %v5920, %v6085
      %v6106 = vmul.f32 %v5924, %v6086
      %v6107 = vmul.f32 %v5930, %v6087
      %v6108 = vmul.f32 %v5934, %v6088
      %v6109 = vmul.f32 %v5940, %v6089
      %v6110 = vmul.f32 %v5944, %v6090
      %6111 = vmatprep.subr.mxu0 0.0
      %6112 = vmatpush1.msra.mxu0 %v2002
      %6113 = vmatprep.subr.mxu0 0.0
      %6114 = vmatpush1.msra.mxu0 %v2003
      %6115 = vmatprep.subr.mxu0 0.0
      %6116 = vmatpush1.msra.mxu0 %v2004
      %6117 = vmatprep.subr.mxu0 0.0
      %6118 = vmatpush1.msra.mxu0 %v2005
      %6119 = vmatprep.subr.mxu0 0.0
      %6120 = vmatpush1.msra.mxu0 %v2006
      %6121 = vmatprep.subr.mxu0 0.0
      %6122 = vmatpush1.msra.mxu0 %v2007
      %6123 = vmatprep.subr.mxu0 0.0
      %6124 = vmatpush1.msra.mxu0 %v2008
      %6125 = vmatprep.subr.mxu0 0.0
      %6126 = vmatpush1.msra.mxu0 %v2009
      %6127 = vmatprep.subr.mxu0 0.0
      %6128 = vmatpush1.msra.mxu0 %v2010
      %6129 = vmatprep.subr.mxu0 0.0
      %6130 = vmatpush1.msra.mxu0 %v2011
      %6131 = vmatprep.subr.mxu0 0.0
      %6132 = vmatpush1.msra.mxu0 %v2012
      %6133 = vmatprep.subr.mxu0 0.0
      %6134 = vmatpush1.msra.mxu0 %v2013
      %6135 = vmatprep.subr.mxu0 0.0
      %6136 = vmatpush1.msra.mxu0 %v2014
      %6137 = vmatprep.subr.mxu0 0.0
      %6138 = vmatpush1.msra.mxu0 %v2015
      %6139 = vmatprep.subr.mxu0 0.0
      %6140 = vmatpush1.msra.mxu0 %v2016
      %6141 = vmatprep.subr.mxu0 0.0
      %6142 = vmatpush1.msra.mxu0 %v2017
      %6143 = vmatprep.subr.mxu0 0.0
      %6144 = vmatpush1.msra.mxu0 0.0
      %6145 = vmatprep.subr.mxu0 0.0
      %6146 = vmatpush1.msra.mxu0 0.0
      %6147 = vmatprep.subr.mxu0 0.0
      %6148 = vmatpush1.msra.mxu0 0.0
      %6149 = vmatprep.subr.mxu0 0.0
      %6150 = vmatpush1.msra.mxu0 0.0
      %6151 = vmatprep.subr.mxu0 0.0
      %6152 = vmatpush1.msra.mxu0 0.0
      %6153 = vmatprep.subr.mxu0 0.0
      %6154 = vmatpush1.msra.mxu0 0.0
      %6155 = vmatprep.subr.mxu0 0.0
      %6156 = vmatpush1.msra.mxu0 0.0
      %6157 = vmatprep.subr.mxu0 0.0
      %6158 = vmatpush1.msra.mxu0 0.0
      %6159 = vmatprep.subr.mxu0 0.0
      %6160 = vmatpush1.msra.mxu0 0.0
      %6161 = vmatprep.subr.mxu0 0.0
      %6162 = vmatpush1.msra.mxu0 0.0
      %6163 = vmatprep.subr.mxu0 0.0
      %6164 = vmatpush1.msra.mxu0 0.0
      %6165 = vmatprep.subr.mxu0 0.0
      %6166 = vmatpush1.msra.mxu0 0.0
      %6167 = vmatprep.subr.mxu0 0.0
      %6168 = vmatpush1.msra.mxu0 0.0
      %6169 = vmatprep.subr.mxu0 0.0
      %6170 = vmatpush1.msra.mxu0 0.0
      %6171 = vmatprep.subr.mxu0 0.0
      %6172 = vmatpush1.msra.mxu0 0.0
      %6173 = vmatprep.subr.mxu0 0.0
      %6174 = vmatpush1.msra.mxu0 0.0
      %6175 = vmatprep.mubr.f32.mxu0 0.0
      %6176 = vmatmul.mubr.f32.gmra.mrb[0].mxu0 %v6091
      %v6177 = vpop.f32.mrb[0].mxu0
      %v6178 = vadd.f32 0.0, %v6177
      %v6179 = vpop.f32.mrb[0].mxu0
      %6180 = vmatprep.mubr.f32.mxu0 0.0
      %6181 = vmatmul.mubr.f32.gmra.mrb[0].mxu0 %v6092
      %v6182 = vpop.f32.mrb[0].mxu0
      %v6183 = vadd.f32 0.0, %v6182
      %v6184 = vpop.f32.mrb[0].mxu0
      %6185 = vmatprep.mubr.f32.mxu0 0.0
      %6186 = vmatmul.mubr.f32.gmra.mrb[0].mxu0 %v6093
      %v6187 = vpop.f32.mrb[0].mxu0
      %v6188 = vadd.f32 0.0, %v6187
      %v6189 = vpop.f32.mrb[0].mxu0
      %6190 = vmatprep.mubr.f32.mxu0 0.0
      %6191 = vmatmul.mubr.f32.gmra.mrb[0].mxu0 %v6094
      %v6192 = vpop.f32.mrb[0].mxu0
      %v6193 = vadd.f32 0.0, %v6192
      %v6194 = vpop.f32.mrb[0].mxu0
      %6195 = vmatprep.mubr.f32.mxu0 0.0
      %6196 = vmatmul.mubr.f32.gmra.mrb[0].mxu0 %v6095
      %v6197 = vpop.f32.mrb[0].mxu0
      %v6198 = vadd.f32 0.0, %v6197
      %v6199 = vpop.f32.mrb[0].mxu0
      %6200 = vmatprep.mubr.f32.mxu0 0.0
      %6201 = vmatmul.mubr.f32.gmra.mrb[0].mxu0 %v6096
      %v6202 = vpop.f32.mrb[0].mxu0
      %v6203 = vadd.f32 0.0, %v6202
      %v6204 = vpop.f32.mrb[0].mxu0
      %6205 = vmatprep.mubr.f32.mxu0 0.0
      %6206 = vmatmul.mubr.f32.gmra.mrb[0].mxu0 %v6097
      %v6207 = vpop.f32.mrb[0].mxu0
      %v6208 = vadd.f32 0.0, %v6207
      %v6209 = vpop.f32.mrb[0].mxu0
      %6210 = vmatprep.mubr.f32.mxu0 0.0
      %6211 = vmatmul.mubr.f32.gmra.mrb[0].mxu0 %v6098
      %v6212 = vpop.f32.mrb[0].mxu0
      %v6213 = vadd.f32 0.0, %v6212
      %v6214 = vpop.f32.mrb[0].mxu0
      %6215 = vmatprep.mubr.f32.mxu0 0.0
      %6216 = vmatmul.mubr.f32.gmra.mrb[0].mxu0 %v6099
      %v6217 = vpop.f32.mrb[0].mxu0
      %v6218 = vadd.f32 0.0, %v6217
      %v6219 = vpop.f32.mrb[0].mxu0
      %6220 = vmatprep.mubr.f32.mxu0 0.0
      %6221 = vmatmul.mubr.f32.gmra.mrb[0].mxu0 %v6100
      %v6222 = vpop.f32.mrb[0].mxu0
      %v6223 = vadd.f32 0.0, %v6222
      %v6224 = vpop.f32.mrb[0].mxu0
      %6225 = vmatprep.mubr.f32.mxu0 0.0
      %6226 = vmatmul.mubr.f32.gmra.mrb[0].mxu0 %v6101
      %v6227 = vpop.f32.mrb[0].mxu0
      %v6228 = vadd.f32 0.0, %v6227
      %v6229 = vpop.f32.mrb[0].mxu0
      %6230 = vmatprep.mubr.f32.mxu0 0.0
      %6231 = vmatmul.mubr.f32.gmra.mrb[0].mxu0 %v6102
      %v6232 = vpop.f32.mrb[0].mxu0
      %v6233 = vadd.f32 0.0, %v6232
      %v6234 = vpop.f32.mrb[0].mxu0
      %6235 = vmatprep.mubr.f32.mxu0 0.0
      %6236 = vmatmul.mubr.f32.gmra.mrb[0].mxu0 %v6103
      %v6237 = vpop.f32.mrb[0].mxu0
      %v6238 = vadd.f32 0.0, %v6237
      %v6239 = vpop.f32.mrb[0].mxu0
      %6240 = vmatprep.mubr.f32.mxu0 0.0
      %6241 = vmatmul.mubr.f32.gmra.mrb[0].mxu0 %v6104
      %v6242 = vpop.f32.mrb[0].mxu0
      %v6243 = vadd.f32 0.0, %v6242
      %v6244 = vpop.f32.mrb[0].mxu0
      %6245 = vmatprep.mubr.f32.mxu0 0.0
      %6246 = vmatmul.mubr.f32.gmra.mrb[0].mxu0 %v6105
      %v6247 = vpop.f32.mrb[0].mxu0
      %v6248 = vadd.f32 0.0, %v6247
      %v6249 = vpop.f32.mrb[0].mxu0
      %6250 = vmatprep.mubr.f32.mxu0 0.0
      %6251 = vmatmul.mubr.f32.gmra.mrb[0].mxu0 %v6106
      %v6252 = vpop.f32.mrb[0].mxu0
      %v6253 = vadd.f32 0.0, %v6252
      %v6254 = vpop.f32.mrb[0].mxu0
      %6255 = vmatprep.mubr.f32.mxu0 0.0
      %6256 = vmatmul.mubr.f32.gmra.mrb[0].mxu0 %v6107
      %v6257 = vpop.f32.mrb[0].mxu0
      %v6258 = vadd.f32 0.0, %v6257
      %v6259 = vpop.f32.mrb[0].mxu0
      %6260 = vmatprep.mubr.f32.mxu0 0.0
      %6261 = vmatmul.mubr.f32.gmra.mrb[0].mxu0 %v6108
      %v6262 = vpop.f32.mrb[0].mxu0
      %v6263 = vadd.f32 0.0, %v6262
      %v6264 = vpop.f32.mrb[0].mxu0
      %6265 = vmatprep.mubr.f32.mxu0 0.0
      %6266 = vmatmul.mubr.f32.gmra.mrb[0].mxu0 %v6109
      %v6267 = vpop.f32.mrb[0].mxu0
      %v6268 = vadd.f32 0.0, %v6267
      %v6269 = vpop.f32.mrb[0].mxu0
      %6270 = vmatprep.mubr.f32.mxu0 0.0
      %6271 = vmatmul.mubr.f32.gmra.mrb[0].mxu0 %v6110
      %v6272 = vpop.f32.mrb[0].mxu0
      %v6273 = vadd.f32 0.0, %v6272
      %v6274 = vpop.f32.mrb[0].mxu0
      %6275 = vdwg.mxu0
      %v6276 = vsub.f32 0.0, %v6178
      %v6277 = vsub.f32 0.0, %v6183
      %v6278 = vsub.f32 0.0, %v6188
      %v6279 = vsub.f32 0.0, %v6193
      %v6280 = vsub.f32 0.0, %v6198
      %v6281 = vsub.f32 0.0, %v6203
      %v6282 = vsub.f32 0.0, %v6208
      %v6283 = vsub.f32 0.0, %v6213
      %v6284 = vsub.f32 0.0, %v6218
      %v6285 = vsub.f32 0.0, %v6223
      %v6286 = vsub.f32 0.0, %v6228
      %v6287 = vsub.f32 0.0, %v6233
      %v6288 = vsub.f32 0.0, %v6238
      %v6289 = vsub.f32 0.0, %v6243
      %v6290 = vsub.f32 0.0, %v6248
      %v6291 = vsub.f32 0.0, %v6253
      %v6292 = vsub.f32 0.0, %v6258
      %v6293 = vsub.f32 0.0, %v6263
      %v6294 = vsub.f32 0.0, %v6268
      %v6295 = vsub.f32 0.0, %v6273
      %v6296 = vxor.u32 %v6276, 2147483648
      %v6297 = vxor.u32 %v6277, 2147483648
      %v6298 = vxor.u32 %v6278, 2147483648
      %v6299 = vxor.u32 %v6279, 2147483648
      %v6300 = vxor.u32 %v6280, 2147483648
      %v6301 = vxor.u32 %v6281, 2147483648
      %v6302 = vxor.u32 %v6282, 2147483648
      %v6303 = vxor.u32 %v6283, 2147483648
      %v6304 = vxor.u32 %v6284, 2147483648
      %v6305 = vxor.u32 %v6285, 2147483648
      %v6306 = vxor.u32 %v6286, 2147483648
      %v6307 = vxor.u32 %v6287, 2147483648
      %v6308 = vxor.u32 %v6288, 2147483648
      %v6309 = vxor.u32 %v6289, 2147483648
      %v6310 = vxor.u32 %v6290, 2147483648
      %v6311 = vxor.u32 %v6291, 2147483648
      %v6312 = vxor.u32 %v6292, 2147483648
      %v6313 = vxor.u32 %v6293, 2147483648
      %v6314 = vxor.u32 %v6294, 2147483648
      %v6315 = vxor.u32 %v6295, 2147483648
      %v6316 = vmul.f32 %v6296, 1.442695
      %v6317 = vpow.pop %v6316
      %v6318 = vmul.f32 %v6297, 1.442695
      %v6319 = vpow.pop %v6318
      %v6320 = vmul.f32 %v6298, 1.442695
      %v6321 = vpow.pop %v6320
      %v6322 = vmul.f32 %v6299, 1.442695
      %v6323 = vpow.pop %v6322
      %v6324 = vmul.f32 %v6300, 1.442695
      %v6325 = vpow.pop %v6324
      %v6326 = vmul.f32 %v6301, 1.442695
      %v6327 = vpow.pop %v6326
      %v6328 = vmul.f32 %v6302, 1.442695
      %v6329 = vpow.pop %v6328
      %v6330 = vmul.f32 %v6303, 1.442695
      %v6331 = vpow.pop %v6330
      %v6332 = vmul.f32 %v6304, 1.442695
      %v6333 = vpow.pop %v6332
      %v6334 = vmul.f32 %v6305, 1.442695
      %v6335 = vpow.pop %v6334
      %v6336 = vmul.f32 %v6306, 1.442695
      %v6337 = vpow.pop %v6336
      %v6338 = vmul.f32 %v6307, 1.442695
      %v6339 = vpow.pop %v6338
      %v6340 = vmul.f32 %v6308, 1.442695
      %v6341 = vpow.pop %v6340
      %v6342 = vmul.f32 %v6309, 1.442695
      %v6343 = vpow.pop %v6342
      %v6344 = vmul.f32 %v6310, 1.442695
      %v6345 = vpow.pop %v6344
      %v6346 = vmul.f32 %v6311, 1.442695
      %v6347 = vpow.pop %v6346
      %v6348 = vmul.f32 %v6312, 1.442695
      %v6349 = vpow.pop %v6348
      %v6350 = vmul.f32 %v6313, 1.442695
      %v6351 = vpow.pop %v6350
      %v6352 = vmul.f32 %v6314, 1.442695
      %v6353 = vpow.pop %v6352
      %v6354 = vmul.f32 %v6315, 1.442695
      %v6355 = vpow.pop %v6354
      %v6356 = vadd.f32 %v6317, 1.0
      %v6357 = vadd.f32 %v6319, 1.0
      %v6358 = vadd.f32 %v6321, 1.0
      %v6359 = vadd.f32 %v6323, 1.0
      %v6360 = vadd.f32 %v6325, 1.0
      %v6361 = vadd.f32 %v6327, 1.0
      %v6362 = vadd.f32 %v6329, 1.0
      %v6363 = vadd.f32 %v6331, 1.0
      %v6364 = vadd.f32 %v6333, 1.0
      %v6365 = vadd.f32 %v6335, 1.0
      %v6366 = vadd.f32 %v6337, 1.0
      %v6367 = vadd.f32 %v6339, 1.0
      %v6368 = vadd.f32 %v6341, 1.0
      %v6369 = vadd.f32 %v6343, 1.0
      %v6370 = vadd.f32 %v6345, 1.0
      %v6371 = vadd.f32 %v6347, 1.0
      %v6372 = vadd.f32 %v6349, 1.0
      %v6373 = vadd.f32 %v6351, 1.0
      %v6374 = vadd.f32 %v6353, 1.0
      %v6375 = vadd.f32 %v6355, 1.0
      %v6376 = vrcp.pop %v6356
      %v6377 = vmul.f32 1.0, %v6376
      %v6378 = vrcp.pop %v6357
      %v6379 = vmul.f32 1.0, %v6378
      %v6380 = vrcp.pop %v6358
      %v6381 = vmul.f32 1.0, %v6380
      %v6382 = vrcp.pop %v6359
      %v6383 = vmul.f32 1.0, %v6382
      %v6384 = vrcp.pop %v6360
      %v6385 = vmul.f32 1.0, %v6384
      %v6386 = vrcp.pop %v6361
      %v6387 = vmul.f32 1.0, %v6386
      %v6388 = vrcp.pop %v6362
      %v6389 = vmul.f32 1.0, %v6388
      %v6390 = vrcp.pop %v6363
      %v6391 = vmul.f32 1.0, %v6390
      %v6392 = vrcp.pop %v6364
      %v6393 = vmul.f32 1.0, %v6392
      %v6394 = vrcp.pop %v6365
      %v6395 = vmul.f32 1.0, %v6394
      %v6396 = vrcp.pop %v6366
      %v6397 = vmul.f32 1.0, %v6396
      %v6398 = vrcp.pop %v6367
      %v6399 = vmul.f32 1.0, %v6398
      %v6400 = vrcp.pop %v6368
      %v6401 = vmul.f32 1.0, %v6400
      %v6402 = vrcp.pop %v6369
      %v6403 = vmul.f32 1.0, %v6402
      %v6404 = vrcp.pop %v6370
      %v6405 = vmul.f32 1.0, %v6404
      %v6406 = vrcp.pop %v6371
      %v6407 = vmul.f32 1.0, %v6406
      %v6408 = vrcp.pop %v6372
      %v6409 = vmul.f32 1.0, %v6408
      %v6410 = vrcp.pop %v6373
      %v6411 = vmul.f32 1.0, %v6410
      %v6412 = vrcp.pop %v6374
      %v6413 = vmul.f32 1.0, %v6412
      %v6414 = vrcp.pop %v6375
      %v6415 = vmul.f32 1.0, %v6414
      %v6416 = vmul.f32 %v6377, %v6071
      %v6417 = vmul.f32 %v6379, %v6072
      %v6418 = vmul.f32 %v6381, %v6073
      %v6419 = vmul.f32 %v6383, %v6074
      %v6420 = vmul.f32 %v6385, %v6075
      %v6421 = vmul.f32 %v6387, %v6076
      %v6422 = vmul.f32 %v6389, %v6077
      %v6423 = vmul.f32 %v6391, %v6078
      %v6424 = vmul.f32 %v6393, %v6079
      %v6425 = vmul.f32 %v6395, %v6080
      %v6426 = vsub.f32 0.0, %v6071
      %v6427 = vsub.f32 0.0, %v6072
      %v6428 = vsub.f32 0.0, %v6073
      %v6429 = vsub.f32 0.0, %v6074
      %v6430 = vsub.f32 0.0, %v6075
      %v6431 = vsub.f32 0.0, %v6076
      %v6432 = vsub.f32 0.0, %v6077
      %v6433 = vsub.f32 0.0, %v6078
      %v6434 = vsub.f32 0.0, %v6079
      %v6435 = vsub.f32 0.0, %v6080
      %v6436 = vmul.f32 %v6397, %v6426
      %v6437 = vmul.f32 %v6399, %v6427
      %v6438 = vmul.f32 %v6401, %v6428
      %v6439 = vmul.f32 %v6403, %v6429
      %v6440 = vmul.f32 %v6405, %v6430
      %v6441 = vmul.f32 %v6407, %v6431
      %v6442 = vmul.f32 %v6409, %v6432
      %v6443 = vmul.f32 %v6411, %v6433
      %v6444 = vmul.f32 %v6413, %v6434
      %v6445 = vmul.f32 %v6415, %v6435
      %v6446 = vadd.f32 %v5983, %v6416
      %v6447 = vadd.f32 %v5986, %v6417
      %v6448 = vadd.f32 %v5991, %v6418
      %v6449 = vadd.f32 %v5994, %v6419
      %v6450 = vadd.f32 %v5999, %v6420
      %v6451 = vadd.f32 %v6002, %v6421
      %v6452 = vadd.f32 %v6007, %v6422
      %v6453 = vadd.f32 %v6010, %v6423
      %v6454 = vadd.f32 %v6015, %v6424
      %v6455 = vadd.f32 %v6018, %v6425
      %v6456 = vadd.f32 %v6023, %v6436
      %v6457 = vadd.f32 %v6026, %v6437
      %v6458 = vadd.f32 %v6031, %v6438
      %v6459 = vadd.f32 %v6034, %v6439
      %v6460 = vadd.f32 %v6039, %v6440
      %v6461 = vadd.f32 %v6042, %v6441
      %v6462 = vadd.f32 %v6047, %v6442
      %v6463 = vadd.f32 %v6050, %v6443
      %v6464 = vadd.f32 %v6055, %v6444
      %v6465 = vadd.f32 %v6058, %v6445
      %v6466 = vpack.c.bf16 %v6447, %v6446
      %v6467 = vpack.c.bf16 %v6449, %v6448
      %v6468 = vpack.c.bf16 %v6451, %v6450
      %v6469 = vpack.c.bf16 %v6453, %v6452
      %v6470 = vpack.c.bf16 %v6455, %v6454
      %v6471 = vpack.c.bf16 %v6457, %v6456
      %v6472 = vpack.c.bf16 %v6459, %v6458
      %v6473 = vpack.c.bf16 %v6461, %v6460
      %v6474 = vpack.c.bf16 %v6463, %v6462
      %v6475 = vpack.c.bf16 %v6465, %v6464
      %s6476 = scalar_lea.vmem %s10, 64
      %v6477 = vld [vmem:[%s6476] sm:$0xf]
      %v6478 = vld [vmem:[%s6476 + $0x4] sm:$0xf]
      %v6479 = vld [vmem:[%s6476 + $0x8] sm:$0xf]
      %v6480 = vld [vmem:[%s6476 + $0xc] sm:$0xf]
      %v6481 = vld [vmem:[%s6476 + $0x10] sm:$0xf]
      %v6482 = vld [vmem:[%s6476 + $0x14] sm:$0xf]
      %v6483 = vld [vmem:[%s6476 + $0x18] sm:$0xf]
      %v6484 = vld [vmem:[%s6476 + $0x1c] sm:$0xf]
      %v6485 = vld [vmem:[%s6476 + $0x20] sm:$0xf]
      %v6486 = vld [vmem:[%s6476 + $0x24] sm:$0xf]
      %v6487 = vld [vmem:[%s6476 + $0x28] sm:$0xf]
      %v6488 = vld [vmem:[%s6476 + $0x2c] sm:$0xf]
      %v6489 = vld [vmem:[%s6476 + $0x30] sm:$0xf]
      %v6490 = vld [vmem:[%s6476 + $0x34] sm:$0xf]
      %v6491 = vld [vmem:[%s6476 + $0x38] sm:$0xf]
      %v6492 = vld [vmem:[%s6476 + $0x3c] sm:$0xf]
      %v6493 = vld [vmem:[%s11 + $0x1] sm:$0x1]
      %v6494 = vlaneseq
      %v6495 = vshrl.u32 %v6494, 7
      %v6496 = vsub.s32 0, %v6495
      %v6497 = vrot.slane %v6493, %v6496
      %v6514 = vunpack.c.l.b16 %v6477
      %v6515 = vunpack.c.l.b16 %v6478
      %v6516 = vunpack.c.l.b16 %v6479
      %v6517 = vunpack.c.l.b16 %v6480
      %v6518 = vunpack.c.l.b16 %v6481
      %v6519 = vunpack.c.l.b16 %v6482
      %v6520 = vunpack.c.l.b16 %v6483
      %v6521 = vunpack.c.l.b16 %v6484
      %v6522 = vunpack.c.l.b16 %v6485
      %v6523 = vunpack.c.l.b16 %v6486
      %v6524 = vunpack.c.l.b16 %v6487
      %v6525 = vunpack.c.l.b16 %v6488
      %v6526 = vunpack.c.l.b16 %v6489
      %v6527 = vunpack.c.l.b16 %v6490
      %v6528 = vunpack.c.l.b16 %v6491
      %v6529 = vunpack.c.l.b16 %v6492
      %v6530 = vpack.c.b16 %v6515, %v6514
      %v6531 = vpack.c.b16 %v6517, %v6516
      %v6532 = vpack.c.b16 %v6519, %v6518
      %v6533 = vpack.c.b16 %v6521, %v6520
      %v6534 = vpack.c.b16 %v6523, %v6522
      %v6535 = vpack.c.b16 %v6525, %v6524
      %v6536 = vpack.c.b16 %v6527, %v6526
      %v6537 = vpack.c.b16 %v6529, %v6528
      %6546 = vmatprep.subr.bf16.mxu0 0
      %6547 = vmatpush1.bf16.msra.mxu0 %v6530
      %6548 = vmatprep.subr.bf16.mxu0 0
      %6549 = vmatpush1.bf16.msra.mxu0 %v6531
      %6550 = vmatprep.subr.bf16.mxu0 0
      %6551 = vmatpush1.bf16.msra.mxu0 %v6532
      %6552 = vmatprep.subr.bf16.mxu0 0
      %6553 = vmatpush1.bf16.msra.mxu0 %v6533
      %6554 = vmatprep.subr.bf16.mxu0 0
      %6555 = vmatpush1.bf16.msra.mxu0 %v6534
      %6556 = vmatprep.subr.bf16.mxu0 0
      %6557 = vmatpush1.bf16.msra.mxu0 %v6535
      %6558 = vmatprep.subr.bf16.mxu0 0
      %6559 = vmatpush1.bf16.msra.mxu0 %v6536
      %6560 = vmatprep.subr.bf16.mxu0 0
      %6561 = vmatpush1.bf16.msra.mxu0 %v6537
      %6562 = vmatprep.subr.bf16.mxu0 0
      %6563 = vmatpush1.bf16.msra.mxu0 0
      %6564 = vmatprep.subr.bf16.mxu0 0
      %6565 = vmatpush1.bf16.msra.mxu0 0
      %6566 = vmatprep.subr.bf16.mxu0 0
      %6567 = vmatpush1.bf16.msra.mxu0 0
      %6568 = vmatprep.subr.bf16.mxu0 0
      %6569 = vmatpush1.bf16.msra.mxu0 0
      %6570 = vmatprep.subr.bf16.mxu0 0
      %6571 = vmatpush1.bf16.msra.mxu0 0
      %6572 = vmatprep.subr.bf16.mxu0 0
      %6573 = vmatpush1.bf16.msra.mxu0 0
      %6574 = vmatprep.subr.bf16.mxu0 0
      %6575 = vmatpush1.bf16.msra.mxu0 0
      %6576 = vmatprep.subr.bf16.mxu0 0
      %6577 = vmatpush1.bf16.msra.mxu0 0
      %6578 = vmatprep.mubr.bf16.mxu0 0
      %6579 = vmatmul.mubr.bf16.gmra.mrb[0].mxu0 %v6466
      %v6580 = vpop.f32.mrb[0].mxu0
      %v6581 = vadd.f32 %v6497, %v6580
      %v6582 = vpop.f32.mrb[0].mxu0
      %v6583 = vpop.f32.mrb[0].mxu0
      %v6584 = vadd.f32 %v6497, %v6583
      %v6585 = vpop.f32.mrb[0].mxu0
      %6586 = vmatprep.mubr.bf16.mxu0 0
      %6587 = vmatmul.mubr.bf16.gmra.mrb[0].mxu0 %v6467
      %v6588 = vpop.f32.mrb[0].mxu0
      %v6589 = vadd.f32 %v6497, %v6588
      %v6590 = vpop.f32.mrb[0].mxu0
      %v6591 = vpop.f32.mrb[0].mxu0
      %v6592 = vadd.f32 %v6497, %v6591
      %v6593 = vpop.f32.mrb[0].mxu0
      %6594 = vmatprep.mubr.bf16.mxu0 0
      %6595 = vmatmul.mubr.bf16.gmra.mrb[0].mxu0 %v6468
      %v6596 = vpop.f32.mrb[0].mxu0
      %v6597 = vadd.f32 %v6497, %v6596
      %v6598 = vpop.f32.mrb[0].mxu0
      %v6599 = vpop.f32.mrb[0].mxu0
      %v6600 = vadd.f32 %v6497, %v6599
      %v6601 = vpop.f32.mrb[0].mxu0
      %6602 = vmatprep.mubr.bf16.mxu0 0
      %6603 = vmatmul.mubr.bf16.gmra.mrb[0].mxu0 %v6469
      %v6604 = vpop.f32.mrb[0].mxu0
      %v6605 = vadd.f32 %v6497, %v6604
      %v6606 = vpop.f32.mrb[0].mxu0
      %v6607 = vpop.f32.mrb[0].mxu0
      %v6608 = vadd.f32 %v6497, %v6607
      %v6609 = vpop.f32.mrb[0].mxu0
      %6610 = vmatprep.mubr.bf16.mxu0 0
      %6611 = vmatmul.mubr.bf16.gmra.mrb[0].mxu0 %v6470
      %v6612 = vpop.f32.mrb[0].mxu0
      %v6613 = vadd.f32 %v6497, %v6612
      %v6614 = vpop.f32.mrb[0].mxu0
      %v6615 = vpop.f32.mrb[0].mxu0
      %v6616 = vadd.f32 %v6497, %v6615
      %v6617 = vpop.f32.mrb[0].mxu0
      %6618 = vmatprep.mubr.bf16.mxu0 0
      %6619 = vmatmul.mubr.bf16.gmra.mrb[0].mxu0 %v6471
      %v6620 = vpop.f32.mrb[0].mxu0
      %v6621 = vadd.f32 %v6497, %v6620
      %v6622 = vpop.f32.mrb[0].mxu0
      %v6623 = vpop.f32.mrb[0].mxu0
      %v6624 = vadd.f32 %v6497, %v6623
      %v6625 = vpop.f32.mrb[0].mxu0
      %6626 = vmatprep.mubr.bf16.mxu0 0
      %6627 = vmatmul.mubr.bf16.gmra.mrb[0].mxu0 %v6472
      %v6628 = vpop.f32.mrb[0].mxu0
      %v6629 = vadd.f32 %v6497, %v6628
      %v6630 = vpop.f32.mrb[0].mxu0
      %v6631 = vpop.f32.mrb[0].mxu0
      %v6632 = vadd.f32 %v6497, %v6631
      %v6633 = vpop.f32.mrb[0].mxu0
      %6634 = vmatprep.mubr.bf16.mxu0 0
      %6635 = vmatmul.mubr.bf16.gmra.mrb[0].mxu0 %v6473
      %v6636 = vpop.f32.mrb[0].mxu0
      %v6637 = vadd.f32 %v6497, %v6636
      %v6638 = vpop.f32.mrb[0].mxu0
      %v6639 = vpop.f32.mrb[0].mxu0
      %v6640 = vadd.f32 %v6497, %v6639
      %v6641 = vpop.f32.mrb[0].mxu0
      %6642 = vmatprep.mubr.bf16.mxu0 0
      %6643 = vmatmul.mubr.bf16.gmra.mrb[0].mxu0 %v6474
      %v6644 = vpop.f32.mrb[0].mxu0
      %v6645 = vadd.f32 %v6497, %v6644
      %v6646 = vpop.f32.mrb[0].mxu0
      %v6647 = vpop.f32.mrb[0].mxu0
      %v6648 = vadd.f32 %v6497, %v6647
      %v6649 = vpop.f32.mrb[0].mxu0
      %6650 = vmatprep.mubr.bf16.mxu0 0
      %6651 = vmatmul.mubr.bf16.gmra.mrb[0].mxu0 %v6475
      %v6652 = vpop.f32.mrb[0].mxu0
      %v6653 = vadd.f32 %v6497, %v6652
      %v6654 = vpop.f32.mrb[0].mxu0
      %v6655 = vpop.f32.mrb[0].mxu0
      %v6656 = vadd.f32 %v6497, %v6655
      %v6657 = vpop.f32.mrb[0].mxu0
      %6658 = vdwg.mxu0
      %v6659 = vadd.f32 %v5336, %v6581
      %v6660 = vadd.f32 %v5337, %v6584
      %v6661 = vadd.f32 %v5338, %v6589
      %v6662 = vadd.f32 %v5339, %v6592
      %v6663 = vadd.f32 %v5340, %v6597
      %v6664 = vadd.f32 %v5341, %v6600
      %v6665 = vadd.f32 %v5342, %v6605
      %v6666 = vadd.f32 %v5343, %v6608
      %v6667 = vadd.f32 %v5344, %v6613
      %v6668 = vadd.f32 %v5345, %v6616
      %v6669 = vadd.f32 %v5346, %v6621
      %v6670 = vadd.f32 %v5347, %v6624
      %v6671 = vadd.f32 %v5348, %v6629
      %v6672 = vadd.f32 %v5349, %v6632
      %v6673 = vadd.f32 %v5350, %v6637
      %v6674 = vadd.f32 %v5351, %v6640
      %v6675 = vadd.f32 %v5352, %v6645
      %v6676 = vadd.f32 %v5353, %v6648
      %v6677 = vadd.f32 %v5354, %v6653
      %v6678 = vadd.f32 %v5355, %v6656
      %6679 = vadd.xlane.f32.xlu0 %v6659
      %v6680 = vpop.xlane.xlu0 %6679
      %6681 = vadd.xlane.f32.xlu0 %v6660
      %v6682 = vpop.xlane.xlu0 %6681
      %6683 = vadd.xlane.f32.xlu0 %v6661
      %v6684 = vpop.xlane.xlu0 %6683
      %6685 = vadd.xlane.f32.xlu0 %v6662
      %v6686 = vpop.xlane.xlu0 %6685
      %6687 = vadd.xlane.f32.xlu0 %v6663
      %v6688 = vpop.xlane.xlu0 %6687
      %6689 = vadd.xlane.f32.xlu0 %v6664
      %v6690 = vpop.xlane.xlu0 %6689
      %6691 = vadd.xlane.f32.xlu0 %v6665
      %v6692 = vpop.xlane.xlu0 %6691
      %6693 = vadd.xlane.f32.xlu0 %v6666
      %v6694 = vpop.xlane.xlu0 %6693
      %6695 = vadd.xlane.f32.xlu0 %v6667
      %v6696 = vpop.xlane.xlu0 %6695
      %6697 = vadd.xlane.f32.xlu0 %v6668
      %v6698 = vpop.xlane.xlu0 %6697
      %6699 = vadd.xlane.f32.xlu0 %v6669
      %v6700 = vpop.xlane.xlu0 %6699
      %6701 = vadd.xlane.f32.xlu0 %v6670
      %v6702 = vpop.xlane.xlu0 %6701
      %6703 = vadd.xlane.f32.xlu0 %v6671
      %v6704 = vpop.xlane.xlu0 %6703
      %6705 = vadd.xlane.f32.xlu0 %v6672
      %v6706 = vpop.xlane.xlu0 %6705
      %6707 = vadd.xlane.f32.xlu0 %v6673
      %v6708 = vpop.xlane.xlu0 %6707
      %6709 = vadd.xlane.f32.xlu0 %v6674
      %v6710 = vpop.xlane.xlu0 %6709
      %6711 = vadd.xlane.f32.xlu0 %v6675
      %v6712 = vpop.xlane.xlu0 %6711
      %6713 = vadd.xlane.f32.xlu0 %v6676
      %v6714 = vpop.xlane.xlu0 %6713
      %6715 = vadd.xlane.f32.xlu0 %v6677
      %v6716 = vpop.xlane.xlu0 %6715
      %6717 = vadd.xlane.f32.xlu0 %v6678
      %v6718 = vpop.xlane.xlu0 %6717
      %v6719 = vmul.f32 %v6680, %v2060
      %v6720 = vmul.f32 %v6682, %v2060
      %v6721 = vmul.f32 %v6684, %v2060
      %v6722 = vmul.f32 %v6686, %v2060
      %v6723 = vmul.f32 %v6688, %v2060
      %v6724 = vmul.f32 %v6690, %v2060
      %v6725 = vmul.f32 %v6692, %v2060
      %v6726 = vmul.f32 %v6694, %v2060
      %v6727 = vmul.f32 %v6696, %v2060
      %v6728 = vmul.f32 %v6698, %v2060
      %v6729 = vmul.f32 %v6700, %v2060
      %v6730 = vmul.f32 %v6702, %v2060
      %v6731 = vmul.f32 %v6704, %v2060
      %v6732 = vmul.f32 %v6706, %v2060
      %v6733 = vmul.f32 %v6708, %v2060
      %v6734 = vmul.f32 %v6710, %v2060
      %v6735 = vmul.f32 %v6712, %v2060
      %v6736 = vmul.f32 %v6714, %v2060
      %v6737 = vmul.f32 %v6716, %v2060
      %v6738 = vmul.f32 %v6718, %v2060
      %v6739 = vsub.f32 %v6659, %v6719
      %v6740 = vsub.f32 %v6660, %v6720
      %v6741 = vsub.f32 %v6661, %v6721
      %v6742 = vsub.f32 %v6662, %v6722
      %v6743 = vsub.f32 %v6663, %v6723
      %v6744 = vsub.f32 %v6664, %v6724
      %v6745 = vsub.f32 %v6665, %v6725
      %v6746 = vsub.f32 %v6666, %v6726
      %v6747 = vsub.f32 %v6667, %v6727
      %v6748 = vsub.f32 %v6668, %v6728
      %v6749 = vsub.f32 %v6669, %v6729
      %v6750 = vsub.f32 %v6670, %v6730
      %v6751 = vsub.f32 %v6671, %v6731
      %v6752 = vsub.f32 %v6672, %v6732
      %v6753 = vsub.f32 %v6673, %v6733
      %v6754 = vsub.f32 %v6674, %v6734
      %v6755 = vsub.f32 %v6675, %v6735
      %v6756 = vsub.f32 %v6676, %v6736
      %v6757 = vsub.f32 %v6677, %v6737
      %v6758 = vsub.f32 %v6678, %v6738
      %v6759 = vmul.f32 %v6739, %v6739
      %v6760 = vmul.f32 %v6740, %v6740
      %v6761 = vmul.f32 %v6741, %v6741
      %v6762 = vmul.f32 %v6742, %v6742
      %v6763 = vmul.f32 %v6743, %v6743
      %v6764 = vmul.f32 %v6744, %v6744
      %v6765 = vmul.f32 %v6745, %v6745
      %v6766 = vmul.f32 %v6746, %v6746
      %v6767 = vmul.f32 %v6747, %v6747
      %v6768 = vmul.f32 %v6748, %v6748
      %v6769 = vmul.f32 %v6749, %v6749
      %v6770 = vmul.f32 %v6750, %v6750
      %v6771 = vmul.f32 %v6751, %v6751
      %v6772 = vmul.f32 %v6752, %v6752
      %v6773 = vmul.f32 %v6753, %v6753
      %v6774 = vmul.f32 %v6754, %v6754
      %v6775 = vmul.f32 %v6755, %v6755
      %v6776 = vmul.f32 %v6756, %v6756
      %v6777 = vmul.f32 %v6757, %v6757
      %v6778 = vmul.f32 %v6758, %v6758
      %6779 = vadd.xlane.f32.xlu0 %v6759
      %v6780 = vpop.xlane.xlu0 %6779
      %6781 = vadd.xlane.f32.xlu0 %v6760
      %v6782 = vpop.xlane.xlu0 %6781
      %6783 = vadd.xlane.f32.xlu0 %v6761
      %v6784 = vpop.xlane.xlu0 %6783
      %6785 = vadd.xlane.f32.xlu0 %v6762
      %v6786 = vpop.xlane.xlu0 %6785
      %6787 = vadd.xlane.f32.xlu0 %v6763
      %v6788 = vpop.xlane.xlu0 %6787
      %6789 = vadd.xlane.f32.xlu0 %v6764
      %v6790 = vpop.xlane.xlu0 %6789
      %6791 = vadd.xlane.f32.xlu0 %v6765
      %v6792 = vpop.xlane.xlu0 %6791
      %6793 = vadd.xlane.f32.xlu0 %v6766
      %v6794 = vpop.xlane.xlu0 %6793
      %6795 = vadd.xlane.f32.xlu0 %v6767
      %v6796 = vpop.xlane.xlu0 %6795
      %6797 = vadd.xlane.f32.xlu0 %v6768
      %v6798 = vpop.xlane.xlu0 %6797
      %6799 = vadd.xlane.f32.xlu0 %v6769
      %v6800 = vpop.xlane.xlu0 %6799
      %6801 = vadd.xlane.f32.xlu0 %v6770
      %v6802 = vpop.xlane.xlu0 %6801
      %6803 = vadd.xlane.f32.xlu0 %v6771
      %v6804 = vpop.xlane.xlu0 %6803
      %6805 = vadd.xlane.f32.xlu0 %v6772
      %v6806 = vpop.xlane.xlu0 %6805
      %6807 = vadd.xlane.f32.xlu0 %v6773
      %v6808 = vpop.xlane.xlu0 %6807
      %6809 = vadd.xlane.f32.xlu0 %v6774
      %v6810 = vpop.xlane.xlu0 %6809
      %6811 = vadd.xlane.f32.xlu0 %v6775
      %v6812 = vpop.xlane.xlu0 %6811
      %6813 = vadd.xlane.f32.xlu0 %v6776
      %v6814 = vpop.xlane.xlu0 %6813
      %6815 = vadd.xlane.f32.xlu0 %v6777
      %v6816 = vpop.xlane.xlu0 %6815
      %6817 = vadd.xlane.f32.xlu0 %v6778
      %v6818 = vpop.xlane.xlu0 %6817
      %v6819 = vmul.f32 %v6780, %v2060
      %v6820 = vmul.f32 %v6782, %v2060
      %v6821 = vmul.f32 %v6784, %v2060
      %v6822 = vmul.f32 %v6786, %v2060
      %v6823 = vmul.f32 %v6788, %v2060
      %v6824 = vmul.f32 %v6790, %v2060
      %v6825 = vmul.f32 %v6792, %v2060
      %v6826 = vmul.f32 %v6794, %v2060
      %v6827 = vmul.f32 %v6796, %v2060
      %v6828 = vmul.f32 %v6798, %v2060
      %v6829 = vmul.f32 %v6800, %v2060
      %v6830 = vmul.f32 %v6802, %v2060
      %v6831 = vmul.f32 %v6804, %v2060
      %v6832 = vmul.f32 %v6806, %v2060
      %v6833 = vmul.f32 %v6808, %v2060
      %v6834 = vmul.f32 %v6810, %v2060
      %v6835 = vmul.f32 %v6812, %v2060
      %v6836 = vmul.f32 %v6814, %v2060
      %v6837 = vmul.f32 %v6816, %v2060
      %v6838 = vmul.f32 %v6818, %v2060
      %v6839 = vadd.f32 %v6819, 1e-05
      %v6840 = vadd.f32 %v6820, 1e-05
      %v6841 = vadd.f32 %v6821, 1e-05
      %v6842 = vadd.f32 %v6822, 1e-05
      %v6843 = vadd.f32 %v6823, 1e-05
      %v6844 = vadd.f32 %v6824, 1e-05
      %v6845 = vadd.f32 %v6825, 1e-05
      %v6846 = vadd.f32 %v6826, 1e-05
      %v6847 = vadd.f32 %v6827, 1e-05
      %v6848 = vadd.f32 %v6828, 1e-05
      %v6849 = vadd.f32 %v6829, 1e-05
      %v6850 = vadd.f32 %v6830, 1e-05
      %v6851 = vadd.f32 %v6831, 1e-05
      %v6852 = vadd.f32 %v6832, 1e-05
      %v6853 = vadd.f32 %v6833, 1e-05
      %v6854 = vadd.f32 %v6834, 1e-05
      %v6855 = vadd.f32 %v6835, 1e-05
      %v6856 = vadd.f32 %v6836, 1e-05
      %v6857 = vadd.f32 %v6837, 1e-05
      %v6858 = vadd.f32 %v6838, 1e-05
      %v6859 = vrsqrt.pop %v6839
      %v6860 = vrsqrt.pop %v6840
      %v6861 = vrsqrt.pop %v6841
      %v6862 = vrsqrt.pop %v6842
      %v6863 = vrsqrt.pop %v6843
      %v6864 = vrsqrt.pop %v6844
      %v6865 = vrsqrt.pop %v6845
      %v6866 = vrsqrt.pop %v6846
      %v6867 = vrsqrt.pop %v6847
      %v6868 = vrsqrt.pop %v6848
      %v6869 = vrsqrt.pop %v6849
      %v6870 = vrsqrt.pop %v6850
      %v6871 = vrsqrt.pop %v6851
      %v6872 = vrsqrt.pop %v6852
      %v6873 = vrsqrt.pop %v6853
      %v6874 = vrsqrt.pop %v6854
      %v6875 = vrsqrt.pop %v6855
      %v6876 = vrsqrt.pop %v6856
      %v6877 = vrsqrt.pop %v6857
      %v6878 = vrsqrt.pop %v6858
      %v6879 = vmul.f32 %v6739, %v6859
      %v6880 = vmul.f32 %v6740, %v6860
      %v6881 = vmul.f32 %v6741, %v6861
      %v6882 = vmul.f32 %v6742, %v6862
      %v6883 = vmul.f32 %v6743, %v6863
      %v6884 = vmul.f32 %v6744, %v6864
      %v6885 = vmul.f32 %v6745, %v6865
      %v6886 = vmul.f32 %v6746, %v6866
      %v6887 = vmul.f32 %v6747, %v6867
      %v6888 = vmul.f32 %v6748, %v6868
      %v6889 = vmul.f32 %v6749, %v6869
      %v6890 = vmul.f32 %v6750, %v6870
      %v6891 = vmul.f32 %v6751, %v6871
      %v6892 = vmul.f32 %v6752, %v6872
      %v6893 = vmul.f32 %v6753, %v6873
      %v6894 = vmul.f32 %v6754, %v6874
      %v6895 = vmul.f32 %v6755, %v6875
      %v6896 = vmul.f32 %v6756, %v6876
      %v6897 = vmul.f32 %v6757, %v6877
      %v6898 = vmul.f32 %v6758, %v6878
      %v6899 = vmul.f32 %v6879, %v5581
      %v6900 = vmul.f32 %v6880, %v5581
      %v6901 = vmul.f32 %v6881, %v5581
      %v6902 = vmul.f32 %v6882, %v5581
      %v6903 = vmul.f32 %v6883, %v5581
      %v6904 = vmul.f32 %v6884, %v5581
      %v6905 = vmul.f32 %v6885, %v5581
      %v6906 = vmul.f32 %v6886, %v5581
      %v6907 = vmul.f32 %v6887, %v5581
      %v6908 = vmul.f32 %v6888, %v5581
      %v6909 = vmul.f32 %v6889, %v5581
      %v6910 = vmul.f32 %v6890, %v5581
      %v6911 = vmul.f32 %v6891, %v5581
      %v6912 = vmul.f32 %v6892, %v5581
      %v6913 = vmul.f32 %v6893, %v5581
      %v6914 = vmul.f32 %v6894, %v5581
      %v6915 = vmul.f32 %v6895, %v5581
      %v6916 = vmul.f32 %v6896, %v5581
      %v6917 = vmul.f32 %v6897, %v5581
      %v6918 = vmul.f32 %v6898, %v5581
      %v6919 = vadd.f32 %v6899, %v5605
      %v6920 = vadd.f32 %v6900, %v5605
      %v6921 = vadd.f32 %v6901, %v5605
      %v6922 = vadd.f32 %v6902, %v5605
      %v6923 = vadd.f32 %v6903, %v5605
      %v6924 = vadd.f32 %v6904, %v5605
      %v6925 = vadd.f32 %v6905, %v5605
      %v6926 = vadd.f32 %v6906, %v5605
      %v6927 = vadd.f32 %v6907, %v5605
      %v6928 = vadd.f32 %v6908, %v5605
      %v6929 = vadd.f32 %v6909, %v5605
      %v6930 = vadd.f32 %v6910, %v5605
      %v6931 = vadd.f32 %v6911, %v5605
      %v6932 = vadd.f32 %v6912, %v5605
      %v6933 = vadd.f32 %v6913, %v5605
      %v6934 = vadd.f32 %v6914, %v5605
      %v6935 = vadd.f32 %v6915, %v5605
      %v6936 = vadd.f32 %v6916, %v5605
      %v6937 = vadd.f32 %v6917, %v5605
      %v6938 = vadd.f32 %v6918, %v5605
      %v6939 = vpack.c.bf16 %v6920, %v6919
      %v6940 = vpack.c.bf16 %v6922, %v6921
      %v6941 = vpack.c.bf16 %v6924, %v6923
      %v6942 = vpack.c.bf16 %v6926, %v6925
      %v6943 = vpack.c.bf16 %v6928, %v6927
      %v6944 = vpack.c.bf16 %v6930, %v6929
      %v6945 = vpack.c.bf16 %v6932, %v6931
      %v6946 = vpack.c.bf16 %v6934, %v6933
      %v6947 = vpack.c.bf16 %v6936, %v6935
      %v6948 = vpack.c.bf16 %v6938, %v6937
      %s6949 = scalar_lea.vmem %s12, 256
      %v6950 = vld [vmem:[%s6949] sm:$0xff]
      %v6951 = vld [vmem:[%s6949 + $0x8] sm:$0xff]
      %v6952 = vld [vmem:[%s6949 + $0x10] sm:$0xff]
      %v6953 = vld [vmem:[%s6949 + $0x18] sm:$0xff]
      %v6954 = vld [vmem:[%s6949 + $0x20] sm:$0xff]
      %v6955 = vld [vmem:[%s6949 + $0x28] sm:$0xff]
      %v6956 = vld [vmem:[%s6949 + $0x30] sm:$0xff]
      %v6957 = vld [vmem:[%s6949 + $0x38] sm:$0xff]
      %v6958 = vld [vmem:[%s6949 + $0x40] sm:$0xff]
      %v6959 = vld [vmem:[%s6949 + $0x48] sm:$0xff]
      %v6960 = vld [vmem:[%s6949 + $0x50] sm:$0xff]
      %v6961 = vld [vmem:[%s6949 + $0x58] sm:$0xff]
      %v6962 = vld [vmem:[%s6949 + $0x60] sm:$0xff]
      %v6963 = vld [vmem:[%s6949 + $0x68] sm:$0xff]
      %v6964 = vld [vmem:[%s6949 + $0x70] sm:$0xff]
      %v6965 = vld [vmem:[%s6949 + $0x78] sm:$0xff]
      %v6966 = vld [vmem:[%s6949 + $0x80] sm:$0xff]
      %v6967 = vld [vmem:[%s6949 + $0x88] sm:$0xff]
      %v6968 = vld [vmem:[%s6949 + $0x90] sm:$0xff]
      %v6969 = vld [vmem:[%s6949 + $0x98] sm:$0xff]
      %v6970 = vld [vmem:[%s6949 + $0xa0] sm:$0xff]
      %v6971 = vld [vmem:[%s6949 + $0xa8] sm:$0xff]
      %v6972 = vld [vmem:[%s6949 + $0xb0] sm:$0xff]
      %v6973 = vld [vmem:[%s6949 + $0xb8] sm:$0xff]
      %v6974 = vld [vmem:[%s6949 + $0xc0] sm:$0xff]
      %v6975 = vld [vmem:[%s6949 + $0xc8] sm:$0xff]
      %v6976 = vld [vmem:[%s6949 + $0xd0] sm:$0xff]
      %v6977 = vld [vmem:[%s6949 + $0xd8] sm:$0xff]
      %v6978 = vld [vmem:[%s6949 + $0xe0] sm:$0xff]
      %v6979 = vld [vmem:[%s6949 + $0xe8] sm:$0xff]
      %v6980 = vld [vmem:[%s6949 + $0xf0] sm:$0xff]
      %v6981 = vld [vmem:[%s6949 + $0xf8] sm:$0xff]
      %s6982 = scalar_lea.vmem %s13, 1
      %v6983 = vld [vmem:[%s6982] ss:$2 sm:$0xf]
      %v6985 = vlaneseq
      %v6986 = vshrl.u32 %v6985, 7
      %v6987 = vsub.s32 0, %v6986
      %v6988 = vrot.slane %v6983, %v6987
      %v6989 = vlaneseq
      %v6990 = vshrl.u32 %v6989, 7
      %v6991 = vsub.s32 1, %v6990
      %v6992 = vrot.slane %v6983, %v6991
      %v6993 = vlaneseq
      %v6994 = vshrl.u32 %v6993, 7
      %v6995 = vsub.s32 2, %v6994
      %v6996 = vrot.slane %v6983, %v6995
      %v6997 = vlaneseq
      %v6998 = vshrl.u32 %v6997, 7
      %v6999 = vsub.s32 3, %v6998
      %v7000 = vrot.slane %v6983, %v6999
      %v7037 = vunpack.c.l.b16 %v6950
      %v7038 = vunpack.c.h.b16 %v6950
      %v7039 = vunpack.c.l.b16 %v6951
      %v7040 = vunpack.c.h.b16 %v6951
      %v7041 = vunpack.c.l.b16 %v6952
      %v7042 = vunpack.c.h.b16 %v6952
      %v7043 = vunpack.c.l.b16 %v6953
      %v7044 = vunpack.c.h.b16 %v6953
      %v7045 = vunpack.c.l.b16 %v6954
      %v7046 = vunpack.c.h.b16 %v6954
      %v7047 = vunpack.c.l.b16 %v6955
      %v7048 = vunpack.c.h.b16 %v6955
      %v7049 = vunpack.c.l.b16 %v6956
      %v7050 = vunpack.c.h.b16 %v6956
      %v7051 = vunpack.c.l.b16 %v6957
      %v7052 = vunpack.c.h.b16 %v6957
      %v7053 = vunpack.c.l.b16 %v6958
      %v7054 = vunpack.c.h.b16 %v6958
      %v7055 = vunpack.c.l.b16 %v6959
      %v7056 = vunpack.c.h.b16 %v6959
      %v7057 = vunpack.c.l.b16 %v6960
      %v7058 = vunpack.c.h.b16 %v6960
      %v7059 = vunpack.c.l.b16 %v6961
      %v7060 = vunpack.c.h.b16 %v6961
      %v7061 = vunpack.c.l.b16 %v6962
      %v7062 = vunpack.c.h.b16 %v6962
      %v7063 = vunpack.c.l.b16 %v6963
      %v7064 = vunpack.c.h.b16 %v6963
      %v7065 = vunpack.c.l.b16 %v6964
      %v7066 = vunpack.c.h.b16 %v6964
      %v7067 = vunpack.c.l.b16 %v6965
      %v7068 = vunpack.c.h.b16 %v6965
      %v7069 = vunpack.c.l.b16 %v6966
      %v7070 = vunpack.c.h.b16 %v6966
      %v7071 = vunpack.c.l.b16 %v6967
      %v7072 = vunpack.c.h.b16 %v6967
      %v7073 = vunpack.c.l.b16 %v6968
      %v7074 = vunpack.c.h.b16 %v6968
      %v7075 = vunpack.c.l.b16 %v6969
      %v7076 = vunpack.c.h.b16 %v6969
      %v7077 = vunpack.c.l.b16 %v6970
      %v7078 = vunpack.c.h.b16 %v6970
      %v7079 = vunpack.c.l.b16 %v6971
      %v7080 = vunpack.c.h.b16 %v6971
      %v7081 = vunpack.c.l.b16 %v6972
      %v7082 = vunpack.c.h.b16 %v6972
      %v7083 = vunpack.c.l.b16 %v6973
      %v7084 = vunpack.c.h.b16 %v6973
      %v7085 = vunpack.c.l.b16 %v6974
      %v7086 = vunpack.c.h.b16 %v6974
      %v7087 = vunpack.c.l.b16 %v6975
      %v7088 = vunpack.c.h.b16 %v6975
      %v7089 = vunpack.c.l.b16 %v6976
      %v7090 = vunpack.c.h.b16 %v6976
      %v7091 = vunpack.c.l.b16 %v6977
      %v7092 = vunpack.c.h.b16 %v6977
      %v7093 = vunpack.c.l.b16 %v6978
      %v7094 = vunpack.c.h.b16 %v6978
      %v7095 = vunpack.c.l.b16 %v6979
      %v7096 = vunpack.c.h.b16 %v6979
      %v7097 = vunpack.c.l.b16 %v6980
      %v7098 = vunpack.c.h.b16 %v6980
      %v7099 = vunpack.c.l.b16 %v6981
      %v7100 = vunpack.c.h.b16 %v6981
      %v7101 = vpack.c.b16 %v7041, %v7037
      %v7102 = vpack.c.b16 %v7042, %v7038
      %v7103 = vpack.c.b16 %v7043, %v7039
      %v7104 = vpack.c.b16 %v7044, %v7040
      %v7105 = vpack.c.b16 %v7049, %v7045
      %v7106 = vpack.c.b16 %v7050, %v7046
      %v7107 = vpack.c.b16 %v7051, %v7047
      %v7108 = vpack.c.b16 %v7052, %v7048
      %v7109 = vpack.c.b16 %v7057, %v7053
      %v7110 = vpack.c.b16 %v7058, %v7054
      %v7111 = vpack.c.b16 %v7059, %v7055
      %v7112 = vpack.c.b16 %v7060, %v7056
      %v7113 = vpack.c.b16 %v7065, %v7061
      %v7114 = vpack.c.b16 %v7066, %v7062
      %v7115 = vpack.c.b16 %v7067, %v7063
      %v7116 = vpack.c.b16 %v7068, %v7064
      %v7117 = vpack.c.b16 %v7073, %v7069
      %v7118 = vpack.c.b16 %v7074, %v7070
      %v7119 = vpack.c.b16 %v7075, %v7071
      %v7120 = vpack.c.b16 %v7076, %v7072
      %v7121 = vpack.c.b16 %v7081, %v7077
      %v7122 = vpack.c.b16 %v7082, %v7078
      %v7123 = vpack.c.b16 %v7083, %v7079
      %v7124 = vpack.c.b16 %v7084, %v7080
      %v7125 = vpack.c.b16 %v7089, %v7085
      %v7126 = vpack.c.b16 %v7090, %v7086
      %v7127 = vpack.c.b16 %v7091, %v7087
      %v7128 = vpack.c.b16 %v7092, %v7088
      %v7129 = vpack.c.b16 %v7097, %v7093
      %v7130 = vpack.c.b16 %v7098, %v7094
      %v7131 = vpack.c.b16 %v7099, %v7095
      %v7132 = vpack.c.b16 %v7100, %v7096
      %7165 = vmatprep.subr.bf16.mxu0 %v7102
      %7166 = vmatpush1.bf16.msra.mxu0 %v7101
      %7167 = vmatprep.subr.bf16.mxu0 %v7106
      %7168 = vmatpush1.bf16.msra.mxu0 %v7105
      %7169 = vmatprep.subr.bf16.mxu0 %v7110
      %7170 = vmatpush1.bf16.msra.mxu0 %v7109
      %7171 = vmatprep.subr.bf16.mxu0 %v7114
      %7172 = vmatpush1.bf16.msra.mxu0 %v7113
      %7173 = vmatprep.subr.bf16.mxu0 %v7118
      %7174 = vmatpush1.bf16.msra.mxu0 %v7117
      %7175 = vmatprep.subr.bf16.mxu0 %v7122
      %7176 = vmatpush1.bf16.msra.mxu0 %v7121
      %7177 = vmatprep.subr.bf16.mxu0 %v7126
      %7178 = vmatpush1.bf16.msra.mxu0 %v7125
      %7179 = vmatprep.subr.bf16.mxu0 %v7130
      %7180 = vmatpush1.bf16.msra.mxu0 %v7129
      %7181 = vmatprep.subr.bf16.mxu0 0
      %7182 = vmatpush1.bf16.msra.mxu0 0
      %7183 = vmatprep.subr.bf16.mxu0 0
      %7184 = vmatpush1.bf16.msra.mxu0 0
      %7185 = vmatprep.subr.bf16.mxu0 0
      %7186 = vmatpush1.bf16.msra.mxu0 0
      %7187 = vmatprep.subr.bf16.mxu0 0
      %7188 = vmatpush1.bf16.msra.mxu0 0
      %7189 = vmatprep.subr.bf16.mxu0 0
      %7190 = vmatpush1.bf16.msra.mxu0 0
      %7191 = vmatprep.subr.bf16.mxu0 0
      %7192 = vmatpush1.bf16.msra.mxu0 0
      %7193 = vmatprep.subr.bf16.mxu0 0
      %7194 = vmatpush1.bf16.msra.mxu0 0
      %7195 = vmatprep.subr.bf16.mxu0 0
      %7196 = vmatpush1.bf16.msra.mxu0 0
      %7197 = vmatprep.mubr.bf16.mxu0 0
      %7198 = vmatmul.mubr.bf16.gmra.mrb[0].mxu0 %v6939
      %v7199 = vpop.f32.mrb[0].mxu0
      %v7200 = vadd.f32 %v6988, %v7199
      %v7201 = vpop.f32.mrb[0].mxu0
      %v7202 = vadd.f32 %v6992, %v7201
      %v7203 = vpop.f32.mrb[0].mxu0
      %v7204 = vadd.f32 %v6988, %v7203
      %v7205 = vpop.f32.mrb[0].mxu0
      %v7206 = vadd.f32 %v6992, %v7205
      %7207 = vmatprep.mubr.bf16.mxu0 0
      %7208 = vmatmul.mubr.bf16.gmra.mrb[0].mxu0 %v6940
      %v7209 = vpop.f32.mrb[0].mxu0
      %v7210 = vadd.f32 %v6988, %v7209
      %v7211 = vpop.f32.mrb[0].mxu0
      %v7212 = vadd.f32 %v6992, %v7211
      %v7213 = vpop.f32.mrb[0].mxu0
      %v7214 = vadd.f32 %v6988, %v7213
      %v7215 = vpop.f32.mrb[0].mxu0
      %v7216 = vadd.f32 %v6992, %v7215
      %7217 = vmatprep.mubr.bf16.mxu0 0
      %7218 = vmatmul.mubr.bf16.gmra.mrb[0].mxu0 %v6941
      %v7219 = vpop.f32.mrb[0].mxu0
      %v7220 = vadd.f32 %v6988, %v7219
      %v7221 = vpop.f32.mrb[0].mxu0
      %v7222 = vadd.f32 %v6992, %v7221
      %v7223 = vpop.f32.mrb[0].mxu0
      %v7224 = vadd.f32 %v6988, %v7223
      %v7225 = vpop.f32.mrb[0].mxu0
      %v7226 = vadd.f32 %v6992, %v7225
      %7227 = vmatprep.mubr.bf16.mxu0 0
      %7228 = vmatmul.mubr.bf16.gmra.mrb[0].mxu0 %v6942
      %v7229 = vpop.f32.mrb[0].mxu0
      %v7230 = vadd.f32 %v6988, %v7229
      %v7231 = vpop.f32.mrb[0].mxu0
      %v7232 = vadd.f32 %v6992, %v7231
      %v7233 = vpop.f32.mrb[0].mxu0
      %v7234 = vadd.f32 %v6988, %v7233
      %v7235 = vpop.f32.mrb[0].mxu0
      %v7236 = vadd.f32 %v6992, %v7235
      %7237 = vmatprep.mubr.bf16.mxu0 0
      %7238 = vmatmul.mubr.bf16.gmra.mrb[0].mxu0 %v6943
      %v7239 = vpop.f32.mrb[0].mxu0
      %v7240 = vadd.f32 %v6988, %v7239
      %v7241 = vpop.f32.mrb[0].mxu0
      %v7242 = vadd.f32 %v6992, %v7241
      %v7243 = vpop.f32.mrb[0].mxu0
      %v7244 = vadd.f32 %v6988, %v7243
      %v7245 = vpop.f32.mrb[0].mxu0
      %v7246 = vadd.f32 %v6992, %v7245
      %7247 = vmatprep.mubr.bf16.mxu0 0
      %7248 = vmatmul.mubr.bf16.gmra.mrb[0].mxu0 %v6944
      %v7249 = vpop.f32.mrb[0].mxu0
      %v7250 = vadd.f32 %v6988, %v7249
      %v7251 = vpop.f32.mrb[0].mxu0
      %v7252 = vadd.f32 %v6992, %v7251
      %v7253 = vpop.f32.mrb[0].mxu0
      %v7254 = vadd.f32 %v6988, %v7253
      %v7255 = vpop.f32.mrb[0].mxu0
      %v7256 = vadd.f32 %v6992, %v7255
      %7257 = vmatprep.mubr.bf16.mxu0 0
      %7258 = vmatmul.mubr.bf16.gmra.mrb[0].mxu0 %v6945
      %v7259 = vpop.f32.mrb[0].mxu0
      %v7260 = vadd.f32 %v6988, %v7259
      %v7261 = vpop.f32.mrb[0].mxu0
      %v7262 = vadd.f32 %v6992, %v7261
      %v7263 = vpop.f32.mrb[0].mxu0
      %v7264 = vadd.f32 %v6988, %v7263
      %v7265 = vpop.f32.mrb[0].mxu0
      %v7266 = vadd.f32 %v6992, %v7265
      %7267 = vmatprep.mubr.bf16.mxu0 0
      %7268 = vmatmul.mubr.bf16.gmra.mrb[0].mxu0 %v6946
      %v7269 = vpop.f32.mrb[0].mxu0
      %v7270 = vadd.f32 %v6988, %v7269
      %v7271 = vpop.f32.mrb[0].mxu0
      %v7272 = vadd.f32 %v6992, %v7271
      %v7273 = vpop.f32.mrb[0].mxu0
      %v7274 = vadd.f32 %v6988, %v7273
      %v7275 = vpop.f32.mrb[0].mxu0
      %v7276 = vadd.f32 %v6992, %v7275
      %7277 = vmatprep.mubr.bf16.mxu0 0
      %7278 = vmatmul.mubr.bf16.gmra.mrb[0].mxu0 %v6947
      %v7279 = vpop.f32.mrb[0].mxu0
      %v7280 = vadd.f32 %v6988, %v7279
      %v7281 = vpop.f32.mrb[0].mxu0
      %v7282 = vadd.f32 %v6992, %v7281
      %v7283 = vpop.f32.mrb[0].mxu0
      %v7284 = vadd.f32 %v6988, %v7283
      %v7285 = vpop.f32.mrb[0].mxu0
      %v7286 = vadd.f32 %v6992, %v7285
      %7287 = vmatprep.mubr.bf16.mxu0 0
      %7288 = vmatmul.mubr.bf16.gmra.mrb[0].mxu0 %v6948
      %v7289 = vpop.f32.mrb[0].mxu0
      %v7290 = vadd.f32 %v6988, %v7289
      %v7291 = vpop.f32.mrb[0].mxu0
      %v7292 = vadd.f32 %v6992, %v7291
      %v7293 = vpop.f32.mrb[0].mxu0
      %v7294 = vadd.f32 %v6988, %v7293
      %v7295 = vpop.f32.mrb[0].mxu0
      %v7296 = vadd.f32 %v6992, %v7295
      %7297 = vdwg.mxu0
      %7298 = vmatprep.subr.bf16.mxu0 %v7104
      %7299 = vmatpush1.bf16.msra.mxu0 %v7103
      %7300 = vmatprep.subr.bf16.mxu0 %v7108
      %7301 = vmatpush1.bf16.msra.mxu0 %v7107
      %7302 = vmatprep.subr.bf16.mxu0 %v7112
      %7303 = vmatpush1.bf16.msra.mxu0 %v7111
      %7304 = vmatprep.subr.bf16.mxu0 %v7116
      %7305 = vmatpush1.bf16.msra.mxu0 %v7115
      %7306 = vmatprep.subr.bf16.mxu0 %v7120
      %7307 = vmatpush1.bf16.msra.mxu0 %v7119
      %7308 = vmatprep.subr.bf16.mxu0 %v7124
      %7309 = vmatpush1.bf16.msra.mxu0 %v7123
      %7310 = vmatprep.subr.bf16.mxu0 %v7128
      %7311 = vmatpush1.bf16.msra.mxu0 %v7127
      %7312 = vmatprep.subr.bf16.mxu0 %v7132
      %7313 = vmatpush1.bf16.msra.mxu0 %v7131
      %7314 = vmatprep.subr.bf16.mxu0 0
      %7315 = vmatpush1.bf16.msra.mxu0 0
      %7316 = vmatprep.subr.bf16.mxu0 0
      %7317 = vmatpush1.bf16.msra.mxu0 0
      %7318 = vmatprep.subr.bf16.mxu0 0
      %7319 = vmatpush1.bf16.msra.mxu0 0
      %7320 = vmatprep.subr.bf16.mxu0 0
      %7321 = vmatpush1.bf16.msra.mxu0 0
      %7322 = vmatprep.subr.bf16.mxu0 0
      %7323 = vmatpush1.bf16.msra.mxu0 0
      %7324 = vmatprep.subr.bf16.mxu0 0
      %7325 = vmatpush1.bf16.msra.mxu0 0
      %7326 = vmatprep.subr.bf16.mxu0 0
      %7327 = vmatpush1.bf16.msra.mxu0 0
      %7328 = vmatprep.subr.bf16.mxu0 0
      %7329 = vmatpush1.bf16.msra.mxu0 0
      %7330 = vmatprep.mubr.bf16.mxu0 0
      %7331 = vmatmul.mubr.bf16.gmra.mrb[0].mxu0 %v6939
      %v7332 = vpop.f32.mrb[0].mxu0
      %v7333 = vadd.f32 %v6996, %v7332
      %v7334 = vpop.f32.mrb[0].mxu0
      %v7335 = vadd.f32 %v7000, %v7334
      %v7336 = vpop.f32.mrb[0].mxu0
      %v7337 = vadd.f32 %v6996, %v7336
      %v7338 = vpop.f32.mrb[0].mxu0
      %v7339 = vadd.f32 %v7000, %v7338
      %7340 = vmatprep.mubr.bf16.mxu0 0
      %7341 = vmatmul.mubr.bf16.gmra.mrb[0].mxu0 %v6940
      %v7342 = vpop.f32.mrb[0].mxu0
      %v7343 = vadd.f32 %v6996, %v7342
      %v7344 = vpop.f32.mrb[0].mxu0
      %v7345 = vadd.f32 %v7000, %v7344
      %v7346 = vpop.f32.mrb[0].mxu0
      %v7347 = vadd.f32 %v6996, %v7346
      %v7348 = vpop.f32.mrb[0].mxu0
      %v7349 = vadd.f32 %v7000, %v7348
      %7350 = vmatprep.mubr.bf16.mxu0 0
      %7351 = vmatmul.mubr.bf16.gmra.mrb[0].mxu0 %v6941
      %v7352 = vpop.f32.mrb[0].mxu0
      %v7353 = vadd.f32 %v6996, %v7352
      %v7354 = vpop.f32.mrb[0].mxu0
      %v7355 = vadd.f32 %v7000, %v7354
      %v7356 = vpop.f32.mrb[0].mxu0
      %v7357 = vadd.f32 %v6996, %v7356
      %v7358 = vpop.f32.mrb[0].mxu0
      %v7359 = vadd.f32 %v7000, %v7358
      %7360 = vmatprep.mubr.bf16.mxu0 0
      %7361 = vmatmul.mubr.bf16.gmra.mrb[0].mxu0 %v6942
      %v7362 = vpop.f32.mrb[0].mxu0
      %v7363 = vadd.f32 %v6996, %v7362
      %v7364 = vpop.f32.mrb[0].mxu0
      %v7365 = vadd.f32 %v7000, %v7364
      %v7366 = vpop.f32.mrb[0].mxu0
      %v7367 = vadd.f32 %v6996, %v7366
      %v7368 = vpop.f32.mrb[0].mxu0
      %v7369 = vadd.f32 %v7000, %v7368
      %7370 = vmatprep.mubr.bf16.mxu0 0
      %7371 = vmatmul.mubr.bf16.gmra.mrb[0].mxu0 %v6943
      %v7372 = vpop.f32.mrb[0].mxu0
      %v7373 = vadd.f32 %v6996, %v7372
      %v7374 = vpop.f32.mrb[0].mxu0
      %v7375 = vadd.f32 %v7000, %v7374
      %v7376 = vpop.f32.mrb[0].mxu0
      %v7377 = vadd.f32 %v6996, %v7376
      %v7378 = vpop.f32.mrb[0].mxu0
      %v7379 = vadd.f32 %v7000, %v7378
      %7380 = vmatprep.mubr.bf16.mxu0 0
      %7381 = vmatmul.mubr.bf16.gmra.mrb[0].mxu0 %v6944
      %v7382 = vpop.f32.mrb[0].mxu0
      %v7383 = vadd.f32 %v6996, %v7382
      %v7384 = vpop.f32.mrb[0].mxu0
      %v7385 = vadd.f32 %v7000, %v7384
      %v7386 = vpop.f32.mrb[0].mxu0
      %v7387 = vadd.f32 %v6996, %v7386
      %v7388 = vpop.f32.mrb[0].mxu0
      %v7389 = vadd.f32 %v7000, %v7388
      %7390 = vmatprep.mubr.bf16.mxu0 0
      %7391 = vmatmul.mubr.bf16.gmra.mrb[0].mxu0 %v6945
      %v7392 = vpop.f32.mrb[0].mxu0
      %v7393 = vadd.f32 %v6996, %v7392
      %v7394 = vpop.f32.mrb[0].mxu0
      %v7395 = vadd.f32 %v7000, %v7394
      %v7396 = vpop.f32.mrb[0].mxu0
      %v7397 = vadd.f32 %v6996, %v7396
      %v7398 = vpop.f32.mrb[0].mxu0
      %v7399 = vadd.f32 %v7000, %v7398
      %7400 = vmatprep.mubr.bf16.mxu0 0
      %7401 = vmatmul.mubr.bf16.gmra.mrb[0].mxu0 %v6946
      %v7402 = vpop.f32.mrb[0].mxu0
      %v7403 = vadd.f32 %v6996, %v7402
      %v7404 = vpop.f32.mrb[0].mxu0
      %v7405 = vadd.f32 %v7000, %v7404
      %v7406 = vpop.f32.mrb[0].mxu0
      %v7407 = vadd.f32 %v6996, %v7406
      %v7408 = vpop.f32.mrb[0].mxu0
      %v7409 = vadd.f32 %v7000, %v7408
      %7410 = vmatprep.mubr.bf16.mxu0 0
      %7411 = vmatmul.mubr.bf16.gmra.mrb[0].mxu0 %v6947
      %v7412 = vpop.f32.mrb[0].mxu0
      %v7413 = vadd.f32 %v6996, %v7412
      %v7414 = vpop.f32.mrb[0].mxu0
      %v7415 = vadd.f32 %v7000, %v7414
      %v7416 = vpop.f32.mrb[0].mxu0
      %v7417 = vadd.f32 %v6996, %v7416
      %v7418 = vpop.f32.mrb[0].mxu0
      %v7419 = vadd.f32 %v7000, %v7418
      %7420 = vmatprep.mubr.bf16.mxu0 0
      %7421 = vmatmul.mubr.bf16.gmra.mrb[0].mxu0 %v6948
      %v7422 = vpop.f32.mrb[0].mxu0
      %v7423 = vadd.f32 %v6996, %v7422
      %v7424 = vpop.f32.mrb[0].mxu0
      %v7425 = vadd.f32 %v7000, %v7424
      %v7426 = vpop.f32.mrb[0].mxu0
      %v7427 = vadd.f32 %v6996, %v7426
      %v7428 = vpop.f32.mrb[0].mxu0
      %v7429 = vadd.f32 %v7000, %v7428
      %7430 = vdwg.mxu0
      %v7431 = vmul.f32 %v7200, %v7200
      %v7432 = vmul.f32 %v7202, %v7202
      %v7433 = vmul.f32 %v7333, %v7333
      %v7434 = vmul.f32 %v7335, %v7335
      %v7435 = vmul.f32 %v7204, %v7204
      %v7436 = vmul.f32 %v7206, %v7206
      %v7437 = vmul.f32 %v7337, %v7337
      %v7438 = vmul.f32 %v7339, %v7339
      %v7439 = vmul.f32 %v7210, %v7210
      %v7440 = vmul.f32 %v7212, %v7212
      %v7441 = vmul.f32 %v7343, %v7343
      %v7442 = vmul.f32 %v7345, %v7345
      %v7443 = vmul.f32 %v7214, %v7214
      %v7444 = vmul.f32 %v7216, %v7216
      %v7445 = vmul.f32 %v7347, %v7347
      %v7446 = vmul.f32 %v7349, %v7349
      %v7447 = vmul.f32 %v7220, %v7220
      %v7448 = vmul.f32 %v7222, %v7222
      %v7449 = vmul.f32 %v7353, %v7353
      %v7450 = vmul.f32 %v7355, %v7355
      %v7451 = vmul.f32 %v7224, %v7224
      %v7452 = vmul.f32 %v7226, %v7226
      %v7453 = vmul.f32 %v7357, %v7357
      %v7454 = vmul.f32 %v7359, %v7359
      %v7455 = vmul.f32 %v7230, %v7230
      %v7456 = vmul.f32 %v7232, %v7232
      %v7457 = vmul.f32 %v7363, %v7363
      %v7458 = vmul.f32 %v7365, %v7365
      %v7459 = vmul.f32 %v7234, %v7234
      %v7460 = vmul.f32 %v7236, %v7236
      %v7461 = vmul.f32 %v7367, %v7367
      %v7462 = vmul.f32 %v7369, %v7369
      %v7463 = vmul.f32 %v7240, %v7240
      %v7464 = vmul.f32 %v7242, %v7242
      %v7465 = vmul.f32 %v7373, %v7373
      %v7466 = vmul.f32 %v7375, %v7375
      %v7467 = vmul.f32 %v7244, %v7244
      %v7468 = vmul.f32 %v7246, %v7246
      %v7469 = vmul.f32 %v7377, %v7377
      %v7470 = vmul.f32 %v7379, %v7379
      %v7471 = vmul.f32 %v7250, %v7250
      %v7472 = vmul.f32 %v7252, %v7252
      %v7473 = vmul.f32 %v7383, %v7383
      %v7474 = vmul.f32 %v7385, %v7385
      %v7475 = vmul.f32 %v7254, %v7254
      %v7476 = vmul.f32 %v7256, %v7256
      %v7477 = vmul.f32 %v7387, %v7387
      %v7478 = vmul.f32 %v7389, %v7389
      %v7479 = vmul.f32 %v7260, %v7260
      %v7480 = vmul.f32 %v7262, %v7262
      %v7481 = vmul.f32 %v7393, %v7393
      %v7482 = vmul.f32 %v7395, %v7395
      %v7483 = vmul.f32 %v7264, %v7264
      %v7484 = vmul.f32 %v7266, %v7266
      %v7485 = vmul.f32 %v7397, %v7397
      %v7486 = vmul.f32 %v7399, %v7399
      %v7487 = vmul.f32 %v7270, %v7270
      %v7488 = vmul.f32 %v7272, %v7272
      %v7489 = vmul.f32 %v7403, %v7403
      %v7490 = vmul.f32 %v7405, %v7405
      %v7491 = vmul.f32 %v7274, %v7274
      %v7492 = vmul.f32 %v7276, %v7276
      %v7493 = vmul.f32 %v7407, %v7407
      %v7494 = vmul.f32 %v7409, %v7409
      %v7495 = vmul.f32 %v7280, %v7280
      %v7496 = vmul.f32 %v7282, %v7282
      %v7497 = vmul.f32 %v7413, %v7413
      %v7498 = vmul.f32 %v7415, %v7415
      %v7499 = vmul.f32 %v7284, %v7284
      %v7500 = vmul.f32 %v7286, %v7286
      %v7501 = vmul.f32 %v7417, %v7417
      %v7502 = vmul.f32 %v7419, %v7419
      %v7503 = vmul.f32 %v7290, %v7290
      %v7504 = vmul.f32 %v7292, %v7292
      %v7505 = vmul.f32 %v7423, %v7423
      %v7506 = vmul.f32 %v7425, %v7425
      %v7507 = vmul.f32 %v7294, %v7294
      %v7508 = vmul.f32 %v7296, %v7296
      %v7509 = vmul.f32 %v7427, %v7427
      %v7510 = vmul.f32 %v7429, %v7429
      %v7511 = vmul.f32 %v7200, %v7431
      %v7512 = vmul.f32 %v7202, %v7432
      %v7513 = vmul.f32 %v7333, %v7433
      %v7514 = vmul.f32 %v7335, %v7434
      %v7515 = vmul.f32 %v7204, %v7435
      %v7516 = vmul.f32 %v7206, %v7436
      %v7517 = vmul.f32 %v7337, %v7437
      %v7518 = vmul.f32 %v7339, %v7438
      %v7519 = vmul.f32 %v7210, %v7439
      %v7520 = vmul.f32 %v7212, %v7440
      %v7521 = vmul.f32 %v7343, %v7441
      %v7522 = vmul.f32 %v7345, %v7442
      %v7523 = vmul.f32 %v7214, %v7443
      %v7524 = vmul.f32 %v7216, %v7444
      %v7525 = vmul.f32 %v7347, %v7445
      %v7526 = vmul.f32 %v7349, %v7446
      %v7527 = vmul.f32 %v7220, %v7447
      %v7528 = vmul.f32 %v7222, %v7448
      %v7529 = vmul.f32 %v7353, %v7449
      %v7530 = vmul.f32 %v7355, %v7450
      %v7531 = vmul.f32 %v7224, %v7451
      %v7532 = vmul.f32 %v7226, %v7452
      %v7533 = vmul.f32 %v7357, %v7453
      %v7534 = vmul.f32 %v7359, %v7454
      %v7535 = vmul.f32 %v7230, %v7455
      %v7536 = vmul.f32 %v7232, %v7456
      %v7537 = vmul.f32 %v7363, %v7457
      %v7538 = vmul.f32 %v7365, %v7458
      %v7539 = vmul.f32 %v7234, %v7459
      %v7540 = vmul.f32 %v7236, %v7460
      %v7541 = vmul.f32 %v7367, %v7461
      %v7542 = vmul.f32 %v7369, %v7462
      %v7543 = vmul.f32 %v7240, %v7463
      %v7544 = vmul.f32 %v7242, %v7464
      %v7545 = vmul.f32 %v7373, %v7465
      %v7546 = vmul.f32 %v7375, %v7466
      %v7547 = vmul.f32 %v7244, %v7467
      %v7548 = vmul.f32 %v7246, %v7468
      %v7549 = vmul.f32 %v7377, %v7469
      %v7550 = vmul.f32 %v7379, %v7470
      %v7551 = vmul.f32 %v7250, %v7471
      %v7552 = vmul.f32 %v7252, %v7472
      %v7553 = vmul.f32 %v7383, %v7473
      %v7554 = vmul.f32 %v7385, %v7474
      %v7555 = vmul.f32 %v7254, %v7475
      %v7556 = vmul.f32 %v7256, %v7476
      %v7557 = vmul.f32 %v7387, %v7477
      %v7558 = vmul.f32 %v7389, %v7478
      %v7559 = vmul.f32 %v7260, %v7479
      %v7560 = vmul.f32 %v7262, %v7480
      %v7561 = vmul.f32 %v7393, %v7481
      %v7562 = vmul.f32 %v7395, %v7482
      %v7563 = vmul.f32 %v7264, %v7483
      %v7564 = vmul.f32 %v7266, %v7484
      %v7565 = vmul.f32 %v7397, %v7485
      %v7566 = vmul.f32 %v7399, %v7486
      %v7567 = vmul.f32 %v7270, %v7487
      %v7568 = vmul.f32 %v7272, %v7488
      %v7569 = vmul.f32 %v7403, %v7489
      %v7570 = vmul.f32 %v7405, %v7490
      %v7571 = vmul.f32 %v7274, %v7491
      %v7572 = vmul.f32 %v7276, %v7492
      %v7573 = vmul.f32 %v7407, %v7493
      %v7574 = vmul.f32 %v7409, %v7494
      %v7575 = vmul.f32 %v7280, %v7495
      %v7576 = vmul.f32 %v7282, %v7496
      %v7577 = vmul.f32 %v7413, %v7497
      %v7578 = vmul.f32 %v7415, %v7498
      %v7579 = vmul.f32 %v7284, %v7499
      %v7580 = vmul.f32 %v7286, %v7500
      %v7581 = vmul.f32 %v7417, %v7501
      %v7582 = vmul.f32 %v7419, %v7502
      %v7583 = vmul.f32 %v7290, %v7503
      %v7584 = vmul.f32 %v7292, %v7504
      %v7585 = vmul.f32 %v7423, %v7505
      %v7586 = vmul.f32 %v7425, %v7506
      %v7587 = vmul.f32 %v7294, %v7507
      %v7588 = vmul.f32 %v7296, %v7508
      %v7589 = vmul.f32 %v7427, %v7509
      %v7590 = vmul.f32 %v7429, %v7510
      %v7591 = vmul.f32 %v7511, 0.044715
      %v7592 = vmul.f32 %v7512, 0.044715
      %v7593 = vmul.f32 %v7513, 0.044715
      %v7594 = vmul.f32 %v7514, 0.044715
      %v7595 = vmul.f32 %v7515, 0.044715
      %v7596 = vmul.f32 %v7516, 0.044715
      %v7597 = vmul.f32 %v7517, 0.044715
      %v7598 = vmul.f32 %v7518, 0.044715
      %v7599 = vmul.f32 %v7519, 0.044715
      %v7600 = vmul.f32 %v7520, 0.044715
      %v7601 = vmul.f32 %v7521, 0.044715
      %v7602 = vmul.f32 %v7522, 0.044715
      %v7603 = vmul.f32 %v7523, 0.044715
      %v7604 = vmul.f32 %v7524, 0.044715
      %v7605 = vmul.f32 %v7525, 0.044715
      %v7606 = vmul.f32 %v7526, 0.044715
      %v7607 = vmul.f32 %v7527, 0.044715
      %v7608 = vmul.f32 %v7528, 0.044715
      %v7609 = vmul.f32 %v7529, 0.044715
      %v7610 = vmul.f32 %v7530, 0.044715
      %v7611 = vmul.f32 %v7531, 0.044715
      %v7612 = vmul.f32 %v7532, 0.044715
      %v7613 = vmul.f32 %v7533, 0.044715
      %v7614 = vmul.f32 %v7534, 0.044715
      %v7615 = vmul.f32 %v7535, 0.044715
      %v7616 = vmul.f32 %v7536, 0.044715
      %v7617 = vmul.f32 %v7537, 0.044715
      %v7618 = vmul.f32 %v7538, 0.044715
      %v7619 = vmul.f32 %v7539, 0.044715
      %v7620 = vmul.f32 %v7540, 0.044715
      %v7621 = vmul.f32 %v7541, 0.044715
      %v7622 = vmul.f32 %v7542, 0.044715
      %v7623 = vmul.f32 %v7543, 0.044715
      %v7624 = vmul.f32 %v7544, 0.044715
      %v7625 = vmul.f32 %v7545, 0.044715
      %v7626 = vmul.f32 %v7546, 0.044715
      %v7627 = vmul.f32 %v7547, 0.044715
      %v7628 = vmul.f32 %v7548, 0.044715
      %v7629 = vmul.f32 %v7549, 0.044715
      %v7630 = vmul.f32 %v7550, 0.044715
      %v7631 = vmul.f32 %v7551, 0.044715
      %v7632 = vmul.f32 %v7552, 0.044715
      %v7633 = vmul.f32 %v7553, 0.044715
      %v7634 = vmul.f32 %v7554, 0.044715
      %v7635 = vmul.f32 %v7555, 0.044715
      %v7636 = vmul.f32 %v7556, 0.044715
      %v7637 = vmul.f32 %v7557, 0.044715
      %v7638 = vmul.f32 %v7558, 0.044715
      %v7639 = vmul.f32 %v7559, 0.044715
      %v7640 = vmul.f32 %v7560, 0.044715
      %v7641 = vmul.f32 %v7561, 0.044715
      %v7642 = vmul.f32 %v7562, 0.044715
      %v7643 = vmul.f32 %v7563, 0.044715
      %v7644 = vmul.f32 %v7564, 0.044715
      %v7645 = vmul.f32 %v7565, 0.044715
      %v7646 = vmul.f32 %v7566, 0.044715
      %v7647 = vmul.f32 %v7567, 0.044715
      %v7648 = vmul.f32 %v7568, 0.044715
      %v7649 = vmul.f32 %v7569, 0.044715
      %v7650 = vmul.f32 %v7570, 0.044715
      %v7651 = vmul.f32 %v7571, 0.044715
      %v7652 = vmul.f32 %v7572, 0.044715
      %v7653 = vmul.f32 %v7573, 0.044715
      %v7654 = vmul.f32 %v7574, 0.044715
      %v7655 = vmul.f32 %v7575, 0.044715
      %v7656 = vmul.f32 %v7576, 0.044715
      %v7657 = vmul.f32 %v7577, 0.044715
      %v7658 = vmul.f32 %v7578, 0.044715
      %v7659 = vmul.f32 %v7579, 0.044715
      %v7660 = vmul.f32 %v7580, 0.044715
      %v7661 = vmul.f32 %v7581, 0.044715
      %v7662 = vmul.f32 %v7582, 0.044715
      %v7663 = vmul.f32 %v7583, 0.044715
      %v7664 = vmul.f32 %v7584, 0.044715
      %v7665 = vmul.f32 %v7585, 0.044715
      %v7666 = vmul.f32 %v7586, 0.044715
      %v7667 = vmul.f32 %v7587, 0.044715
      %v7668 = vmul.f32 %v7588, 0.044715
      %v7669 = vmul.f32 %v7589, 0.044715
      %v7670 = vmul.f32 %v7590, 0.044715
      %v7671 = vadd.f32 %v7200, %v7591
      %v7672 = vadd.f32 %v7202, %v7592
      %v7673 = vadd.f32 %v7333, %v7593
      %v7674 = vadd.f32 %v7335, %v7594
      %v7675 = vadd.f32 %v7204, %v7595
      %v7676 = vadd.f32 %v7206, %v7596
      %v7677 = vadd.f32 %v7337, %v7597
      %v7678 = vadd.f32 %v7339, %v7598
      %v7679 = vadd.f32 %v7210, %v7599
      %v7680 = vadd.f32 %v7212, %v7600
      %v7681 = vadd.f32 %v7343, %v7601
      %v7682 = vadd.f32 %v7345, %v7602
      %v7683 = vadd.f32 %v7214, %v7603
      %v7684 = vadd.f32 %v7216, %v7604
      %v7685 = vadd.f32 %v7347, %v7605
      %v7686 = vadd.f32 %v7349, %v7606
      %v7687 = vadd.f32 %v7220, %v7607
      %v7688 = vadd.f32 %v7222, %v7608
      %v7689 = vadd.f32 %v7353, %v7609
      %v7690 = vadd.f32 %v7355, %v7610
      %v7691 = vadd.f32 %v7224, %v7611
      %v7692 = vadd.f32 %v7226, %v7612
      %v7693 = vadd.f32 %v7357, %v7613
      %v7694 = vadd.f32 %v7359, %v7614
      %v7695 = vadd.f32 %v7230, %v7615
      %v7696 = vadd.f32 %v7232, %v7616
      %v7697 = vadd.f32 %v7363, %v7617
      %v7698 = vadd.f32 %v7365, %v7618
      %v7699 = vadd.f32 %v7234, %v7619
      %v7700 = vadd.f32 %v7236, %v7620
      %v7701 = vadd.f32 %v7367, %v7621
      %v7702 = vadd.f32 %v7369, %v7622
      %v7703 = vadd.f32 %v7240, %v7623
      %v7704 = vadd.f32 %v7242, %v7624
      %v7705 = vadd.f32 %v7373, %v7625
      %v7706 = vadd.f32 %v7375, %v7626
      %v7707 = vadd.f32 %v7244, %v7627
      %v7708 = vadd.f32 %v7246, %v7628
      %v7709 = vadd.f32 %v7377, %v7629
      %v7710 = vadd.f32 %v7379, %v7630
      %v7711 = vadd.f32 %v7250, %v7631
      %v7712 = vadd.f32 %v7252, %v7632
      %v7713 = vadd.f32 %v7383, %v7633
      %v7714 = vadd.f32 %v7385, %v7634
      %v7715 = vadd.f32 %v7254, %v7635
      %v7716 = vadd.f32 %v7256, %v7636
      %v7717 = vadd.f32 %v7387, %v7637
      %v7718 = vadd.f32 %v7389, %v7638
      %v7719 = vadd.f32 %v7260, %v7639
      %v7720 = vadd.f32 %v7262, %v7640
      %v7721 = vadd.f32 %v7393, %v7641
      %v7722 = vadd.f32 %v7395, %v7642
      %v7723 = vadd.f32 %v7264, %v7643
      %v7724 = vadd.f32 %v7266, %v7644
      %v7725 = vadd.f32 %v7397, %v7645
      %v7726 = vadd.f32 %v7399, %v7646
      %v7727 = vadd.f32 %v7270, %v7647
      %v7728 = vadd.f32 %v7272, %v7648
      %v7729 = vadd.f32 %v7403, %v7649
      %v7730 = vadd.f32 %v7405, %v7650
      %v7731 = vadd.f32 %v7274, %v7651
      %v7732 = vadd.f32 %v7276, %v7652
      %v7733 = vadd.f32 %v7407, %v7653
      %v7734 = vadd.f32 %v7409, %v7654
      %v7735 = vadd.f32 %v7280, %v7655
      %v7736 = vadd.f32 %v7282, %v7656
      %v7737 = vadd.f32 %v7413, %v7657
      %v7738 = vadd.f32 %v7415, %v7658
      %v7739 = vadd.f32 %v7284, %v7659
      %v7740 = vadd.f32 %v7286, %v7660
      %v7741 = vadd.f32 %v7417, %v7661
      %v7742 = vadd.f32 %v7419, %v7662
      %v7743 = vadd.f32 %v7290, %v7663
      %v7744 = vadd.f32 %v7292, %v7664
      %v7745 = vadd.f32 %v7423, %v7665
      %v7746 = vadd.f32 %v7425, %v7666
      %v7747 = vadd.f32 %v7294, %v7667
      %v7748 = vadd.f32 %v7296, %v7668
      %v7749 = vadd.f32 %v7427, %v7669
      %v7750 = vadd.f32 %v7429, %v7670
      %v7751 = vmul.f32 %v7671, 0.7978846
      %v7752 = vmul.f32 %v7672, 0.7978846
      %v7753 = vmul.f32 %v7673, 0.7978846
      %v7754 = vmul.f32 %v7674, 0.7978846
      %v7755 = vmul.f32 %v7675, 0.7978846
      %v7756 = vmul.f32 %v7676, 0.7978846
      %v7757 = vmul.f32 %v7677, 0.7978846
      %v7758 = vmul.f32 %v7678, 0.7978846
      %v7759 = vmul.f32 %v7679, 0.7978846
      %v7760 = vmul.f32 %v7680, 0.7978846
      %v7761 = vmul.f32 %v7681, 0.7978846
      %v7762 = vmul.f32 %v7682, 0.7978846
      %v7763 = vmul.f32 %v7683, 0.7978846
      %v7764 = vmul.f32 %v7684, 0.7978846
      %v7765 = vmul.f32 %v7685, 0.7978846
      %v7766 = vmul.f32 %v7686, 0.7978846
      %v7767 = vmul.f32 %v7687, 0.7978846
      %v7768 = vmul.f32 %v7688, 0.7978846
      %v7769 = vmul.f32 %v7689, 0.7978846
      %v7770 = vmul.f32 %v7690, 0.7978846
      %v7771 = vmul.f32 %v7691, 0.7978846
      %v7772 = vmul.f32 %v7692, 0.7978846
      %v7773 = vmul.f32 %v7693, 0.7978846
      %v7774 = vmul.f32 %v7694, 0.7978846
      %v7775 = vmul.f32 %v7695, 0.7978846
      %v7776 = vmul.f32 %v7696, 0.7978846
      %v7777 = vmul.f32 %v7697, 0.7978846
      %v7778 = vmul.f32 %v7698, 0.7978846
      %v7779 = vmul.f32 %v7699, 0.7978846
      %v7780 = vmul.f32 %v7700, 0.7978846
      %v7781 = vmul.f32 %v7701, 0.7978846
      %v7782 = vmul.f32 %v7702, 0.7978846
      %v7783 = vmul.f32 %v7703, 0.7978846
      %v7784 = vmul.f32 %v7704, 0.7978846
      %v7785 = vmul.f32 %v7705, 0.7978846
      %v7786 = vmul.f32 %v7706, 0.7978846
      %v7787 = vmul.f32 %v7707, 0.7978846
      %v7788 = vmul.f32 %v7708, 0.7978846
      %v7789 = vmul.f32 %v7709, 0.7978846
      %v7790 = vmul.f32 %v7710, 0.7978846
      %v7791 = vmul.f32 %v7711, 0.7978846
      %v7792 = vmul.f32 %v7712, 0.7978846
      %v7793 = vmul.f32 %v7713, 0.7978846
      %v7794 = vmul.f32 %v7714, 0.7978846
      %v7795 = vmul.f32 %v7715, 0.7978846
      %v7796 = vmul.f32 %v7716, 0.7978846
      %v7797 = vmul.f32 %v7717, 0.7978846
      %v7798 = vmul.f32 %v7718, 0.7978846
      %v7799 = vmul.f32 %v7719, 0.7978846
      %v7800 = vmul.f32 %v7720, 0.7978846
      %v7801 = vmul.f32 %v7721, 0.7978846
      %v7802 = vmul.f32 %v7722, 0.7978846
      %v7803 = vmul.f32 %v7723, 0.7978846
      %v7804 = vmul.f32 %v7724, 0.7978846
      %v7805 = vmul.f32 %v7725, 0.7978846
      %v7806 = vmul.f32 %v7726, 0.7978846
      %v7807 = vmul.f32 %v7727, 0.7978846
      %v7808 = vmul.f32 %v7728, 0.7978846
      %v7809 = vmul.f32 %v7729, 0.7978846
      %v7810 = vmul.f32 %v7730, 0.7978846
      %v7811 = vmul.f32 %v7731, 0.7978846
      %v7812 = vmul.f32 %v7732, 0.7978846
      %v7813 = vmul.f32 %v7733, 0.7978846
      %v7814 = vmul.f32 %v7734, 0.7978846
      %v7815 = vmul.f32 %v7735, 0.7978846
      %v7816 = vmul.f32 %v7736, 0.7978846
      %v7817 = vmul.f32 %v7737, 0.7978846
      %v7818 = vmul.f32 %v7738, 0.7978846
      %v7819 = vmul.f32 %v7739, 0.7978846
      %v7820 = vmul.f32 %v7740, 0.7978846
      %v7821 = vmul.f32 %v7741, 0.7978846
      %v7822 = vmul.f32 %v7742, 0.7978846
      %v7823 = vmul.f32 %v7743, 0.7978846
      %v7824 = vmul.f32 %v7744, 0.7978846
      %v7825 = vmul.f32 %v7745, 0.7978846
      %v7826 = vmul.f32 %v7746, 0.7978846
      %v7827 = vmul.f32 %v7747, 0.7978846
      %v7828 = vmul.f32 %v7748, 0.7978846
      %v7829 = vmul.f32 %v7749, 0.7978846
      %v7830 = vmul.f32 %v7750, 0.7978846
      %v7831 = vtanh.pop %v7751
      %v7832 = vtanh.pop %v7752
      %v7833 = vtanh.pop %v7753
      %v7834 = vtanh.pop %v7754
      %v7835 = vtanh.pop %v7755
      %v7836 = vtanh.pop %v7756
      %v7837 = vtanh.pop %v7757
      %v7838 = vtanh.pop %v7758
      %v7839 = vtanh.pop %v7759
      %v7840 = vtanh.pop %v7760
      %v7841 = vtanh.pop %v7761
      %v7842 = vtanh.pop %v7762
      %v7843 = vtanh.pop %v7763
      %v7844 = vtanh.pop %v7764
      %v7845 = vtanh.pop %v7765
      %v7846 = vtanh.pop %v7766
      %v7847 = vtanh.pop %v7767
      %v7848 = vtanh.pop %v7768
      %v7849 = vtanh.pop %v7769
      %v7850 = vtanh.pop %v7770
      %v7851 = vtanh.pop %v7771
      %v7852 = vtanh.pop %v7772
      %v7853 = vtanh.pop %v7773
      %v7854 = vtanh.pop %v7774
      %v7855 = vtanh.pop %v7775
      %v7856 = vtanh.pop %v7776
      %v7857 = vtanh.pop %v7777
      %v7858 = vtanh.pop %v7778
      %v7859 = vtanh.pop %v7779
      %v7860 = vtanh.pop %v7780
      %v7861 = vtanh.pop %v7781
      %v7862 = vtanh.pop %v7782
      %v7863 = vtanh.pop %v7783
      %v7864 = vtanh.pop %v7784
      %v7865 = vtanh.pop %v7785
      %v7866 = vtanh.pop %v7786
      %v7867 = vtanh.pop %v7787
      %v7868 = vtanh.pop %v7788
      %v7869 = vtanh.pop %v7789
      %v7870 = vtanh.pop %v7790
      %v7871 = vtanh.pop %v7791
      %v7872 = vtanh.pop %v7792
      %v7873 = vtanh.pop %v7793
      %v7874 = vtanh.pop %v7794
      %v7875 = vtanh.pop %v7795
      %v7876 = vtanh.pop %v7796
      %v7877 = vtanh.pop %v7797
      %v7878 = vtanh.pop %v7798
      %v7879 = vtanh.pop %v7799
      %v7880 = vtanh.pop %v7800
      %v7881 = vtanh.pop %v7801
      %v7882 = vtanh.pop %v7802
      %v7883 = vtanh.pop %v7803
      %v7884 = vtanh.pop %v7804
      %v7885 = vtanh.pop %v7805
      %v7886 = vtanh.pop %v7806
      %v7887 = vtanh.pop %v7807
      %v7888 = vtanh.pop %v7808
      %v7889 = vtanh.pop %v7809
      %v7890 = vtanh.pop %v7810
      %v7891 = vtanh.pop %v7811
      %v7892 = vtanh.pop %v7812
      %v7893 = vtanh.pop %v7813
      %v7894 = vtanh.pop %v7814
      %v7895 = vtanh.pop %v7815
      %v7896 = vtanh.pop %v7816
      %v7897 = vtanh.pop %v7817
      %v7898 = vtanh.pop %v7818
      %v7899 = vtanh.pop %v7819
      %v7900 = vtanh.pop %v7820
      %v7901 = vtanh.pop %v7821
      %v7902 = vtanh.pop %v7822
      %v7903 = vtanh.pop %v7823
      %v7904 = vtanh.pop %v7824
      %v7905 = vtanh.pop %v7825
      %v7906 = vtanh.pop %v7826
      %v7907 = vtanh.pop %v7827
      %v7908 = vtanh.pop %v7828
      %v7909 = vtanh.pop %v7829
      %v7910 = vtanh.pop %v7830
      %v7911 = vadd.f32 %v7831, 1.0
      %v7912 = vadd.f32 %v7832, 1.0
      %v7913 = vadd.f32 %v7833, 1.0
      %v7914 = vadd.f32 %v7834, 1.0
      %v7915 = vadd.f32 %v7835, 1.0
      %v7916 = vadd.f32 %v7836, 1.0
      %v7917 = vadd.f32 %v7837, 1.0
      %v7918 = vadd.f32 %v7838, 1.0
      %v7919 = vadd.f32 %v7839, 1.0
      %v7920 = vadd.f32 %v7840, 1.0
      %v7921 = vadd.f32 %v7841, 1.0
      %v7922 = vadd.f32 %v7842, 1.0
      %v7923 = vadd.f32 %v7843, 1.0
      %v7924 = vadd.f32 %v7844, 1.0
      %v7925 = vadd.f32 %v7845, 1.0
      %v7926 = vadd.f32 %v7846, 1.0
      %v7927 = vadd.f32 %v7847, 1.0
      %v7928 = vadd.f32 %v7848, 1.0
      %v7929 = vadd.f32 %v7849, 1.0
      %v7930 = vadd.f32 %v7850, 1.0
      %v7931 = vadd.f32 %v7851, 1.0
      %v7932 = vadd.f32 %v7852, 1.0
      %v7933 = vadd.f32 %v7853, 1.0
      %v7934 = vadd.f32 %v7854, 1.0
      %v7935 = vadd.f32 %v7855, 1.0
      %v7936 = vadd.f32 %v7856, 1.0
      %v7937 = vadd.f32 %v7857, 1.0
      %v7938 = vadd.f32 %v7858, 1.0
      %v7939 = vadd.f32 %v7859, 1.0
      %v7940 = vadd.f32 %v7860, 1.0
      %v7941 = vadd.f32 %v7861, 1.0
      %v7942 = vadd.f32 %v7862, 1.0
      %v7943 = vadd.f32 %v7863, 1.0
      %v7944 = vadd.f32 %v7864, 1.0
      %v7945 = vadd.f32 %v7865, 1.0
      %v7946 = vadd.f32 %v7866, 1.0
      %v7947 = vadd.f32 %v7867, 1.0
      %v7948 = vadd.f32 %v7868, 1.0
      %v7949 = vadd.f32 %v7869, 1.0
      %v7950 = vadd.f32 %v7870, 1.0
      %v7951 = vadd.f32 %v7871, 1.0
      %v7952 = vadd.f32 %v7872, 1.0
      %v7953 = vadd.f32 %v7873, 1.0
      %v7954 = vadd.f32 %v7874, 1.0
      %v7955 = vadd.f32 %v7875, 1.0
      %v7956 = vadd.f32 %v7876, 1.0
      %v7957 = vadd.f32 %v7877, 1.0
      %v7958 = vadd.f32 %v7878, 1.0
      %v7959 = vadd.f32 %v7879, 1.0
      %v7960 = vadd.f32 %v7880, 1.0
      %v7961 = vadd.f32 %v7881, 1.0
      %v7962 = vadd.f32 %v7882, 1.0
      %v7963 = vadd.f32 %v7883, 1.0
      %v7964 = vadd.f32 %v7884, 1.0
      %v7965 = vadd.f32 %v7885, 1.0
      %v7966 = vadd.f32 %v7886, 1.0
      %v7967 = vadd.f32 %v7887, 1.0
      %v7968 = vadd.f32 %v7888, 1.0
      %v7969 = vadd.f32 %v7889, 1.0
      %v7970 = vadd.f32 %v7890, 1.0
      %v7971 = vadd.f32 %v7891, 1.0
      %v7972 = vadd.f32 %v7892, 1.0
      %v7973 = vadd.f32 %v7893, 1.0
      %v7974 = vadd.f32 %v7894, 1.0
      %v7975 = vadd.f32 %v7895, 1.0
      %v7976 = vadd.f32 %v7896, 1.0
      %v7977 = vadd.f32 %v7897, 1.0
      %v7978 = vadd.f32 %v7898, 1.0
      %v7979 = vadd.f32 %v7899, 1.0
      %v7980 = vadd.f32 %v7900, 1.0
      %v7981 = vadd.f32 %v7901, 1.0
      %v7982 = vadd.f32 %v7902, 1.0
      %v7983 = vadd.f32 %v7903, 1.0
      %v7984 = vadd.f32 %v7904, 1.0
      %v7985 = vadd.f32 %v7905, 1.0
      %v7986 = vadd.f32 %v7906, 1.0
      %v7987 = vadd.f32 %v7907, 1.0
      %v7988 = vadd.f32 %v7908, 1.0
      %v7989 = vadd.f32 %v7909, 1.0
      %v7990 = vadd.f32 %v7910, 1.0
      %v7991 = vmul.f32 %v7911, 0.5
      %v7992 = vmul.f32 %v7912, 0.5
      %v7993 = vmul.f32 %v7913, 0.5
      %v7994 = vmul.f32 %v7914, 0.5
      %v7995 = vmul.f32 %v7915, 0.5
      %v7996 = vmul.f32 %v7916, 0.5
      %v7997 = vmul.f32 %v7917, 0.5
      %v7998 = vmul.f32 %v7918, 0.5
      %v7999 = vmul.f32 %v7919, 0.5
      %v8000 = vmul.f32 %v7920, 0.5
      %v8001 = vmul.f32 %v7921, 0.5
      %v8002 = vmul.f32 %v7922, 0.5
      %v8003 = vmul.f32 %v7923, 0.5
      %v8004 = vmul.f32 %v7924, 0.5
      %v8005 = vmul.f32 %v7925, 0.5
      %v8006 = vmul.f32 %v7926, 0.5
      %v8007 = vmul.f32 %v7927, 0.5
      %v8008 = vmul.f32 %v7928, 0.5
      %v8009 = vmul.f32 %v7929, 0.5
      %v8010 = vmul.f32 %v7930, 0.5
      %v8011 = vmul.f32 %v7931, 0.5
      %v8012 = vmul.f32 %v7932, 0.5
      %v8013 = vmul.f32 %v7933, 0.5
      %v8014 = vmul.f32 %v7934, 0.5
      %v8015 = vmul.f32 %v7935, 0.5
      %v8016 = vmul.f32 %v7936, 0.5
      %v8017 = vmul.f32 %v7937, 0.5
      %v8018 = vmul.f32 %v7938, 0.5
      %v8019 = vmul.f32 %v7939, 0.5
      %v8020 = vmul.f32 %v7940, 0.5
      %v8021 = vmul.f32 %v7941, 0.5
      %v8022 = vmul.f32 %v7942, 0.5
      %v8023 = vmul.f32 %v7943, 0.5
      %v8024 = vmul.f32 %v7944, 0.5
      %v8025 = vmul.f32 %v7945, 0.5
      %v8026 = vmul.f32 %v7946, 0.5
      %v8027 = vmul.f32 %v7947, 0.5
      %v8028 = vmul.f32 %v7948, 0.5
      %v8029 = vmul.f32 %v7949, 0.5
      %v8030 = vmul.f32 %v7950, 0.5
      %v8031 = vmul.f32 %v7951, 0.5
      %v8032 = vmul.f32 %v7952, 0.5
      %v8033 = vmul.f32 %v7953, 0.5
      %v8034 = vmul.f32 %v7954, 0.5
      %v8035 = vmul.f32 %v7955, 0.5
      %v8036 = vmul.f32 %v7956, 0.5
      %v8037 = vmul.f32 %v7957, 0.5
      %v8038 = vmul.f32 %v7958, 0.5
      %v8039 = vmul.f32 %v7959, 0.5
      %v8040 = vmul.f32 %v7960, 0.5
      %v8041 = vmul.f32 %v7961, 0.5
      %v8042 = vmul.f32 %v7962, 0.5
      %v8043 = vmul.f32 %v7963, 0.5
      %v8044 = vmul.f32 %v7964, 0.5
      %v8045 = vmul.f32 %v7965, 0.5
      %v8046 = vmul.f32 %v7966, 0.5
      %v8047 = vmul.f32 %v7967, 0.5
      %v8048 = vmul.f32 %v7968, 0.5
      %v8049 = vmul.f32 %v7969, 0.5
      %v8050 = vmul.f32 %v7970, 0.5
      %v8051 = vmul.f32 %v7971, 0.5
      %v8052 = vmul.f32 %v7972, 0.5
      %v8053 = vmul.f32 %v7973, 0.5
      %v8054 = vmul.f32 %v7974, 0.5
      %v8055 = vmul.f32 %v7975, 0.5
      %v8056 = vmul.f32 %v7976, 0.5
      %v8057 = vmul.f32 %v7977, 0.5
      %v8058 = vmul.f32 %v7978, 0.5
      %v8059 = vmul.f32 %v7979, 0.5
      %v8060 = vmul.f32 %v7980, 0.5
      %v8061 = vmul.f32 %v7981, 0.5
      %v8062 = vmul.f32 %v7982, 0.5
      %v8063 = vmul.f32 %v7983, 0.5
      %v8064 = vmul.f32 %v7984, 0.5
      %v8065 = vmul.f32 %v7985, 0.5
      %v8066 = vmul.f32 %v7986, 0.5
      %v8067 = vmul.f32 %v7987, 0.5
      %v8068 = vmul.f32 %v7988, 0.5
      %v8069 = vmul.f32 %v7989, 0.5
      %v8070 = vmul.f32 %v7990, 0.5
      %v8071 = vmul.f32 %v7200, %v7991
      %v8072 = vmul.f32 %v7202, %v7992
      %v8073 = vmul.f32 %v7333, %v7993
      %v8074 = vmul.f32 %v7335, %v7994
      %v8075 = vmul.f32 %v7204, %v7995
      %v8076 = vmul.f32 %v7206, %v7996
      %v8077 = vmul.f32 %v7337, %v7997
      %v8078 = vmul.f32 %v7339, %v7998
      %v8079 = vmul.f32 %v7210, %v7999
      %v8080 = vmul.f32 %v7212, %v8000
      %v8081 = vmul.f32 %v7343, %v8001
      %v8082 = vmul.f32 %v7345, %v8002
      %v8083 = vmul.f32 %v7214, %v8003
      %v8084 = vmul.f32 %v7216, %v8004
      %v8085 = vmul.f32 %v7347, %v8005
      %v8086 = vmul.f32 %v7349, %v8006
      %v8087 = vmul.f32 %v7220, %v8007
      %v8088 = vmul.f32 %v7222, %v8008
      %v8089 = vmul.f32 %v7353, %v8009
      %v8090 = vmul.f32 %v7355, %v8010
      %v8091 = vmul.f32 %v7224, %v8011
      %v8092 = vmul.f32 %v7226, %v8012
      %v8093 = vmul.f32 %v7357, %v8013
      %v8094 = vmul.f32 %v7359, %v8014
      %v8095 = vmul.f32 %v7230, %v8015
      %v8096 = vmul.f32 %v7232, %v8016
      %v8097 = vmul.f32 %v7363, %v8017
      %v8098 = vmul.f32 %v7365, %v8018
      %v8099 = vmul.f32 %v7234, %v8019
      %v8100 = vmul.f32 %v7236, %v8020
      %v8101 = vmul.f32 %v7367, %v8021
      %v8102 = vmul.f32 %v7369, %v8022
      %v8103 = vmul.f32 %v7240, %v8023
      %v8104 = vmul.f32 %v7242, %v8024
      %v8105 = vmul.f32 %v7373, %v8025
      %v8106 = vmul.f32 %v7375, %v8026
      %v8107 = vmul.f32 %v7244, %v8027
      %v8108 = vmul.f32 %v7246, %v8028
      %v8109 = vmul.f32 %v7377, %v8029
      %v8110 = vmul.f32 %v7379, %v8030
      %v8111 = vmul.f32 %v7250, %v8031
      %v8112 = vmul.f32 %v7252, %v8032
      %v8113 = vmul.f32 %v7383, %v8033
      %v8114 = vmul.f32 %v7385, %v8034
      %v8115 = vmul.f32 %v7254, %v8035
      %v8116 = vmul.f32 %v7256, %v8036
      %v8117 = vmul.f32 %v7387, %v8037
      %v8118 = vmul.f32 %v7389, %v8038
      %v8119 = vmul.f32 %v7260, %v8039
      %v8120 = vmul.f32 %v7262, %v8040
      %v8121 = vmul.f32 %v7393, %v8041
      %v8122 = vmul.f32 %v7395, %v8042
      %v8123 = vmul.f32 %v7264, %v8043
      %v8124 = vmul.f32 %v7266, %v8044
      %v8125 = vmul.f32 %v7397, %v8045
      %v8126 = vmul.f32 %v7399, %v8046
      %v8127 = vmul.f32 %v7270, %v8047
      %v8128 = vmul.f32 %v7272, %v8048
      %v8129 = vmul.f32 %v7403, %v8049
      %v8130 = vmul.f32 %v7405, %v8050
      %v8131 = vmul.f32 %v7274, %v8051
      %v8132 = vmul.f32 %v7276, %v8052
      %v8133 = vmul.f32 %v7407, %v8053
      %v8134 = vmul.f32 %v7409, %v8054
      %v8135 = vmul.f32 %v7280, %v8055
      %v8136 = vmul.f32 %v7282, %v8056
      %v8137 = vmul.f32 %v7413, %v8057
      %v8138 = vmul.f32 %v7415, %v8058
      %v8139 = vmul.f32 %v7284, %v8059
      %v8140 = vmul.f32 %v7286, %v8060
      %v8141 = vmul.f32 %v7417, %v8061
      %v8142 = vmul.f32 %v7419, %v8062
      %v8143 = vmul.f32 %v7290, %v8063
      %v8144 = vmul.f32 %v7292, %v8064
      %v8145 = vmul.f32 %v7423, %v8065
      %v8146 = vmul.f32 %v7425, %v8066
      %v8147 = vmul.f32 %v7294, %v8067
      %v8148 = vmul.f32 %v7296, %v8068
      %v8149 = vmul.f32 %v7427, %v8069
      %v8150 = vmul.f32 %v7429, %v8070
      %v8151 = vpack.c.bf16 %v8075, %v8071
      %v8152 = vpack.c.bf16 %v8076, %v8072
      %v8153 = vpack.c.bf16 %v8077, %v8073
      %v8154 = vpack.c.bf16 %v8078, %v8074
      %v8155 = vpack.c.bf16 %v8083, %v8079
      %v8156 = vpack.c.bf16 %v8084, %v8080
      %v8157 = vpack.c.bf16 %v8085, %v8081
      %v8158 = vpack.c.bf16 %v8086, %v8082
      %v8159 = vpack.c.bf16 %v8091, %v8087
      %v8160 = vpack.c.bf16 %v8092, %v8088
      %v8161 = vpack.c.bf16 %v8093, %v8089
      %v8162 = vpack.c.bf16 %v8094, %v8090
      %v8163 = vpack.c.bf16 %v8099, %v8095
      %v8164 = vpack.c.bf16 %v8100, %v8096
      %v8165 = vpack.c.bf16 %v8101, %v8097
      %v8166 = vpack.c.bf16 %v8102, %v8098
      %v8167 = vpack.c.bf16 %v8107, %v8103
      %v8168 = vpack.c.bf16 %v8108, %v8104
      %v8169 = vpack.c.bf16 %v8109, %v8105
      %v8170 = vpack.c.bf16 %v8110, %v8106
      %v8171 = vpack.c.bf16 %v8115, %v8111
      %v8172 = vpack.c.bf16 %v8116, %v8112
      %v8173 = vpack.c.bf16 %v8117, %v8113
      %v8174 = vpack.c.bf16 %v8118, %v8114
      %v8175 = vpack.c.bf16 %v8123, %v8119
      %v8176 = vpack.c.bf16 %v8124, %v8120
      %v8177 = vpack.c.bf16 %v8125, %v8121
      %v8178 = vpack.c.bf16 %v8126, %v8122
      %v8179 = vpack.c.bf16 %v8131, %v8127
      %v8180 = vpack.c.bf16 %v8132, %v8128
      %v8181 = vpack.c.bf16 %v8133, %v8129
      %v8182 = vpack.c.bf16 %v8134, %v8130
      %v8183 = vpack.c.bf16 %v8139, %v8135
      %v8184 = vpack.c.bf16 %v8140, %v8136
      %v8185 = vpack.c.bf16 %v8141, %v8137
      %v8186 = vpack.c.bf16 %v8142, %v8138
      %v8187 = vpack.c.bf16 %v8147, %v8143
      %v8188 = vpack.c.bf16 %v8148, %v8144
      %v8189 = vpack.c.bf16 %v8149, %v8145
      %v8190 = vpack.c.bf16 %v8150, %v8146
      %s8191 = scalar_lea.vmem %s14, 256
      %v8192 = vld [vmem:[%s8191] sm:$0xf]
      %v8193 = vld [vmem:[%s8191 + $0x4] sm:$0xf]
      %v8194 = vld [vmem:[%s8191 + $0x8] sm:$0xf]
      %v8195 = vld [vmem:[%s8191 + $0xc] sm:$0xf]
      %v8196 = vld [vmem:[%s8191 + $0x10] sm:$0xf]
      %v8197 = vld [vmem:[%s8191 + $0x14] sm:$0xf]
      %v8198 = vld [vmem:[%s8191 + $0x18] sm:$0xf]
      %v8199 = vld [vmem:[%s8191 + $0x1c] sm:$0xf]
      %v8200 = vld [vmem:[%s8191 + $0x20] sm:$0xf]
      %v8201 = vld [vmem:[%s8191 + $0x24] sm:$0xf]
      %v8202 = vld [vmem:[%s8191 + $0x28] sm:$0xf]
      %v8203 = vld [vmem:[%s8191 + $0x2c] sm:$0xf]
      %v8204 = vld [vmem:[%s8191 + $0x30] sm:$0xf]
      %v8205 = vld [vmem:[%s8191 + $0x34] sm:$0xf]
      %v8206 = vld [vmem:[%s8191 + $0x38] sm:$0xf]
      %v8207 = vld [vmem:[%s8191 + $0x3c] sm:$0xf]
      %v8208 = vld [vmem:[%s8191 + $0x40] sm:$0xf]
      %v8209 = vld [vmem:[%s8191 + $0x44] sm:$0xf]
      %v8210 = vld [vmem:[%s8191 + $0x48] sm:$0xf]
      %v8211 = vld [vmem:[%s8191 + $0x4c] sm:$0xf]
      %v8212 = vld [vmem:[%s8191 + $0x50] sm:$0xf]
      %v8213 = vld [vmem:[%s8191 + $0x54] sm:$0xf]
      %v8214 = vld [vmem:[%s8191 + $0x58] sm:$0xf]
      %v8215 = vld [vmem:[%s8191 + $0x5c] sm:$0xf]
      %v8216 = vld [vmem:[%s8191 + $0x60] sm:$0xf]
      %v8217 = vld [vmem:[%s8191 + $0x64] sm:$0xf]
      %v8218 = vld [vmem:[%s8191 + $0x68] sm:$0xf]
      %v8219 = vld [vmem:[%s8191 + $0x6c] sm:$0xf]
      %v8220 = vld [vmem:[%s8191 + $0x70] sm:$0xf]
      %v8221 = vld [vmem:[%s8191 + $0x74] sm:$0xf]
      %v8222 = vld [vmem:[%s8191 + $0x78] sm:$0xf]
      %v8223 = vld [vmem:[%s8191 + $0x7c] sm:$0xf]
      %v8224 = vld [vmem:[%s8191 + $0x80] sm:$0xf]
      %v8225 = vld [vmem:[%s8191 + $0x84] sm:$0xf]
      %v8226 = vld [vmem:[%s8191 + $0x88] sm:$0xf]
      %v8227 = vld [vmem:[%s8191 + $0x8c] sm:$0xf]
      %v8228 = vld [vmem:[%s8191 + $0x90] sm:$0xf]
      %v8229 = vld [vmem:[%s8191 + $0x94] sm:$0xf]
      %v8230 = vld [vmem:[%s8191 + $0x98] sm:$0xf]
      %v8231 = vld [vmem:[%s8191 + $0x9c] sm:$0xf]
      %v8232 = vld [vmem:[%s8191 + $0xa0] sm:$0xf]
      %v8233 = vld [vmem:[%s8191 + $0xa4] sm:$0xf]
      %v8234 = vld [vmem:[%s8191 + $0xa8] sm:$0xf]
      %v8235 = vld [vmem:[%s8191 + $0xac] sm:$0xf]
      %v8236 = vld [vmem:[%s8191 + $0xb0] sm:$0xf]
      %v8237 = vld [vmem:[%s8191 + $0xb4] sm:$0xf]
      %v8238 = vld [vmem:[%s8191 + $0xb8] sm:$0xf]
      %v8239 = vld [vmem:[%s8191 + $0xbc] sm:$0xf]
      %v8240 = vld [vmem:[%s8191 + $0xc0] sm:$0xf]
      %v8241 = vld [vmem:[%s8191 + $0xc4] sm:$0xf]
      %v8242 = vld [vmem:[%s8191 + $0xc8] sm:$0xf]
      %v8243 = vld [vmem:[%s8191 + $0xcc] sm:$0xf]
      %v8244 = vld [vmem:[%s8191 + $0xd0] sm:$0xf]
      %v8245 = vld [vmem:[%s8191 + $0xd4] sm:$0xf]
      %v8246 = vld [vmem:[%s8191 + $0xd8] sm:$0xf]
      %v8247 = vld [vmem:[%s8191 + $0xdc] sm:$0xf]
      %v8248 = vld [vmem:[%s8191 + $0xe0] sm:$0xf]
      %v8249 = vld [vmem:[%s8191 + $0xe4] sm:$0xf]
      %v8250 = vld [vmem:[%s8191 + $0xe8] sm:$0xf]
      %v8251 = vld [vmem:[%s8191 + $0xec] sm:$0xf]
      %v8252 = vld [vmem:[%s8191 + $0xf0] sm:$0xf]
      %v8253 = vld [vmem:[%s8191 + $0xf4] sm:$0xf]
      %v8254 = vld [vmem:[%s8191 + $0xf8] sm:$0xf]
      %v8255 = vld [vmem:[%s8191 + $0xfc] sm:$0xf]
      %v8256 = vld [vmem:[%s15 + $0x1] sm:$0x1]
      %v8257 = vlaneseq
      %v8258 = vshrl.u32 %v8257, 7
      %v8259 = vsub.s32 0, %v8258
      %v8260 = vrot.slane %v8256, %v8259
      %v8325 = vunpack.c.l.b16 %v8192
      %v8326 = vunpack.c.l.b16 %v8193
      %v8327 = vunpack.c.l.b16 %v8194
      %v8328 = vunpack.c.l.b16 %v8195
      %v8329 = vunpack.c.l.b16 %v8196
      %v8330 = vunpack.c.l.b16 %v8197
      %v8331 = vunpack.c.l.b16 %v8198
      %v8332 = vunpack.c.l.b16 %v8199
      %v8333 = vunpack.c.l.b16 %v8200
      %v8334 = vunpack.c.l.b16 %v8201
      %v8335 = vunpack.c.l.b16 %v8202
      %v8336 = vunpack.c.l.b16 %v8203
      %v8337 = vunpack.c.l.b16 %v8204
      %v8338 = vunpack.c.l.b16 %v8205
      %v8339 = vunpack.c.l.b16 %v8206
      %v8340 = vunpack.c.l.b16 %v8207
      %v8341 = vunpack.c.l.b16 %v8208
      %v8342 = vunpack.c.l.b16 %v8209
      %v8343 = vunpack.c.l.b16 %v8210
      %v8344 = vunpack.c.l.b16 %v8211
      %v8345 = vunpack.c.l.b16 %v8212
      %v8346 = vunpack.c.l.b16 %v8213
      %v8347 = vunpack.c.l.b16 %v8214
      %v8348 = vunpack.c.l.b16 %v8215
      %v8349 = vunpack.c.l.b16 %v8216
      %v8350 = vunpack.c.l.b16 %v8217
      %v8351 = vunpack.c.l.b16 %v8218
      %v8352 = vunpack.c.l.b16 %v8219
      %v8353 = vunpack.c.l.b16 %v8220
      %v8354 = vunpack.c.l.b16 %v8221
      %v8355 = vunpack.c.l.b16 %v8222
      %v8356 = vunpack.c.l.b16 %v8223
      %v8357 = vunpack.c.l.b16 %v8224
      %v8358 = vunpack.c.l.b16 %v8225
      %v8359 = vunpack.c.l.b16 %v8226
      %v8360 = vunpack.c.l.b16 %v8227
      %v8361 = vunpack.c.l.b16 %v8228
      %v8362 = vunpack.c.l.b16 %v8229
      %v8363 = vunpack.c.l.b16 %v8230
      %v8364 = vunpack.c.l.b16 %v8231
      %v8365 = vunpack.c.l.b16 %v8232
      %v8366 = vunpack.c.l.b16 %v8233
      %v8367 = vunpack.c.l.b16 %v8234
      %v8368 = vunpack.c.l.b16 %v8235
      %v8369 = vunpack.c.l.b16 %v8236
      %v8370 = vunpack.c.l.b16 %v8237
      %v8371 = vunpack.c.l.b16 %v8238
      %v8372 = vunpack.c.l.b16 %v8239
      %v8373 = vunpack.c.l.b16 %v8240
      %v8374 = vunpack.c.l.b16 %v8241
      %v8375 = vunpack.c.l.b16 %v8242
      %v8376 = vunpack.c.l.b16 %v8243
      %v8377 = vunpack.c.l.b16 %v8244
      %v8378 = vunpack.c.l.b16 %v8245
      %v8379 = vunpack.c.l.b16 %v8246
      %v8380 = vunpack.c.l.b16 %v8247
      %v8381 = vunpack.c.l.b16 %v8248
      %v8382 = vunpack.c.l.b16 %v8249
      %v8383 = vunpack.c.l.b16 %v8250
      %v8384 = vunpack.c.l.b16 %v8251
      %v8385 = vunpack.c.l.b16 %v8252
      %v8386 = vunpack.c.l.b16 %v8253
      %v8387 = vunpack.c.l.b16 %v8254
      %v8388 = vunpack.c.l.b16 %v8255
      %v8389 = vpack.c.b16 %v8326, %v8325
      %v8390 = vpack.c.b16 %v8328, %v8327
      %v8391 = vpack.c.b16 %v8330, %v8329
      %v8392 = vpack.c.b16 %v8332, %v8331
      %v8393 = vpack.c.b16 %v8334, %v8333
      %v8394 = vpack.c.b16 %v8336, %v8335
      %v8395 = vpack.c.b16 %v8338, %v8337
      %v8396 = vpack.c.b16 %v8340, %v8339
      %v8397 = vpack.c.b16 %v8342, %v8341
      %v8398 = vpack.c.b16 %v8344, %v8343
      %v8399 = vpack.c.b16 %v8346, %v8345
      %v8400 = vpack.c.b16 %v8348, %v8347
      %v8401 = vpack.c.b16 %v8350, %v8349
      %v8402 = vpack.c.b16 %v8352, %v8351
      %v8403 = vpack.c.b16 %v8354, %v8353
      %v8404 = vpack.c.b16 %v8356, %v8355
      %v8405 = vpack.c.b16 %v8358, %v8357
      %v8406 = vpack.c.b16 %v8360, %v8359
      %v8407 = vpack.c.b16 %v8362, %v8361
      %v8408 = vpack.c.b16 %v8364, %v8363
      %v8409 = vpack.c.b16 %v8366, %v8365
      %v8410 = vpack.c.b16 %v8368, %v8367
      %v8411 = vpack.c.b16 %v8370, %v8369
      %v8412 = vpack.c.b16 %v8372, %v8371
      %v8413 = vpack.c.b16 %v8374, %v8373
      %v8414 = vpack.c.b16 %v8376, %v8375
      %v8415 = vpack.c.b16 %v8378, %v8377
      %v8416 = vpack.c.b16 %v8380, %v8379
      %v8417 = vpack.c.b16 %v8382, %v8381
      %v8418 = vpack.c.b16 %v8384, %v8383
      %v8419 = vpack.c.b16 %v8386, %v8385
      %v8420 = vpack.c.b16 %v8388, %v8387
      %8453 = vmatprep.subr.bf16.mxu0 0
      %8454 = vmatpush1.bf16.msra.mxu0 %v8389
      %8455 = vmatprep.subr.bf16.mxu0 0
      %8456 = vmatpush1.bf16.msra.mxu0 %v8390
      %8457 = vmatprep.subr.bf16.mxu0 0
      %8458 = vmatpush1.bf16.msra.mxu0 %v8391
      %8459 = vmatprep.subr.bf16.mxu0 0
      %8460 = vmatpush1.bf16.msra.mxu0 %v8392
      %8461 = vmatprep.subr.bf16.mxu0 0
      %8462 = vmatpush1.bf16.msra.mxu0 %v8393
      %8463 = vmatprep.subr.bf16.mxu0 0
      %8464 = vmatpush1.bf16.msra.mxu0 %v8394
      %8465 = vmatprep.subr.bf16.mxu0 0
      %8466 = vmatpush1.bf16.msra.mxu0 %v8395
      %8467 = vmatprep.subr.bf16.mxu0 0
      %8468 = vmatpush1.bf16.msra.mxu0 %v8396
      %8469 = vmatprep.subr.bf16.mxu0 0
      %8470 = vmatpush1.bf16.msra.mxu0 %v8397
      %8471 = vmatprep.subr.bf16.mxu0 0
      %8472 = vmatpush1.bf16.msra.mxu0 %v8398
      %8473 = vmatprep.subr.bf16.mxu0 0
      %8474 = vmatpush1.bf16.msra.mxu0 %v8399
      %8475 = vmatprep.subr.bf16.mxu0 0
      %8476 = vmatpush1.bf16.msra.mxu0 %v8400
      %8477 = vmatprep.subr.bf16.mxu0 0
      %8478 = vmatpush1.bf16.msra.mxu0 %v8401
      %8479 = vmatprep.subr.bf16.mxu0 0
      %8480 = vmatpush1.bf16.msra.mxu0 %v8402
      %8481 = vmatprep.subr.bf16.mxu0 0
      %8482 = vmatpush1.bf16.msra.mxu0 %v8403
      %8483 = vmatprep.subr.bf16.mxu0 0
      %8484 = vmatpush1.bf16.msra.mxu0 %v8404
      %8485 = vmatprep.mubr.bf16.mxu0 %v8152
      %8486 = vmatmul.mubr.bf16.gmra.mrb[0].mxu0 %v8151
      %v8487 = vpop.f32.mrb[0].mxu0
      %v8488 = vadd.f32 %v8260, %v8487
      %v8489 = vpop.f32.mrb[0].mxu0
      %v8490 = vpop.f32.mrb[0].mxu0
      %v8491 = vadd.f32 %v8260, %v8490
      %v8492 = vpop.f32.mrb[0].mxu0
      %8493 = vmatprep.mubr.bf16.mxu0 %v8156
      %8494 = vmatmul.mubr.bf16.gmra.mrb[0].mxu0 %v8155
      %v8495 = vpop.f32.mrb[0].mxu0
      %v8496 = vpop.f32.mrb[0].mxu0
      %v8497 = vpop.f32.mrb[0].mxu0
      %v8498 = vpop.f32.mrb[0].mxu0
      %8499 = vmatprep.mubr.bf16.mxu0 %v8160
      %8500 = vmatmul.mubr.bf16.gmra.mrb[0].mxu0 %v8159
      %v8501 = vpop.f32.mrb[0].mxu0
      %v8502 = vpop.f32.mrb[0].mxu0
      %v8503 = vpop.f32.mrb[0].mxu0
      %v8504 = vpop.f32.mrb[0].mxu0
      %8505 = vmatprep.mubr.bf16.mxu0 %v8164
      %8506 = vmatmul.mubr.bf16.gmra.mrb[0].mxu0 %v8163
      %v8507 = vpop.f32.mrb[0].mxu0
      %v8508 = vpop.f32.mrb[0].mxu0
      %v8509 = vpop.f32.mrb[0].mxu0
      %v8510 = vpop.f32.mrb[0].mxu0
      %8511 = vmatprep.mubr.bf16.mxu0 %v8168
      %8512 = vmatmul.mubr.bf16.gmra.mrb[0].mxu0 %v8167
      %v8513 = vpop.f32.mrb[0].mxu0
      %v8514 = vpop.f32.mrb[0].mxu0
      %v8515 = vpop.f32.mrb[0].mxu0
      %v8516 = vpop.f32.mrb[0].mxu0
      %8517 = vmatprep.mubr.bf16.mxu0 %v8172
      %8518 = vmatmul.mubr.bf16.gmra.mrb[0].mxu0 %v8171
      %v8519 = vpop.f32.mrb[0].mxu0
      %v8520 = vadd.f32 %v8260, %v8519
      %v8521 = vpop.f32.mrb[0].mxu0
      %v8522 = vpop.f32.mrb[0].mxu0
      %v8523 = vadd.f32 %v8260, %v8522
      %v8524 = vpop.f32.mrb[0].mxu0
      %8525 = vmatprep.mubr.bf16.mxu0 %v8176
      %8526 = vmatmul.mubr.bf16.gmra.mrb[0].mxu0 %v8175
      %v8527 = vpop.f32.mrb[0].mxu0
      %v8528 = vpop.f32.mrb[0].mxu0
      %v8529 = vpop.f32.mrb[0].mxu0
      %v8530 = vpop.f32.mrb[0].mxu0
      %8531 = vmatprep.mubr.bf16.mxu0 %v8180
      %8532 = vmatmul.mubr.bf16.gmra.mrb[0].mxu0 %v8179
      %v8533 = vpop.f32.mrb[0].mxu0
      %v8534 = vpop.f32.mrb[0].mxu0
      %v8535 = vpop.f32.mrb[0].mxu0
      %v8536 = vpop.f32.mrb[0].mxu0
      %8537 = vmatprep.mubr.bf16.mxu0 %v8184
      %8538 = vmatmul.mubr.bf16.gmra.mrb[0].mxu0 %v8183
      %v8539 = vpop.f32.mrb[0].mxu0
      %v8540 = vpop.f32.mrb[0].mxu0
      %v8541 = vpop.f32.mrb[0].mxu0
      %v8542 = vpop.f32.mrb[0].mxu0
      %8543 = vmatprep.mubr.bf16.mxu0 %v8188
      %8544 = vmatmul.mubr.bf16.gmra.mrb[0].mxu0 %v8187
      %v8545 = vpop.f32.mrb[0].mxu0
      %v8546 = vpop.f32.mrb[0].mxu0
      %v8547 = vpop.f32.mrb[0].mxu0
      %v8548 = vpop.f32.mrb[0].mxu0
      %8549 = vdwg.mxu0
      %8550 = vmatprep.subr.bf16.mxu0 0
      %8551 = vmatpush1.bf16.msra.mxu0 %v8405
      %8552 = vmatprep.subr.bf16.mxu0 0
      %8553 = vmatpush1.bf16.msra.mxu0 %v8406
      %8554 = vmatprep.subr.bf16.mxu0 0
      %8555 = vmatpush1.bf16.msra.mxu0 %v8407
      %8556 = vmatprep.subr.bf16.mxu0 0
      %8557 = vmatpush1.bf16.msra.mxu0 %v8408
      %8558 = vmatprep.subr.bf16.mxu0 0
      %8559 = vmatpush1.bf16.msra.mxu0 %v8409
      %8560 = vmatprep.subr.bf16.mxu0 0
      %8561 = vmatpush1.bf16.msra.mxu0 %v8410
      %8562 = vmatprep.subr.bf16.mxu0 0
      %8563 = vmatpush1.bf16.msra.mxu0 %v8411
      %8564 = vmatprep.subr.bf16.mxu0 0
      %8565 = vmatpush1.bf16.msra.mxu0 %v8412
      %8566 = vmatprep.subr.bf16.mxu0 0
      %8567 = vmatpush1.bf16.msra.mxu0 %v8413
      %8568 = vmatprep.subr.bf16.mxu0 0
      %8569 = vmatpush1.bf16.msra.mxu0 %v8414
      %8570 = vmatprep.subr.bf16.mxu0 0
      %8571 = vmatpush1.bf16.msra.mxu0 %v8415
      %8572 = vmatprep.subr.bf16.mxu0 0
      %8573 = vmatpush1.bf16.msra.mxu0 %v8416
      %8574 = vmatprep.subr.bf16.mxu0 0
      %8575 = vmatpush1.bf16.msra.mxu0 %v8417
      %8576 = vmatprep.subr.bf16.mxu0 0
      %8577 = vmatpush1.bf16.msra.mxu0 %v8418
      %8578 = vmatprep.subr.bf16.mxu0 0
      %8579 = vmatpush1.bf16.msra.mxu0 %v8419
      %8580 = vmatprep.subr.bf16.mxu0 0
      %8581 = vmatpush1.bf16.msra.mxu0 %v8420
      %8582 = vmatprep.mubr.bf16.mxu0 %v8154
      %8583 = vmatmul.mubr.bf16.gmra.mrb[0].mxu0 %v8153
      %v8584 = vpop.f32.mrb[0].mxu0
      %v8585 = vadd.f32 %v8488, %v8584
      %v8586 = vpop.f32.mrb[0].mxu0
      %v8587 = vpop.f32.mrb[0].mxu0
      %v8588 = vadd.f32 %v8491, %v8587
      %v8589 = vpop.f32.mrb[0].mxu0
      %8590 = vmatprep.mubr.bf16.mxu0 %v8158
      %8591 = vmatmul.mubr.bf16.gmra.mrb[0].mxu0 %v8157
      %v8592 = vpop.f32.mrb[0].mxu0
      %v8593 = vpop.f32.mrb[0].mxu0
      %v8594 = vpop.f32.mrb[0].mxu0
      %v8595 = vpop.f32.mrb[0].mxu0
      %8596 = vmatprep.mubr.bf16.mxu0 %v8162
      %8597 = vmatmul.mubr.bf16.gmra.mrb[0].mxu0 %v8161
      %v8598 = vpop.f32.mrb[0].mxu0
      %v8599 = vpop.f32.mrb[0].mxu0
      %v8600 = vpop.f32.mrb[0].mxu0
      %v8601 = vpop.f32.mrb[0].mxu0
      %8602 = vmatprep.mubr.bf16.mxu0 %v8166
      %8603 = vmatmul.mubr.bf16.gmra.mrb[0].mxu0 %v8165
      %v8604 = vpop.f32.mrb[0].mxu0
      %v8605 = vpop.f32.mrb[0].mxu0
      %v8606 = vpop.f32.mrb[0].mxu0
      %v8607 = vpop.f32.mrb[0].mxu0
      %8608 = vmatprep.mubr.bf16.mxu0 %v8170
      %8609 = vmatmul.mubr.bf16.gmra.mrb[0].mxu0 %v8169
      %v8610 = vpop.f32.mrb[0].mxu0
      %v8611 = vpop.f32.mrb[0].mxu0
      %v8612 = vpop.f32.mrb[0].mxu0
      %v8613 = vpop.f32.mrb[0].mxu0
      %8614 = vmatprep.mubr.bf16.mxu0 %v8174
      %8615 = vmatmul.mubr.bf16.gmra.mrb[0].mxu0 %v8173
      %v8616 = vpop.f32.mrb[0].mxu0
      %v8617 = vadd.f32 %v8520, %v8616
      %v8618 = vpop.f32.mrb[0].mxu0
      %v8619 = vpop.f32.mrb[0].mxu0
      %v8620 = vadd.f32 %v8523, %v8619
      %v8621 = vpop.f32.mrb[0].mxu0
      %8622 = vmatprep.mubr.bf16.mxu0 %v8178
      %8623 = vmatmul.mubr.bf16.gmra.mrb[0].mxu0 %v8177
      %v8624 = vpop.f32.mrb[0].mxu0
      %v8625 = vpop.f32.mrb[0].mxu0
      %v8626 = vpop.f32.mrb[0].mxu0
      %v8627 = vpop.f32.mrb[0].mxu0
      %8628 = vmatprep.mubr.bf16.mxu0 %v8182
      %8629 = vmatmul.mubr.bf16.gmra.mrb[0].mxu0 %v8181
      %v8630 = vpop.f32.mrb[0].mxu0
      %v8631 = vpop.f32.mrb[0].mxu0
      %v8632 = vpop.f32.mrb[0].mxu0
      %v8633 = vpop.f32.mrb[0].mxu0
      %8634 = vmatprep.mubr.bf16.mxu0 %v8186
      %8635 = vmatmul.mubr.bf16.gmra.mrb[0].mxu0 %v8185
      %v8636 = vpop.f32.mrb[0].mxu0
      %v8637 = vpop.f32.mrb[0].mxu0
      %v8638 = vpop.f32.mrb[0].mxu0
      %v8639 = vpop.f32.mrb[0].mxu0
      %8640 = vmatprep.mubr.bf16.mxu0 %v8190
      %8641 = vmatmul.mubr.bf16.gmra.mrb[0].mxu0 %v8189
      %v8642 = vpop.f32.mrb[0].mxu0
      %v8643 = vpop.f32.mrb[0].mxu0
      %v8644 = vpop.f32.mrb[0].mxu0
      %v8645 = vpop.f32.mrb[0].mxu0
      %8646 = vdwg.mxu0
      %v8647 = vadd.f32 %v6659, %v8585
      %v8648 = vadd.f32 %v6660, %v8588
      %v8649 = vadd.f32 %v6669, %v8617
      %v8650 = vadd.f32 %v6670, %v8620
      %v8651 = vld [vmem:[%s16] sm:$0x1]
      %v8652 = vld [vmem:[%s17] sm:$0x1]
      %8653 = vadd.xlane.f32.xlu0 %v8647
      %v8654 = vpop.xlane.xlu0 %8653
      %8655 = vadd.xlane.f32.xlu0 %v8648
      %v8656 = vpop.xlane.xlu0 %8655
      %8657 = vadd.xlane.f32.xlu0 %v8649
      %v8658 = vpop.xlane.xlu0 %8657
      %8659 = vadd.xlane.f32.xlu0 %v8650
      %v8660 = vpop.xlane.xlu0 %8659
      %v8661 = vmul.f32 %v8654, %v2060
      %v8662 = vmul.f32 %v8656, %v2060
      %v8663 = vmul.f32 %v8658, %v2060
      %v8664 = vmul.f32 %v8660, %v2060
      %v8665 = vsub.f32 %v8647, %v8661
      %v8666 = vsub.f32 %v8648, %v8662
      %v8667 = vsub.f32 %v8649, %v8663
      %v8668 = vsub.f32 %v8650, %v8664
      %v8669 = vmul.f32 %v8665, %v8665
      %v8670 = vmul.f32 %v8666, %v8666
      %v8671 = vmul.f32 %v8667, %v8667
      %v8672 = vmul.f32 %v8668, %v8668
      %8673 = vadd.xlane.f32.xlu0 %v8669
      %v8674 = vpop.xlane.xlu0 %8673
      %8675 = vadd.xlane.f32.xlu0 %v8670
      %v8676 = vpop.xlane.xlu0 %8675
      %8677 = vadd.xlane.f32.xlu0 %v8671
      %v8678 = vpop.xlane.xlu0 %8677
      %8679 = vadd.xlane.f32.xlu0 %v8672
      %v8680 = vpop.xlane.xlu0 %8679
      %v8681 = vmul.f32 %v8674, %v2060
      %v8682 = vmul.f32 %v8676, %v2060
      %v8683 = vmul.f32 %v8678, %v2060
      %v8684 = vmul.f32 %v8680, %v2060
      %v8685 = vadd.f32 %v8681, 1e-05
      %v8686 = vadd.f32 %v8682, 1e-05
      %v8687 = vadd.f32 %v8683, 1e-05
      %v8688 = vadd.f32 %v8684, 1e-05
      %v8689 = vrsqrt.pop %v8685
      %v8690 = vrsqrt.pop %v8686
      %v8691 = vrsqrt.pop %v8687
      %v8692 = vrsqrt.pop %v8688
      %v8693 = vmul.f32 %v8665, %v8689
      %v8694 = vmul.f32 %v8666, %v8690
      %v8695 = vmul.f32 %v8667, %v8691
      %v8696 = vmul.f32 %v8668, %v8692
      %v8698 = vlaneseq
      %v8699 = vshrl.u32 %v8698, 7
      %v8700 = vsub.s32 0, %v8699
      %v8701 = vrot.slane %v8651, %v8700
      %v8703 = vmul.f32 %v8693, %v8701
      %v8704 = vmul.f32 %v8694, %v8701
      %v8705 = vmul.f32 %v8695, %v8701
      %v8706 = vmul.f32 %v8696, %v8701
      %v8708 = vlaneseq
      %v8709 = vshrl.u32 %v8708, 7
      %v8710 = vsub.s32 0, %v8709
      %v8711 = vrot.slane %v8652, %v8710
      %v8713 = vadd.f32 %v8703, %v8711
      %v8714 = vadd.f32 %v8704, %v8711
      %v8715 = vadd.f32 %v8705, %v8711
      %v8716 = vadd.f32 %v8706, %v8711
      %v8717 = vpack.c.bf16 %v8714, %v8713
      %v8718 = vpack.c.bf16 %v8716, %v8715
      %v8719 = vld [vmem:[%s18] sm:$0xf]
      %v8720 = vld [vmem:[%s18 + $0x4] sm:$0xf]
      %v8721 = vld [vmem:[%s18 + $0x8] sm:$0xf]
      %v8722 = vld [vmem:[%s18 + $0xc] sm:$0xf]
      %v8723 = vld [vmem:[%s18 + $0x10] sm:$0xf]
      %v8724 = vld [vmem:[%s18 + $0x14] sm:$0xf]
      %v8725 = vld [vmem:[%s18 + $0x18] sm:$0xf]
      %v8726 = vld [vmem:[%s18 + $0x1c] sm:$0xf]
      %v8727 = vld [vmem:[%s18 + $0x20] sm:$0xf]
      %v8728 = vld [vmem:[%s18 + $0x24] sm:$0xf]
      %v8729 = vld [vmem:[%s18 + $0x28] sm:$0xf]
      %v8730 = vld [vmem:[%s18 + $0x2c] sm:$0xf]
      %v8731 = vld [vmem:[%s18 + $0x30] sm:$0xf]
      %v8732 = vld [vmem:[%s18 + $0x34] sm:$0xf]
      %v8733 = vld [vmem:[%s18 + $0x38] sm:$0xf]
      %v8734 = vld [vmem:[%s18 + $0x3c] sm:$0xf]
      %v8735 = vld [vmem:[%s19] sm:$0x1]
      %v8737 = vlaneseq
      %v8738 = vshrl.u32 %v8737, 7
      %v8739 = vsub.s32 0, %v8738
      %v8740 = vrot.slane %v8735, %v8739
      %v8758 = vunpack.c.l.b16 %v8719
      %v8759 = vunpack.c.l.b16 %v8720
      %v8760 = vunpack.c.l.b16 %v8721
      %v8761 = vunpack.c.l.b16 %v8722
      %v8762 = vunpack.c.l.b16 %v8723
      %v8763 = vunpack.c.l.b16 %v8724
      %v8764 = vunpack.c.l.b16 %v8725
      %v8765 = vunpack.c.l.b16 %v8726
      %v8766 = vunpack.c.l.b16 %v8727
      %v8767 = vunpack.c.l.b16 %v8728
      %v8768 = vunpack.c.l.b16 %v8729
      %v8769 = vunpack.c.l.b16 %v8730
      %v8770 = vunpack.c.l.b16 %v8731
      %v8771 = vunpack.c.l.b16 %v8732
      %v8772 = vunpack.c.l.b16 %v8733
      %v8773 = vunpack.c.l.b16 %v8734
      %v8774 = vpack.c.b16 %v8759, %v8758
      %v8775 = vpack.c.b16 %v8761, %v8760
      %v8776 = vpack.c.b16 %v8763, %v8762
      %v8777 = vpack.c.b16 %v8765, %v8764
      %v8778 = vpack.c.b16 %v8767, %v8766
      %v8779 = vpack.c.b16 %v8769, %v8768
      %v8780 = vpack.c.b16 %v8771, %v8770
      %v8781 = vpack.c.b16 %v8773, %v8772
      %8790 = vmatprep.subr.bf16.mxu0 0
      %8791 = vmatpush1.bf16.msra.mxu0 %v8774
      %8792 = vmatprep.subr.bf16.mxu0 0
      %8793 = vmatpush1.bf16.msra.mxu0 %v8775
      %8794 = vmatprep.subr.bf16.mxu0 0
      %8795 = vmatpush1.bf16.msra.mxu0 %v8776
      %8796 = vmatprep.subr.bf16.mxu0 0
      %8797 = vmatpush1.bf16.msra.mxu0 %v8777
      %8798 = vmatprep.subr.bf16.mxu0 0
      %8799 = vmatpush1.bf16.msra.mxu0 %v8778
      %8800 = vmatprep.subr.bf16.mxu0 0
      %8801 = vmatpush1.bf16.msra.mxu0 %v8779
      %8802 = vmatprep.subr.bf16.mxu0 0
      %8803 = vmatpush1.bf16.msra.mxu0 %v8780
      %8804 = vmatprep.subr.bf16.mxu0 0
      %8805 = vmatpush1.bf16.msra.mxu0 %v8781
      %8806 = vmatprep.subr.bf16.mxu0 0
      %8807 = vmatpush1.bf16.msra.mxu0 0
      %8808 = vmatprep.subr.bf16.mxu0 0
      %8809 = vmatpush1.bf16.msra.mxu0 0
      %8810 = vmatprep.subr.bf16.mxu0 0
      %8811 = vmatpush1.bf16.msra.mxu0 0
      %8812 = vmatprep.subr.bf16.mxu0 0
      %8813 = vmatpush1.bf16.msra.mxu0 0
      %8814 = vmatprep.subr.bf16.mxu0 0
      %8815 = vmatpush1.bf16.msra.mxu0 0
      %8816 = vmatprep.subr.bf16.mxu0 0
      %8817 = vmatpush1.bf16.msra.mxu0 0
      %8818 = vmatprep.subr.bf16.mxu0 0
      %8819 = vmatpush1.bf16.msra.mxu0 0
      %8820 = vmatprep.subr.bf16.mxu0 0
      %8821 = vmatpush1.bf16.msra.mxu0 0
      %8822 = vmatprep.mubr.bf16.mxu0 0
      %8823 = vmatmul.mubr.bf16.gmra.mrb[0].mxu0 %v8717
      %v8824 = vpop.f32.mrb[0].mxu0
      %v8825 = vadd.f32 %v8740, %v8824
      %v8826 = vpop.f32.mrb[0].mxu0
      %v8827 = vpop.f32.mrb[0].mxu0
      %v8828 = vadd.f32 %v8740, %v8827
      %v8829 = vpop.f32.mrb[0].mxu0
      %8830 = vmatprep.mubr.bf16.mxu0 0
      %8831 = vmatmul.mubr.bf16.gmra.mrb[0].mxu0 %v8718
      %v8832 = vpop.f32.mrb[0].mxu0
      %v8833 = vadd.f32 %v8740, %v8832
      %v8834 = vpop.f32.mrb[0].mxu0
      %v8835 = vpop.f32.mrb[0].mxu0
      %v8836 = vadd.f32 %v8740, %v8835
      %v8837 = vpop.f32.mrb[0].mxu0
      %8838 = vdwg.mxu0
      %v8839 = vld [vmem:[%s20] sm:$0xff]
      %v8840 = vld [vmem:[%s20 + $0x8] sm:$0xff]
      %v8841 = vld [vmem:[%s20 + $0x10] sm:$0xff]
      %v8842 = vld [vmem:[%s20 + $0x18] sm:$0xff]
      %v8843 = vld [vmem:[%s20 + $0x20] sm:$0xff]
      %v8844 = vld [vmem:[%s20 + $0x28] sm:$0xff]
      %v8845 = vld [vmem:[%s20 + $0x30] sm:$0xff]
      %v8846 = vld [vmem:[%s20 + $0x38] sm:$0xff]
      %v8847 = vld [vmem:[%s20 + $0x40] sm:$0xff]
      %v8848 = vld [vmem:[%s20 + $0x48] sm:$0xff]
      %v8849 = vld [vmem:[%s20 + $0x50] sm:$0xff]
      %v8850 = vld [vmem:[%s20 + $0x58] sm:$0xff]
      %v8851 = vld [vmem:[%s20 + $0x60] sm:$0xff]
      %v8852 = vld [vmem:[%s20 + $0x68] sm:$0xff]
      %v8853 = vld [vmem:[%s20 + $0x70] sm:$0xff]
      %v8854 = vld [vmem:[%s20 + $0x78] sm:$0xff]
      %v8855 = vld [vmem:[%s21] sm:$0x1]
      %v8857 = vlaneseq
      %v8858 = vshrl.u32 %v8857, 7
      %v8859 = vsub.s32 0, %v8858
      %v8860 = vrot.slane %v8855, %v8859
      %8862 = vmatprep.subr.mxu0 0.0
      %8863 = vmatpush1.msra.mxu0 %v8839
      %8864 = vmatprep.subr.mxu0 0.0
      %8865 = vmatpush1.msra.mxu0 %v8840
      %8866 = vmatprep.subr.mxu0 0.0
      %8867 = vmatpush1.msra.mxu0 %v8841
      %8868 = vmatprep.subr.mxu0 0.0
      %8869 = vmatpush1.msra.mxu0 %v8842
      %8870 = vmatprep.subr.mxu0 0.0
      %8871 = vmatpush1.msra.mxu0 %v8843
      %8872 = vmatprep.subr.mxu0 0.0
      %8873 = vmatpush1.msra.mxu0 %v8844
      %8874 = vmatprep.subr.mxu0 0.0
      %8875 = vmatpush1.msra.mxu0 %v8845
      %8876 = vmatprep.subr.mxu0 0.0
      %8877 = vmatpush1.msra.mxu0 %v8846
      %8878 = vmatprep.subr.mxu0 0.0
      %8879 = vmatpush1.msra.mxu0 %v8847
      %8880 = vmatprep.subr.mxu0 0.0
      %8881 = vmatpush1.msra.mxu0 %v8848
      %8882 = vmatprep.subr.mxu0 0.0
      %8883 = vmatpush1.msra.mxu0 %v8849
      %8884 = vmatprep.subr.mxu0 0.0
      %8885 = vmatpush1.msra.mxu0 %v8850
      %8886 = vmatprep.subr.mxu0 0.0
      %8887 = vmatpush1.msra.mxu0 %v8851
      %8888 = vmatprep.subr.mxu0 0.0
      %8889 = vmatpush1.msra.mxu0 %v8852
      %8890 = vmatprep.subr.mxu0 0.0
      %8891 = vmatpush1.msra.mxu0 %v8853
      %8892 = vmatprep.subr.mxu0 0.0
      %8893 = vmatpush1.msra.mxu0 %v8854
      %8894 = vmatprep.subr.mxu0 0.0
      %8895 = vmatpush1.msra.mxu0 0.0
      %8896 = vmatprep.subr.mxu0 0.0
      %8897 = vmatpush1.msra.mxu0 0.0
      %8898 = vmatprep.subr.mxu0 0.0
      %8899 = vmatpush1.msra.mxu0 0.0
      %8900 = vmatprep.subr.mxu0 0.0
      %8901 = vmatpush1.msra.mxu0 0.0
      %8902 = vmatprep.subr.mxu0 0.0
      %8903 = vmatpush1.msra.mxu0 0.0
      %8904 = vmatprep.subr.mxu0 0.0
      %8905 = vmatpush1.msra.mxu0 0.0
      %8906 = vmatprep.subr.mxu0 0.0
      %8907 = vmatpush1.msra.mxu0 0.0
      %8908 = vmatprep.subr.mxu0 0.0
      %8909 = vmatpush1.msra.mxu0 0.0
      %8910 = vmatprep.subr.mxu0 0.0
      %8911 = vmatpush1.msra.mxu0 0.0
      %8912 = vmatprep.subr.mxu0 0.0
      %8913 = vmatpush1.msra.mxu0 0.0
      %8914 = vmatprep.subr.mxu0 0.0
      %8915 = vmatpush1.msra.mxu0 0.0
      %8916 = vmatprep.subr.mxu0 0.0
      %8917 = vmatpush1.msra.mxu0 0.0
      %8918 = vmatprep.subr.mxu0 0.0
      %8919 = vmatpush1.msra.mxu0 0.0
      %8920 = vmatprep.subr.mxu0 0.0
      %8921 = vmatpush1.msra.mxu0 0.0
      %8922 = vmatprep.subr.mxu0 0.0
      %8923 = vmatpush1.msra.mxu0 0.0
      %8924 = vmatprep.subr.mxu0 0.0
      %8925 = vmatpush1.msra.mxu0 0.0
      %8926 = vmatprep.mubr.f32.mxu0 0.0
      %8927 = vmatmul.mubr.f32.gmra.mrb[0].mxu0 %v8825
      %v8928 = vpop.f32.mrb[0].mxu0
      %v8929 = vadd.f32 %v8860, %v8928
      %v8930 = vpop.f32.mrb[0].mxu0
      %8931 = vmatprep.mubr.f32.mxu0 0.0
      %8932 = vmatmul.mubr.f32.gmra.mrb[0].mxu0 %v8828
      %v8933 = vpop.f32.mrb[0].mxu0
      %v8934 = vadd.f32 %v8860, %v8933
      %v8935 = vpop.f32.mrb[0].mxu0
      %8936 = vmatprep.mubr.f32.mxu0 0.0
      %8937 = vmatmul.mubr.f32.gmra.mrb[0].mxu0 %v8833
      %v8938 = vpop.f32.mrb[0].mxu0
      %v8939 = vadd.f32 %v8860, %v8938
      %v8940 = vpop.f32.mrb[0].mxu0
      %8941 = vmatprep.mubr.f32.mxu0 0.0
      %8942 = vmatmul.mubr.f32.gmra.mrb[0].mxu0 %v8836
      %v8943 = vpop.f32.mrb[0].mxu0
      %v8944 = vadd.f32 %v8860, %v8943
      %v8945 = vpop.f32.mrb[0].mxu0
      %8946 = vdwg.mxu0
      %vm8947 = vcmask 31744
      %8948 = vst.msk [vmem:[%s688] sm:$0xff] %vm8947, %v8929
      %8949 = vst.msk [vmem:[%s688 + $0x8] sm:$0xff] %vm8947, %v8934
      %8950 = vst.msk [vmem:[%s688 + $0x10] sm:$0xff] %vm8947, %v8939
      %8951 = vst.msk [vmem:[%s688 + $0x18] sm:$0xff] %vm8947, %v8944
      %s8952 = smul.u32 4, %s33
      %p8953 = scmp.lt.s32.totalorder %s8952, 7
      %s8954 = scalar_select %p8953, %s8952, 7
      %s8955 = smul.addr %s8954, 8
      %s8956 = scalar_lea.vmem %s22, %s8955
      // Predicated region
      $region109: #{vit_forward.1} parent=107 // pred_check
        %p8957 = pneg %p518
      $region110: #{vit_forward.1} parent=107 // pred_check_branch
        %8959 = sbr.rel (%p8957) target = $region112
      $region111: #{vit_forward.1} parent=107 // pred_region
        %s8960 = smul.u32 4, %s33
      $region112: #{vit_forward.1} parent=107 // pred_fallthru
        _
    $region108: #{vit_forward.1} parent=5 // pred_fallthru
      _
    %p8961 = scmp.le.s32.totalorder 2, %s28
    // Predicated region
    $region113: #{vit_forward.1} parent=5 // pred_check
      %p8962 = pneg %p8961
    $region114: #{vit_forward.1} parent=5 // pred_check_branch
      %8964 = sbr.rel (%p8962) target = $region116
    $region115: #{vit_forward.1} parent=5 // pred_region
      %s8965 = ssub.s32 %s28, 2
      // Predicated region
      $region117: #{vit_forward.1} parent=115 // pred_check
        %p8966 = pneg %p524
      $region118: #{vit_forward.1} parent=115 // pred_check_branch
        %8968 = sbr.rel (%p8966) target = $region120
      $region119: #{vit_forward.1} parent=115 // pred_region
        %s8969 = smul.u32 4, %s34
        %p8970 = scmp.lt.s32.totalorder %s8969, 7
        %s8971 = scalar_select %p8970, %s8969, 7
        %s8972 = smul.addr %s8971, 8
        %s8973 = scalar_lea.vmem %s22, %s8972
      $region120: #{vit_forward.1} parent=115 // pred_fallthru
        _
    $region116: #{vit_forward.1} parent=5 // pred_fallthru
      _
  $region6: #{vit_forward.1} parent=0 // loop_footer
    %s32 = sadd.s32 1, %s28
  $region7: #{vit_forward.1} parent=0 // loop_footer_branch
    %27 = sbr.rel target = $region3
  $region8: #{vit_forward.1} parent=0 // loop_exit
    _

</llo_original>
